<compile_context>
chip_gen: v5e
topology: v5e:2x2
jax: 0.10.0
libtpu: 0.0.40
codegen_flags: <defaults>
</compile_context>

<pallas_src>
import jax
import jax.numpy as jnp
from jax.experimental import pallas as pl
from jax.experimental.pallas import tpu as pltpu


def divfree_kernel(xyT_ref, B0_ref, B1_ref, b_ref, W_ref, uvT_ref):
    # xyT_ref : (2, TN)  coordinate tile, lane-dense (row 0 = x, row 1 = y)
    # B0_ref  : (H, 1)   RFF frequencies (x component)
    # B1_ref  : (H, 1)   RFF frequencies (y component)
    # b_ref   : (H, 1)   RFF phases
    # W_ref   : (2, H)   pre-rotated, amplitude-folded weights [a*B1 ; -a*B0]
    # uvT_ref : (2, TN)  output [f_y ; -f_x], lane-dense
    x = xyT_ref[0:1, :]                                   # (1, TN)
    y = xyT_ref[1:2, :]                                   # (1, TN)

    # z[h, n] = B0[h]*x[n] + B1[h]*y[n] + b[h]  — VPU broadcast-FMA, keeps the
    # K=2 contraction off the MXU.
    z = B0_ref[...] * x + B1_ref[...] * y + b_ref[...]    # (H, TN)

    # cos on the EUP; kept in f32 for v5e compatibility / accuracy.
    c = jnp.cos(z)                                        # (H, TN)

    # uv^T = W @ cos(z): K=H contraction, lane-dense TN output (MXU).
    uvT_ref[...] = jnp.dot(
        W_ref[...], c, preferred_element_type=jnp.float32
    ).astype(uvT_ref.dtype)


def divfree(xy, B, b, a, *, tile_n=512):
    """xy: (N, 2) float32. Returns uv: (N, 2) = [df/dy, -df/dx] of the RFF stream fn."""
    N, two = xy.shape
    assert two == 2
    H = B.shape[1]
    assert B.shape == (2, H) and b.shape == (1, H) and a.shape == (1, H)

    # Ragged N: pad to a multiple of tile_n (padded columns are sliced off below).
    Np = tile_n * pl.cdiv(N, tile_n)
    xyT = jnp.zeros((2, Np), jnp.float32).at[:, :N].set(xy.T.astype(jnp.float32))

    # One-time wrapper precompute (layout plumbing + folding, not per-tile work).
    B0 = B[0].reshape(H, 1).astype(jnp.float32)
    B1 = B[1].reshape(H, 1).astype(jnp.float32)
    bc = b.reshape(H, 1).astype(jnp.float32)
    # Fold amplitude and the 90-degree rotation:  uv^T = [a*B1 ; -a*B0] @ cos(z)
    W = jnp.concatenate([a * B[1:2], -(a * B[0:1])], axis=0).astype(jnp.float32)  # (2, H)

    grid = (Np // tile_n,)
    cost = pl.CostEstimate(
        flops=2 * 2 * H * Np + 4 * H * Np,          # W@cos matmul + broadcast FMAs
        transcendentals=H * Np,                     # cos
        bytes_accessed=4 * (2 * Np + 2 * Np + 5 * H),
    )

    uvT = pl.pallas_call(
        divfree_kernel,
        out_shape=jax.ShapeDtypeStruct((2, Np), jnp.float32),
        grid_spec=pltpu.PrefetchScalarGridSpec(
            num_scalar_prefetch=0,
            grid=grid,
            in_specs=[
                pl.BlockSpec((2, tile_n), lambda i: (0, i)),  # xy^T tile (lane-dense)
                pl.BlockSpec((H, 1), lambda i: (0, 0)),       # B0 (resident)
                pl.BlockSpec((H, 1), lambda i: (0, 0)),       # B1 (resident)
                pl.BlockSpec((H, 1), lambda i: (0, 0)),       # b  (resident)
                pl.BlockSpec((2, H), lambda i: (0, 0)),       # W  (resident)
            ],
            out_specs=pl.BlockSpec((2, tile_n), lambda i: (0, i)),
        ),
        compiler_params=pltpu.CompilerParams(
            dimension_semantics=("parallel",),
        ),
        cost_estimate=cost,
    )(xyT, B0, B1, bc, W)

    return uvT[:, :N].T


# ---------------- pure-JAX reference (via autodiff, mirroring torch.autograd.grad) ----
def stream_fn(xy_row, B, b, a):
    # xy_row: (2,), scalar stream function f(xy)
    z = xy_row @ B + b[0]                  # (H,)
    return jnp.sum(a[0] * jnp.sin(z))


def divfree_ref(xy, B, b, a):
    grad_fn = jax.vmap(jax.grad(stream_fn), in_axes=(0, None, None, None))
    f_xy = grad_fn(xy, B, b, a)            # (N, 2) = (f_x, f_y)
    return jnp.concatenate([f_xy[:, 1:2], -f_xy[:, 0:1]], axis=-1)


if __name__ == "__main__":
    key = jax.random.PRNGKey(0)
    k_xy, k_B, k_b, k_a = jax.random.split(key, 4)

    N = 1000     # deliberately not a multiple of tile_n -> exercises padding path
    H = 128      # RFF hidden width

    xy = jax.random.normal(k_xy, (N, 2), dtype=jnp.float32)
    B = jax.random.normal(k_B, (2, H), dtype=jnp.float32)        # frequencies
    b = jax.random.uniform(k_b, (1, H), dtype=jnp.float32) * 6.28
    a = jax.random.normal(k_a, (1, H), dtype=jnp.float32) / jnp.sqrt(H)

    uv = divfree(xy, B, b, a, tile_n=512)
    uv = jax.block_until_ready(uv)

    uv_ref = divfree_ref(xy, B, b, a)
    assert uv.shape == (N, 2)
    assert jnp.allclose(uv, uv_ref, atol=1e-4, rtol=1e-4), (
        float(jnp.max(jnp.abs(uv - uv_ref)))
    )

    print("KERNEL_OK")
</pallas_src>

<mosaic_0001>
module attributes {stable_mosaic.version = 11 : i64} {
  func.func @divfree_kernel(%arg0: i32, %arg1: memref<2x512xf32, #tpu.memory_space<vmem>>, %arg2: memref<128x1xf32, #tpu.memory_space<vmem>>, %arg3: memref<128x1xf32, #tpu.memory_space<vmem>>, %arg4: memref<128x1xf32, #tpu.memory_space<vmem>>, %arg5: memref<2x128xf32, #tpu.memory_space<vmem>>, %arg6: memref<2x512xf32, #tpu.memory_space<vmem>>) attributes {dimension_semantics = [#tpu.dimension_semantics<parallel>], iteration_bounds = array<i64: 2>, scalar_prefetch = 0 : i64, scratch_operands = 0 : i64, tpu.core_type = #tpu.core_type<tc>, window_params = [{transform_indices = @transform_0, window_bounds = array<i64: 2, 512>}, {pipeline_mode = #tpu.pipeline_mode<synchronous>, transform_indices = @transform_1, window_bounds = array<i64: 128, 1>}, {pipeline_mode = #tpu.pipeline_mode<synchronous>, transform_indices = @transform_2, window_bounds = array<i64: 128, 1>}, {pipeline_mode = #tpu.pipeline_mode<synchronous>, transform_indices = @transform_3, window_bounds = array<i64: 128, 1>}, {pipeline_mode = #tpu.pipeline_mode<synchronous>, transform_indices = @transform_4, window_bounds = array<i64: 2, 128>}, {transform_indices = @transform_5, window_bounds = array<i64: 2, 512>}]} {
    %c0 = arith.constant 0 : index
    %c0_0 = arith.constant 0 : index
    %0 = vector.load %arg1[%c0, %c0_0] : memref<2x512xf32, #tpu.memory_space<vmem>>, vector<1x512xf32>
    %c1 = arith.constant 1 : index
    %c0_1 = arith.constant 0 : index
    %1 = vector.load %arg1[%c1, %c0_1] : memref<2x512xf32, #tpu.memory_space<vmem>>, vector<1x512xf32>
    %c0_2 = arith.constant 0 : index
    %c0_3 = arith.constant 0 : index
    %2 = vector.load %arg2[%c0_2, %c0_3] : memref<128x1xf32, #tpu.memory_space<vmem>>, vector<128x1xf32>
    %3 = vector.broadcast %2 : vector<128x1xf32> to vector<128x512xf32>
    %4 = vector.broadcast %0 : vector<1x512xf32> to vector<128x512xf32>
    %5 = arith.mulf %3, %4 : vector<128x512xf32>
    %c0_4 = arith.constant 0 : index
    %c0_5 = arith.constant 0 : index
    %6 = vector.load %arg3[%c0_4, %c0_5] : memref<128x1xf32, #tpu.memory_space<vmem>>, vector<128x1xf32>
    %7 = vector.broadcast %6 : vector<128x1xf32> to vector<128x512xf32>
    %8 = vector.broadcast %1 : vector<1x512xf32> to vector<128x512xf32>
    %9 = arith.mulf %7, %8 : vector<128x512xf32>
    %10 = arith.addf %5, %9 : vector<128x512xf32>
    %c0_6 = arith.constant 0 : index
    %c0_7 = arith.constant 0 : index
    %11 = vector.load %arg4[%c0_6, %c0_7] : memref<128x1xf32, #tpu.memory_space<vmem>>, vector<128x1xf32>
    %12 = vector.broadcast %11 : vector<128x1xf32> to vector<128x512xf32>
    %13 = arith.addf %10, %12 : vector<128x512xf32>
    %14 = math.cos %13 : vector<128x512xf32>
    %c0_8 = arith.constant 0 : index
    %c0_9 = arith.constant 0 : index
    %15 = vector.load %arg5[%c0_8, %c0_9] : memref<2x128xf32, #tpu.memory_space<vmem>>, vector<2x128xf32>
    %cst = arith.constant dense<0.000000e+00> : vector<2x512xf32>
    %16 = tpu.matmul %15, %14, %cst {dimension_numbers = #tpu.dot_dimension_numbers<[1], [0], [0], [1], [0, 0, 1, 1], [], []>} : vector<2x128xf32>, vector<128x512xf32>, vector<2x512xf32> -> vector<2x512xf32>
    %c0_10 = arith.constant 0 : index
    %c0_11 = arith.constant 0 : index
    %17 = vector.load %arg6[%c0_10, %c0_11] : memref<2x512xf32, #tpu.memory_space<vmem>>, vector<2x512xf32>
    tpu.vector_store %arg6[%c0_10, %c0_11], %16 {strides = array<i32>} : memref<2x512xf32, #tpu.memory_space<vmem>>, vector<2x512xf32>,
    return
  }
  func.func @transform_0(%arg0: i32) -> (i32, i32) {
    %c0_i32 = arith.constant 0 : i32
    %c0_i32_0 = arith.constant 0 : i32
    return %c0_i32, %arg0 : i32, i32
  }
  func.func @transform_1(%arg0: i32) -> (i32, i32) {
    %c0_i32 = arith.constant 0 : i32
    %c0_i32_0 = arith.constant 0 : i32
    %c0_i32_1 = arith.constant 0 : i32
    return %c0_i32, %c0_i32_0 : i32, i32
  }
  func.func @transform_2(%arg0: i32) -> (i32, i32) {
    %c0_i32 = arith.constant 0 : i32
    %c0_i32_0 = arith.constant 0 : i32
    %c0_i32_1 = arith.constant 0 : i32
    return %c0_i32, %c0_i32_0 : i32, i32
  }
  func.func @transform_3(%arg0: i32) -> (i32, i32) {
    %c0_i32 = arith.constant 0 : i32
    %c0_i32_0 = arith.constant 0 : i32
    %c0_i32_1 = arith.constant 0 : i32
    return %c0_i32, %c0_i32_0 : i32, i32
  }
  func.func @transform_4(%arg0: i32) -> (i32, i32) {
    %c0_i32 = arith.constant 0 : i32
    %c0_i32_0 = arith.constant 0 : i32
    %c0_i32_1 = arith.constant 0 : i32
    return %c0_i32, %c0_i32_0 : i32, i32
  }
  func.func @transform_5(%arg0: i32) -> (i32, i32) {
    %c0_i32 = arith.constant 0 : i32
    %c0_i32_0 = arith.constant 0 : i32
    return %c0_i32, %arg0 : i32, i32
  }
}

</mosaic_0001>

<llo_original>
// kernel: tpu_custom_call.1
$region0: #{tpu_custom_call.1}
  #allocation0 [shape = 'u32[]', space=smem, size = 0x4, offset = 0x4, fixed_abs, tag = 'smem constant byte address 0x4 - core index']
  #allocation1 [shape = 'u32[72,128]{1,0:T(1,128)}', space=vmem, size = 0x9000, scoped, tag = 'internal scratch']
  %s0 = inlined_call_operand.vmem [shape: f32[2,1024], index: 0, kind: input, shape index: {}]
  %s1 = inlined_call_operand.vmem [shape: f32[128,1], index: 1, kind: input, shape index: {}]
  %s2 = inlined_call_operand.vmem [shape: f32[128,1], index: 2, kind: input, shape index: {}]
  %s3 = inlined_call_operand.vmem [shape: f32[128,1], index: 3, kind: input, shape index: {}]
  %s4 = inlined_call_operand.vmem [shape: f32[2,128], index: 4, kind: input, shape index: {}]
  %s5 = inlined_call_operand.hbm [shape: f32[2,1024], index: 5, kind: output, shape index: {}]
  %s6 = sld [smem:[#allocation0]]
  $region53: #{tpu_custom_call.1} parent=0
    _
  %s8 = ssub.s32 1, %s6
  %s9 = scalar_select 0, %s8, %s6
  $region1: #{tpu_custom_call.1} parent=0
    #allocation2 [shape = 'u8[8192]{0}', space=vmem, size = 0x2000, scoped, tag = 'output window, operand 0']
    #allocation3 [shape = 's32[2]{0}', space=sflag, size = 0x8, scoped, tag = 'scoped memory for tpu_custom_call.1']
    %10 = vsyncpa [#allocation3], 0
    %s11 = scalar_lea.sflag [#allocation3], 1
    %12 = vsyncpa %s11, 0
    loop: start=0, step=1, limit=4
    $region2: #{tpu_custom_call.1} parent=1 // loop_pre_header
      _
    $region3: #{tpu_custom_call.1} parent=1 // loop_header
      %s14 = sphi 0, %s18
      %p15 = scmp.ge.s32.totalorder %s14, 4
      %s24 = sphi 0, %s26
      %s27 = sphi 0, %s24
      %s28 = sphi 0, %s27
      %s44 = sphi 0, %s28
      %s48 = sphi 0, %s48
      %s50 = sphi 0, %s48
      %s51 = sphi 0, %s50
      %s65 = sphi 0, %s51
      %s69 = sphi 0, %s69
      %s71 = sphi 0, %s69
      %s72 = sphi 0, %s71
      %s86 = sphi 0, %s72
      %s90 = sphi 0, %s90
      %s92 = sphi 0, %s90
      %s93 = sphi 0, %s92
      %s107 = sphi 0, %s93
      %s111 = sphi 0, %s111
      %s113 = sphi 0, %s111
      %s114 = sphi 0, %s113
      %s128 = sphi 0, %s114
      %s134 = sphi 0, %s136
      %s137 = sphi 0, %s134
      %s138 = sphi 0, %s137
      %s154 = sphi 0, %s138
    $region4: #{tpu_custom_call.1} parent=1 // loop_header_branch
      %17 = sbr.rel (%p15) target = $region8
    $region5: #{tpu_custom_call.1} parent=1 // loop_body
      %s19 = ssub.s32 %s14, 1
      %s20 = ssub.s32 %s14, 2
      %s21 = sadd.s32 %s14, 1
      %s22 = ssub.s32 %s14, %s21
      %p23 = scmp.eq.s32.totalorder %s22, 0
      %s25 = sadd.s32 %s24, 1
      %s26 = scalar_select %p23, %s24, %s25
      %p29 = pneg %p23
      %p30 = scmp.eq.s32.totalorder %s14, 1
      %p31 = por %p29, %p30
      %p32 = scmp.ne.s32.totalorder %s24, %s27
      %p33 = scmp.eq.s32.totalorder %s14, 0
      %p34 = por %p32, %p33
      %p35 = scmp.ne.s32.totalorder %s24, %s27
      %p36 = scmp.eq.s32.totalorder %s19, 1
      %p37 = por %p35, %p36
      %p38 = scmp.ne.s32.totalorder %s27, %s28
      %p39 = scmp.eq.s32.totalorder %s19, 0
      %p40 = por %p38, %p39
      %p41 = scmp.ne.s32.totalorder %s27, %s28
      %p42 = scmp.eq.s32.totalorder %s20, 1
      %p43 = por %p41, %p42
      %p45 = scmp.ne.s32.totalorder %s28, %s44
      %p46 = scmp.eq.s32.totalorder %s20, 0
      %p47 = por %p45, %p46
      %s49 = sadd.s32 %s48, 1
      %p52 = scmp.eq.s32.totalorder %s14, 1
      %p53 = scmp.ne.s32.totalorder %s48, %s50
      %p54 = scmp.eq.s32.totalorder %s14, 0
      %p55 = por %p53, %p54
      %p56 = scmp.ne.s32.totalorder %s48, %s50
      %p57 = scmp.eq.s32.totalorder %s19, 1
      %p58 = por %p56, %p57
      %p59 = scmp.ne.s32.totalorder %s50, %s51
      %p60 = scmp.eq.s32.totalorder %s19, 0
      %p61 = por %p59, %p60
      %p62 = scmp.ne.s32.totalorder %s50, %s51
      %p63 = scmp.eq.s32.totalorder %s20, 1
      %p64 = por %p62, %p63
      %p66 = scmp.ne.s32.totalorder %s51, %s65
      %p67 = scmp.eq.s32.totalorder %s20, 0
      %p68 = por %p66, %p67
      %s70 = sadd.s32 %s69, 1
      %p73 = scmp.eq.s32.totalorder %s14, 1
      %p74 = scmp.ne.s32.totalorder %s69, %s71
      %p75 = scmp.eq.s32.totalorder %s14, 0
      %p76 = por %p74, %p75
      %p77 = scmp.ne.s32.totalorder %s69, %s71
      %p78 = scmp.eq.s32.totalorder %s19, 1
      %p79 = por %p77, %p78
      %p80 = scmp.ne.s32.totalorder %s71, %s72
      %p81 = scmp.eq.s32.totalorder %s19, 0
      %p82 = por %p80, %p81
      %p83 = scmp.ne.s32.totalorder %s71, %s72
      %p84 = scmp.eq.s32.totalorder %s20, 1
      %p85 = por %p83, %p84
      %p87 = scmp.ne.s32.totalorder %s72, %s86
      %p88 = scmp.eq.s32.totalorder %s20, 0
      %p89 = por %p87, %p88
      %s91 = sadd.s32 %s90, 1
      %p94 = scmp.eq.s32.totalorder %s14, 1
      %p95 = scmp.ne.s32.totalorder %s90, %s92
      %p96 = scmp.eq.s32.totalorder %s14, 0
      %p97 = por %p95, %p96
      %p98 = scmp.ne.s32.totalorder %s90, %s92
      %p99 = scmp.eq.s32.totalorder %s19, 1
      %p100 = por %p98, %p99
      %p101 = scmp.ne.s32.totalorder %s92, %s93
      %p102 = scmp.eq.s32.totalorder %s19, 0
      %p103 = por %p101, %p102
      %p104 = scmp.ne.s32.totalorder %s92, %s93
      %p105 = scmp.eq.s32.totalorder %s20, 1
      %p106 = por %p104, %p105
      %p108 = scmp.ne.s32.totalorder %s93, %s107
      %p109 = scmp.eq.s32.totalorder %s20, 0
      %p110 = por %p108, %p109
      %s112 = sadd.s32 %s111, 1
      %p115 = scmp.eq.s32.totalorder %s14, 1
      %p116 = scmp.ne.s32.totalorder %s111, %s113
      %p117 = scmp.eq.s32.totalorder %s14, 0
      %p118 = por %p116, %p117
      %p119 = scmp.ne.s32.totalorder %s111, %s113
      %p120 = scmp.eq.s32.totalorder %s19, 1
      %p121 = por %p119, %p120
      %p122 = scmp.ne.s32.totalorder %s113, %s114
      %p123 = scmp.eq.s32.totalorder %s19, 0
      %p124 = por %p122, %p123
      %p125 = scmp.ne.s32.totalorder %s113, %s114
      %p126 = scmp.eq.s32.totalorder %s20, 1
      %p127 = por %p125, %p126
      %p129 = scmp.ne.s32.totalorder %s114, %s128
      %p130 = scmp.eq.s32.totalorder %s20, 0
      %p131 = por %p129, %p130
      %s132 = ssub.s32 %s14, %s21
      %p133 = scmp.eq.s32.totalorder %s132, 0
      %s135 = sadd.s32 %s134, 1
      %s136 = scalar_select %p133, %s134, %s135
      %p139 = pneg %p133
      %p140 = scmp.eq.s32.totalorder %s14, 1
      %p141 = por %p139, %p140
      %p142 = scmp.ne.s32.totalorder %s134, %s137
      %p143 = scmp.eq.s32.totalorder %s14, 0
      %p144 = por %p142, %p143
      %p145 = scmp.ne.s32.totalorder %s134, %s137
      %p146 = scmp.eq.s32.totalorder %s19, 1
      %p147 = por %p145, %p146
      %p148 = scmp.ne.s32.totalorder %s137, %s138
      %p149 = scmp.eq.s32.totalorder %s19, 0
      %p150 = por %p148, %p149
      %p151 = scmp.ne.s32.totalorder %s137, %s138
      %p152 = scmp.eq.s32.totalorder %s20, 1
      %p153 = por %p151, %p152
      %p155 = scmp.ne.s32.totalorder %s138, %s154
      %p156 = scmp.eq.s32.totalorder %s20, 0
      %p157 = por %p155, %p156
      %p158 = scmp.le.s32.totalorder 1, %s14
      %p159 = scmp.lt.s32.totalorder %s14, 3
      %p160 = pnand %p158, %p159
      %p161 = pneg %p160
      // Predicated region
      $region9: #{tpu_custom_call.1} parent=5 // pred_check
        _
      $region10: #{tpu_custom_call.1} parent=5 // pred_check_branch
        %163 = sbr.rel (%p160) target = $region12
      $region11: #{tpu_custom_call.1} parent=5 // pred_region
        %s164 = ssub.s32 %s14, 1
        // Predicated region
        $region13: #{tpu_custom_call.1} parent=11 // pred_check
          %p165 = pneg %p61
        $region14: #{tpu_custom_call.1} parent=11 // pred_check_branch
          %167 = sbr.rel (%p165) target = $region16
        $region15: #{tpu_custom_call.1} parent=11 // pred_region
          _
        $region16: #{tpu_custom_call.1} parent=11 // pred_fallthru
          _
        // Predicated region
        $region17: #{tpu_custom_call.1} parent=11 // pred_check
          %p168 = pneg %p82
        $region18: #{tpu_custom_call.1} parent=11 // pred_check_branch
          %170 = sbr.rel (%p168) target = $region20
        $region19: #{tpu_custom_call.1} parent=11 // pred_region
          _
        $region20: #{tpu_custom_call.1} parent=11 // pred_fallthru
          _
        // Predicated region
        $region21: #{tpu_custom_call.1} parent=11 // pred_check
          %p171 = pneg %p103
        $region22: #{tpu_custom_call.1} parent=11 // pred_check_branch
          %173 = sbr.rel (%p171) target = $region24
        $region23: #{tpu_custom_call.1} parent=11 // pred_region
          _
        $region24: #{tpu_custom_call.1} parent=11 // pred_fallthru
          _
        // Predicated region
        $region25: #{tpu_custom_call.1} parent=11 // pred_check
          %p174 = pneg %p124
        $region26: #{tpu_custom_call.1} parent=11 // pred_check_branch
          %176 = sbr.rel (%p174) target = $region28
        $region27: #{tpu_custom_call.1} parent=11 // pred_region
          _
        $region28: #{tpu_custom_call.1} parent=11 // pred_fallthru
          _
      $region12: #{tpu_custom_call.1} parent=5 // pred_fallthru
        _
      %p177 = scmp.lt.s32.totalorder %s14, 2
      // Predicated region
      $region29: #{tpu_custom_call.1} parent=5 // pred_check
        %p178 = pneg %p177
      $region30: #{tpu_custom_call.1} parent=5 // pred_check_branch
        %180 = sbr.rel (%p178) target = $region32
      $region31: #{tpu_custom_call.1} parent=5 // pred_region
        // Predicated region
        $region33: #{tpu_custom_call.1} parent=31 // pred_check
          %p181 = pneg %p34
        $region34: #{tpu_custom_call.1} parent=31 // pred_check_branch
          %183 = sbr.rel (%p181) target = $region36
        $region35: #{tpu_custom_call.1} parent=31 // pred_region
          %s184 = smul.u32 4, %s14
          %p185 = scmp.lt.s32.totalorder %s184, 7
          %s186 = scalar_select %p185, %s184, 7
          %s187 = smul.addr %s186, 2
          %s188 = scalar_lea.vmem %s0, %s187
          %s189 = smul.u32 4, %s14
        $region36: #{tpu_custom_call.1} parent=31 // pred_fallthru
          _
      $region32: #{tpu_custom_call.1} parent=5 // pred_fallthru
        _
      %p190 = scmp.le.s32.totalorder 1, %s14
      %p191 = scmp.lt.s32.totalorder %s14, 3
      %p192 = pnand %p190, %p191
      %p193 = pneg %p192
      // Predicated region
      $region37: #{tpu_custom_call.1} parent=5 // pred_check
        _
      $region38: #{tpu_custom_call.1} parent=5 // pred_check_branch
        %195 = sbr.rel (%p192) target = $region40
      $region39: #{tpu_custom_call.1} parent=5 // pred_region
        %s196 = ssub.s32 %s14, 1
        %s197 = smul.u32 4, %s19
        %p198 = scmp.lt.s32.totalorder %s197, 7
        %s199 = scalar_select %p198, %s197, 7
        %s200 = smul.addr %s199, 2
        %s201 = scalar_lea.vmem %s0, %s200
        %p202 = pneg %p40
        %p203 = pneg %p37
        %p204 = pneg %p61
        %p205 = pneg %p58
        %p206 = pneg %p82
        %p207 = pneg %p79
        %p208 = pneg %p103
        %p209 = pneg %p100
        %p210 = pneg %p124
        %p211 = pneg %p121
        %p212 = pneg %p150
        %p213 = pneg %p147
        %s214 = sand.u32 %s137, 1
        %s215 = scalar_lea.sflag [#allocation3], %s214
        %s216 = sand.u32 %s137, 1
        %s217 = smul.addr %s216, 8
        %s218 = scalar_lea.vmem [#allocation2], %s217
        %s219 = smul.u32 4, %s19
        %p220 = scmp.lt.s32.totalorder %s219, 7
        %s221 = scalar_select %p220, %s219, 7
        %s222 = smul.addr %s221, 2
        %s223 = scalar_lea.vmem %s0, %s222
        %s224 = smul.u32 4, %s19
        %s225 = smul.u32 4, %s19
        %v226 = vld [vmem:[%s223] ss:$2 sm:$0xf]
        %s227 = scalar_lea.vmem %s223, 1
        %v228 = vld [vmem:[%s227] ss:$2 sm:$0xf]
        %v229 = vld [vmem:[%s1] sm:$0xff]
        %v230 = vld [vmem:[%s1 + $0x8] sm:$0xff]
        %v231 = vld [vmem:[%s1 + $0x10] sm:$0xff]
        %v232 = vld [vmem:[%s1 + $0x18] sm:$0xff]
        %v233 = vld [vmem:[%s1 + $0x20] sm:$0xff]
        %v234 = vld [vmem:[%s1 + $0x28] sm:$0xff]
        %v235 = vld [vmem:[%s1 + $0x30] sm:$0xff]
        %v236 = vld [vmem:[%s1 + $0x38] sm:$0xff]
        %v237 = vld [vmem:[%s1 + $0x40] sm:$0xff]
        %v238 = vld [vmem:[%s1 + $0x48] sm:$0xff]
        %v239 = vld [vmem:[%s1 + $0x50] sm:$0xff]
        %v240 = vld [vmem:[%s1 + $0x58] sm:$0xff]
        %v241 = vld [vmem:[%s1 + $0x60] sm:$0xff]
        %v242 = vld [vmem:[%s1 + $0x68] sm:$0xff]
        %v243 = vld [vmem:[%s1 + $0x70] sm:$0xff]
        %v244 = vld [vmem:[%s1 + $0x78] sm:$0xff]
        %246 = vset.pattern.permute.xlu0 0
        %247 = vperm.xlu0 %246, %v229
        %v248 = vpop.permute.xlu0 %247
        %251 = vset.pattern.permute.xlu0 0
        %252 = vperm.xlu0 %251, %v230
        %v253 = vpop.permute.xlu0 %252
        %256 = vset.pattern.permute.xlu0 0
        %257 = vperm.xlu0 %256, %v231
        %v258 = vpop.permute.xlu0 %257
        %261 = vset.pattern.permute.xlu0 0
        %262 = vperm.xlu0 %261, %v232
        %v263 = vpop.permute.xlu0 %262
        %266 = vset.pattern.permute.xlu0 0
        %267 = vperm.xlu0 %266, %v233
        %v268 = vpop.permute.xlu0 %267
        %271 = vset.pattern.permute.xlu0 0
        %272 = vperm.xlu0 %271, %v234
        %v273 = vpop.permute.xlu0 %272
        %276 = vset.pattern.permute.xlu0 0
        %277 = vperm.xlu0 %276, %v235
        %v278 = vpop.permute.xlu0 %277
        %281 = vset.pattern.permute.xlu0 0
        %282 = vperm.xlu0 %281, %v236
        %v283 = vpop.permute.xlu0 %282
        %286 = vset.pattern.permute.xlu0 0
        %287 = vperm.xlu0 %286, %v237
        %v288 = vpop.permute.xlu0 %287
        %291 = vset.pattern.permute.xlu0 0
        %292 = vperm.xlu0 %291, %v238
        %v293 = vpop.permute.xlu0 %292
        %296 = vset.pattern.permute.xlu0 0
        %297 = vperm.xlu0 %296, %v239
        %v298 = vpop.permute.xlu0 %297
        %301 = vset.pattern.permute.xlu0 0
        %302 = vperm.xlu0 %301, %v240
        %v303 = vpop.permute.xlu0 %302
        %306 = vset.pattern.permute.xlu0 0
        %307 = vperm.xlu0 %306, %v241
        %v308 = vpop.permute.xlu0 %307
        %311 = vset.pattern.permute.xlu0 0
        %312 = vperm.xlu0 %311, %v242
        %v313 = vpop.permute.xlu0 %312
        %316 = vset.pattern.permute.xlu0 0
        %317 = vperm.xlu0 %316, %v243
        %v318 = vpop.permute.xlu0 %317
        %321 = vset.pattern.permute.xlu0 0
        %322 = vperm.xlu0 %321, %v244
        %v323 = vpop.permute.xlu0 %322
        %v326 = vperm.slane %v226, 0
        %v327 = vperm.slane %v226, 1
        %v328 = vperm.slane %v226, 2
        %v329 = vperm.slane %v226, 3
        %v334 = vmul.f32 %v248, %v326
        %v335 = vmul.f32 %v248, %v327
        %v336 = vmul.f32 %v248, %v328
        %v337 = vmul.f32 %v248, %v329
        %v338 = vmul.f32 %v253, %v326
        %v339 = vmul.f32 %v253, %v327
        %v340 = vmul.f32 %v253, %v328
        %v341 = vmul.f32 %v253, %v329
        %v342 = vmul.f32 %v258, %v326
        %v343 = vmul.f32 %v258, %v327
        %v344 = vmul.f32 %v258, %v328
        %v345 = vmul.f32 %v258, %v329
        %v346 = vmul.f32 %v263, %v326
        %v347 = vmul.f32 %v263, %v327
        %v348 = vmul.f32 %v263, %v328
        %v349 = vmul.f32 %v263, %v329
        %v350 = vmul.f32 %v268, %v326
        %v351 = vmul.f32 %v268, %v327
        %v352 = vmul.f32 %v268, %v328
        %v353 = vmul.f32 %v268, %v329
        %v354 = vmul.f32 %v273, %v326
        %v355 = vmul.f32 %v273, %v327
        %v356 = vmul.f32 %v273, %v328
        %v357 = vmul.f32 %v273, %v329
        %v358 = vmul.f32 %v278, %v326
        %v359 = vmul.f32 %v278, %v327
        %v360 = vmul.f32 %v278, %v328
        %v361 = vmul.f32 %v278, %v329
        %v362 = vmul.f32 %v283, %v326
        %v363 = vmul.f32 %v283, %v327
        %v364 = vmul.f32 %v283, %v328
        %v365 = vmul.f32 %v283, %v329
        %v366 = vmul.f32 %v288, %v326
        %v367 = vmul.f32 %v288, %v327
        %v368 = vmul.f32 %v288, %v328
        %v369 = vmul.f32 %v288, %v329
        %v370 = vmul.f32 %v293, %v326
        %v371 = vmul.f32 %v293, %v327
        %v372 = vmul.f32 %v293, %v328
        %v373 = vmul.f32 %v293, %v329
        %v374 = vmul.f32 %v298, %v326
        %v375 = vmul.f32 %v298, %v327
        %v376 = vmul.f32 %v298, %v328
        %v377 = vmul.f32 %v298, %v329
        %v378 = vmul.f32 %v303, %v326
        %v379 = vmul.f32 %v303, %v327
        %v380 = vmul.f32 %v303, %v328
        %v381 = vmul.f32 %v303, %v329
        %v382 = vmul.f32 %v308, %v326
        %v383 = vmul.f32 %v308, %v327
        %v384 = vmul.f32 %v308, %v328
        %v385 = vmul.f32 %v308, %v329
        %v386 = vmul.f32 %v313, %v326
        %v387 = vmul.f32 %v313, %v327
        %v388 = vmul.f32 %v313, %v328
        %v389 = vmul.f32 %v313, %v329
        %v390 = vmul.f32 %v318, %v326
        %v391 = vmul.f32 %v318, %v327
        %v392 = vmul.f32 %v318, %v328
        %v393 = vmul.f32 %v318, %v329
        %v394 = vmul.f32 %v323, %v326
        %v395 = vmul.f32 %v323, %v327
        %v396 = vmul.f32 %v323, %v328
        %v397 = vmul.f32 %v323, %v329
        %v398 = vld [vmem:[%s2] sm:$0xff]
        %v399 = vld [vmem:[%s2 + $0x8] sm:$0xff]
        %v400 = vld [vmem:[%s2 + $0x10] sm:$0xff]
        %v401 = vld [vmem:[%s2 + $0x18] sm:$0xff]
        %v402 = vld [vmem:[%s2 + $0x20] sm:$0xff]
        %v403 = vld [vmem:[%s2 + $0x28] sm:$0xff]
        %v404 = vld [vmem:[%s2 + $0x30] sm:$0xff]
        %v405 = vld [vmem:[%s2 + $0x38] sm:$0xff]
        %v406 = vld [vmem:[%s2 + $0x40] sm:$0xff]
        %v407 = vld [vmem:[%s2 + $0x48] sm:$0xff]
        %v408 = vld [vmem:[%s2 + $0x50] sm:$0xff]
        %v409 = vld [vmem:[%s2 + $0x58] sm:$0xff]
        %v410 = vld [vmem:[%s2 + $0x60] sm:$0xff]
        %v411 = vld [vmem:[%s2 + $0x68] sm:$0xff]
        %v412 = vld [vmem:[%s2 + $0x70] sm:$0xff]
        %v413 = vld [vmem:[%s2 + $0x78] sm:$0xff]
        %415 = vset.pattern.permute.xlu0 0
        %416 = vperm.xlu0 %415, %v398
        %v417 = vpop.permute.xlu0 %416
        %420 = vset.pattern.permute.xlu0 0
        %421 = vperm.xlu0 %420, %v399
        %v422 = vpop.permute.xlu0 %421
        %425 = vset.pattern.permute.xlu0 0
        %426 = vperm.xlu0 %425, %v400
        %v427 = vpop.permute.xlu0 %426
        %430 = vset.pattern.permute.xlu0 0
        %431 = vperm.xlu0 %430, %v401
        %v432 = vpop.permute.xlu0 %431
        %435 = vset.pattern.permute.xlu0 0
        %436 = vperm.xlu0 %435, %v402
        %v437 = vpop.permute.xlu0 %436
        %440 = vset.pattern.permute.xlu0 0
        %441 = vperm.xlu0 %440, %v403
        %v442 = vpop.permute.xlu0 %441
        %445 = vset.pattern.permute.xlu0 0
        %446 = vperm.xlu0 %445, %v404
        %v447 = vpop.permute.xlu0 %446
        %450 = vset.pattern.permute.xlu0 0
        %451 = vperm.xlu0 %450, %v405
        %v452 = vpop.permute.xlu0 %451
        %455 = vset.pattern.permute.xlu0 0
        %456 = vperm.xlu0 %455, %v406
        %v457 = vpop.permute.xlu0 %456
        %460 = vset.pattern.permute.xlu0 0
        %461 = vperm.xlu0 %460, %v407
        %v462 = vpop.permute.xlu0 %461
        %465 = vset.pattern.permute.xlu0 0
        %466 = vperm.xlu0 %465, %v408
        %v467 = vpop.permute.xlu0 %466
        %470 = vset.pattern.permute.xlu0 0
        %471 = vperm.xlu0 %470, %v409
        %v472 = vpop.permute.xlu0 %471
        %475 = vset.pattern.permute.xlu0 0
        %476 = vperm.xlu0 %475, %v410
        %v477 = vpop.permute.xlu0 %476
        %480 = vset.pattern.permute.xlu0 0
        %481 = vperm.xlu0 %480, %v411
        %v482 = vpop.permute.xlu0 %481
        %485 = vset.pattern.permute.xlu0 0
        %486 = vperm.xlu0 %485, %v412
        %v487 = vpop.permute.xlu0 %486
        %490 = vset.pattern.permute.xlu0 0
        %491 = vperm.xlu0 %490, %v413
        %v492 = vpop.permute.xlu0 %491
        %v495 = vperm.slane %v228, 0
        %v496 = vperm.slane %v228, 1
        %v497 = vperm.slane %v228, 2
        %v498 = vperm.slane %v228, 3
        %v503 = vmul.f32 %v417, %v495
        %v504 = vmul.f32 %v417, %v496
        %v505 = vmul.f32 %v417, %v497
        %v506 = vmul.f32 %v417, %v498
        %v507 = vmul.f32 %v422, %v495
        %v508 = vmul.f32 %v422, %v496
        %v509 = vmul.f32 %v422, %v497
        %v510 = vmul.f32 %v422, %v498
        %v511 = vmul.f32 %v427, %v495
        %v512 = vmul.f32 %v427, %v496
        %v513 = vmul.f32 %v427, %v497
        %v514 = vmul.f32 %v427, %v498
        %v515 = vmul.f32 %v432, %v495
        %v516 = vmul.f32 %v432, %v496
        %v517 = vmul.f32 %v432, %v497
        %v518 = vmul.f32 %v432, %v498
        %v519 = vmul.f32 %v437, %v495
        %v520 = vmul.f32 %v437, %v496
        %v521 = vmul.f32 %v437, %v497
        %v522 = vmul.f32 %v437, %v498
        %v523 = vmul.f32 %v442, %v495
        %v524 = vmul.f32 %v442, %v496
        %v525 = vmul.f32 %v442, %v497
        %v526 = vmul.f32 %v442, %v498
        %v527 = vmul.f32 %v447, %v495
        %v528 = vmul.f32 %v447, %v496
        %v529 = vmul.f32 %v447, %v497
        %v530 = vmul.f32 %v447, %v498
        %v531 = vmul.f32 %v452, %v495
        %v532 = vmul.f32 %v452, %v496
        %v533 = vmul.f32 %v452, %v497
        %v534 = vmul.f32 %v452, %v498
        %v535 = vmul.f32 %v457, %v495
        %v536 = vmul.f32 %v457, %v496
        %v537 = vmul.f32 %v457, %v497
        %v538 = vmul.f32 %v457, %v498
        %v539 = vmul.f32 %v462, %v495
        %v540 = vmul.f32 %v462, %v496
        %v541 = vmul.f32 %v462, %v497
        %v542 = vmul.f32 %v462, %v498
        %v543 = vmul.f32 %v467, %v495
        %v544 = vmul.f32 %v467, %v496
        %v545 = vmul.f32 %v467, %v497
        %v546 = vmul.f32 %v467, %v498
        %v547 = vmul.f32 %v472, %v495
        %v548 = vmul.f32 %v472, %v496
        %v549 = vmul.f32 %v472, %v497
        %v550 = vmul.f32 %v472, %v498
        %v551 = vmul.f32 %v477, %v495
        %v552 = vmul.f32 %v477, %v496
        %v553 = vmul.f32 %v477, %v497
        %v554 = vmul.f32 %v477, %v498
        %v555 = vmul.f32 %v482, %v495
        %v556 = vmul.f32 %v482, %v496
        %v557 = vmul.f32 %v482, %v497
        %v558 = vmul.f32 %v482, %v498
        %v559 = vmul.f32 %v487, %v495
        %v560 = vmul.f32 %v487, %v496
        %v561 = vmul.f32 %v487, %v497
        %v562 = vmul.f32 %v487, %v498
        %v563 = vmul.f32 %v492, %v495
        %v564 = vmul.f32 %v492, %v496
        %v565 = vmul.f32 %v492, %v497
        %v566 = vmul.f32 %v492, %v498
        %v567 = vadd.f32 %v334, %v503
        %v568 = vadd.f32 %v335, %v504
        %v569 = vadd.f32 %v336, %v505
        %v570 = vadd.f32 %v337, %v506
        %v571 = vadd.f32 %v338, %v507
        %v572 = vadd.f32 %v339, %v508
        %v573 = vadd.f32 %v340, %v509
        %v574 = vadd.f32 %v341, %v510
        %v575 = vadd.f32 %v342, %v511
        %v576 = vadd.f32 %v343, %v512
        %v577 = vadd.f32 %v344, %v513
        %v578 = vadd.f32 %v345, %v514
        %v579 = vadd.f32 %v346, %v515
        %v580 = vadd.f32 %v347, %v516
        %v581 = vadd.f32 %v348, %v517
        %v582 = vadd.f32 %v349, %v518
        %v583 = vadd.f32 %v350, %v519
        %v584 = vadd.f32 %v351, %v520
        %v585 = vadd.f32 %v352, %v521
        %v586 = vadd.f32 %v353, %v522
        %v587 = vadd.f32 %v354, %v523
        %v588 = vadd.f32 %v355, %v524
        %v589 = vadd.f32 %v356, %v525
        %v590 = vadd.f32 %v357, %v526
        %v591 = vadd.f32 %v358, %v527
        %v592 = vadd.f32 %v359, %v528
        %v593 = vadd.f32 %v360, %v529
        %v594 = vadd.f32 %v361, %v530
        %v595 = vadd.f32 %v362, %v531
        %v596 = vadd.f32 %v363, %v532
        %v597 = vadd.f32 %v364, %v533
        %v598 = vadd.f32 %v365, %v534
        %v599 = vadd.f32 %v366, %v535
        %v600 = vadd.f32 %v367, %v536
        %v601 = vadd.f32 %v368, %v537
        %v602 = vadd.f32 %v369, %v538
        %v603 = vadd.f32 %v370, %v539
        %v604 = vadd.f32 %v371, %v540
        %v605 = vadd.f32 %v372, %v541
        %v606 = vadd.f32 %v373, %v542
        %v607 = vadd.f32 %v374, %v543
        %v608 = vadd.f32 %v375, %v544
        %v609 = vadd.f32 %v376, %v545
        %v610 = vadd.f32 %v377, %v546
        %v611 = vadd.f32 %v378, %v547
        %v612 = vadd.f32 %v379, %v548
        %v613 = vadd.f32 %v380, %v549
        %v614 = vadd.f32 %v381, %v550
        %v615 = vadd.f32 %v382, %v551
        %v616 = vadd.f32 %v383, %v552
        %v617 = vadd.f32 %v384, %v553
        %v618 = vadd.f32 %v385, %v554
        %v619 = vadd.f32 %v386, %v555
        %v620 = vadd.f32 %v387, %v556
        %v621 = vadd.f32 %v388, %v557
        %v622 = vadd.f32 %v389, %v558
        %v623 = vadd.f32 %v390, %v559
        %v624 = vadd.f32 %v391, %v560
        %v625 = vadd.f32 %v392, %v561
        %v626 = vadd.f32 %v393, %v562
        %v627 = vadd.f32 %v394, %v563
        %v628 = vadd.f32 %v395, %v564
        %v629 = vadd.f32 %v396, %v565
        %v630 = vadd.f32 %v397, %v566
        %v631 = vld [vmem:[%s3] sm:$0xff]
        %v632 = vld [vmem:[%s3 + $0x8] sm:$0xff]
        %v633 = vld [vmem:[%s3 + $0x10] sm:$0xff]
        %v634 = vld [vmem:[%s3 + $0x18] sm:$0xff]
        %v635 = vld [vmem:[%s3 + $0x20] sm:$0xff]
        %v636 = vld [vmem:[%s3 + $0x28] sm:$0xff]
        %v637 = vld [vmem:[%s3 + $0x30] sm:$0xff]
        %v638 = vld [vmem:[%s3 + $0x38] sm:$0xff]
        %v639 = vld [vmem:[%s3 + $0x40] sm:$0xff]
        %v640 = vld [vmem:[%s3 + $0x48] sm:$0xff]
        %v641 = vld [vmem:[%s3 + $0x50] sm:$0xff]
        %v642 = vld [vmem:[%s3 + $0x58] sm:$0xff]
        %v643 = vld [vmem:[%s3 + $0x60] sm:$0xff]
        %v644 = vld [vmem:[%s3 + $0x68] sm:$0xff]
        %v645 = vld [vmem:[%s3 + $0x70] sm:$0xff]
        %v646 = vld [vmem:[%s3 + $0x78] sm:$0xff]
        %648 = vset.pattern.permute.xlu0 0
        %649 = vperm.xlu0 %648, %v631
        %v650 = vpop.permute.xlu0 %649
        %653 = vset.pattern.permute.xlu0 0
        %654 = vperm.xlu0 %653, %v632
        %v655 = vpop.permute.xlu0 %654
        %658 = vset.pattern.permute.xlu0 0
        %659 = vperm.xlu0 %658, %v633
        %v660 = vpop.permute.xlu0 %659
        %663 = vset.pattern.permute.xlu0 0
        %664 = vperm.xlu0 %663, %v634
        %v665 = vpop.permute.xlu0 %664
        %668 = vset.pattern.permute.xlu0 0
        %669 = vperm.xlu0 %668, %v635
        %v670 = vpop.permute.xlu0 %669
        %673 = vset.pattern.permute.xlu0 0
        %674 = vperm.xlu0 %673, %v636
        %v675 = vpop.permute.xlu0 %674
        %678 = vset.pattern.permute.xlu0 0
        %679 = vperm.xlu0 %678, %v637
        %v680 = vpop.permute.xlu0 %679
        %683 = vset.pattern.permute.xlu0 0
        %684 = vperm.xlu0 %683, %v638
        %v685 = vpop.permute.xlu0 %684
        %688 = vset.pattern.permute.xlu0 0
        %689 = vperm.xlu0 %688, %v639
        %v690 = vpop.permute.xlu0 %689
        %693 = vset.pattern.permute.xlu0 0
        %694 = vperm.xlu0 %693, %v640
        %v695 = vpop.permute.xlu0 %694
        %698 = vset.pattern.permute.xlu0 0
        %699 = vperm.xlu0 %698, %v641
        %v700 = vpop.permute.xlu0 %699
        %703 = vset.pattern.permute.xlu0 0
        %704 = vperm.xlu0 %703, %v642
        %v705 = vpop.permute.xlu0 %704
        %708 = vset.pattern.permute.xlu0 0
        %709 = vperm.xlu0 %708, %v643
        %v710 = vpop.permute.xlu0 %709
        %713 = vset.pattern.permute.xlu0 0
        %714 = vperm.xlu0 %713, %v644
        %v715 = vpop.permute.xlu0 %714
        %718 = vset.pattern.permute.xlu0 0
        %719 = vperm.xlu0 %718, %v645
        %v720 = vpop.permute.xlu0 %719
        %723 = vset.pattern.permute.xlu0 0
        %724 = vperm.xlu0 %723, %v646
        %v725 = vpop.permute.xlu0 %724
        %v727 = vadd.f32 %v567, %v650
        %v728 = vadd.f32 %v568, %v650
        %v729 = vadd.f32 %v569, %v650
        %v730 = vadd.f32 %v570, %v650
        %v731 = vadd.f32 %v571, %v655
        %v732 = vadd.f32 %v572, %v655
        %v733 = vadd.f32 %v573, %v655
        %v734 = vadd.f32 %v574, %v655
        %v735 = vadd.f32 %v575, %v660
        %v736 = vadd.f32 %v576, %v660
        %v737 = vadd.f32 %v577, %v660
        %v738 = vadd.f32 %v578, %v660
        %v739 = vadd.f32 %v579, %v665
        %v740 = vadd.f32 %v580, %v665
        %v741 = vadd.f32 %v581, %v665
        %v742 = vadd.f32 %v582, %v665
        %v743 = vadd.f32 %v583, %v670
        %v744 = vadd.f32 %v584, %v670
        %v745 = vadd.f32 %v585, %v670
        %v746 = vadd.f32 %v586, %v670
        %v747 = vadd.f32 %v587, %v675
        %v748 = vadd.f32 %v588, %v675
        %v749 = vadd.f32 %v589, %v675
        %v750 = vadd.f32 %v590, %v675
        %v751 = vadd.f32 %v591, %v680
        %v752 = vadd.f32 %v592, %v680
        %v753 = vadd.f32 %v593, %v680
        %v754 = vadd.f32 %v594, %v680
        %v755 = vadd.f32 %v595, %v685
        %v756 = vadd.f32 %v596, %v685
        %v757 = vadd.f32 %v597, %v685
        %v758 = vadd.f32 %v598, %v685
        %v759 = vadd.f32 %v599, %v690
        %v760 = vadd.f32 %v600, %v690
        %v761 = vadd.f32 %v601, %v690
        %v762 = vadd.f32 %v602, %v690
        %v763 = vadd.f32 %v603, %v695
        %v764 = vadd.f32 %v604, %v695
        %v765 = vadd.f32 %v605, %v695
        %v766 = vadd.f32 %v606, %v695
        %v767 = vadd.f32 %v607, %v700
        %v768 = vadd.f32 %v608, %v700
        %v769 = vadd.f32 %v609, %v700
        %v770 = vadd.f32 %v610, %v700
        %v771 = vadd.f32 %v611, %v705
        %v772 = vadd.f32 %v612, %v705
        %v773 = vadd.f32 %v613, %v705
        %v774 = vadd.f32 %v614, %v705
        %v775 = vadd.f32 %v615, %v710
        %v776 = vadd.f32 %v616, %v710
        %v777 = vadd.f32 %v617, %v710
        %v778 = vadd.f32 %v618, %v710
        %v779 = vadd.f32 %v619, %v715
        %v780 = vadd.f32 %v620, %v715
        %v781 = vadd.f32 %v621, %v715
        %v782 = vadd.f32 %v622, %v715
        %v783 = vadd.f32 %v623, %v720
        %v784 = vadd.f32 %v624, %v720
        %v785 = vadd.f32 %v625, %v720
        %v786 = vadd.f32 %v626, %v720
        %v787 = vadd.f32 %v627, %v725
        %v788 = vadd.f32 %v628, %v725
        %v789 = vadd.f32 %v629, %v725
        %v790 = vadd.f32 %v630, %v725
        %v791 = vand.u32 2147483647, %v727
        %vm792 = vcmp.le.f32.partialorder %v791, 0.7853982
        %vm793 = vcmp.lt.s32.totalorder %v727, 0
        %v794 = vand.u32 %v727, 2139095040
        %v795 = vshrl.u32 %v794, 23
        %v796 = vsub.s32 %v795, 127
        %v797 = vand.u32 2147483647, %v727
        %v798 = vand.u32 %v797, 8388607
        %v799 = vor.u32 %v798, 8388608
        %v800 = vsub.s32 0, %v799
        %v801 = vadd.s32 %v796, 1
        %vm802 = vcmp.gt.s32.totalorder %v801, 0
        %v803 = vsel %vm802, %v801, 0
        %v804 = vshrl.u32 %v803, 5
        %v805 = vand.u32 %v803, 31
        %v806 = vsub.s32 32, %v805
        %v807 = vshrl.u32 683565275, %v806
        %v808 = vshll.u32 683565275, %v805
        %v809 = vshrl.u32 2475754826, %v806
        %v810 = vor.u32 %v808, %v809
        %v811 = vshll.u32 2475754826, %v805
        %v812 = vshrl.u32 2131351028, %v806
        %v813 = vor.u32 %v811, %v812
        %v814 = vshll.u32 2131351028, %v805
        %v815 = vshrl.u32 2102212464, %v806
        %v816 = vor.u32 %v814, %v815
        %v817 = vshll.u32 2102212464, %v805
        %v818 = vshrl.u32 920167782, %v806
        %v819 = vor.u32 %v817, %v818
        %v820 = vshll.u32 920167782, %v805
        %v821 = vshrl.u32 1326507024, %v806
        %v822 = vor.u32 %v820, %v821
        %vm823 = vcmp.lt.s32.totalorder %v804, 1
        %vm824 = vcmp.lt.s32.totalorder %v804, 2
        %vm825 = vcmp.lt.s32.totalorder %v804, 3
        %vm826 = vcmp.lt.s32.totalorder %v804, 4
        %v827 = vsel %vm823, %v807, %v810
        %v828 = vsel %vm826, %v816, 2102212464
        %v829 = vsel %vm825, %v813, %v828
        %v830 = vsel %vm824, %v827, %v829
        %v831 = vsel %vm823, %v810, %v813
        %v832 = vsel %vm826, %v819, 920167782
        %v833 = vsel %vm825, %v816, %v832
        %v834 = vsel %vm824, %v831, %v833
        %v835 = vsel %vm823, %v813, %v816
        %v836 = vsel %vm826, %v822, 1326507024
        %v837 = vsel %vm825, %v819, %v836
        %v838 = vsel %vm824, %v835, %v837
        %v839 = vshll.u32 %v799, 8
        %v840 = vand.u32 %v839, 65535
        %v841 = vshrl.u32 %v839, 16
        %v842 = vand.u32 %v838, 65535
        %v843 = vshrl.u32 %v838, 16
        %v844 = vmul.u32 %v840, %v842
        %v845 = vmul.u32 %v840, %v843
        %v846 = vmul.u32 %v841, %v842
        %v847 = vmul.u32 %v841, %v843
        %v848 = vshll.u32 %v845, 16
        %v849 = vshrl.u32 %v845, 16
        %v850 = vshll.u32 %v846, 16
        %v851 = vshrl.u32 %v846, 16
        %vm852 = vc.u32 %v844, %v848
        %v853 = vsel %vm852, 1, 0
        %v854 = vadd.s32 %v844, %v848
        %v855 = vadd.s32 %v847, %v853
        %vm856 = vc.u32 %v854, %v850
        %v857 = vsel %vm856, 1, 0
        %v858 = vadd.s32 %v854, %v850
        %v859 = vadd.s32 %v855, %v857
        %v860 = vadd.s32 %v859, %v849
        %v861 = vadd.s32 %v860, %v851
        %v862 = vand.u32 %v839, 65535
        %v863 = vshrl.u32 %v839, 16
        %v864 = vand.u32 %v834, 65535
        %v865 = vshrl.u32 %v834, 16
        %v866 = vmul.u32 %v862, %v864
        %v867 = vmul.u32 %v862, %v865
        %v868 = vmul.u32 %v863, %v864
        %v869 = vmul.u32 %v863, %v865
        %v870 = vshll.u32 %v867, 16
        %v871 = vshrl.u32 %v867, 16
        %v872 = vshll.u32 %v868, 16
        %v873 = vshrl.u32 %v868, 16
        %vm874 = vc.u32 %v866, %v870
        %v875 = vsel %vm874, 1, 0
        %v876 = vadd.s32 %v866, %v870
        %v877 = vadd.s32 %v869, %v875
        %vm878 = vc.u32 %v876, %v872
        %v879 = vsel %vm878, 1, 0
        %v880 = vadd.s32 %v876, %v872
        %v881 = vadd.s32 %v877, %v879
        %v882 = vadd.s32 %v881, %v871
        %v883 = vadd.s32 %v882, %v873
        %v884 = vmul.u32 %v839, %v830
        %v885 = vadd.s32 %v861, %v880
        %vm886 = vc.u32 %v861, %v880
        %v887 = vadd.s32 %v883, 1
        %v888 = vsel %vm886, %v887, %v883
        %v889 = vadd.s32 %v884, %v888
        %v890 = vadd.s32 %v889, 536870912
        %v891 = vshrl.u32 %v890, 30
        %v892 = vshll.u32 %v891, 30
        %v893 = vsub.s32 %v889, %v892
        %vm894 = vcmp.lt.s32.totalorder %v893, 0
        %v895 = vsub.s32 0, %v893
        %v896 = vsel %vm894, %v895, %v893
        %v897 = vclz %v896
        %v898 = vsub.s32 %v897, 2
        %vm899 = vcmp.gt.s32.totalorder 0, %v898
        %v900 = vsel %vm899, 0, %v898
        %v901 = vsub.s32 32, %v900
        %v902 = vshll.u32 %v893, %v900
        %v903 = vshrl.u32 %v885, %v901
        %v904 = vor.u32 %v902, %v903
        %v905 = vsub.s32 4294967266, %v900
        %v906 = vadd.s32 %v905, 127
        %v907 = vshll.u32 %v906, 23
        %v908 = vor.u32 4788187, %v907
        %v909 = vand.u32 2147483647, %v908
        %v911 = vcvt.s32.f32 %v904
        %v912 = vmul.f32 %v911, %v909
        %v913 = vxor.u32 %v912, 2147483648
        %v914 = vsel %vm793, %v913, %v912
        %v915 = vsub.s32 4, %v891
        %v916 = vsel %vm793, %v915, %v891
        %v917 = vsel %vm792, %v727, %v914
        %v918 = vsel %vm792, 0, %v916
        %v919 = vmul.f32 %v917, %v917
        %v920 = vmul.f32 %v919, -0.001358992
        %v921 = vadd.f32 %v920, 0.041655596
        %v922 = vmul.f32 %v919, %v921
        %v923 = vadd.f32 %v922, -0.4999988
        %v924 = vmul.f32 %v919, %v923
        %v925 = vadd.f32 1.0, %v924
        %v926 = vmul.f32 %v917, %v917
        %v927 = vmul.f32 %v926, -0.00019511016
        %v928 = vadd.f32 %v927, 0.008332121
        %v929 = vmul.f32 %v926, %v928
        %v930 = vadd.f32 %v929, -0.16666654
        %v931 = vmul.f32 %v926, %v930
        %v932 = vadd.f32 %v931, 1.0
        %v933 = vmul.f32 %v932, %v917
        %vm934 = vweird.f32 %v727
        %v935 = vand.u32 %v918, 3
        %vm936 = vcmp.lt.s32.totalorder %v935, 2
        %vm937 = vcmp.eq.s32.totalorder %v935, 0
        %v938 = vxor.u32 %v933, 2147483648
        %v939 = vsel %vm937, %v925, %v938
        %vm940 = vcmp.eq.s32.totalorder %v935, 2
        %v941 = vxor.u32 %v925, 2147483648
        %v942 = vsel %vm940, %v941, %v933
        %v943 = vsel %vm936, %v939, %v942
        %v944 = vsel %vm934, nan, %v943
        %v945 = vand.u32 2147483647, %v728
        %vm946 = vcmp.le.f32.partialorder %v945, 0.7853982
        %vm947 = vcmp.lt.s32.totalorder %v728, 0
        %v948 = vand.u32 %v728, 2139095040
        %v949 = vshrl.u32 %v948, 23
        %v950 = vsub.s32 %v949, 127
        %v951 = vand.u32 2147483647, %v728
        %v952 = vand.u32 %v951, 8388607
        %v953 = vor.u32 %v952, 8388608
        %v954 = vsub.s32 0, %v953
        %v955 = vadd.s32 %v950, 1
        %vm956 = vcmp.gt.s32.totalorder %v955, 0
        %v957 = vsel %vm956, %v955, 0
        %v958 = vshrl.u32 %v957, 5
        %v959 = vand.u32 %v957, 31
        %v960 = vsub.s32 32, %v959
        %v961 = vshrl.u32 683565275, %v960
        %v962 = vshll.u32 683565275, %v959
        %v963 = vshrl.u32 2475754826, %v960
        %v964 = vor.u32 %v962, %v963
        %v965 = vshll.u32 2475754826, %v959
        %v966 = vshrl.u32 2131351028, %v960
        %v967 = vor.u32 %v965, %v966
        %v968 = vshll.u32 2131351028, %v959
        %v969 = vshrl.u32 2102212464, %v960
        %v970 = vor.u32 %v968, %v969
        %v971 = vshll.u32 2102212464, %v959
        %v972 = vshrl.u32 920167782, %v960
        %v973 = vor.u32 %v971, %v972
        %v974 = vshll.u32 920167782, %v959
        %v975 = vshrl.u32 1326507024, %v960
        %v976 = vor.u32 %v974, %v975
        %vm977 = vcmp.lt.s32.totalorder %v958, 1
        %vm978 = vcmp.lt.s32.totalorder %v958, 2
        %vm979 = vcmp.lt.s32.totalorder %v958, 3
        %vm980 = vcmp.lt.s32.totalorder %v958, 4
        %v981 = vsel %vm977, %v961, %v964
        %v982 = vsel %vm980, %v970, 2102212464
        %v983 = vsel %vm979, %v967, %v982
        %v984 = vsel %vm978, %v981, %v983
        %v985 = vsel %vm977, %v964, %v967
        %v986 = vsel %vm980, %v973, 920167782
        %v987 = vsel %vm979, %v970, %v986
        %v988 = vsel %vm978, %v985, %v987
        %v989 = vsel %vm977, %v967, %v970
        %v990 = vsel %vm980, %v976, 1326507024
        %v991 = vsel %vm979, %v973, %v990
        %v992 = vsel %vm978, %v989, %v991
        %v993 = vshll.u32 %v953, 8
        %v994 = vand.u32 %v993, 65535
        %v995 = vshrl.u32 %v993, 16
        %v996 = vand.u32 %v992, 65535
        %v997 = vshrl.u32 %v992, 16
        %v998 = vmul.u32 %v994, %v996
        %v999 = vmul.u32 %v994, %v997
        %v1000 = vmul.u32 %v995, %v996
        %v1001 = vmul.u32 %v995, %v997
        %v1002 = vshll.u32 %v999, 16
        %v1003 = vshrl.u32 %v999, 16
        %v1004 = vshll.u32 %v1000, 16
        %v1005 = vshrl.u32 %v1000, 16
        %vm1006 = vc.u32 %v998, %v1002
        %v1007 = vsel %vm1006, 1, 0
        %v1008 = vadd.s32 %v998, %v1002
        %v1009 = vadd.s32 %v1001, %v1007
        %vm1010 = vc.u32 %v1008, %v1004
        %v1011 = vsel %vm1010, 1, 0
        %v1012 = vadd.s32 %v1008, %v1004
        %v1013 = vadd.s32 %v1009, %v1011
        %v1014 = vadd.s32 %v1013, %v1003
        %v1015 = vadd.s32 %v1014, %v1005
        %v1016 = vand.u32 %v993, 65535
        %v1017 = vshrl.u32 %v993, 16
        %v1018 = vand.u32 %v988, 65535
        %v1019 = vshrl.u32 %v988, 16
        %v1020 = vmul.u32 %v1016, %v1018
        %v1021 = vmul.u32 %v1016, %v1019
        %v1022 = vmul.u32 %v1017, %v1018
        %v1023 = vmul.u32 %v1017, %v1019
        %v1024 = vshll.u32 %v1021, 16
        %v1025 = vshrl.u32 %v1021, 16
        %v1026 = vshll.u32 %v1022, 16
        %v1027 = vshrl.u32 %v1022, 16
        %vm1028 = vc.u32 %v1020, %v1024
        %v1029 = vsel %vm1028, 1, 0
        %v1030 = vadd.s32 %v1020, %v1024
        %v1031 = vadd.s32 %v1023, %v1029
        %vm1032 = vc.u32 %v1030, %v1026
        %v1033 = vsel %vm1032, 1, 0
        %v1034 = vadd.s32 %v1030, %v1026
        %v1035 = vadd.s32 %v1031, %v1033
        %v1036 = vadd.s32 %v1035, %v1025
        %v1037 = vadd.s32 %v1036, %v1027
        %v1038 = vmul.u32 %v993, %v984
        %v1039 = vadd.s32 %v1015, %v1034
        %vm1040 = vc.u32 %v1015, %v1034
        %v1041 = vadd.s32 %v1037, 1
        %v1042 = vsel %vm1040, %v1041, %v1037
        %v1043 = vadd.s32 %v1038, %v1042
        %v1044 = vadd.s32 %v1043, 536870912
        %v1045 = vshrl.u32 %v1044, 30
        %v1046 = vshll.u32 %v1045, 30
        %v1047 = vsub.s32 %v1043, %v1046
        %vm1048 = vcmp.lt.s32.totalorder %v1047, 0
        %v1049 = vsub.s32 0, %v1047
        %v1050 = vsel %vm1048, %v1049, %v1047
        %v1051 = vclz %v1050
        %v1052 = vsub.s32 %v1051, 2
        %vm1053 = vcmp.gt.s32.totalorder 0, %v1052
        %v1054 = vsel %vm1053, 0, %v1052
        %v1055 = vsub.s32 32, %v1054
        %v1056 = vshll.u32 %v1047, %v1054
        %v1057 = vshrl.u32 %v1039, %v1055
        %v1058 = vor.u32 %v1056, %v1057
        %v1059 = vsub.s32 4294967266, %v1054
        %v1060 = vadd.s32 %v1059, 127
        %v1061 = vshll.u32 %v1060, 23
        %v1062 = vor.u32 4788187, %v1061
        %v1063 = vand.u32 2147483647, %v1062
        %v1065 = vcvt.s32.f32 %v1058
        %v1066 = vmul.f32 %v1065, %v1063
        %v1067 = vxor.u32 %v1066, 2147483648
        %v1068 = vsel %vm947, %v1067, %v1066
        %v1069 = vsub.s32 4, %v1045
        %v1070 = vsel %vm947, %v1069, %v1045
        %v1071 = vsel %vm946, %v728, %v1068
        %v1072 = vsel %vm946, 0, %v1070
        %v1073 = vmul.f32 %v1071, %v1071
        %v1074 = vmul.f32 %v1073, -0.001358992
        %v1075 = vadd.f32 %v1074, 0.041655596
        %v1076 = vmul.f32 %v1073, %v1075
        %v1077 = vadd.f32 %v1076, -0.4999988
        %v1078 = vmul.f32 %v1073, %v1077
        %v1079 = vadd.f32 1.0, %v1078
        %v1080 = vmul.f32 %v1071, %v1071
        %v1081 = vmul.f32 %v1080, -0.00019511016
        %v1082 = vadd.f32 %v1081, 0.008332121
        %v1083 = vmul.f32 %v1080, %v1082
        %v1084 = vadd.f32 %v1083, -0.16666654
        %v1085 = vmul.f32 %v1080, %v1084
        %v1086 = vadd.f32 %v1085, 1.0
        %v1087 = vmul.f32 %v1086, %v1071
        %vm1088 = vweird.f32 %v728
        %v1089 = vand.u32 %v1072, 3
        %vm1090 = vcmp.lt.s32.totalorder %v1089, 2
        %vm1091 = vcmp.eq.s32.totalorder %v1089, 0
        %v1092 = vxor.u32 %v1087, 2147483648
        %v1093 = vsel %vm1091, %v1079, %v1092
        %vm1094 = vcmp.eq.s32.totalorder %v1089, 2
        %v1095 = vxor.u32 %v1079, 2147483648
        %v1096 = vsel %vm1094, %v1095, %v1087
        %v1097 = vsel %vm1090, %v1093, %v1096
        %v1098 = vsel %vm1088, nan, %v1097
        %v1099 = vand.u32 2147483647, %v729
        %vm1100 = vcmp.le.f32.partialorder %v1099, 0.7853982
        %vm1101 = vcmp.lt.s32.totalorder %v729, 0
        %v1102 = vand.u32 %v729, 2139095040
        %v1103 = vshrl.u32 %v1102, 23
        %v1104 = vsub.s32 %v1103, 127
        %v1105 = vand.u32 2147483647, %v729
        %v1106 = vand.u32 %v1105, 8388607
        %v1107 = vor.u32 %v1106, 8388608
        %v1108 = vsub.s32 0, %v1107
        %v1109 = vadd.s32 %v1104, 1
        %vm1110 = vcmp.gt.s32.totalorder %v1109, 0
        %v1111 = vsel %vm1110, %v1109, 0
        %v1112 = vshrl.u32 %v1111, 5
        %v1113 = vand.u32 %v1111, 31
        %v1114 = vsub.s32 32, %v1113
        %v1115 = vshrl.u32 683565275, %v1114
        %v1116 = vshll.u32 683565275, %v1113
        %v1117 = vshrl.u32 2475754826, %v1114
        %v1118 = vor.u32 %v1116, %v1117
        %v1119 = vshll.u32 2475754826, %v1113
        %v1120 = vshrl.u32 2131351028, %v1114
        %v1121 = vor.u32 %v1119, %v1120
        %v1122 = vshll.u32 2131351028, %v1113
        %v1123 = vshrl.u32 2102212464, %v1114
        %v1124 = vor.u32 %v1122, %v1123
        %v1125 = vshll.u32 2102212464, %v1113
        %v1126 = vshrl.u32 920167782, %v1114
        %v1127 = vor.u32 %v1125, %v1126
        %v1128 = vshll.u32 920167782, %v1113
        %v1129 = vshrl.u32 1326507024, %v1114
        %v1130 = vor.u32 %v1128, %v1129
        %vm1131 = vcmp.lt.s32.totalorder %v1112, 1
        %vm1132 = vcmp.lt.s32.totalorder %v1112, 2
        %vm1133 = vcmp.lt.s32.totalorder %v1112, 3
        %vm1134 = vcmp.lt.s32.totalorder %v1112, 4
        %v1135 = vsel %vm1131, %v1115, %v1118
        %v1136 = vsel %vm1134, %v1124, 2102212464
        %v1137 = vsel %vm1133, %v1121, %v1136
        %v1138 = vsel %vm1132, %v1135, %v1137
        %v1139 = vsel %vm1131, %v1118, %v1121
        %v1140 = vsel %vm1134, %v1127, 920167782
        %v1141 = vsel %vm1133, %v1124, %v1140
        %v1142 = vsel %vm1132, %v1139, %v1141
        %v1143 = vsel %vm1131, %v1121, %v1124
        %v1144 = vsel %vm1134, %v1130, 1326507024
        %v1145 = vsel %vm1133, %v1127, %v1144
        %v1146 = vsel %vm1132, %v1143, %v1145
        %v1147 = vshll.u32 %v1107, 8
        %v1148 = vand.u32 %v1147, 65535
        %v1149 = vshrl.u32 %v1147, 16
        %v1150 = vand.u32 %v1146, 65535
        %v1151 = vshrl.u32 %v1146, 16
        %v1152 = vmul.u32 %v1148, %v1150
        %v1153 = vmul.u32 %v1148, %v1151
        %v1154 = vmul.u32 %v1149, %v1150
        %v1155 = vmul.u32 %v1149, %v1151
        %v1156 = vshll.u32 %v1153, 16
        %v1157 = vshrl.u32 %v1153, 16
        %v1158 = vshll.u32 %v1154, 16
        %v1159 = vshrl.u32 %v1154, 16
        %vm1160 = vc.u32 %v1152, %v1156
        %v1161 = vsel %vm1160, 1, 0
        %v1162 = vadd.s32 %v1152, %v1156
        %v1163 = vadd.s32 %v1155, %v1161
        %vm1164 = vc.u32 %v1162, %v1158
        %v1165 = vsel %vm1164, 1, 0
        %v1166 = vadd.s32 %v1162, %v1158
        %v1167 = vadd.s32 %v1163, %v1165
        %v1168 = vadd.s32 %v1167, %v1157
        %v1169 = vadd.s32 %v1168, %v1159
        %v1170 = vand.u32 %v1147, 65535
        %v1171 = vshrl.u32 %v1147, 16
        %v1172 = vand.u32 %v1142, 65535
        %v1173 = vshrl.u32 %v1142, 16
        %v1174 = vmul.u32 %v1170, %v1172
        %v1175 = vmul.u32 %v1170, %v1173
        %v1176 = vmul.u32 %v1171, %v1172
        %v1177 = vmul.u32 %v1171, %v1173
        %v1178 = vshll.u32 %v1175, 16
        %v1179 = vshrl.u32 %v1175, 16
        %v1180 = vshll.u32 %v1176, 16
        %v1181 = vshrl.u32 %v1176, 16
        %vm1182 = vc.u32 %v1174, %v1178
        %v1183 = vsel %vm1182, 1, 0
        %v1184 = vadd.s32 %v1174, %v1178
        %v1185 = vadd.s32 %v1177, %v1183
        %vm1186 = vc.u32 %v1184, %v1180
        %v1187 = vsel %vm1186, 1, 0
        %v1188 = vadd.s32 %v1184, %v1180
        %v1189 = vadd.s32 %v1185, %v1187
        %v1190 = vadd.s32 %v1189, %v1179
        %v1191 = vadd.s32 %v1190, %v1181
        %v1192 = vmul.u32 %v1147, %v1138
        %v1193 = vadd.s32 %v1169, %v1188
        %vm1194 = vc.u32 %v1169, %v1188
        %v1195 = vadd.s32 %v1191, 1
        %v1196 = vsel %vm1194, %v1195, %v1191
        %v1197 = vadd.s32 %v1192, %v1196
        %v1198 = vadd.s32 %v1197, 536870912
        %v1199 = vshrl.u32 %v1198, 30
        %v1200 = vshll.u32 %v1199, 30
        %v1201 = vsub.s32 %v1197, %v1200
        %vm1202 = vcmp.lt.s32.totalorder %v1201, 0
        %v1203 = vsub.s32 0, %v1201
        %v1204 = vsel %vm1202, %v1203, %v1201
        %v1205 = vclz %v1204
        %v1206 = vsub.s32 %v1205, 2
        %vm1207 = vcmp.gt.s32.totalorder 0, %v1206
        %v1208 = vsel %vm1207, 0, %v1206
        %v1209 = vsub.s32 32, %v1208
        %v1210 = vshll.u32 %v1201, %v1208
        %v1211 = vshrl.u32 %v1193, %v1209
        %v1212 = vor.u32 %v1210, %v1211
        %v1213 = vsub.s32 4294967266, %v1208
        %v1214 = vadd.s32 %v1213, 127
        %v1215 = vshll.u32 %v1214, 23
        %v1216 = vor.u32 4788187, %v1215
        %v1217 = vand.u32 2147483647, %v1216
        %v1219 = vcvt.s32.f32 %v1212
        %v1220 = vmul.f32 %v1219, %v1217
        %v1221 = vxor.u32 %v1220, 2147483648
        %v1222 = vsel %vm1101, %v1221, %v1220
        %v1223 = vsub.s32 4, %v1199
        %v1224 = vsel %vm1101, %v1223, %v1199
        %v1225 = vsel %vm1100, %v729, %v1222
        %v1226 = vsel %vm1100, 0, %v1224
        %v1227 = vmul.f32 %v1225, %v1225
        %v1228 = vmul.f32 %v1227, -0.001358992
        %v1229 = vadd.f32 %v1228, 0.041655596
        %v1230 = vmul.f32 %v1227, %v1229
        %v1231 = vadd.f32 %v1230, -0.4999988
        %v1232 = vmul.f32 %v1227, %v1231
        %v1233 = vadd.f32 1.0, %v1232
        %v1234 = vmul.f32 %v1225, %v1225
        %v1235 = vmul.f32 %v1234, -0.00019511016
        %v1236 = vadd.f32 %v1235, 0.008332121
        %v1237 = vmul.f32 %v1234, %v1236
        %v1238 = vadd.f32 %v1237, -0.16666654
        %v1239 = vmul.f32 %v1234, %v1238
        %v1240 = vadd.f32 %v1239, 1.0
        %v1241 = vmul.f32 %v1240, %v1225
        %vm1242 = vweird.f32 %v729
        %v1243 = vand.u32 %v1226, 3
        %vm1244 = vcmp.lt.s32.totalorder %v1243, 2
        %vm1245 = vcmp.eq.s32.totalorder %v1243, 0
        %v1246 = vxor.u32 %v1241, 2147483648
        %v1247 = vsel %vm1245, %v1233, %v1246
        %vm1248 = vcmp.eq.s32.totalorder %v1243, 2
        %v1249 = vxor.u32 %v1233, 2147483648
        %v1250 = vsel %vm1248, %v1249, %v1241
        %v1251 = vsel %vm1244, %v1247, %v1250
        %v1252 = vsel %vm1242, nan, %v1251
        %v1253 = vand.u32 2147483647, %v730
        %vm1254 = vcmp.le.f32.partialorder %v1253, 0.7853982
        %vm1255 = vcmp.lt.s32.totalorder %v730, 0
        %v1256 = vand.u32 %v730, 2139095040
        %v1257 = vshrl.u32 %v1256, 23
        %v1258 = vsub.s32 %v1257, 127
        %v1259 = vand.u32 2147483647, %v730
        %v1260 = vand.u32 %v1259, 8388607
        %v1261 = vor.u32 %v1260, 8388608
        %v1262 = vsub.s32 0, %v1261
        %v1263 = vadd.s32 %v1258, 1
        %vm1264 = vcmp.gt.s32.totalorder %v1263, 0
        %v1265 = vsel %vm1264, %v1263, 0
        %v1266 = vshrl.u32 %v1265, 5
        %v1267 = vand.u32 %v1265, 31
        %v1268 = vsub.s32 32, %v1267
        %v1269 = vshrl.u32 683565275, %v1268
        %v1270 = vshll.u32 683565275, %v1267
        %v1271 = vshrl.u32 2475754826, %v1268
        %v1272 = vor.u32 %v1270, %v1271
        %v1273 = vshll.u32 2475754826, %v1267
        %v1274 = vshrl.u32 2131351028, %v1268
        %v1275 = vor.u32 %v1273, %v1274
        %v1276 = vshll.u32 2131351028, %v1267
        %v1277 = vshrl.u32 2102212464, %v1268
        %v1278 = vor.u32 %v1276, %v1277
        %v1279 = vshll.u32 2102212464, %v1267
        %v1280 = vshrl.u32 920167782, %v1268
        %v1281 = vor.u32 %v1279, %v1280
        %v1282 = vshll.u32 920167782, %v1267
        %v1283 = vshrl.u32 1326507024, %v1268
        %v1284 = vor.u32 %v1282, %v1283
        %vm1285 = vcmp.lt.s32.totalorder %v1266, 1
        %vm1286 = vcmp.lt.s32.totalorder %v1266, 2
        %vm1287 = vcmp.lt.s32.totalorder %v1266, 3
        %vm1288 = vcmp.lt.s32.totalorder %v1266, 4
        %v1289 = vsel %vm1285, %v1269, %v1272
        %v1290 = vsel %vm1288, %v1278, 2102212464
        %v1291 = vsel %vm1287, %v1275, %v1290
        %v1292 = vsel %vm1286, %v1289, %v1291
        %v1293 = vsel %vm1285, %v1272, %v1275
        %v1294 = vsel %vm1288, %v1281, 920167782
        %v1295 = vsel %vm1287, %v1278, %v1294
        %v1296 = vsel %vm1286, %v1293, %v1295
        %v1297 = vsel %vm1285, %v1275, %v1278
        %v1298 = vsel %vm1288, %v1284, 1326507024
        %v1299 = vsel %vm1287, %v1281, %v1298
        %v1300 = vsel %vm1286, %v1297, %v1299
        %v1301 = vshll.u32 %v1261, 8
        %v1302 = vand.u32 %v1301, 65535
        %v1303 = vshrl.u32 %v1301, 16
        %v1304 = vand.u32 %v1300, 65535
        %v1305 = vshrl.u32 %v1300, 16
        %v1306 = vmul.u32 %v1302, %v1304
        %v1307 = vmul.u32 %v1302, %v1305
        %v1308 = vmul.u32 %v1303, %v1304
        %v1309 = vmul.u32 %v1303, %v1305
        %v1310 = vshll.u32 %v1307, 16
        %v1311 = vshrl.u32 %v1307, 16
        %v1312 = vshll.u32 %v1308, 16
        %v1313 = vshrl.u32 %v1308, 16
        %vm1314 = vc.u32 %v1306, %v1310
        %v1315 = vsel %vm1314, 1, 0
        %v1316 = vadd.s32 %v1306, %v1310
        %v1317 = vadd.s32 %v1309, %v1315
        %vm1318 = vc.u32 %v1316, %v1312
        %v1319 = vsel %vm1318, 1, 0
        %v1320 = vadd.s32 %v1316, %v1312
        %v1321 = vadd.s32 %v1317, %v1319
        %v1322 = vadd.s32 %v1321, %v1311
        %v1323 = vadd.s32 %v1322, %v1313
        %v1324 = vand.u32 %v1301, 65535
        %v1325 = vshrl.u32 %v1301, 16
        %v1326 = vand.u32 %v1296, 65535
        %v1327 = vshrl.u32 %v1296, 16
        %v1328 = vmul.u32 %v1324, %v1326
        %v1329 = vmul.u32 %v1324, %v1327
        %v1330 = vmul.u32 %v1325, %v1326
        %v1331 = vmul.u32 %v1325, %v1327
        %v1332 = vshll.u32 %v1329, 16
        %v1333 = vshrl.u32 %v1329, 16
        %v1334 = vshll.u32 %v1330, 16
        %v1335 = vshrl.u32 %v1330, 16
        %vm1336 = vc.u32 %v1328, %v1332
        %v1337 = vsel %vm1336, 1, 0
        %v1338 = vadd.s32 %v1328, %v1332
        %v1339 = vadd.s32 %v1331, %v1337
        %vm1340 = vc.u32 %v1338, %v1334
        %v1341 = vsel %vm1340, 1, 0
        %v1342 = vadd.s32 %v1338, %v1334
        %v1343 = vadd.s32 %v1339, %v1341
        %v1344 = vadd.s32 %v1343, %v1333
        %v1345 = vadd.s32 %v1344, %v1335
        %v1346 = vmul.u32 %v1301, %v1292
        %v1347 = vadd.s32 %v1323, %v1342
        %vm1348 = vc.u32 %v1323, %v1342
        %v1349 = vadd.s32 %v1345, 1
        %v1350 = vsel %vm1348, %v1349, %v1345
        %v1351 = vadd.s32 %v1346, %v1350
        %v1352 = vadd.s32 %v1351, 536870912
        %v1353 = vshrl.u32 %v1352, 30
        %v1354 = vshll.u32 %v1353, 30
        %v1355 = vsub.s32 %v1351, %v1354
        %vm1356 = vcmp.lt.s32.totalorder %v1355, 0
        %v1357 = vsub.s32 0, %v1355
        %v1358 = vsel %vm1356, %v1357, %v1355
        %v1359 = vclz %v1358
        %v1360 = vsub.s32 %v1359, 2
        %vm1361 = vcmp.gt.s32.totalorder 0, %v1360
        %v1362 = vsel %vm1361, 0, %v1360
        %v1363 = vsub.s32 32, %v1362
        %v1364 = vshll.u32 %v1355, %v1362
        %v1365 = vshrl.u32 %v1347, %v1363
        %v1366 = vor.u32 %v1364, %v1365
        %v1367 = vsub.s32 4294967266, %v1362
        %v1368 = vadd.s32 %v1367, 127
        %v1369 = vshll.u32 %v1368, 23
        %v1370 = vor.u32 4788187, %v1369
        %v1371 = vand.u32 2147483647, %v1370
        %v1373 = vcvt.s32.f32 %v1366
        %v1374 = vmul.f32 %v1373, %v1371
        %v1375 = vxor.u32 %v1374, 2147483648
        %v1376 = vsel %vm1255, %v1375, %v1374
        %v1377 = vsub.s32 4, %v1353
        %v1378 = vsel %vm1255, %v1377, %v1353
        %v1379 = vsel %vm1254, %v730, %v1376
        %v1380 = vsel %vm1254, 0, %v1378
        %v1381 = vmul.f32 %v1379, %v1379
        %v1382 = vmul.f32 %v1381, -0.001358992
        %v1383 = vadd.f32 %v1382, 0.041655596
        %v1384 = vmul.f32 %v1381, %v1383
        %v1385 = vadd.f32 %v1384, -0.4999988
        %v1386 = vmul.f32 %v1381, %v1385
        %v1387 = vadd.f32 1.0, %v1386
        %v1388 = vmul.f32 %v1379, %v1379
        %v1389 = vmul.f32 %v1388, -0.00019511016
        %v1390 = vadd.f32 %v1389, 0.008332121
        %v1391 = vmul.f32 %v1388, %v1390
        %v1392 = vadd.f32 %v1391, -0.16666654
        %v1393 = vmul.f32 %v1388, %v1392
        %v1394 = vadd.f32 %v1393, 1.0
        %v1395 = vmul.f32 %v1394, %v1379
        %vm1396 = vweird.f32 %v730
        %v1397 = vand.u32 %v1380, 3
        %vm1398 = vcmp.lt.s32.totalorder %v1397, 2
        %vm1399 = vcmp.eq.s32.totalorder %v1397, 0
        %v1400 = vxor.u32 %v1395, 2147483648
        %v1401 = vsel %vm1399, %v1387, %v1400
        %vm1402 = vcmp.eq.s32.totalorder %v1397, 2
        %v1403 = vxor.u32 %v1387, 2147483648
        %v1404 = vsel %vm1402, %v1403, %v1395
        %v1405 = vsel %vm1398, %v1401, %v1404
        %v1406 = vsel %vm1396, nan, %v1405
        %v1407 = vand.u32 2147483647, %v731
        %vm1408 = vcmp.le.f32.partialorder %v1407, 0.7853982
        %vm1409 = vcmp.lt.s32.totalorder %v731, 0
        %v1410 = vand.u32 %v731, 2139095040
        %v1411 = vshrl.u32 %v1410, 23
        %v1412 = vsub.s32 %v1411, 127
        %v1413 = vand.u32 2147483647, %v731
        %v1414 = vand.u32 %v1413, 8388607
        %v1415 = vor.u32 %v1414, 8388608
        %v1416 = vsub.s32 0, %v1415
        %v1417 = vadd.s32 %v1412, 1
        %vm1418 = vcmp.gt.s32.totalorder %v1417, 0
        %v1419 = vsel %vm1418, %v1417, 0
        %v1420 = vshrl.u32 %v1419, 5
        %v1421 = vand.u32 %v1419, 31
        %v1422 = vsub.s32 32, %v1421
        %v1423 = vshrl.u32 683565275, %v1422
        %v1424 = vshll.u32 683565275, %v1421
        %v1425 = vshrl.u32 2475754826, %v1422
        %v1426 = vor.u32 %v1424, %v1425
        %v1427 = vshll.u32 2475754826, %v1421
        %v1428 = vshrl.u32 2131351028, %v1422
        %v1429 = vor.u32 %v1427, %v1428
        %v1430 = vshll.u32 2131351028, %v1421
        %v1431 = vshrl.u32 2102212464, %v1422
        %v1432 = vor.u32 %v1430, %v1431
        %v1433 = vshll.u32 2102212464, %v1421
        %v1434 = vshrl.u32 920167782, %v1422
        %v1435 = vor.u32 %v1433, %v1434
        %v1436 = vshll.u32 920167782, %v1421
        %v1437 = vshrl.u32 1326507024, %v1422
        %v1438 = vor.u32 %v1436, %v1437
        %vm1439 = vcmp.lt.s32.totalorder %v1420, 1
        %vm1440 = vcmp.lt.s32.totalorder %v1420, 2
        %vm1441 = vcmp.lt.s32.totalorder %v1420, 3
        %vm1442 = vcmp.lt.s32.totalorder %v1420, 4
        %v1443 = vsel %vm1439, %v1423, %v1426
        %v1444 = vsel %vm1442, %v1432, 2102212464
        %v1445 = vsel %vm1441, %v1429, %v1444
        %v1446 = vsel %vm1440, %v1443, %v1445
        %v1447 = vsel %vm1439, %v1426, %v1429
        %v1448 = vsel %vm1442, %v1435, 920167782
        %v1449 = vsel %vm1441, %v1432, %v1448
        %v1450 = vsel %vm1440, %v1447, %v1449
        %v1451 = vsel %vm1439, %v1429, %v1432
        %v1452 = vsel %vm1442, %v1438, 1326507024
        %v1453 = vsel %vm1441, %v1435, %v1452
        %v1454 = vsel %vm1440, %v1451, %v1453
        %v1455 = vshll.u32 %v1415, 8
        %v1456 = vand.u32 %v1455, 65535
        %v1457 = vshrl.u32 %v1455, 16
        %v1458 = vand.u32 %v1454, 65535
        %v1459 = vshrl.u32 %v1454, 16
        %v1460 = vmul.u32 %v1456, %v1458
        %v1461 = vmul.u32 %v1456, %v1459
        %v1462 = vmul.u32 %v1457, %v1458
        %v1463 = vmul.u32 %v1457, %v1459
        %v1464 = vshll.u32 %v1461, 16
        %v1465 = vshrl.u32 %v1461, 16
        %v1466 = vshll.u32 %v1462, 16
        %v1467 = vshrl.u32 %v1462, 16
        %vm1468 = vc.u32 %v1460, %v1464
        %v1469 = vsel %vm1468, 1, 0
        %v1470 = vadd.s32 %v1460, %v1464
        %v1471 = vadd.s32 %v1463, %v1469
        %vm1472 = vc.u32 %v1470, %v1466
        %v1473 = vsel %vm1472, 1, 0
        %v1474 = vadd.s32 %v1470, %v1466
        %v1475 = vadd.s32 %v1471, %v1473
        %v1476 = vadd.s32 %v1475, %v1465
        %v1477 = vadd.s32 %v1476, %v1467
        %v1478 = vand.u32 %v1455, 65535
        %v1479 = vshrl.u32 %v1455, 16
        %v1480 = vand.u32 %v1450, 65535
        %v1481 = vshrl.u32 %v1450, 16
        %v1482 = vmul.u32 %v1478, %v1480
        %v1483 = vmul.u32 %v1478, %v1481
        %v1484 = vmul.u32 %v1479, %v1480
        %v1485 = vmul.u32 %v1479, %v1481
        %v1486 = vshll.u32 %v1483, 16
        %v1487 = vshrl.u32 %v1483, 16
        %v1488 = vshll.u32 %v1484, 16
        %v1489 = vshrl.u32 %v1484, 16
        %vm1490 = vc.u32 %v1482, %v1486
        %v1491 = vsel %vm1490, 1, 0
        %v1492 = vadd.s32 %v1482, %v1486
        %v1493 = vadd.s32 %v1485, %v1491
        %vm1494 = vc.u32 %v1492, %v1488
        %v1495 = vsel %vm1494, 1, 0
        %v1496 = vadd.s32 %v1492, %v1488
        %v1497 = vadd.s32 %v1493, %v1495
        %v1498 = vadd.s32 %v1497, %v1487
        %v1499 = vadd.s32 %v1498, %v1489
        %v1500 = vmul.u32 %v1455, %v1446
        %v1501 = vadd.s32 %v1477, %v1496
        %vm1502 = vc.u32 %v1477, %v1496
        %v1503 = vadd.s32 %v1499, 1
        %v1504 = vsel %vm1502, %v1503, %v1499
        %v1505 = vadd.s32 %v1500, %v1504
        %v1506 = vadd.s32 %v1505, 536870912
        %v1507 = vshrl.u32 %v1506, 30
        %v1508 = vshll.u32 %v1507, 30
        %v1509 = vsub.s32 %v1505, %v1508
        %vm1510 = vcmp.lt.s32.totalorder %v1509, 0
        %v1511 = vsub.s32 0, %v1509
        %v1512 = vsel %vm1510, %v1511, %v1509
        %v1513 = vclz %v1512
        %v1514 = vsub.s32 %v1513, 2
        %vm1515 = vcmp.gt.s32.totalorder 0, %v1514
        %v1516 = vsel %vm1515, 0, %v1514
        %v1517 = vsub.s32 32, %v1516
        %v1518 = vshll.u32 %v1509, %v1516
        %v1519 = vshrl.u32 %v1501, %v1517
        %v1520 = vor.u32 %v1518, %v1519
        %v1521 = vsub.s32 4294967266, %v1516
        %v1522 = vadd.s32 %v1521, 127
        %v1523 = vshll.u32 %v1522, 23
        %v1524 = vor.u32 4788187, %v1523
        %v1525 = vand.u32 2147483647, %v1524
        %v1527 = vcvt.s32.f32 %v1520
        %v1528 = vmul.f32 %v1527, %v1525
        %v1529 = vxor.u32 %v1528, 2147483648
        %v1530 = vsel %vm1409, %v1529, %v1528
        %v1531 = vsub.s32 4, %v1507
        %v1532 = vsel %vm1409, %v1531, %v1507
        %v1533 = vsel %vm1408, %v731, %v1530
        %v1534 = vsel %vm1408, 0, %v1532
        %v1535 = vmul.f32 %v1533, %v1533
        %v1536 = vmul.f32 %v1535, -0.001358992
        %v1537 = vadd.f32 %v1536, 0.041655596
        %v1538 = vmul.f32 %v1535, %v1537
        %v1539 = vadd.f32 %v1538, -0.4999988
        %v1540 = vmul.f32 %v1535, %v1539
        %v1541 = vadd.f32 1.0, %v1540
        %v1542 = vmul.f32 %v1533, %v1533
        %v1543 = vmul.f32 %v1542, -0.00019511016
        %v1544 = vadd.f32 %v1543, 0.008332121
        %v1545 = vmul.f32 %v1542, %v1544
        %v1546 = vadd.f32 %v1545, -0.16666654
        %v1547 = vmul.f32 %v1542, %v1546
        %v1548 = vadd.f32 %v1547, 1.0
        %v1549 = vmul.f32 %v1548, %v1533
        %vm1550 = vweird.f32 %v731
        %v1551 = vand.u32 %v1534, 3
        %vm1552 = vcmp.lt.s32.totalorder %v1551, 2
        %vm1553 = vcmp.eq.s32.totalorder %v1551, 0
        %v1554 = vxor.u32 %v1549, 2147483648
        %v1555 = vsel %vm1553, %v1541, %v1554
        %vm1556 = vcmp.eq.s32.totalorder %v1551, 2
        %v1557 = vxor.u32 %v1541, 2147483648
        %v1558 = vsel %vm1556, %v1557, %v1549
        %v1559 = vsel %vm1552, %v1555, %v1558
        %v1560 = vsel %vm1550, nan, %v1559
        %v1561 = vand.u32 2147483647, %v732
        %vm1562 = vcmp.le.f32.partialorder %v1561, 0.7853982
        %vm1563 = vcmp.lt.s32.totalorder %v732, 0
        %v1564 = vand.u32 %v732, 2139095040
        %v1565 = vshrl.u32 %v1564, 23
        %v1566 = vsub.s32 %v1565, 127
        %v1567 = vand.u32 2147483647, %v732
        %v1568 = vand.u32 %v1567, 8388607
        %v1569 = vor.u32 %v1568, 8388608
        %v1570 = vsub.s32 0, %v1569
        %v1571 = vadd.s32 %v1566, 1
        %vm1572 = vcmp.gt.s32.totalorder %v1571, 0
        %v1573 = vsel %vm1572, %v1571, 0
        %v1574 = vshrl.u32 %v1573, 5
        %v1575 = vand.u32 %v1573, 31
        %v1576 = vsub.s32 32, %v1575
        %v1577 = vshrl.u32 683565275, %v1576
        %v1578 = vshll.u32 683565275, %v1575
        %v1579 = vshrl.u32 2475754826, %v1576
        %v1580 = vor.u32 %v1578, %v1579
        %v1581 = vshll.u32 2475754826, %v1575
        %v1582 = vshrl.u32 2131351028, %v1576
        %v1583 = vor.u32 %v1581, %v1582
        %v1584 = vshll.u32 2131351028, %v1575
        %v1585 = vshrl.u32 2102212464, %v1576
        %v1586 = vor.u32 %v1584, %v1585
        %v1587 = vshll.u32 2102212464, %v1575
        %v1588 = vshrl.u32 920167782, %v1576
        %v1589 = vor.u32 %v1587, %v1588
        %v1590 = vshll.u32 920167782, %v1575
        %v1591 = vshrl.u32 1326507024, %v1576
        %v1592 = vor.u32 %v1590, %v1591
        %vm1593 = vcmp.lt.s32.totalorder %v1574, 1
        %vm1594 = vcmp.lt.s32.totalorder %v1574, 2
        %vm1595 = vcmp.lt.s32.totalorder %v1574, 3
        %vm1596 = vcmp.lt.s32.totalorder %v1574, 4
        %v1597 = vsel %vm1593, %v1577, %v1580
        %v1598 = vsel %vm1596, %v1586, 2102212464
        %v1599 = vsel %vm1595, %v1583, %v1598
        %v1600 = vsel %vm1594, %v1597, %v1599
        %v1601 = vsel %vm1593, %v1580, %v1583
        %v1602 = vsel %vm1596, %v1589, 920167782
        %v1603 = vsel %vm1595, %v1586, %v1602
        %v1604 = vsel %vm1594, %v1601, %v1603
        %v1605 = vsel %vm1593, %v1583, %v1586
        %v1606 = vsel %vm1596, %v1592, 1326507024
        %v1607 = vsel %vm1595, %v1589, %v1606
        %v1608 = vsel %vm1594, %v1605, %v1607
        %v1609 = vshll.u32 %v1569, 8
        %v1610 = vand.u32 %v1609, 65535
        %v1611 = vshrl.u32 %v1609, 16
        %v1612 = vand.u32 %v1608, 65535
        %v1613 = vshrl.u32 %v1608, 16
        %v1614 = vmul.u32 %v1610, %v1612
        %v1615 = vmul.u32 %v1610, %v1613
        %v1616 = vmul.u32 %v1611, %v1612
        %v1617 = vmul.u32 %v1611, %v1613
        %v1618 = vshll.u32 %v1615, 16
        %v1619 = vshrl.u32 %v1615, 16
        %v1620 = vshll.u32 %v1616, 16
        %v1621 = vshrl.u32 %v1616, 16
        %vm1622 = vc.u32 %v1614, %v1618
        %v1623 = vsel %vm1622, 1, 0
        %v1624 = vadd.s32 %v1614, %v1618
        %v1625 = vadd.s32 %v1617, %v1623
        %vm1626 = vc.u32 %v1624, %v1620
        %v1627 = vsel %vm1626, 1, 0
        %v1628 = vadd.s32 %v1624, %v1620
        %v1629 = vadd.s32 %v1625, %v1627
        %v1630 = vadd.s32 %v1629, %v1619
        %v1631 = vadd.s32 %v1630, %v1621
        %v1632 = vand.u32 %v1609, 65535
        %v1633 = vshrl.u32 %v1609, 16
        %v1634 = vand.u32 %v1604, 65535
        %v1635 = vshrl.u32 %v1604, 16
        %v1636 = vmul.u32 %v1632, %v1634
        %v1637 = vmul.u32 %v1632, %v1635
        %v1638 = vmul.u32 %v1633, %v1634
        %v1639 = vmul.u32 %v1633, %v1635
        %v1640 = vshll.u32 %v1637, 16
        %v1641 = vshrl.u32 %v1637, 16
        %v1642 = vshll.u32 %v1638, 16
        %v1643 = vshrl.u32 %v1638, 16
        %vm1644 = vc.u32 %v1636, %v1640
        %v1645 = vsel %vm1644, 1, 0
        %v1646 = vadd.s32 %v1636, %v1640
        %v1647 = vadd.s32 %v1639, %v1645
        %vm1648 = vc.u32 %v1646, %v1642
        %v1649 = vsel %vm1648, 1, 0
        %v1650 = vadd.s32 %v1646, %v1642
        %v1651 = vadd.s32 %v1647, %v1649
        %v1652 = vadd.s32 %v1651, %v1641
        %v1653 = vadd.s32 %v1652, %v1643
        %v1654 = vmul.u32 %v1609, %v1600
        %v1655 = vadd.s32 %v1631, %v1650
        %vm1656 = vc.u32 %v1631, %v1650
        %v1657 = vadd.s32 %v1653, 1
        %v1658 = vsel %vm1656, %v1657, %v1653
        %v1659 = vadd.s32 %v1654, %v1658
        %v1660 = vadd.s32 %v1659, 536870912
        %v1661 = vshrl.u32 %v1660, 30
        %v1662 = vshll.u32 %v1661, 30
        %v1663 = vsub.s32 %v1659, %v1662
        %vm1664 = vcmp.lt.s32.totalorder %v1663, 0
        %v1665 = vsub.s32 0, %v1663
        %v1666 = vsel %vm1664, %v1665, %v1663
        %v1667 = vclz %v1666
        %v1668 = vsub.s32 %v1667, 2
        %vm1669 = vcmp.gt.s32.totalorder 0, %v1668
        %v1670 = vsel %vm1669, 0, %v1668
        %v1671 = vsub.s32 32, %v1670
        %v1672 = vshll.u32 %v1663, %v1670
        %v1673 = vshrl.u32 %v1655, %v1671
        %v1674 = vor.u32 %v1672, %v1673
        %v1675 = vsub.s32 4294967266, %v1670
        %v1676 = vadd.s32 %v1675, 127
        %v1677 = vshll.u32 %v1676, 23
        %v1678 = vor.u32 4788187, %v1677
        %v1679 = vand.u32 2147483647, %v1678
        %v1681 = vcvt.s32.f32 %v1674
        %v1682 = vmul.f32 %v1681, %v1679
        %v1683 = vxor.u32 %v1682, 2147483648
        %v1684 = vsel %vm1563, %v1683, %v1682
        %v1685 = vsub.s32 4, %v1661
        %v1686 = vsel %vm1563, %v1685, %v1661
        %v1687 = vsel %vm1562, %v732, %v1684
        %v1688 = vsel %vm1562, 0, %v1686
        %v1689 = vmul.f32 %v1687, %v1687
        %v1690 = vmul.f32 %v1689, -0.001358992
        %v1691 = vadd.f32 %v1690, 0.041655596
        %v1692 = vmul.f32 %v1689, %v1691
        %v1693 = vadd.f32 %v1692, -0.4999988
        %v1694 = vmul.f32 %v1689, %v1693
        %v1695 = vadd.f32 1.0, %v1694
        %v1696 = vmul.f32 %v1687, %v1687
        %v1697 = vmul.f32 %v1696, -0.00019511016
        %v1698 = vadd.f32 %v1697, 0.008332121
        %v1699 = vmul.f32 %v1696, %v1698
        %v1700 = vadd.f32 %v1699, -0.16666654
        %v1701 = vmul.f32 %v1696, %v1700
        %v1702 = vadd.f32 %v1701, 1.0
        %v1703 = vmul.f32 %v1702, %v1687
        %vm1704 = vweird.f32 %v732
        %v1705 = vand.u32 %v1688, 3
        %vm1706 = vcmp.lt.s32.totalorder %v1705, 2
        %vm1707 = vcmp.eq.s32.totalorder %v1705, 0
        %v1708 = vxor.u32 %v1703, 2147483648
        %v1709 = vsel %vm1707, %v1695, %v1708
        %vm1710 = vcmp.eq.s32.totalorder %v1705, 2
        %v1711 = vxor.u32 %v1695, 2147483648
        %v1712 = vsel %vm1710, %v1711, %v1703
        %v1713 = vsel %vm1706, %v1709, %v1712
        %v1714 = vsel %vm1704, nan, %v1713
        %v1715 = vand.u32 2147483647, %v733
        %vm1716 = vcmp.le.f32.partialorder %v1715, 0.7853982
        %vm1717 = vcmp.lt.s32.totalorder %v733, 0
        %v1718 = vand.u32 %v733, 2139095040
        %v1719 = vshrl.u32 %v1718, 23
        %v1720 = vsub.s32 %v1719, 127
        %v1721 = vand.u32 2147483647, %v733
        %v1722 = vand.u32 %v1721, 8388607
        %v1723 = vor.u32 %v1722, 8388608
        %v1724 = vsub.s32 0, %v1723
        %v1725 = vadd.s32 %v1720, 1
        %vm1726 = vcmp.gt.s32.totalorder %v1725, 0
        %v1727 = vsel %vm1726, %v1725, 0
        %v1728 = vshrl.u32 %v1727, 5
        %v1729 = vand.u32 %v1727, 31
        %v1730 = vsub.s32 32, %v1729
        %v1731 = vshrl.u32 683565275, %v1730
        %v1732 = vshll.u32 683565275, %v1729
        %v1733 = vshrl.u32 2475754826, %v1730
        %v1734 = vor.u32 %v1732, %v1733
        %v1735 = vshll.u32 2475754826, %v1729
        %v1736 = vshrl.u32 2131351028, %v1730
        %v1737 = vor.u32 %v1735, %v1736
        %v1738 = vshll.u32 2131351028, %v1729
        %v1739 = vshrl.u32 2102212464, %v1730
        %v1740 = vor.u32 %v1738, %v1739
        %v1741 = vshll.u32 2102212464, %v1729
        %v1742 = vshrl.u32 920167782, %v1730
        %v1743 = vor.u32 %v1741, %v1742
        %v1744 = vshll.u32 920167782, %v1729
        %v1745 = vshrl.u32 1326507024, %v1730
        %v1746 = vor.u32 %v1744, %v1745
        %vm1747 = vcmp.lt.s32.totalorder %v1728, 1
        %vm1748 = vcmp.lt.s32.totalorder %v1728, 2
        %vm1749 = vcmp.lt.s32.totalorder %v1728, 3
        %vm1750 = vcmp.lt.s32.totalorder %v1728, 4
        %v1751 = vsel %vm1747, %v1731, %v1734
        %v1752 = vsel %vm1750, %v1740, 2102212464
        %v1753 = vsel %vm1749, %v1737, %v1752
        %v1754 = vsel %vm1748, %v1751, %v1753
        %v1755 = vsel %vm1747, %v1734, %v1737
        %v1756 = vsel %vm1750, %v1743, 920167782
        %v1757 = vsel %vm1749, %v1740, %v1756
        %v1758 = vsel %vm1748, %v1755, %v1757
        %v1759 = vsel %vm1747, %v1737, %v1740
        %v1760 = vsel %vm1750, %v1746, 1326507024
        %v1761 = vsel %vm1749, %v1743, %v1760
        %v1762 = vsel %vm1748, %v1759, %v1761
        %v1763 = vshll.u32 %v1723, 8
        %v1764 = vand.u32 %v1763, 65535
        %v1765 = vshrl.u32 %v1763, 16
        %v1766 = vand.u32 %v1762, 65535
        %v1767 = vshrl.u32 %v1762, 16
        %v1768 = vmul.u32 %v1764, %v1766
        %v1769 = vmul.u32 %v1764, %v1767
        %v1770 = vmul.u32 %v1765, %v1766
        %v1771 = vmul.u32 %v1765, %v1767
        %v1772 = vshll.u32 %v1769, 16
        %v1773 = vshrl.u32 %v1769, 16
        %v1774 = vshll.u32 %v1770, 16
        %v1775 = vshrl.u32 %v1770, 16
        %vm1776 = vc.u32 %v1768, %v1772
        %v1777 = vsel %vm1776, 1, 0
        %v1778 = vadd.s32 %v1768, %v1772
        %v1779 = vadd.s32 %v1771, %v1777
        %vm1780 = vc.u32 %v1778, %v1774
        %v1781 = vsel %vm1780, 1, 0
        %v1782 = vadd.s32 %v1778, %v1774
        %v1783 = vadd.s32 %v1779, %v1781
        %v1784 = vadd.s32 %v1783, %v1773
        %v1785 = vadd.s32 %v1784, %v1775
        %v1786 = vand.u32 %v1763, 65535
        %v1787 = vshrl.u32 %v1763, 16
        %v1788 = vand.u32 %v1758, 65535
        %v1789 = vshrl.u32 %v1758, 16
        %v1790 = vmul.u32 %v1786, %v1788
        %v1791 = vmul.u32 %v1786, %v1789
        %v1792 = vmul.u32 %v1787, %v1788
        %v1793 = vmul.u32 %v1787, %v1789
        %v1794 = vshll.u32 %v1791, 16
        %v1795 = vshrl.u32 %v1791, 16
        %v1796 = vshll.u32 %v1792, 16
        %v1797 = vshrl.u32 %v1792, 16
        %vm1798 = vc.u32 %v1790, %v1794
        %v1799 = vsel %vm1798, 1, 0
        %v1800 = vadd.s32 %v1790, %v1794
        %v1801 = vadd.s32 %v1793, %v1799
        %vm1802 = vc.u32 %v1800, %v1796
        %v1803 = vsel %vm1802, 1, 0
        %v1804 = vadd.s32 %v1800, %v1796
        %v1805 = vadd.s32 %v1801, %v1803
        %v1806 = vadd.s32 %v1805, %v1795
        %v1807 = vadd.s32 %v1806, %v1797
        %v1808 = vmul.u32 %v1763, %v1754
        %v1809 = vadd.s32 %v1785, %v1804
        %vm1810 = vc.u32 %v1785, %v1804
        %v1811 = vadd.s32 %v1807, 1
        %v1812 = vsel %vm1810, %v1811, %v1807
        %v1813 = vadd.s32 %v1808, %v1812
        %v1814 = vadd.s32 %v1813, 536870912
        %v1815 = vshrl.u32 %v1814, 30
        %v1816 = vshll.u32 %v1815, 30
        %v1817 = vsub.s32 %v1813, %v1816
        %vm1818 = vcmp.lt.s32.totalorder %v1817, 0
        %v1819 = vsub.s32 0, %v1817
        %v1820 = vsel %vm1818, %v1819, %v1817
        %v1821 = vclz %v1820
        %v1822 = vsub.s32 %v1821, 2
        %vm1823 = vcmp.gt.s32.totalorder 0, %v1822
        %v1824 = vsel %vm1823, 0, %v1822
        %v1825 = vsub.s32 32, %v1824
        %v1826 = vshll.u32 %v1817, %v1824
        %v1827 = vshrl.u32 %v1809, %v1825
        %v1828 = vor.u32 %v1826, %v1827
        %v1829 = vsub.s32 4294967266, %v1824
        %v1830 = vadd.s32 %v1829, 127
        %v1831 = vshll.u32 %v1830, 23
        %v1832 = vor.u32 4788187, %v1831
        %v1833 = vand.u32 2147483647, %v1832
        %v1835 = vcvt.s32.f32 %v1828
        %v1836 = vmul.f32 %v1835, %v1833
        %v1837 = vxor.u32 %v1836, 2147483648
        %v1838 = vsel %vm1717, %v1837, %v1836
        %v1839 = vsub.s32 4, %v1815
        %v1840 = vsel %vm1717, %v1839, %v1815
        %v1841 = vsel %vm1716, %v733, %v1838
        %v1842 = vsel %vm1716, 0, %v1840
        %v1843 = vmul.f32 %v1841, %v1841
        %v1844 = vmul.f32 %v1843, -0.001358992
        %v1845 = vadd.f32 %v1844, 0.041655596
        %v1846 = vmul.f32 %v1843, %v1845
        %v1847 = vadd.f32 %v1846, -0.4999988
        %v1848 = vmul.f32 %v1843, %v1847
        %v1849 = vadd.f32 1.0, %v1848
        %v1850 = vmul.f32 %v1841, %v1841
        %v1851 = vmul.f32 %v1850, -0.00019511016
        %v1852 = vadd.f32 %v1851, 0.008332121
        %v1853 = vmul.f32 %v1850, %v1852
        %v1854 = vadd.f32 %v1853, -0.16666654
        %v1855 = vmul.f32 %v1850, %v1854
        %v1856 = vadd.f32 %v1855, 1.0
        %v1857 = vmul.f32 %v1856, %v1841
        %vm1858 = vweird.f32 %v733
        %v1859 = vand.u32 %v1842, 3
        %vm1860 = vcmp.lt.s32.totalorder %v1859, 2
        %vm1861 = vcmp.eq.s32.totalorder %v1859, 0
        %v1862 = vxor.u32 %v1857, 2147483648
        %v1863 = vsel %vm1861, %v1849, %v1862
        %vm1864 = vcmp.eq.s32.totalorder %v1859, 2
        %v1865 = vxor.u32 %v1849, 2147483648
        %v1866 = vsel %vm1864, %v1865, %v1857
        %v1867 = vsel %vm1860, %v1863, %v1866
        %v1868 = vsel %vm1858, nan, %v1867
        %v1869 = vand.u32 2147483647, %v734
        %vm1870 = vcmp.le.f32.partialorder %v1869, 0.7853982
        %vm1871 = vcmp.lt.s32.totalorder %v734, 0
        %v1872 = vand.u32 %v734, 2139095040
        %v1873 = vshrl.u32 %v1872, 23
        %v1874 = vsub.s32 %v1873, 127
        %v1875 = vand.u32 2147483647, %v734
        %v1876 = vand.u32 %v1875, 8388607
        %v1877 = vor.u32 %v1876, 8388608
        %v1878 = vsub.s32 0, %v1877
        %v1879 = vadd.s32 %v1874, 1
        %vm1880 = vcmp.gt.s32.totalorder %v1879, 0
        %v1881 = vsel %vm1880, %v1879, 0
        %v1882 = vshrl.u32 %v1881, 5
        %v1883 = vand.u32 %v1881, 31
        %v1884 = vsub.s32 32, %v1883
        %v1885 = vshrl.u32 683565275, %v1884
        %v1886 = vshll.u32 683565275, %v1883
        %v1887 = vshrl.u32 2475754826, %v1884
        %v1888 = vor.u32 %v1886, %v1887
        %v1889 = vshll.u32 2475754826, %v1883
        %v1890 = vshrl.u32 2131351028, %v1884
        %v1891 = vor.u32 %v1889, %v1890
        %v1892 = vshll.u32 2131351028, %v1883
        %v1893 = vshrl.u32 2102212464, %v1884
        %v1894 = vor.u32 %v1892, %v1893
        %v1895 = vshll.u32 2102212464, %v1883
        %v1896 = vshrl.u32 920167782, %v1884
        %v1897 = vor.u32 %v1895, %v1896
        %v1898 = vshll.u32 920167782, %v1883
        %v1899 = vshrl.u32 1326507024, %v1884
        %v1900 = vor.u32 %v1898, %v1899
        %vm1901 = vcmp.lt.s32.totalorder %v1882, 1
        %vm1902 = vcmp.lt.s32.totalorder %v1882, 2
        %vm1903 = vcmp.lt.s32.totalorder %v1882, 3
        %vm1904 = vcmp.lt.s32.totalorder %v1882, 4
        %v1905 = vsel %vm1901, %v1885, %v1888
        %v1906 = vsel %vm1904, %v1894, 2102212464
        %v1907 = vsel %vm1903, %v1891, %v1906
        %v1908 = vsel %vm1902, %v1905, %v1907
        %v1909 = vsel %vm1901, %v1888, %v1891
        %v1910 = vsel %vm1904, %v1897, 920167782
        %v1911 = vsel %vm1903, %v1894, %v1910
        %v1912 = vsel %vm1902, %v1909, %v1911
        %v1913 = vsel %vm1901, %v1891, %v1894
        %v1914 = vsel %vm1904, %v1900, 1326507024
        %v1915 = vsel %vm1903, %v1897, %v1914
        %v1916 = vsel %vm1902, %v1913, %v1915
        %v1917 = vshll.u32 %v1877, 8
        %v1918 = vand.u32 %v1917, 65535
        %v1919 = vshrl.u32 %v1917, 16
        %v1920 = vand.u32 %v1916, 65535
        %v1921 = vshrl.u32 %v1916, 16
        %v1922 = vmul.u32 %v1918, %v1920
        %v1923 = vmul.u32 %v1918, %v1921
        %v1924 = vmul.u32 %v1919, %v1920
        %v1925 = vmul.u32 %v1919, %v1921
        %v1926 = vshll.u32 %v1923, 16
        %v1927 = vshrl.u32 %v1923, 16
        %v1928 = vshll.u32 %v1924, 16
        %v1929 = vshrl.u32 %v1924, 16
        %vm1930 = vc.u32 %v1922, %v1926
        %v1931 = vsel %vm1930, 1, 0
        %v1932 = vadd.s32 %v1922, %v1926
        %v1933 = vadd.s32 %v1925, %v1931
        %vm1934 = vc.u32 %v1932, %v1928
        %v1935 = vsel %vm1934, 1, 0
        %v1936 = vadd.s32 %v1932, %v1928
        %v1937 = vadd.s32 %v1933, %v1935
        %v1938 = vadd.s32 %v1937, %v1927
        %v1939 = vadd.s32 %v1938, %v1929
        %v1940 = vand.u32 %v1917, 65535
        %v1941 = vshrl.u32 %v1917, 16
        %v1942 = vand.u32 %v1912, 65535
        %v1943 = vshrl.u32 %v1912, 16
        %v1944 = vmul.u32 %v1940, %v1942
        %v1945 = vmul.u32 %v1940, %v1943
        %v1946 = vmul.u32 %v1941, %v1942
        %v1947 = vmul.u32 %v1941, %v1943
        %v1948 = vshll.u32 %v1945, 16
        %v1949 = vshrl.u32 %v1945, 16
        %v1950 = vshll.u32 %v1946, 16
        %v1951 = vshrl.u32 %v1946, 16
        %vm1952 = vc.u32 %v1944, %v1948
        %v1953 = vsel %vm1952, 1, 0
        %v1954 = vadd.s32 %v1944, %v1948
        %v1955 = vadd.s32 %v1947, %v1953
        %vm1956 = vc.u32 %v1954, %v1950
        %v1957 = vsel %vm1956, 1, 0
        %v1958 = vadd.s32 %v1954, %v1950
        %v1959 = vadd.s32 %v1955, %v1957
        %v1960 = vadd.s32 %v1959, %v1949
        %v1961 = vadd.s32 %v1960, %v1951
        %v1962 = vmul.u32 %v1917, %v1908
        %v1963 = vadd.s32 %v1939, %v1958
        %vm1964 = vc.u32 %v1939, %v1958
        %v1965 = vadd.s32 %v1961, 1
        %v1966 = vsel %vm1964, %v1965, %v1961
        %v1967 = vadd.s32 %v1962, %v1966
        %v1968 = vadd.s32 %v1967, 536870912
        %v1969 = vshrl.u32 %v1968, 30
        %v1970 = vshll.u32 %v1969, 30
        %v1971 = vsub.s32 %v1967, %v1970
        %vm1972 = vcmp.lt.s32.totalorder %v1971, 0
        %v1973 = vsub.s32 0, %v1971
        %v1974 = vsel %vm1972, %v1973, %v1971
        %v1975 = vclz %v1974
        %v1976 = vsub.s32 %v1975, 2
        %vm1977 = vcmp.gt.s32.totalorder 0, %v1976
        %v1978 = vsel %vm1977, 0, %v1976
        %v1979 = vsub.s32 32, %v1978
        %v1980 = vshll.u32 %v1971, %v1978
        %v1981 = vshrl.u32 %v1963, %v1979
        %v1982 = vor.u32 %v1980, %v1981
        %v1983 = vsub.s32 4294967266, %v1978
        %v1984 = vadd.s32 %v1983, 127
        %v1985 = vshll.u32 %v1984, 23
        %v1986 = vor.u32 4788187, %v1985
        %v1987 = vand.u32 2147483647, %v1986
        %v1989 = vcvt.s32.f32 %v1982
        %v1990 = vmul.f32 %v1989, %v1987
        %v1991 = vxor.u32 %v1990, 2147483648
        %v1992 = vsel %vm1871, %v1991, %v1990
        %v1993 = vsub.s32 4, %v1969
        %v1994 = vsel %vm1871, %v1993, %v1969
        %v1995 = vsel %vm1870, %v734, %v1992
        %v1996 = vsel %vm1870, 0, %v1994
        %v1997 = vmul.f32 %v1995, %v1995
        %v1998 = vmul.f32 %v1997, -0.001358992
        %v1999 = vadd.f32 %v1998, 0.041655596
        %v2000 = vmul.f32 %v1997, %v1999
        %v2001 = vadd.f32 %v2000, -0.4999988
        %v2002 = vmul.f32 %v1997, %v2001
        %v2003 = vadd.f32 1.0, %v2002
        %v2004 = vmul.f32 %v1995, %v1995
        %v2005 = vmul.f32 %v2004, -0.00019511016
        %v2006 = vadd.f32 %v2005, 0.008332121
        %v2007 = vmul.f32 %v2004, %v2006
        %v2008 = vadd.f32 %v2007, -0.16666654
        %v2009 = vmul.f32 %v2004, %v2008
        %v2010 = vadd.f32 %v2009, 1.0
        %v2011 = vmul.f32 %v2010, %v1995
        %vm2012 = vweird.f32 %v734
        %v2013 = vand.u32 %v1996, 3
        %vm2014 = vcmp.lt.s32.totalorder %v2013, 2
        %vm2015 = vcmp.eq.s32.totalorder %v2013, 0
        %v2016 = vxor.u32 %v2011, 2147483648
        %v2017 = vsel %vm2015, %v2003, %v2016
        %vm2018 = vcmp.eq.s32.totalorder %v2013, 2
        %v2019 = vxor.u32 %v2003, 2147483648
        %v2020 = vsel %vm2018, %v2019, %v2011
        %v2021 = vsel %vm2014, %v2017, %v2020
        %v2022 = vsel %vm2012, nan, %v2021
        %v2023 = vand.u32 2147483647, %v735
        %vm2024 = vcmp.le.f32.partialorder %v2023, 0.7853982
        %vm2025 = vcmp.lt.s32.totalorder %v735, 0
        %v2026 = vand.u32 %v735, 2139095040
        %v2027 = vshrl.u32 %v2026, 23
        %v2028 = vsub.s32 %v2027, 127
        %v2029 = vand.u32 2147483647, %v735
        %v2030 = vand.u32 %v2029, 8388607
        %v2031 = vor.u32 %v2030, 8388608
        %v2032 = vsub.s32 0, %v2031
        %v2033 = vadd.s32 %v2028, 1
        %vm2034 = vcmp.gt.s32.totalorder %v2033, 0
        %v2035 = vsel %vm2034, %v2033, 0
        %v2036 = vshrl.u32 %v2035, 5
        %v2037 = vand.u32 %v2035, 31
        %v2038 = vsub.s32 32, %v2037
        %v2039 = vshrl.u32 683565275, %v2038
        %v2040 = vshll.u32 683565275, %v2037
        %v2041 = vshrl.u32 2475754826, %v2038
        %v2042 = vor.u32 %v2040, %v2041
        %v2043 = vshll.u32 2475754826, %v2037
        %v2044 = vshrl.u32 2131351028, %v2038
        %v2045 = vor.u32 %v2043, %v2044
        %v2046 = vshll.u32 2131351028, %v2037
        %v2047 = vshrl.u32 2102212464, %v2038
        %v2048 = vor.u32 %v2046, %v2047
        %v2049 = vshll.u32 2102212464, %v2037
        %v2050 = vshrl.u32 920167782, %v2038
        %v2051 = vor.u32 %v2049, %v2050
        %v2052 = vshll.u32 920167782, %v2037
        %v2053 = vshrl.u32 1326507024, %v2038
        %v2054 = vor.u32 %v2052, %v2053
        %vm2055 = vcmp.lt.s32.totalorder %v2036, 1
        %vm2056 = vcmp.lt.s32.totalorder %v2036, 2
        %vm2057 = vcmp.lt.s32.totalorder %v2036, 3
        %vm2058 = vcmp.lt.s32.totalorder %v2036, 4
        %v2059 = vsel %vm2055, %v2039, %v2042
        %v2060 = vsel %vm2058, %v2048, 2102212464
        %v2061 = vsel %vm2057, %v2045, %v2060
        %v2062 = vsel %vm2056, %v2059, %v2061
        %v2063 = vsel %vm2055, %v2042, %v2045
        %v2064 = vsel %vm2058, %v2051, 920167782
        %v2065 = vsel %vm2057, %v2048, %v2064
        %v2066 = vsel %vm2056, %v2063, %v2065
        %v2067 = vsel %vm2055, %v2045, %v2048
        %v2068 = vsel %vm2058, %v2054, 1326507024
        %v2069 = vsel %vm2057, %v2051, %v2068
        %v2070 = vsel %vm2056, %v2067, %v2069
        %v2071 = vshll.u32 %v2031, 8
        %v2072 = vand.u32 %v2071, 65535
        %v2073 = vshrl.u32 %v2071, 16
        %v2074 = vand.u32 %v2070, 65535
        %v2075 = vshrl.u32 %v2070, 16
        %v2076 = vmul.u32 %v2072, %v2074
        %v2077 = vmul.u32 %v2072, %v2075
        %v2078 = vmul.u32 %v2073, %v2074
        %v2079 = vmul.u32 %v2073, %v2075
        %v2080 = vshll.u32 %v2077, 16
        %v2081 = vshrl.u32 %v2077, 16
        %v2082 = vshll.u32 %v2078, 16
        %v2083 = vshrl.u32 %v2078, 16
        %vm2084 = vc.u32 %v2076, %v2080
        %v2085 = vsel %vm2084, 1, 0
        %v2086 = vadd.s32 %v2076, %v2080
        %v2087 = vadd.s32 %v2079, %v2085
        %vm2088 = vc.u32 %v2086, %v2082
        %v2089 = vsel %vm2088, 1, 0
        %v2090 = vadd.s32 %v2086, %v2082
        %v2091 = vadd.s32 %v2087, %v2089
        %v2092 = vadd.s32 %v2091, %v2081
        %v2093 = vadd.s32 %v2092, %v2083
        %v2094 = vand.u32 %v2071, 65535
        %v2095 = vshrl.u32 %v2071, 16
        %v2096 = vand.u32 %v2066, 65535
        %v2097 = vshrl.u32 %v2066, 16
        %v2098 = vmul.u32 %v2094, %v2096
        %v2099 = vmul.u32 %v2094, %v2097
        %v2100 = vmul.u32 %v2095, %v2096
        %v2101 = vmul.u32 %v2095, %v2097
        %v2102 = vshll.u32 %v2099, 16
        %v2103 = vshrl.u32 %v2099, 16
        %v2104 = vshll.u32 %v2100, 16
        %v2105 = vshrl.u32 %v2100, 16
        %vm2106 = vc.u32 %v2098, %v2102
        %v2107 = vsel %vm2106, 1, 0
        %v2108 = vadd.s32 %v2098, %v2102
        %v2109 = vadd.s32 %v2101, %v2107
        %vm2110 = vc.u32 %v2108, %v2104
        %v2111 = vsel %vm2110, 1, 0
        %v2112 = vadd.s32 %v2108, %v2104
        %v2113 = vadd.s32 %v2109, %v2111
        %v2114 = vadd.s32 %v2113, %v2103
        %v2115 = vadd.s32 %v2114, %v2105
        %v2116 = vmul.u32 %v2071, %v2062
        %v2117 = vadd.s32 %v2093, %v2112
        %vm2118 = vc.u32 %v2093, %v2112
        %v2119 = vadd.s32 %v2115, 1
        %v2120 = vsel %vm2118, %v2119, %v2115
        %v2121 = vadd.s32 %v2116, %v2120
        %v2122 = vadd.s32 %v2121, 536870912
        %v2123 = vshrl.u32 %v2122, 30
        %v2124 = vshll.u32 %v2123, 30
        %v2125 = vsub.s32 %v2121, %v2124
        %vm2126 = vcmp.lt.s32.totalorder %v2125, 0
        %v2127 = vsub.s32 0, %v2125
        %v2128 = vsel %vm2126, %v2127, %v2125
        %v2129 = vclz %v2128
        %v2130 = vsub.s32 %v2129, 2
        %vm2131 = vcmp.gt.s32.totalorder 0, %v2130
        %v2132 = vsel %vm2131, 0, %v2130
        %v2133 = vsub.s32 32, %v2132
        %v2134 = vshll.u32 %v2125, %v2132
        %v2135 = vshrl.u32 %v2117, %v2133
        %v2136 = vor.u32 %v2134, %v2135
        %v2137 = vsub.s32 4294967266, %v2132
        %v2138 = vadd.s32 %v2137, 127
        %v2139 = vshll.u32 %v2138, 23
        %v2140 = vor.u32 4788187, %v2139
        %v2141 = vand.u32 2147483647, %v2140
        %v2143 = vcvt.s32.f32 %v2136
        %v2144 = vmul.f32 %v2143, %v2141
        %v2145 = vxor.u32 %v2144, 2147483648
        %v2146 = vsel %vm2025, %v2145, %v2144
        %v2147 = vsub.s32 4, %v2123
        %v2148 = vsel %vm2025, %v2147, %v2123
        %v2149 = vsel %vm2024, %v735, %v2146
        %v2150 = vsel %vm2024, 0, %v2148
        %v2151 = vmul.f32 %v2149, %v2149
        %v2152 = vmul.f32 %v2151, -0.001358992
        %v2153 = vadd.f32 %v2152, 0.041655596
        %v2154 = vmul.f32 %v2151, %v2153
        %v2155 = vadd.f32 %v2154, -0.4999988
        %v2156 = vmul.f32 %v2151, %v2155
        %v2157 = vadd.f32 1.0, %v2156
        %v2158 = vmul.f32 %v2149, %v2149
        %v2159 = vmul.f32 %v2158, -0.00019511016
        %v2160 = vadd.f32 %v2159, 0.008332121
        %v2161 = vmul.f32 %v2158, %v2160
        %v2162 = vadd.f32 %v2161, -0.16666654
        %v2163 = vmul.f32 %v2158, %v2162
        %v2164 = vadd.f32 %v2163, 1.0
        %v2165 = vmul.f32 %v2164, %v2149
        %vm2166 = vweird.f32 %v735
        %v2167 = vand.u32 %v2150, 3
        %vm2168 = vcmp.lt.s32.totalorder %v2167, 2
        %vm2169 = vcmp.eq.s32.totalorder %v2167, 0
        %v2170 = vxor.u32 %v2165, 2147483648
        %v2171 = vsel %vm2169, %v2157, %v2170
        %vm2172 = vcmp.eq.s32.totalorder %v2167, 2
        %v2173 = vxor.u32 %v2157, 2147483648
        %v2174 = vsel %vm2172, %v2173, %v2165
        %v2175 = vsel %vm2168, %v2171, %v2174
        %v2176 = vsel %vm2166, nan, %v2175
        %v2177 = vand.u32 2147483647, %v736
        %vm2178 = vcmp.le.f32.partialorder %v2177, 0.7853982
        %vm2179 = vcmp.lt.s32.totalorder %v736, 0
        %v2180 = vand.u32 %v736, 2139095040
        %v2181 = vshrl.u32 %v2180, 23
        %v2182 = vsub.s32 %v2181, 127
        %v2183 = vand.u32 2147483647, %v736
        %v2184 = vand.u32 %v2183, 8388607
        %v2185 = vor.u32 %v2184, 8388608
        %v2186 = vsub.s32 0, %v2185
        %v2187 = vadd.s32 %v2182, 1
        %vm2188 = vcmp.gt.s32.totalorder %v2187, 0
        %v2189 = vsel %vm2188, %v2187, 0
        %v2190 = vshrl.u32 %v2189, 5
        %v2191 = vand.u32 %v2189, 31
        %v2192 = vsub.s32 32, %v2191
        %v2193 = vshrl.u32 683565275, %v2192
        %v2194 = vshll.u32 683565275, %v2191
        %v2195 = vshrl.u32 2475754826, %v2192
        %v2196 = vor.u32 %v2194, %v2195
        %v2197 = vshll.u32 2475754826, %v2191
        %v2198 = vshrl.u32 2131351028, %v2192
        %v2199 = vor.u32 %v2197, %v2198
        %v2200 = vshll.u32 2131351028, %v2191
        %v2201 = vshrl.u32 2102212464, %v2192
        %v2202 = vor.u32 %v2200, %v2201
        %v2203 = vshll.u32 2102212464, %v2191
        %v2204 = vshrl.u32 920167782, %v2192
        %v2205 = vor.u32 %v2203, %v2204
        %v2206 = vshll.u32 920167782, %v2191
        %v2207 = vshrl.u32 1326507024, %v2192
        %v2208 = vor.u32 %v2206, %v2207
        %vm2209 = vcmp.lt.s32.totalorder %v2190, 1
        %vm2210 = vcmp.lt.s32.totalorder %v2190, 2
        %vm2211 = vcmp.lt.s32.totalorder %v2190, 3
        %vm2212 = vcmp.lt.s32.totalorder %v2190, 4
        %v2213 = vsel %vm2209, %v2193, %v2196
        %v2214 = vsel %vm2212, %v2202, 2102212464
        %v2215 = vsel %vm2211, %v2199, %v2214
        %v2216 = vsel %vm2210, %v2213, %v2215
        %v2217 = vsel %vm2209, %v2196, %v2199
        %v2218 = vsel %vm2212, %v2205, 920167782
        %v2219 = vsel %vm2211, %v2202, %v2218
        %v2220 = vsel %vm2210, %v2217, %v2219
        %v2221 = vsel %vm2209, %v2199, %v2202
        %v2222 = vsel %vm2212, %v2208, 1326507024
        %v2223 = vsel %vm2211, %v2205, %v2222
        %v2224 = vsel %vm2210, %v2221, %v2223
        %v2225 = vshll.u32 %v2185, 8
        %v2226 = vand.u32 %v2225, 65535
        %v2227 = vshrl.u32 %v2225, 16
        %v2228 = vand.u32 %v2224, 65535
        %v2229 = vshrl.u32 %v2224, 16
        %v2230 = vmul.u32 %v2226, %v2228
        %v2231 = vmul.u32 %v2226, %v2229
        %v2232 = vmul.u32 %v2227, %v2228
        %v2233 = vmul.u32 %v2227, %v2229
        %v2234 = vshll.u32 %v2231, 16
        %v2235 = vshrl.u32 %v2231, 16
        %v2236 = vshll.u32 %v2232, 16
        %v2237 = vshrl.u32 %v2232, 16
        %vm2238 = vc.u32 %v2230, %v2234
        %v2239 = vsel %vm2238, 1, 0
        %v2240 = vadd.s32 %v2230, %v2234
        %v2241 = vadd.s32 %v2233, %v2239
        %vm2242 = vc.u32 %v2240, %v2236
        %v2243 = vsel %vm2242, 1, 0
        %v2244 = vadd.s32 %v2240, %v2236
        %v2245 = vadd.s32 %v2241, %v2243
        %v2246 = vadd.s32 %v2245, %v2235
        %v2247 = vadd.s32 %v2246, %v2237
        %v2248 = vand.u32 %v2225, 65535
        %v2249 = vshrl.u32 %v2225, 16
        %v2250 = vand.u32 %v2220, 65535
        %v2251 = vshrl.u32 %v2220, 16
        %v2252 = vmul.u32 %v2248, %v2250
        %v2253 = vmul.u32 %v2248, %v2251
        %v2254 = vmul.u32 %v2249, %v2250
        %v2255 = vmul.u32 %v2249, %v2251
        %v2256 = vshll.u32 %v2253, 16
        %v2257 = vshrl.u32 %v2253, 16
        %v2258 = vshll.u32 %v2254, 16
        %v2259 = vshrl.u32 %v2254, 16
        %vm2260 = vc.u32 %v2252, %v2256
        %v2261 = vsel %vm2260, 1, 0
        %v2262 = vadd.s32 %v2252, %v2256
        %v2263 = vadd.s32 %v2255, %v2261
        %vm2264 = vc.u32 %v2262, %v2258
        %v2265 = vsel %vm2264, 1, 0
        %v2266 = vadd.s32 %v2262, %v2258
        %v2267 = vadd.s32 %v2263, %v2265
        %v2268 = vadd.s32 %v2267, %v2257
        %v2269 = vadd.s32 %v2268, %v2259
        %v2270 = vmul.u32 %v2225, %v2216
        %v2271 = vadd.s32 %v2247, %v2266
        %vm2272 = vc.u32 %v2247, %v2266
        %v2273 = vadd.s32 %v2269, 1
        %v2274 = vsel %vm2272, %v2273, %v2269
        %v2275 = vadd.s32 %v2270, %v2274
        %v2276 = vadd.s32 %v2275, 536870912
        %v2277 = vshrl.u32 %v2276, 30
        %v2278 = vshll.u32 %v2277, 30
        %v2279 = vsub.s32 %v2275, %v2278
        %vm2280 = vcmp.lt.s32.totalorder %v2279, 0
        %v2281 = vsub.s32 0, %v2279
        %v2282 = vsel %vm2280, %v2281, %v2279
        %v2283 = vclz %v2282
        %v2284 = vsub.s32 %v2283, 2
        %vm2285 = vcmp.gt.s32.totalorder 0, %v2284
        %v2286 = vsel %vm2285, 0, %v2284
        %v2287 = vsub.s32 32, %v2286
        %v2288 = vshll.u32 %v2279, %v2286
        %v2289 = vshrl.u32 %v2271, %v2287
        %v2290 = vor.u32 %v2288, %v2289
        %v2291 = vsub.s32 4294967266, %v2286
        %v2292 = vadd.s32 %v2291, 127
        %v2293 = vshll.u32 %v2292, 23
        %v2294 = vor.u32 4788187, %v2293
        %v2295 = vand.u32 2147483647, %v2294
        %v2297 = vcvt.s32.f32 %v2290
        %v2298 = vmul.f32 %v2297, %v2295
        %v2299 = vxor.u32 %v2298, 2147483648
        %v2300 = vsel %vm2179, %v2299, %v2298
        %v2301 = vsub.s32 4, %v2277
        %v2302 = vsel %vm2179, %v2301, %v2277
        %v2303 = vsel %vm2178, %v736, %v2300
        %v2304 = vsel %vm2178, 0, %v2302
        %v2305 = vmul.f32 %v2303, %v2303
        %v2306 = vmul.f32 %v2305, -0.001358992
        %v2307 = vadd.f32 %v2306, 0.041655596
        %v2308 = vmul.f32 %v2305, %v2307
        %v2309 = vadd.f32 %v2308, -0.4999988
        %v2310 = vmul.f32 %v2305, %v2309
        %v2311 = vadd.f32 1.0, %v2310
        %v2312 = vmul.f32 %v2303, %v2303
        %v2313 = vmul.f32 %v2312, -0.00019511016
        %v2314 = vadd.f32 %v2313, 0.008332121
        %v2315 = vmul.f32 %v2312, %v2314
        %v2316 = vadd.f32 %v2315, -0.16666654
        %v2317 = vmul.f32 %v2312, %v2316
        %v2318 = vadd.f32 %v2317, 1.0
        %v2319 = vmul.f32 %v2318, %v2303
        %vm2320 = vweird.f32 %v736
        %v2321 = vand.u32 %v2304, 3
        %vm2322 = vcmp.lt.s32.totalorder %v2321, 2
        %vm2323 = vcmp.eq.s32.totalorder %v2321, 0
        %v2324 = vxor.u32 %v2319, 2147483648
        %v2325 = vsel %vm2323, %v2311, %v2324
        %vm2326 = vcmp.eq.s32.totalorder %v2321, 2
        %v2327 = vxor.u32 %v2311, 2147483648
        %v2328 = vsel %vm2326, %v2327, %v2319
        %v2329 = vsel %vm2322, %v2325, %v2328
        %v2330 = vsel %vm2320, nan, %v2329
        %v2331 = vand.u32 2147483647, %v737
        %vm2332 = vcmp.le.f32.partialorder %v2331, 0.7853982
        %vm2333 = vcmp.lt.s32.totalorder %v737, 0
        %v2334 = vand.u32 %v737, 2139095040
        %v2335 = vshrl.u32 %v2334, 23
        %v2336 = vsub.s32 %v2335, 127
        %v2337 = vand.u32 2147483647, %v737
        %v2338 = vand.u32 %v2337, 8388607
        %v2339 = vor.u32 %v2338, 8388608
        %v2340 = vsub.s32 0, %v2339
        %v2341 = vadd.s32 %v2336, 1
        %vm2342 = vcmp.gt.s32.totalorder %v2341, 0
        %v2343 = vsel %vm2342, %v2341, 0
        %v2344 = vshrl.u32 %v2343, 5
        %v2345 = vand.u32 %v2343, 31
        %v2346 = vsub.s32 32, %v2345
        %v2347 = vshrl.u32 683565275, %v2346
        %v2348 = vshll.u32 683565275, %v2345
        %v2349 = vshrl.u32 2475754826, %v2346
        %v2350 = vor.u32 %v2348, %v2349
        %v2351 = vshll.u32 2475754826, %v2345
        %v2352 = vshrl.u32 2131351028, %v2346
        %v2353 = vor.u32 %v2351, %v2352
        %v2354 = vshll.u32 2131351028, %v2345
        %v2355 = vshrl.u32 2102212464, %v2346
        %v2356 = vor.u32 %v2354, %v2355
        %v2357 = vshll.u32 2102212464, %v2345
        %v2358 = vshrl.u32 920167782, %v2346
        %v2359 = vor.u32 %v2357, %v2358
        %v2360 = vshll.u32 920167782, %v2345
        %v2361 = vshrl.u32 1326507024, %v2346
        %v2362 = vor.u32 %v2360, %v2361
        %vm2363 = vcmp.lt.s32.totalorder %v2344, 1
        %vm2364 = vcmp.lt.s32.totalorder %v2344, 2
        %vm2365 = vcmp.lt.s32.totalorder %v2344, 3
        %vm2366 = vcmp.lt.s32.totalorder %v2344, 4
        %v2367 = vsel %vm2363, %v2347, %v2350
        %v2368 = vsel %vm2366, %v2356, 2102212464
        %v2369 = vsel %vm2365, %v2353, %v2368
        %v2370 = vsel %vm2364, %v2367, %v2369
        %v2371 = vsel %vm2363, %v2350, %v2353
        %v2372 = vsel %vm2366, %v2359, 920167782
        %v2373 = vsel %vm2365, %v2356, %v2372
        %v2374 = vsel %vm2364, %v2371, %v2373
        %v2375 = vsel %vm2363, %v2353, %v2356
        %v2376 = vsel %vm2366, %v2362, 1326507024
        %v2377 = vsel %vm2365, %v2359, %v2376
        %v2378 = vsel %vm2364, %v2375, %v2377
        %v2379 = vshll.u32 %v2339, 8
        %v2380 = vand.u32 %v2379, 65535
        %v2381 = vshrl.u32 %v2379, 16
        %v2382 = vand.u32 %v2378, 65535
        %v2383 = vshrl.u32 %v2378, 16
        %v2384 = vmul.u32 %v2380, %v2382
        %v2385 = vmul.u32 %v2380, %v2383
        %v2386 = vmul.u32 %v2381, %v2382
        %v2387 = vmul.u32 %v2381, %v2383
        %v2388 = vshll.u32 %v2385, 16
        %v2389 = vshrl.u32 %v2385, 16
        %v2390 = vshll.u32 %v2386, 16
        %v2391 = vshrl.u32 %v2386, 16
        %vm2392 = vc.u32 %v2384, %v2388
        %v2393 = vsel %vm2392, 1, 0
        %v2394 = vadd.s32 %v2384, %v2388
        %v2395 = vadd.s32 %v2387, %v2393
        %vm2396 = vc.u32 %v2394, %v2390
        %v2397 = vsel %vm2396, 1, 0
        %v2398 = vadd.s32 %v2394, %v2390
        %v2399 = vadd.s32 %v2395, %v2397
        %v2400 = vadd.s32 %v2399, %v2389
        %v2401 = vadd.s32 %v2400, %v2391
        %v2402 = vand.u32 %v2379, 65535
        %v2403 = vshrl.u32 %v2379, 16
        %v2404 = vand.u32 %v2374, 65535
        %v2405 = vshrl.u32 %v2374, 16
        %v2406 = vmul.u32 %v2402, %v2404
        %v2407 = vmul.u32 %v2402, %v2405
        %v2408 = vmul.u32 %v2403, %v2404
        %v2409 = vmul.u32 %v2403, %v2405
        %v2410 = vshll.u32 %v2407, 16
        %v2411 = vshrl.u32 %v2407, 16
        %v2412 = vshll.u32 %v2408, 16
        %v2413 = vshrl.u32 %v2408, 16
        %vm2414 = vc.u32 %v2406, %v2410
        %v2415 = vsel %vm2414, 1, 0
        %v2416 = vadd.s32 %v2406, %v2410
        %v2417 = vadd.s32 %v2409, %v2415
        %vm2418 = vc.u32 %v2416, %v2412
        %v2419 = vsel %vm2418, 1, 0
        %v2420 = vadd.s32 %v2416, %v2412
        %v2421 = vadd.s32 %v2417, %v2419
        %v2422 = vadd.s32 %v2421, %v2411
        %v2423 = vadd.s32 %v2422, %v2413
        %v2424 = vmul.u32 %v2379, %v2370
        %v2425 = vadd.s32 %v2401, %v2420
        %vm2426 = vc.u32 %v2401, %v2420
        %v2427 = vadd.s32 %v2423, 1
        %v2428 = vsel %vm2426, %v2427, %v2423
        %v2429 = vadd.s32 %v2424, %v2428
        %v2430 = vadd.s32 %v2429, 536870912
        %v2431 = vshrl.u32 %v2430, 30
        %v2432 = vshll.u32 %v2431, 30
        %v2433 = vsub.s32 %v2429, %v2432
        %vm2434 = vcmp.lt.s32.totalorder %v2433, 0
        %v2435 = vsub.s32 0, %v2433
        %v2436 = vsel %vm2434, %v2435, %v2433
        %v2437 = vclz %v2436
        %v2438 = vsub.s32 %v2437, 2
        %vm2439 = vcmp.gt.s32.totalorder 0, %v2438
        %v2440 = vsel %vm2439, 0, %v2438
        %v2441 = vsub.s32 32, %v2440
        %v2442 = vshll.u32 %v2433, %v2440
        %v2443 = vshrl.u32 %v2425, %v2441
        %v2444 = vor.u32 %v2442, %v2443
        %v2445 = vsub.s32 4294967266, %v2440
        %v2446 = vadd.s32 %v2445, 127
        %v2447 = vshll.u32 %v2446, 23
        %v2448 = vor.u32 4788187, %v2447
        %v2449 = vand.u32 2147483647, %v2448
        %v2451 = vcvt.s32.f32 %v2444
        %v2452 = vmul.f32 %v2451, %v2449
        %v2453 = vxor.u32 %v2452, 2147483648
        %v2454 = vsel %vm2333, %v2453, %v2452
        %v2455 = vsub.s32 4, %v2431
        %v2456 = vsel %vm2333, %v2455, %v2431
        %v2457 = vsel %vm2332, %v737, %v2454
        %v2458 = vsel %vm2332, 0, %v2456
        %v2459 = vmul.f32 %v2457, %v2457
        %v2460 = vmul.f32 %v2459, -0.001358992
        %v2461 = vadd.f32 %v2460, 0.041655596
        %v2462 = vmul.f32 %v2459, %v2461
        %v2463 = vadd.f32 %v2462, -0.4999988
        %v2464 = vmul.f32 %v2459, %v2463
        %v2465 = vadd.f32 1.0, %v2464
        %v2466 = vmul.f32 %v2457, %v2457
        %v2467 = vmul.f32 %v2466, -0.00019511016
        %v2468 = vadd.f32 %v2467, 0.008332121
        %v2469 = vmul.f32 %v2466, %v2468
        %v2470 = vadd.f32 %v2469, -0.16666654
        %v2471 = vmul.f32 %v2466, %v2470
        %v2472 = vadd.f32 %v2471, 1.0
        %v2473 = vmul.f32 %v2472, %v2457
        %vm2474 = vweird.f32 %v737
        %v2475 = vand.u32 %v2458, 3
        %vm2476 = vcmp.lt.s32.totalorder %v2475, 2
        %vm2477 = vcmp.eq.s32.totalorder %v2475, 0
        %v2478 = vxor.u32 %v2473, 2147483648
        %v2479 = vsel %vm2477, %v2465, %v2478
        %vm2480 = vcmp.eq.s32.totalorder %v2475, 2
        %v2481 = vxor.u32 %v2465, 2147483648
        %v2482 = vsel %vm2480, %v2481, %v2473
        %v2483 = vsel %vm2476, %v2479, %v2482
        %v2484 = vsel %vm2474, nan, %v2483
        %v2485 = vand.u32 2147483647, %v738
        %vm2486 = vcmp.le.f32.partialorder %v2485, 0.7853982
        %vm2487 = vcmp.lt.s32.totalorder %v738, 0
        %v2488 = vand.u32 %v738, 2139095040
        %v2489 = vshrl.u32 %v2488, 23
        %v2490 = vsub.s32 %v2489, 127
        %v2491 = vand.u32 2147483647, %v738
        %v2492 = vand.u32 %v2491, 8388607
        %v2493 = vor.u32 %v2492, 8388608
        %v2494 = vsub.s32 0, %v2493
        %v2495 = vadd.s32 %v2490, 1
        %vm2496 = vcmp.gt.s32.totalorder %v2495, 0
        %v2497 = vsel %vm2496, %v2495, 0
        %v2498 = vshrl.u32 %v2497, 5
        %v2499 = vand.u32 %v2497, 31
        %v2500 = vsub.s32 32, %v2499
        %v2501 = vshrl.u32 683565275, %v2500
        %v2502 = vshll.u32 683565275, %v2499
        %v2503 = vshrl.u32 2475754826, %v2500
        %v2504 = vor.u32 %v2502, %v2503
        %v2505 = vshll.u32 2475754826, %v2499
        %v2506 = vshrl.u32 2131351028, %v2500
        %v2507 = vor.u32 %v2505, %v2506
        %v2508 = vshll.u32 2131351028, %v2499
        %v2509 = vshrl.u32 2102212464, %v2500
        %v2510 = vor.u32 %v2508, %v2509
        %v2511 = vshll.u32 2102212464, %v2499
        %v2512 = vshrl.u32 920167782, %v2500
        %v2513 = vor.u32 %v2511, %v2512
        %v2514 = vshll.u32 920167782, %v2499
        %v2515 = vshrl.u32 1326507024, %v2500
        %v2516 = vor.u32 %v2514, %v2515
        %vm2517 = vcmp.lt.s32.totalorder %v2498, 1
        %vm2518 = vcmp.lt.s32.totalorder %v2498, 2
        %vm2519 = vcmp.lt.s32.totalorder %v2498, 3
        %vm2520 = vcmp.lt.s32.totalorder %v2498, 4
        %v2521 = vsel %vm2517, %v2501, %v2504
        %v2522 = vsel %vm2520, %v2510, 2102212464
        %v2523 = vsel %vm2519, %v2507, %v2522
        %v2524 = vsel %vm2518, %v2521, %v2523
        %v2525 = vsel %vm2517, %v2504, %v2507
        %v2526 = vsel %vm2520, %v2513, 920167782
        %v2527 = vsel %vm2519, %v2510, %v2526
        %v2528 = vsel %vm2518, %v2525, %v2527
        %v2529 = vsel %vm2517, %v2507, %v2510
        %v2530 = vsel %vm2520, %v2516, 1326507024
        %v2531 = vsel %vm2519, %v2513, %v2530
        %v2532 = vsel %vm2518, %v2529, %v2531
        %v2533 = vshll.u32 %v2493, 8
        %v2534 = vand.u32 %v2533, 65535
        %v2535 = vshrl.u32 %v2533, 16
        %v2536 = vand.u32 %v2532, 65535
        %v2537 = vshrl.u32 %v2532, 16
        %v2538 = vmul.u32 %v2534, %v2536
        %v2539 = vmul.u32 %v2534, %v2537
        %v2540 = vmul.u32 %v2535, %v2536
        %v2541 = vmul.u32 %v2535, %v2537
        %v2542 = vshll.u32 %v2539, 16
        %v2543 = vshrl.u32 %v2539, 16
        %v2544 = vshll.u32 %v2540, 16
        %v2545 = vshrl.u32 %v2540, 16
        %vm2546 = vc.u32 %v2538, %v2542
        %v2547 = vsel %vm2546, 1, 0
        %v2548 = vadd.s32 %v2538, %v2542
        %v2549 = vadd.s32 %v2541, %v2547
        %vm2550 = vc.u32 %v2548, %v2544
        %v2551 = vsel %vm2550, 1, 0
        %v2552 = vadd.s32 %v2548, %v2544
        %v2553 = vadd.s32 %v2549, %v2551
        %v2554 = vadd.s32 %v2553, %v2543
        %v2555 = vadd.s32 %v2554, %v2545
        %v2556 = vand.u32 %v2533, 65535
        %v2557 = vshrl.u32 %v2533, 16
        %v2558 = vand.u32 %v2528, 65535
        %v2559 = vshrl.u32 %v2528, 16
        %v2560 = vmul.u32 %v2556, %v2558
        %v2561 = vmul.u32 %v2556, %v2559
        %v2562 = vmul.u32 %v2557, %v2558
        %v2563 = vmul.u32 %v2557, %v2559
        %v2564 = vshll.u32 %v2561, 16
        %v2565 = vshrl.u32 %v2561, 16
        %v2566 = vshll.u32 %v2562, 16
        %v2567 = vshrl.u32 %v2562, 16
        %vm2568 = vc.u32 %v2560, %v2564
        %v2569 = vsel %vm2568, 1, 0
        %v2570 = vadd.s32 %v2560, %v2564
        %v2571 = vadd.s32 %v2563, %v2569
        %vm2572 = vc.u32 %v2570, %v2566
        %v2573 = vsel %vm2572, 1, 0
        %v2574 = vadd.s32 %v2570, %v2566
        %v2575 = vadd.s32 %v2571, %v2573
        %v2576 = vadd.s32 %v2575, %v2565
        %v2577 = vadd.s32 %v2576, %v2567
        %v2578 = vmul.u32 %v2533, %v2524
        %v2579 = vadd.s32 %v2555, %v2574
        %vm2580 = vc.u32 %v2555, %v2574
        %v2581 = vadd.s32 %v2577, 1
        %v2582 = vsel %vm2580, %v2581, %v2577
        %v2583 = vadd.s32 %v2578, %v2582
        %v2584 = vadd.s32 %v2583, 536870912
        %v2585 = vshrl.u32 %v2584, 30
        %v2586 = vshll.u32 %v2585, 30
        %v2587 = vsub.s32 %v2583, %v2586
        %vm2588 = vcmp.lt.s32.totalorder %v2587, 0
        %v2589 = vsub.s32 0, %v2587
        %v2590 = vsel %vm2588, %v2589, %v2587
        %v2591 = vclz %v2590
        %v2592 = vsub.s32 %v2591, 2
        %vm2593 = vcmp.gt.s32.totalorder 0, %v2592
        %v2594 = vsel %vm2593, 0, %v2592
        %v2595 = vsub.s32 32, %v2594
        %v2596 = vshll.u32 %v2587, %v2594
        %v2597 = vshrl.u32 %v2579, %v2595
        %v2598 = vor.u32 %v2596, %v2597
        %v2599 = vsub.s32 4294967266, %v2594
        %v2600 = vadd.s32 %v2599, 127
        %v2601 = vshll.u32 %v2600, 23
        %v2602 = vor.u32 4788187, %v2601
        %v2603 = vand.u32 2147483647, %v2602
        %v2605 = vcvt.s32.f32 %v2598
        %v2606 = vmul.f32 %v2605, %v2603
        %v2607 = vxor.u32 %v2606, 2147483648
        %v2608 = vsel %vm2487, %v2607, %v2606
        %v2609 = vsub.s32 4, %v2585
        %v2610 = vsel %vm2487, %v2609, %v2585
        %v2611 = vsel %vm2486, %v738, %v2608
        %v2612 = vsel %vm2486, 0, %v2610
        %v2613 = vmul.f32 %v2611, %v2611
        %v2614 = vmul.f32 %v2613, -0.001358992
        %v2615 = vadd.f32 %v2614, 0.041655596
        %v2616 = vmul.f32 %v2613, %v2615
        %v2617 = vadd.f32 %v2616, -0.4999988
        %v2618 = vmul.f32 %v2613, %v2617
        %v2619 = vadd.f32 1.0, %v2618
        %v2620 = vmul.f32 %v2611, %v2611
        %v2621 = vmul.f32 %v2620, -0.00019511016
        %v2622 = vadd.f32 %v2621, 0.008332121
        %v2623 = vmul.f32 %v2620, %v2622
        %v2624 = vadd.f32 %v2623, -0.16666654
        %v2625 = vmul.f32 %v2620, %v2624
        %v2626 = vadd.f32 %v2625, 1.0
        %v2627 = vmul.f32 %v2626, %v2611
        %vm2628 = vweird.f32 %v738
        %v2629 = vand.u32 %v2612, 3
        %vm2630 = vcmp.lt.s32.totalorder %v2629, 2
        %vm2631 = vcmp.eq.s32.totalorder %v2629, 0
        %v2632 = vxor.u32 %v2627, 2147483648
        %v2633 = vsel %vm2631, %v2619, %v2632
        %vm2634 = vcmp.eq.s32.totalorder %v2629, 2
        %v2635 = vxor.u32 %v2619, 2147483648
        %v2636 = vsel %vm2634, %v2635, %v2627
        %v2637 = vsel %vm2630, %v2633, %v2636
        %v2638 = vsel %vm2628, nan, %v2637
        %v2639 = vand.u32 2147483647, %v739
        %vm2640 = vcmp.le.f32.partialorder %v2639, 0.7853982
        %vm2641 = vcmp.lt.s32.totalorder %v739, 0
        %v2642 = vand.u32 %v739, 2139095040
        %v2643 = vshrl.u32 %v2642, 23
        %v2644 = vsub.s32 %v2643, 127
        %v2645 = vand.u32 2147483647, %v739
        %v2646 = vand.u32 %v2645, 8388607
        %v2647 = vor.u32 %v2646, 8388608
        %v2648 = vsub.s32 0, %v2647
        %v2649 = vadd.s32 %v2644, 1
        %vm2650 = vcmp.gt.s32.totalorder %v2649, 0
        %v2651 = vsel %vm2650, %v2649, 0
        %v2652 = vshrl.u32 %v2651, 5
        %v2653 = vand.u32 %v2651, 31
        %v2654 = vsub.s32 32, %v2653
        %v2655 = vshrl.u32 683565275, %v2654
        %v2656 = vshll.u32 683565275, %v2653
        %v2657 = vshrl.u32 2475754826, %v2654
        %v2658 = vor.u32 %v2656, %v2657
        %v2659 = vshll.u32 2475754826, %v2653
        %v2660 = vshrl.u32 2131351028, %v2654
        %v2661 = vor.u32 %v2659, %v2660
        %v2662 = vshll.u32 2131351028, %v2653
        %v2663 = vshrl.u32 2102212464, %v2654
        %v2664 = vor.u32 %v2662, %v2663
        %v2665 = vshll.u32 2102212464, %v2653
        %v2666 = vshrl.u32 920167782, %v2654
        %v2667 = vor.u32 %v2665, %v2666
        %v2668 = vshll.u32 920167782, %v2653
        %v2669 = vshrl.u32 1326507024, %v2654
        %v2670 = vor.u32 %v2668, %v2669
        %vm2671 = vcmp.lt.s32.totalorder %v2652, 1
        %vm2672 = vcmp.lt.s32.totalorder %v2652, 2
        %vm2673 = vcmp.lt.s32.totalorder %v2652, 3
        %vm2674 = vcmp.lt.s32.totalorder %v2652, 4
        %v2675 = vsel %vm2671, %v2655, %v2658
        %v2676 = vsel %vm2674, %v2664, 2102212464
        %v2677 = vsel %vm2673, %v2661, %v2676
        %v2678 = vsel %vm2672, %v2675, %v2677
        %v2679 = vsel %vm2671, %v2658, %v2661
        %v2680 = vsel %vm2674, %v2667, 920167782
        %v2681 = vsel %vm2673, %v2664, %v2680
        %v2682 = vsel %vm2672, %v2679, %v2681
        %v2683 = vsel %vm2671, %v2661, %v2664
        %v2684 = vsel %vm2674, %v2670, 1326507024
        %v2685 = vsel %vm2673, %v2667, %v2684
        %v2686 = vsel %vm2672, %v2683, %v2685
        %v2687 = vshll.u32 %v2647, 8
        %v2688 = vand.u32 %v2687, 65535
        %v2689 = vshrl.u32 %v2687, 16
        %v2690 = vand.u32 %v2686, 65535
        %v2691 = vshrl.u32 %v2686, 16
        %v2692 = vmul.u32 %v2688, %v2690
        %v2693 = vmul.u32 %v2688, %v2691
        %v2694 = vmul.u32 %v2689, %v2690
        %v2695 = vmul.u32 %v2689, %v2691
        %v2696 = vshll.u32 %v2693, 16
        %v2697 = vshrl.u32 %v2693, 16
        %v2698 = vshll.u32 %v2694, 16
        %v2699 = vshrl.u32 %v2694, 16
        %vm2700 = vc.u32 %v2692, %v2696
        %v2701 = vsel %vm2700, 1, 0
        %v2702 = vadd.s32 %v2692, %v2696
        %v2703 = vadd.s32 %v2695, %v2701
        %vm2704 = vc.u32 %v2702, %v2698
        %v2705 = vsel %vm2704, 1, 0
        %v2706 = vadd.s32 %v2702, %v2698
        %v2707 = vadd.s32 %v2703, %v2705
        %v2708 = vadd.s32 %v2707, %v2697
        %v2709 = vadd.s32 %v2708, %v2699
        %v2710 = vand.u32 %v2687, 65535
        %v2711 = vshrl.u32 %v2687, 16
        %v2712 = vand.u32 %v2682, 65535
        %v2713 = vshrl.u32 %v2682, 16
        %v2714 = vmul.u32 %v2710, %v2712
        %v2715 = vmul.u32 %v2710, %v2713
        %v2716 = vmul.u32 %v2711, %v2712
        %v2717 = vmul.u32 %v2711, %v2713
        %v2718 = vshll.u32 %v2715, 16
        %v2719 = vshrl.u32 %v2715, 16
        %v2720 = vshll.u32 %v2716, 16
        %v2721 = vshrl.u32 %v2716, 16
        %vm2722 = vc.u32 %v2714, %v2718
        %v2723 = vsel %vm2722, 1, 0
        %v2724 = vadd.s32 %v2714, %v2718
        %v2725 = vadd.s32 %v2717, %v2723
        %vm2726 = vc.u32 %v2724, %v2720
        %v2727 = vsel %vm2726, 1, 0
        %v2728 = vadd.s32 %v2724, %v2720
        %v2729 = vadd.s32 %v2725, %v2727
        %v2730 = vadd.s32 %v2729, %v2719
        %v2731 = vadd.s32 %v2730, %v2721
        %v2732 = vmul.u32 %v2687, %v2678
        %v2733 = vadd.s32 %v2709, %v2728
        %vm2734 = vc.u32 %v2709, %v2728
        %v2735 = vadd.s32 %v2731, 1
        %v2736 = vsel %vm2734, %v2735, %v2731
        %v2737 = vadd.s32 %v2732, %v2736
        %v2738 = vadd.s32 %v2737, 536870912
        %v2739 = vshrl.u32 %v2738, 30
        %v2740 = vshll.u32 %v2739, 30
        %v2741 = vsub.s32 %v2737, %v2740
        %vm2742 = vcmp.lt.s32.totalorder %v2741, 0
        %v2743 = vsub.s32 0, %v2741
        %v2744 = vsel %vm2742, %v2743, %v2741
        %v2745 = vclz %v2744
        %v2746 = vsub.s32 %v2745, 2
        %vm2747 = vcmp.gt.s32.totalorder 0, %v2746
        %v2748 = vsel %vm2747, 0, %v2746
        %v2749 = vsub.s32 32, %v2748
        %v2750 = vshll.u32 %v2741, %v2748
        %v2751 = vshrl.u32 %v2733, %v2749
        %v2752 = vor.u32 %v2750, %v2751
        %v2753 = vsub.s32 4294967266, %v2748
        %v2754 = vadd.s32 %v2753, 127
        %v2755 = vshll.u32 %v2754, 23
        %v2756 = vor.u32 4788187, %v2755
        %v2757 = vand.u32 2147483647, %v2756
        %v2759 = vcvt.s32.f32 %v2752
        %v2760 = vmul.f32 %v2759, %v2757
        %v2761 = vxor.u32 %v2760, 2147483648
        %v2762 = vsel %vm2641, %v2761, %v2760
        %v2763 = vsub.s32 4, %v2739
        %v2764 = vsel %vm2641, %v2763, %v2739
        %v2765 = vsel %vm2640, %v739, %v2762
        %v2766 = vsel %vm2640, 0, %v2764
        %v2767 = vmul.f32 %v2765, %v2765
        %v2768 = vmul.f32 %v2767, -0.001358992
        %v2769 = vadd.f32 %v2768, 0.041655596
        %v2770 = vmul.f32 %v2767, %v2769
        %v2771 = vadd.f32 %v2770, -0.4999988
        %v2772 = vmul.f32 %v2767, %v2771
        %v2773 = vadd.f32 1.0, %v2772
        %v2774 = vmul.f32 %v2765, %v2765
        %v2775 = vmul.f32 %v2774, -0.00019511016
        %v2776 = vadd.f32 %v2775, 0.008332121
        %v2777 = vmul.f32 %v2774, %v2776
        %v2778 = vadd.f32 %v2777, -0.16666654
        %v2779 = vmul.f32 %v2774, %v2778
        %v2780 = vadd.f32 %v2779, 1.0
        %v2781 = vmul.f32 %v2780, %v2765
        %vm2782 = vweird.f32 %v739
        %v2783 = vand.u32 %v2766, 3
        %vm2784 = vcmp.lt.s32.totalorder %v2783, 2
        %vm2785 = vcmp.eq.s32.totalorder %v2783, 0
        %v2786 = vxor.u32 %v2781, 2147483648
        %v2787 = vsel %vm2785, %v2773, %v2786
        %vm2788 = vcmp.eq.s32.totalorder %v2783, 2
        %v2789 = vxor.u32 %v2773, 2147483648
        %v2790 = vsel %vm2788, %v2789, %v2781
        %v2791 = vsel %vm2784, %v2787, %v2790
        %v2792 = vsel %vm2782, nan, %v2791
        %v2793 = vand.u32 2147483647, %v740
        %vm2794 = vcmp.le.f32.partialorder %v2793, 0.7853982
        %vm2795 = vcmp.lt.s32.totalorder %v740, 0
        %v2796 = vand.u32 %v740, 2139095040
        %v2797 = vshrl.u32 %v2796, 23
        %v2798 = vsub.s32 %v2797, 127
        %v2799 = vand.u32 2147483647, %v740
        %v2800 = vand.u32 %v2799, 8388607
        %v2801 = vor.u32 %v2800, 8388608
        %v2802 = vsub.s32 0, %v2801
        %v2803 = vadd.s32 %v2798, 1
        %vm2804 = vcmp.gt.s32.totalorder %v2803, 0
        %v2805 = vsel %vm2804, %v2803, 0
        %v2806 = vshrl.u32 %v2805, 5
        %v2807 = vand.u32 %v2805, 31
        %v2808 = vsub.s32 32, %v2807
        %v2809 = vshrl.u32 683565275, %v2808
        %v2810 = vshll.u32 683565275, %v2807
        %v2811 = vshrl.u32 2475754826, %v2808
        %v2812 = vor.u32 %v2810, %v2811
        %v2813 = vshll.u32 2475754826, %v2807
        %v2814 = vshrl.u32 2131351028, %v2808
        %v2815 = vor.u32 %v2813, %v2814
        %v2816 = vshll.u32 2131351028, %v2807
        %v2817 = vshrl.u32 2102212464, %v2808
        %v2818 = vor.u32 %v2816, %v2817
        %v2819 = vshll.u32 2102212464, %v2807
        %v2820 = vshrl.u32 920167782, %v2808
        %v2821 = vor.u32 %v2819, %v2820
        %v2822 = vshll.u32 920167782, %v2807
        %v2823 = vshrl.u32 1326507024, %v2808
        %v2824 = vor.u32 %v2822, %v2823
        %vm2825 = vcmp.lt.s32.totalorder %v2806, 1
        %vm2826 = vcmp.lt.s32.totalorder %v2806, 2
        %vm2827 = vcmp.lt.s32.totalorder %v2806, 3
        %vm2828 = vcmp.lt.s32.totalorder %v2806, 4
        %v2829 = vsel %vm2825, %v2809, %v2812
        %v2830 = vsel %vm2828, %v2818, 2102212464
        %v2831 = vsel %vm2827, %v2815, %v2830
        %v2832 = vsel %vm2826, %v2829, %v2831
        %v2833 = vsel %vm2825, %v2812, %v2815
        %v2834 = vsel %vm2828, %v2821, 920167782
        %v2835 = vsel %vm2827, %v2818, %v2834
        %v2836 = vsel %vm2826, %v2833, %v2835
        %v2837 = vsel %vm2825, %v2815, %v2818
        %v2838 = vsel %vm2828, %v2824, 1326507024
        %v2839 = vsel %vm2827, %v2821, %v2838
        %v2840 = vsel %vm2826, %v2837, %v2839
        %v2841 = vshll.u32 %v2801, 8
        %v2842 = vand.u32 %v2841, 65535
        %v2843 = vshrl.u32 %v2841, 16
        %v2844 = vand.u32 %v2840, 65535
        %v2845 = vshrl.u32 %v2840, 16
        %v2846 = vmul.u32 %v2842, %v2844
        %v2847 = vmul.u32 %v2842, %v2845
        %v2848 = vmul.u32 %v2843, %v2844
        %v2849 = vmul.u32 %v2843, %v2845
        %v2850 = vshll.u32 %v2847, 16
        %v2851 = vshrl.u32 %v2847, 16
        %v2852 = vshll.u32 %v2848, 16
        %v2853 = vshrl.u32 %v2848, 16
        %vm2854 = vc.u32 %v2846, %v2850
        %v2855 = vsel %vm2854, 1, 0
        %v2856 = vadd.s32 %v2846, %v2850
        %v2857 = vadd.s32 %v2849, %v2855
        %vm2858 = vc.u32 %v2856, %v2852
        %v2859 = vsel %vm2858, 1, 0
        %v2860 = vadd.s32 %v2856, %v2852
        %v2861 = vadd.s32 %v2857, %v2859
        %v2862 = vadd.s32 %v2861, %v2851
        %v2863 = vadd.s32 %v2862, %v2853
        %v2864 = vand.u32 %v2841, 65535
        %v2865 = vshrl.u32 %v2841, 16
        %v2866 = vand.u32 %v2836, 65535
        %v2867 = vshrl.u32 %v2836, 16
        %v2868 = vmul.u32 %v2864, %v2866
        %v2869 = vmul.u32 %v2864, %v2867
        %v2870 = vmul.u32 %v2865, %v2866
        %v2871 = vmul.u32 %v2865, %v2867
        %v2872 = vshll.u32 %v2869, 16
        %v2873 = vshrl.u32 %v2869, 16
        %v2874 = vshll.u32 %v2870, 16
        %v2875 = vshrl.u32 %v2870, 16
        %vm2876 = vc.u32 %v2868, %v2872
        %v2877 = vsel %vm2876, 1, 0
        %v2878 = vadd.s32 %v2868, %v2872
        %v2879 = vadd.s32 %v2871, %v2877
        %vm2880 = vc.u32 %v2878, %v2874
        %v2881 = vsel %vm2880, 1, 0
        %v2882 = vadd.s32 %v2878, %v2874
        %v2883 = vadd.s32 %v2879, %v2881
        %v2884 = vadd.s32 %v2883, %v2873
        %v2885 = vadd.s32 %v2884, %v2875
        %v2886 = vmul.u32 %v2841, %v2832
        %v2887 = vadd.s32 %v2863, %v2882
        %vm2888 = vc.u32 %v2863, %v2882
        %v2889 = vadd.s32 %v2885, 1
        %v2890 = vsel %vm2888, %v2889, %v2885
        %v2891 = vadd.s32 %v2886, %v2890
        %v2892 = vadd.s32 %v2891, 536870912
        %v2893 = vshrl.u32 %v2892, 30
        %v2894 = vshll.u32 %v2893, 30
        %v2895 = vsub.s32 %v2891, %v2894
        %vm2896 = vcmp.lt.s32.totalorder %v2895, 0
        %v2897 = vsub.s32 0, %v2895
        %v2898 = vsel %vm2896, %v2897, %v2895
        %v2899 = vclz %v2898
        %v2900 = vsub.s32 %v2899, 2
        %vm2901 = vcmp.gt.s32.totalorder 0, %v2900
        %v2902 = vsel %vm2901, 0, %v2900
        %v2903 = vsub.s32 32, %v2902
        %v2904 = vshll.u32 %v2895, %v2902
        %v2905 = vshrl.u32 %v2887, %v2903
        %v2906 = vor.u32 %v2904, %v2905
        %v2907 = vsub.s32 4294967266, %v2902
        %v2908 = vadd.s32 %v2907, 127
        %v2909 = vshll.u32 %v2908, 23
        %v2910 = vor.u32 4788187, %v2909
        %v2911 = vand.u32 2147483647, %v2910
        %v2913 = vcvt.s32.f32 %v2906
        %v2914 = vmul.f32 %v2913, %v2911
        %v2915 = vxor.u32 %v2914, 2147483648
        %v2916 = vsel %vm2795, %v2915, %v2914
        %v2917 = vsub.s32 4, %v2893
        %v2918 = vsel %vm2795, %v2917, %v2893
        %v2919 = vsel %vm2794, %v740, %v2916
        %v2920 = vsel %vm2794, 0, %v2918
        %v2921 = vmul.f32 %v2919, %v2919
        %v2922 = vmul.f32 %v2921, -0.001358992
        %v2923 = vadd.f32 %v2922, 0.041655596
        %v2924 = vmul.f32 %v2921, %v2923
        %v2925 = vadd.f32 %v2924, -0.4999988
        %v2926 = vmul.f32 %v2921, %v2925
        %v2927 = vadd.f32 1.0, %v2926
        %v2928 = vmul.f32 %v2919, %v2919
        %v2929 = vmul.f32 %v2928, -0.00019511016
        %v2930 = vadd.f32 %v2929, 0.008332121
        %v2931 = vmul.f32 %v2928, %v2930
        %v2932 = vadd.f32 %v2931, -0.16666654
        %v2933 = vmul.f32 %v2928, %v2932
        %v2934 = vadd.f32 %v2933, 1.0
        %v2935 = vmul.f32 %v2934, %v2919
        %vm2936 = vweird.f32 %v740
        %v2937 = vand.u32 %v2920, 3
        %vm2938 = vcmp.lt.s32.totalorder %v2937, 2
        %vm2939 = vcmp.eq.s32.totalorder %v2937, 0
        %v2940 = vxor.u32 %v2935, 2147483648
        %v2941 = vsel %vm2939, %v2927, %v2940
        %vm2942 = vcmp.eq.s32.totalorder %v2937, 2
        %v2943 = vxor.u32 %v2927, 2147483648
        %v2944 = vsel %vm2942, %v2943, %v2935
        %v2945 = vsel %vm2938, %v2941, %v2944
        %v2946 = vsel %vm2936, nan, %v2945
        %v2947 = vand.u32 2147483647, %v741
        %vm2948 = vcmp.le.f32.partialorder %v2947, 0.7853982
        %vm2949 = vcmp.lt.s32.totalorder %v741, 0
        %v2950 = vand.u32 %v741, 2139095040
        %v2951 = vshrl.u32 %v2950, 23
        %v2952 = vsub.s32 %v2951, 127
        %v2953 = vand.u32 2147483647, %v741
        %v2954 = vand.u32 %v2953, 8388607
        %v2955 = vor.u32 %v2954, 8388608
        %v2956 = vsub.s32 0, %v2955
        %v2957 = vadd.s32 %v2952, 1
        %vm2958 = vcmp.gt.s32.totalorder %v2957, 0
        %v2959 = vsel %vm2958, %v2957, 0
        %v2960 = vshrl.u32 %v2959, 5
        %v2961 = vand.u32 %v2959, 31
        %v2962 = vsub.s32 32, %v2961
        %v2963 = vshrl.u32 683565275, %v2962
        %v2964 = vshll.u32 683565275, %v2961
        %v2965 = vshrl.u32 2475754826, %v2962
        %v2966 = vor.u32 %v2964, %v2965
        %v2967 = vshll.u32 2475754826, %v2961
        %v2968 = vshrl.u32 2131351028, %v2962
        %v2969 = vor.u32 %v2967, %v2968
        %v2970 = vshll.u32 2131351028, %v2961
        %v2971 = vshrl.u32 2102212464, %v2962
        %v2972 = vor.u32 %v2970, %v2971
        %v2973 = vshll.u32 2102212464, %v2961
        %v2974 = vshrl.u32 920167782, %v2962
        %v2975 = vor.u32 %v2973, %v2974
        %v2976 = vshll.u32 920167782, %v2961
        %v2977 = vshrl.u32 1326507024, %v2962
        %v2978 = vor.u32 %v2976, %v2977
        %vm2979 = vcmp.lt.s32.totalorder %v2960, 1
        %vm2980 = vcmp.lt.s32.totalorder %v2960, 2
        %vm2981 = vcmp.lt.s32.totalorder %v2960, 3
        %vm2982 = vcmp.lt.s32.totalorder %v2960, 4
        %v2983 = vsel %vm2979, %v2963, %v2966
        %v2984 = vsel %vm2982, %v2972, 2102212464
        %v2985 = vsel %vm2981, %v2969, %v2984
        %v2986 = vsel %vm2980, %v2983, %v2985
        %v2987 = vsel %vm2979, %v2966, %v2969
        %v2988 = vsel %vm2982, %v2975, 920167782
        %v2989 = vsel %vm2981, %v2972, %v2988
        %v2990 = vsel %vm2980, %v2987, %v2989
        %v2991 = vsel %vm2979, %v2969, %v2972
        %v2992 = vsel %vm2982, %v2978, 1326507024
        %v2993 = vsel %vm2981, %v2975, %v2992
        %v2994 = vsel %vm2980, %v2991, %v2993
        %v2995 = vshll.u32 %v2955, 8
        %v2996 = vand.u32 %v2995, 65535
        %v2997 = vshrl.u32 %v2995, 16
        %v2998 = vand.u32 %v2994, 65535
        %v2999 = vshrl.u32 %v2994, 16
        %v3000 = vmul.u32 %v2996, %v2998
        %v3001 = vmul.u32 %v2996, %v2999
        %v3002 = vmul.u32 %v2997, %v2998
        %v3003 = vmul.u32 %v2997, %v2999
        %v3004 = vshll.u32 %v3001, 16
        %v3005 = vshrl.u32 %v3001, 16
        %v3006 = vshll.u32 %v3002, 16
        %v3007 = vshrl.u32 %v3002, 16
        %vm3008 = vc.u32 %v3000, %v3004
        %v3009 = vsel %vm3008, 1, 0
        %v3010 = vadd.s32 %v3000, %v3004
        %v3011 = vadd.s32 %v3003, %v3009
        %vm3012 = vc.u32 %v3010, %v3006
        %v3013 = vsel %vm3012, 1, 0
        %v3014 = vadd.s32 %v3010, %v3006
        %v3015 = vadd.s32 %v3011, %v3013
        %v3016 = vadd.s32 %v3015, %v3005
        %v3017 = vadd.s32 %v3016, %v3007
        %v3018 = vand.u32 %v2995, 65535
        %v3019 = vshrl.u32 %v2995, 16
        %v3020 = vand.u32 %v2990, 65535
        %v3021 = vshrl.u32 %v2990, 16
        %v3022 = vmul.u32 %v3018, %v3020
        %v3023 = vmul.u32 %v3018, %v3021
        %v3024 = vmul.u32 %v3019, %v3020
        %v3025 = vmul.u32 %v3019, %v3021
        %v3026 = vshll.u32 %v3023, 16
        %v3027 = vshrl.u32 %v3023, 16
        %v3028 = vshll.u32 %v3024, 16
        %v3029 = vshrl.u32 %v3024, 16
        %vm3030 = vc.u32 %v3022, %v3026
        %v3031 = vsel %vm3030, 1, 0
        %v3032 = vadd.s32 %v3022, %v3026
        %v3033 = vadd.s32 %v3025, %v3031
        %vm3034 = vc.u32 %v3032, %v3028
        %v3035 = vsel %vm3034, 1, 0
        %v3036 = vadd.s32 %v3032, %v3028
        %v3037 = vadd.s32 %v3033, %v3035
        %v3038 = vadd.s32 %v3037, %v3027
        %v3039 = vadd.s32 %v3038, %v3029
        %v3040 = vmul.u32 %v2995, %v2986
        %v3041 = vadd.s32 %v3017, %v3036
        %vm3042 = vc.u32 %v3017, %v3036
        %v3043 = vadd.s32 %v3039, 1
        %v3044 = vsel %vm3042, %v3043, %v3039
        %v3045 = vadd.s32 %v3040, %v3044
        %v3046 = vadd.s32 %v3045, 536870912
        %v3047 = vshrl.u32 %v3046, 30
        %v3048 = vshll.u32 %v3047, 30
        %v3049 = vsub.s32 %v3045, %v3048
        %vm3050 = vcmp.lt.s32.totalorder %v3049, 0
        %v3051 = vsub.s32 0, %v3049
        %v3052 = vsel %vm3050, %v3051, %v3049
        %v3053 = vclz %v3052
        %v3054 = vsub.s32 %v3053, 2
        %vm3055 = vcmp.gt.s32.totalorder 0, %v3054
        %v3056 = vsel %vm3055, 0, %v3054
        %v3057 = vsub.s32 32, %v3056
        %v3058 = vshll.u32 %v3049, %v3056
        %v3059 = vshrl.u32 %v3041, %v3057
        %v3060 = vor.u32 %v3058, %v3059
        %v3061 = vsub.s32 4294967266, %v3056
        %v3062 = vadd.s32 %v3061, 127
        %v3063 = vshll.u32 %v3062, 23
        %v3064 = vor.u32 4788187, %v3063
        %v3065 = vand.u32 2147483647, %v3064
        %v3067 = vcvt.s32.f32 %v3060
        %v3068 = vmul.f32 %v3067, %v3065
        %v3069 = vxor.u32 %v3068, 2147483648
        %v3070 = vsel %vm2949, %v3069, %v3068
        %v3071 = vsub.s32 4, %v3047
        %v3072 = vsel %vm2949, %v3071, %v3047
        %v3073 = vsel %vm2948, %v741, %v3070
        %v3074 = vsel %vm2948, 0, %v3072
        %v3075 = vmul.f32 %v3073, %v3073
        %v3076 = vmul.f32 %v3075, -0.001358992
        %v3077 = vadd.f32 %v3076, 0.041655596
        %v3078 = vmul.f32 %v3075, %v3077
        %v3079 = vadd.f32 %v3078, -0.4999988
        %v3080 = vmul.f32 %v3075, %v3079
        %v3081 = vadd.f32 1.0, %v3080
        %v3082 = vmul.f32 %v3073, %v3073
        %v3083 = vmul.f32 %v3082, -0.00019511016
        %v3084 = vadd.f32 %v3083, 0.008332121
        %v3085 = vmul.f32 %v3082, %v3084
        %v3086 = vadd.f32 %v3085, -0.16666654
        %v3087 = vmul.f32 %v3082, %v3086
        %v3088 = vadd.f32 %v3087, 1.0
        %v3089 = vmul.f32 %v3088, %v3073
        %vm3090 = vweird.f32 %v741
        %v3091 = vand.u32 %v3074, 3
        %vm3092 = vcmp.lt.s32.totalorder %v3091, 2
        %vm3093 = vcmp.eq.s32.totalorder %v3091, 0
        %v3094 = vxor.u32 %v3089, 2147483648
        %v3095 = vsel %vm3093, %v3081, %v3094
        %vm3096 = vcmp.eq.s32.totalorder %v3091, 2
        %v3097 = vxor.u32 %v3081, 2147483648
        %v3098 = vsel %vm3096, %v3097, %v3089
        %v3099 = vsel %vm3092, %v3095, %v3098
        %v3100 = vsel %vm3090, nan, %v3099
        %v3101 = vand.u32 2147483647, %v742
        %vm3102 = vcmp.le.f32.partialorder %v3101, 0.7853982
        %vm3103 = vcmp.lt.s32.totalorder %v742, 0
        %v3104 = vand.u32 %v742, 2139095040
        %v3105 = vshrl.u32 %v3104, 23
        %v3106 = vsub.s32 %v3105, 127
        %v3107 = vand.u32 2147483647, %v742
        %v3108 = vand.u32 %v3107, 8388607
        %v3109 = vor.u32 %v3108, 8388608
        %v3110 = vsub.s32 0, %v3109
        %v3111 = vadd.s32 %v3106, 1
        %vm3112 = vcmp.gt.s32.totalorder %v3111, 0
        %v3113 = vsel %vm3112, %v3111, 0
        %v3114 = vshrl.u32 %v3113, 5
        %v3115 = vand.u32 %v3113, 31
        %v3116 = vsub.s32 32, %v3115
        %v3117 = vshrl.u32 683565275, %v3116
        %v3118 = vshll.u32 683565275, %v3115
        %v3119 = vshrl.u32 2475754826, %v3116
        %v3120 = vor.u32 %v3118, %v3119
        %v3121 = vshll.u32 2475754826, %v3115
        %v3122 = vshrl.u32 2131351028, %v3116
        %v3123 = vor.u32 %v3121, %v3122
        %v3124 = vshll.u32 2131351028, %v3115
        %v3125 = vshrl.u32 2102212464, %v3116
        %v3126 = vor.u32 %v3124, %v3125
        %v3127 = vshll.u32 2102212464, %v3115
        %v3128 = vshrl.u32 920167782, %v3116
        %v3129 = vor.u32 %v3127, %v3128
        %v3130 = vshll.u32 920167782, %v3115
        %v3131 = vshrl.u32 1326507024, %v3116
        %v3132 = vor.u32 %v3130, %v3131
        %vm3133 = vcmp.lt.s32.totalorder %v3114, 1
        %vm3134 = vcmp.lt.s32.totalorder %v3114, 2
        %vm3135 = vcmp.lt.s32.totalorder %v3114, 3
        %vm3136 = vcmp.lt.s32.totalorder %v3114, 4
        %v3137 = vsel %vm3133, %v3117, %v3120
        %v3138 = vsel %vm3136, %v3126, 2102212464
        %v3139 = vsel %vm3135, %v3123, %v3138
        %v3140 = vsel %vm3134, %v3137, %v3139
        %v3141 = vsel %vm3133, %v3120, %v3123
        %v3142 = vsel %vm3136, %v3129, 920167782
        %v3143 = vsel %vm3135, %v3126, %v3142
        %v3144 = vsel %vm3134, %v3141, %v3143
        %v3145 = vsel %vm3133, %v3123, %v3126
        %v3146 = vsel %vm3136, %v3132, 1326507024
        %v3147 = vsel %vm3135, %v3129, %v3146
        %v3148 = vsel %vm3134, %v3145, %v3147
        %v3149 = vshll.u32 %v3109, 8
        %v3150 = vand.u32 %v3149, 65535
        %v3151 = vshrl.u32 %v3149, 16
        %v3152 = vand.u32 %v3148, 65535
        %v3153 = vshrl.u32 %v3148, 16
        %v3154 = vmul.u32 %v3150, %v3152
        %v3155 = vmul.u32 %v3150, %v3153
        %v3156 = vmul.u32 %v3151, %v3152
        %v3157 = vmul.u32 %v3151, %v3153
        %v3158 = vshll.u32 %v3155, 16
        %v3159 = vshrl.u32 %v3155, 16
        %v3160 = vshll.u32 %v3156, 16
        %v3161 = vshrl.u32 %v3156, 16
        %vm3162 = vc.u32 %v3154, %v3158
        %v3163 = vsel %vm3162, 1, 0
        %v3164 = vadd.s32 %v3154, %v3158
        %v3165 = vadd.s32 %v3157, %v3163
        %vm3166 = vc.u32 %v3164, %v3160
        %v3167 = vsel %vm3166, 1, 0
        %v3168 = vadd.s32 %v3164, %v3160
        %v3169 = vadd.s32 %v3165, %v3167
        %v3170 = vadd.s32 %v3169, %v3159
        %v3171 = vadd.s32 %v3170, %v3161
        %v3172 = vand.u32 %v3149, 65535
        %v3173 = vshrl.u32 %v3149, 16
        %v3174 = vand.u32 %v3144, 65535
        %v3175 = vshrl.u32 %v3144, 16
        %v3176 = vmul.u32 %v3172, %v3174
        %v3177 = vmul.u32 %v3172, %v3175
        %v3178 = vmul.u32 %v3173, %v3174
        %v3179 = vmul.u32 %v3173, %v3175
        %v3180 = vshll.u32 %v3177, 16
        %v3181 = vshrl.u32 %v3177, 16
        %v3182 = vshll.u32 %v3178, 16
        %v3183 = vshrl.u32 %v3178, 16
        %vm3184 = vc.u32 %v3176, %v3180
        %v3185 = vsel %vm3184, 1, 0
        %v3186 = vadd.s32 %v3176, %v3180
        %v3187 = vadd.s32 %v3179, %v3185
        %vm3188 = vc.u32 %v3186, %v3182
        %v3189 = vsel %vm3188, 1, 0
        %v3190 = vadd.s32 %v3186, %v3182
        %v3191 = vadd.s32 %v3187, %v3189
        %v3192 = vadd.s32 %v3191, %v3181
        %v3193 = vadd.s32 %v3192, %v3183
        %v3194 = vmul.u32 %v3149, %v3140
        %v3195 = vadd.s32 %v3171, %v3190
        %vm3196 = vc.u32 %v3171, %v3190
        %v3197 = vadd.s32 %v3193, 1
        %v3198 = vsel %vm3196, %v3197, %v3193
        %v3199 = vadd.s32 %v3194, %v3198
        %v3200 = vadd.s32 %v3199, 536870912
        %v3201 = vshrl.u32 %v3200, 30
        %v3202 = vshll.u32 %v3201, 30
        %v3203 = vsub.s32 %v3199, %v3202
        %vm3204 = vcmp.lt.s32.totalorder %v3203, 0
        %v3205 = vsub.s32 0, %v3203
        %v3206 = vsel %vm3204, %v3205, %v3203
        %v3207 = vclz %v3206
        %v3208 = vsub.s32 %v3207, 2
        %vm3209 = vcmp.gt.s32.totalorder 0, %v3208
        %v3210 = vsel %vm3209, 0, %v3208
        %v3211 = vsub.s32 32, %v3210
        %v3212 = vshll.u32 %v3203, %v3210
        %v3213 = vshrl.u32 %v3195, %v3211
        %v3214 = vor.u32 %v3212, %v3213
        %v3215 = vsub.s32 4294967266, %v3210
        %v3216 = vadd.s32 %v3215, 127
        %v3217 = vshll.u32 %v3216, 23
        %v3218 = vor.u32 4788187, %v3217
        %v3219 = vand.u32 2147483647, %v3218
        %v3221 = vcvt.s32.f32 %v3214
        %v3222 = vmul.f32 %v3221, %v3219
        %v3223 = vxor.u32 %v3222, 2147483648
        %v3224 = vsel %vm3103, %v3223, %v3222
        %v3225 = vsub.s32 4, %v3201
        %v3226 = vsel %vm3103, %v3225, %v3201
        %v3227 = vsel %vm3102, %v742, %v3224
        %v3228 = vsel %vm3102, 0, %v3226
        %v3229 = vmul.f32 %v3227, %v3227
        %v3230 = vmul.f32 %v3229, -0.001358992
        %v3231 = vadd.f32 %v3230, 0.041655596
        %v3232 = vmul.f32 %v3229, %v3231
        %v3233 = vadd.f32 %v3232, -0.4999988
        %v3234 = vmul.f32 %v3229, %v3233
        %v3235 = vadd.f32 1.0, %v3234
        %v3236 = vmul.f32 %v3227, %v3227
        %v3237 = vmul.f32 %v3236, -0.00019511016
        %v3238 = vadd.f32 %v3237, 0.008332121
        %v3239 = vmul.f32 %v3236, %v3238
        %v3240 = vadd.f32 %v3239, -0.16666654
        %v3241 = vmul.f32 %v3236, %v3240
        %v3242 = vadd.f32 %v3241, 1.0
        %v3243 = vmul.f32 %v3242, %v3227
        %vm3244 = vweird.f32 %v742
        %v3245 = vand.u32 %v3228, 3
        %vm3246 = vcmp.lt.s32.totalorder %v3245, 2
        %vm3247 = vcmp.eq.s32.totalorder %v3245, 0
        %v3248 = vxor.u32 %v3243, 2147483648
        %v3249 = vsel %vm3247, %v3235, %v3248
        %vm3250 = vcmp.eq.s32.totalorder %v3245, 2
        %v3251 = vxor.u32 %v3235, 2147483648
        %v3252 = vsel %vm3250, %v3251, %v3243
        %v3253 = vsel %vm3246, %v3249, %v3252
        %v3254 = vsel %vm3244, nan, %v3253
        %v3255 = vand.u32 2147483647, %v743
        %vm3256 = vcmp.le.f32.partialorder %v3255, 0.7853982
        %vm3257 = vcmp.lt.s32.totalorder %v743, 0
        %v3258 = vand.u32 %v743, 2139095040
        %v3259 = vshrl.u32 %v3258, 23
        %v3260 = vsub.s32 %v3259, 127
        %v3261 = vand.u32 2147483647, %v743
        %v3262 = vand.u32 %v3261, 8388607
        %v3263 = vor.u32 %v3262, 8388608
        %v3264 = vsub.s32 0, %v3263
        %v3265 = vadd.s32 %v3260, 1
        %vm3266 = vcmp.gt.s32.totalorder %v3265, 0
        %v3267 = vsel %vm3266, %v3265, 0
        %v3268 = vshrl.u32 %v3267, 5
        %v3269 = vand.u32 %v3267, 31
        %v3270 = vsub.s32 32, %v3269
        %v3271 = vshrl.u32 683565275, %v3270
        %v3272 = vshll.u32 683565275, %v3269
        %v3273 = vshrl.u32 2475754826, %v3270
        %v3274 = vor.u32 %v3272, %v3273
        %v3275 = vshll.u32 2475754826, %v3269
        %v3276 = vshrl.u32 2131351028, %v3270
        %v3277 = vor.u32 %v3275, %v3276
        %v3278 = vshll.u32 2131351028, %v3269
        %v3279 = vshrl.u32 2102212464, %v3270
        %v3280 = vor.u32 %v3278, %v3279
        %v3281 = vshll.u32 2102212464, %v3269
        %v3282 = vshrl.u32 920167782, %v3270
        %v3283 = vor.u32 %v3281, %v3282
        %v3284 = vshll.u32 920167782, %v3269
        %v3285 = vshrl.u32 1326507024, %v3270
        %v3286 = vor.u32 %v3284, %v3285
        %vm3287 = vcmp.lt.s32.totalorder %v3268, 1
        %vm3288 = vcmp.lt.s32.totalorder %v3268, 2
        %vm3289 = vcmp.lt.s32.totalorder %v3268, 3
        %vm3290 = vcmp.lt.s32.totalorder %v3268, 4
        %v3291 = vsel %vm3287, %v3271, %v3274
        %v3292 = vsel %vm3290, %v3280, 2102212464
        %v3293 = vsel %vm3289, %v3277, %v3292
        %v3294 = vsel %vm3288, %v3291, %v3293
        %v3295 = vsel %vm3287, %v3274, %v3277
        %v3296 = vsel %vm3290, %v3283, 920167782
        %v3297 = vsel %vm3289, %v3280, %v3296
        %v3298 = vsel %vm3288, %v3295, %v3297
        %v3299 = vsel %vm3287, %v3277, %v3280
        %v3300 = vsel %vm3290, %v3286, 1326507024
        %v3301 = vsel %vm3289, %v3283, %v3300
        %v3302 = vsel %vm3288, %v3299, %v3301
        %v3303 = vshll.u32 %v3263, 8
        %v3304 = vand.u32 %v3303, 65535
        %v3305 = vshrl.u32 %v3303, 16
        %v3306 = vand.u32 %v3302, 65535
        %v3307 = vshrl.u32 %v3302, 16
        %v3308 = vmul.u32 %v3304, %v3306
        %v3309 = vmul.u32 %v3304, %v3307
        %v3310 = vmul.u32 %v3305, %v3306
        %v3311 = vmul.u32 %v3305, %v3307
        %v3312 = vshll.u32 %v3309, 16
        %v3313 = vshrl.u32 %v3309, 16
        %v3314 = vshll.u32 %v3310, 16
        %v3315 = vshrl.u32 %v3310, 16
        %vm3316 = vc.u32 %v3308, %v3312
        %v3317 = vsel %vm3316, 1, 0
        %v3318 = vadd.s32 %v3308, %v3312
        %v3319 = vadd.s32 %v3311, %v3317
        %vm3320 = vc.u32 %v3318, %v3314
        %v3321 = vsel %vm3320, 1, 0
        %v3322 = vadd.s32 %v3318, %v3314
        %v3323 = vadd.s32 %v3319, %v3321
        %v3324 = vadd.s32 %v3323, %v3313
        %v3325 = vadd.s32 %v3324, %v3315
        %v3326 = vand.u32 %v3303, 65535
        %v3327 = vshrl.u32 %v3303, 16
        %v3328 = vand.u32 %v3298, 65535
        %v3329 = vshrl.u32 %v3298, 16
        %v3330 = vmul.u32 %v3326, %v3328
        %v3331 = vmul.u32 %v3326, %v3329
        %v3332 = vmul.u32 %v3327, %v3328
        %v3333 = vmul.u32 %v3327, %v3329
        %v3334 = vshll.u32 %v3331, 16
        %v3335 = vshrl.u32 %v3331, 16
        %v3336 = vshll.u32 %v3332, 16
        %v3337 = vshrl.u32 %v3332, 16
        %vm3338 = vc.u32 %v3330, %v3334
        %v3339 = vsel %vm3338, 1, 0
        %v3340 = vadd.s32 %v3330, %v3334
        %v3341 = vadd.s32 %v3333, %v3339
        %vm3342 = vc.u32 %v3340, %v3336
        %v3343 = vsel %vm3342, 1, 0
        %v3344 = vadd.s32 %v3340, %v3336
        %v3345 = vadd.s32 %v3341, %v3343
        %v3346 = vadd.s32 %v3345, %v3335
        %v3347 = vadd.s32 %v3346, %v3337
        %v3348 = vmul.u32 %v3303, %v3294
        %v3349 = vadd.s32 %v3325, %v3344
        %vm3350 = vc.u32 %v3325, %v3344
        %v3351 = vadd.s32 %v3347, 1
        %v3352 = vsel %vm3350, %v3351, %v3347
        %v3353 = vadd.s32 %v3348, %v3352
        %v3354 = vadd.s32 %v3353, 536870912
        %v3355 = vshrl.u32 %v3354, 30
        %v3356 = vshll.u32 %v3355, 30
        %v3357 = vsub.s32 %v3353, %v3356
        %vm3358 = vcmp.lt.s32.totalorder %v3357, 0
        %v3359 = vsub.s32 0, %v3357
        %v3360 = vsel %vm3358, %v3359, %v3357
        %v3361 = vclz %v3360
        %v3362 = vsub.s32 %v3361, 2
        %vm3363 = vcmp.gt.s32.totalorder 0, %v3362
        %v3364 = vsel %vm3363, 0, %v3362
        %v3365 = vsub.s32 32, %v3364
        %v3366 = vshll.u32 %v3357, %v3364
        %v3367 = vshrl.u32 %v3349, %v3365
        %v3368 = vor.u32 %v3366, %v3367
        %v3369 = vsub.s32 4294967266, %v3364
        %v3370 = vadd.s32 %v3369, 127
        %v3371 = vshll.u32 %v3370, 23
        %v3372 = vor.u32 4788187, %v3371
        %v3373 = vand.u32 2147483647, %v3372
        %v3375 = vcvt.s32.f32 %v3368
        %v3376 = vmul.f32 %v3375, %v3373
        %v3377 = vxor.u32 %v3376, 2147483648
        %v3378 = vsel %vm3257, %v3377, %v3376
        %v3379 = vsub.s32 4, %v3355
        %v3380 = vsel %vm3257, %v3379, %v3355
        %v3381 = vsel %vm3256, %v743, %v3378
        %v3382 = vsel %vm3256, 0, %v3380
        %v3383 = vmul.f32 %v3381, %v3381
        %v3384 = vmul.f32 %v3383, -0.001358992
        %v3385 = vadd.f32 %v3384, 0.041655596
        %v3386 = vmul.f32 %v3383, %v3385
        %v3387 = vadd.f32 %v3386, -0.4999988
        %v3388 = vmul.f32 %v3383, %v3387
        %v3389 = vadd.f32 1.0, %v3388
        %v3390 = vmul.f32 %v3381, %v3381
        %v3391 = vmul.f32 %v3390, -0.00019511016
        %v3392 = vadd.f32 %v3391, 0.008332121
        %v3393 = vmul.f32 %v3390, %v3392
        %v3394 = vadd.f32 %v3393, -0.16666654
        %v3395 = vmul.f32 %v3390, %v3394
        %v3396 = vadd.f32 %v3395, 1.0
        %v3397 = vmul.f32 %v3396, %v3381
        %vm3398 = vweird.f32 %v743
        %v3399 = vand.u32 %v3382, 3
        %vm3400 = vcmp.lt.s32.totalorder %v3399, 2
        %vm3401 = vcmp.eq.s32.totalorder %v3399, 0
        %v3402 = vxor.u32 %v3397, 2147483648
        %v3403 = vsel %vm3401, %v3389, %v3402
        %vm3404 = vcmp.eq.s32.totalorder %v3399, 2
        %v3405 = vxor.u32 %v3389, 2147483648
        %v3406 = vsel %vm3404, %v3405, %v3397
        %v3407 = vsel %vm3400, %v3403, %v3406
        %v3408 = vsel %vm3398, nan, %v3407
        %v3409 = vand.u32 2147483647, %v744
        %vm3410 = vcmp.le.f32.partialorder %v3409, 0.7853982
        %vm3411 = vcmp.lt.s32.totalorder %v744, 0
        %v3412 = vand.u32 %v744, 2139095040
        %v3413 = vshrl.u32 %v3412, 23
        %v3414 = vsub.s32 %v3413, 127
        %v3415 = vand.u32 2147483647, %v744
        %v3416 = vand.u32 %v3415, 8388607
        %v3417 = vor.u32 %v3416, 8388608
        %v3418 = vsub.s32 0, %v3417
        %v3419 = vadd.s32 %v3414, 1
        %vm3420 = vcmp.gt.s32.totalorder %v3419, 0
        %v3421 = vsel %vm3420, %v3419, 0
        %v3422 = vshrl.u32 %v3421, 5
        %v3423 = vand.u32 %v3421, 31
        %v3424 = vsub.s32 32, %v3423
        %v3425 = vshrl.u32 683565275, %v3424
        %v3426 = vshll.u32 683565275, %v3423
        %v3427 = vshrl.u32 2475754826, %v3424
        %v3428 = vor.u32 %v3426, %v3427
        %v3429 = vshll.u32 2475754826, %v3423
        %v3430 = vshrl.u32 2131351028, %v3424
        %v3431 = vor.u32 %v3429, %v3430
        %v3432 = vshll.u32 2131351028, %v3423
        %v3433 = vshrl.u32 2102212464, %v3424
        %v3434 = vor.u32 %v3432, %v3433
        %v3435 = vshll.u32 2102212464, %v3423
        %v3436 = vshrl.u32 920167782, %v3424
        %v3437 = vor.u32 %v3435, %v3436
        %v3438 = vshll.u32 920167782, %v3423
        %v3439 = vshrl.u32 1326507024, %v3424
        %v3440 = vor.u32 %v3438, %v3439
        %vm3441 = vcmp.lt.s32.totalorder %v3422, 1
        %vm3442 = vcmp.lt.s32.totalorder %v3422, 2
        %vm3443 = vcmp.lt.s32.totalorder %v3422, 3
        %vm3444 = vcmp.lt.s32.totalorder %v3422, 4
        %v3445 = vsel %vm3441, %v3425, %v3428
        %v3446 = vsel %vm3444, %v3434, 2102212464
        %v3447 = vsel %vm3443, %v3431, %v3446
        %v3448 = vsel %vm3442, %v3445, %v3447
        %v3449 = vsel %vm3441, %v3428, %v3431
        %v3450 = vsel %vm3444, %v3437, 920167782
        %v3451 = vsel %vm3443, %v3434, %v3450
        %v3452 = vsel %vm3442, %v3449, %v3451
        %v3453 = vsel %vm3441, %v3431, %v3434
        %v3454 = vsel %vm3444, %v3440, 1326507024
        %v3455 = vsel %vm3443, %v3437, %v3454
        %v3456 = vsel %vm3442, %v3453, %v3455
        %v3457 = vshll.u32 %v3417, 8
        %v3458 = vand.u32 %v3457, 65535
        %v3459 = vshrl.u32 %v3457, 16
        %v3460 = vand.u32 %v3456, 65535
        %v3461 = vshrl.u32 %v3456, 16
        %v3462 = vmul.u32 %v3458, %v3460
        %v3463 = vmul.u32 %v3458, %v3461
        %v3464 = vmul.u32 %v3459, %v3460
        %v3465 = vmul.u32 %v3459, %v3461
        %v3466 = vshll.u32 %v3463, 16
        %v3467 = vshrl.u32 %v3463, 16
        %v3468 = vshll.u32 %v3464, 16
        %v3469 = vshrl.u32 %v3464, 16
        %vm3470 = vc.u32 %v3462, %v3466
        %v3471 = vsel %vm3470, 1, 0
        %v3472 = vadd.s32 %v3462, %v3466
        %v3473 = vadd.s32 %v3465, %v3471
        %vm3474 = vc.u32 %v3472, %v3468
        %v3475 = vsel %vm3474, 1, 0
        %v3476 = vadd.s32 %v3472, %v3468
        %v3477 = vadd.s32 %v3473, %v3475
        %v3478 = vadd.s32 %v3477, %v3467
        %v3479 = vadd.s32 %v3478, %v3469
        %v3480 = vand.u32 %v3457, 65535
        %v3481 = vshrl.u32 %v3457, 16
        %v3482 = vand.u32 %v3452, 65535
        %v3483 = vshrl.u32 %v3452, 16
        %v3484 = vmul.u32 %v3480, %v3482
        %v3485 = vmul.u32 %v3480, %v3483
        %v3486 = vmul.u32 %v3481, %v3482
        %v3487 = vmul.u32 %v3481, %v3483
        %v3488 = vshll.u32 %v3485, 16
        %v3489 = vshrl.u32 %v3485, 16
        %v3490 = vshll.u32 %v3486, 16
        %v3491 = vshrl.u32 %v3486, 16
        %vm3492 = vc.u32 %v3484, %v3488
        %v3493 = vsel %vm3492, 1, 0
        %v3494 = vadd.s32 %v3484, %v3488
        %v3495 = vadd.s32 %v3487, %v3493
        %vm3496 = vc.u32 %v3494, %v3490
        %v3497 = vsel %vm3496, 1, 0
        %v3498 = vadd.s32 %v3494, %v3490
        %v3499 = vadd.s32 %v3495, %v3497
        %v3500 = vadd.s32 %v3499, %v3489
        %v3501 = vadd.s32 %v3500, %v3491
        %v3502 = vmul.u32 %v3457, %v3448
        %v3503 = vadd.s32 %v3479, %v3498
        %vm3504 = vc.u32 %v3479, %v3498
        %v3505 = vadd.s32 %v3501, 1
        %v3506 = vsel %vm3504, %v3505, %v3501
        %v3507 = vadd.s32 %v3502, %v3506
        %v3508 = vadd.s32 %v3507, 536870912
        %v3509 = vshrl.u32 %v3508, 30
        %v3510 = vshll.u32 %v3509, 30
        %v3511 = vsub.s32 %v3507, %v3510
        %vm3512 = vcmp.lt.s32.totalorder %v3511, 0
        %v3513 = vsub.s32 0, %v3511
        %v3514 = vsel %vm3512, %v3513, %v3511
        %v3515 = vclz %v3514
        %v3516 = vsub.s32 %v3515, 2
        %vm3517 = vcmp.gt.s32.totalorder 0, %v3516
        %v3518 = vsel %vm3517, 0, %v3516
        %v3519 = vsub.s32 32, %v3518
        %v3520 = vshll.u32 %v3511, %v3518
        %v3521 = vshrl.u32 %v3503, %v3519
        %v3522 = vor.u32 %v3520, %v3521
        %v3523 = vsub.s32 4294967266, %v3518
        %v3524 = vadd.s32 %v3523, 127
        %v3525 = vshll.u32 %v3524, 23
        %v3526 = vor.u32 4788187, %v3525
        %v3527 = vand.u32 2147483647, %v3526
        %v3529 = vcvt.s32.f32 %v3522
        %v3530 = vmul.f32 %v3529, %v3527
        %v3531 = vxor.u32 %v3530, 2147483648
        %v3532 = vsel %vm3411, %v3531, %v3530
        %v3533 = vsub.s32 4, %v3509
        %v3534 = vsel %vm3411, %v3533, %v3509
        %v3535 = vsel %vm3410, %v744, %v3532
        %v3536 = vsel %vm3410, 0, %v3534
        %v3537 = vmul.f32 %v3535, %v3535
        %v3538 = vmul.f32 %v3537, -0.001358992
        %v3539 = vadd.f32 %v3538, 0.041655596
        %v3540 = vmul.f32 %v3537, %v3539
        %v3541 = vadd.f32 %v3540, -0.4999988
        %v3542 = vmul.f32 %v3537, %v3541
        %v3543 = vadd.f32 1.0, %v3542
        %v3544 = vmul.f32 %v3535, %v3535
        %v3545 = vmul.f32 %v3544, -0.00019511016
        %v3546 = vadd.f32 %v3545, 0.008332121
        %v3547 = vmul.f32 %v3544, %v3546
        %v3548 = vadd.f32 %v3547, -0.16666654
        %v3549 = vmul.f32 %v3544, %v3548
        %v3550 = vadd.f32 %v3549, 1.0
        %v3551 = vmul.f32 %v3550, %v3535
        %vm3552 = vweird.f32 %v744
        %v3553 = vand.u32 %v3536, 3
        %vm3554 = vcmp.lt.s32.totalorder %v3553, 2
        %vm3555 = vcmp.eq.s32.totalorder %v3553, 0
        %v3556 = vxor.u32 %v3551, 2147483648
        %v3557 = vsel %vm3555, %v3543, %v3556
        %vm3558 = vcmp.eq.s32.totalorder %v3553, 2
        %v3559 = vxor.u32 %v3543, 2147483648
        %v3560 = vsel %vm3558, %v3559, %v3551
        %v3561 = vsel %vm3554, %v3557, %v3560
        %v3562 = vsel %vm3552, nan, %v3561
        %v3563 = vand.u32 2147483647, %v745
        %vm3564 = vcmp.le.f32.partialorder %v3563, 0.7853982
        %vm3565 = vcmp.lt.s32.totalorder %v745, 0
        %v3566 = vand.u32 %v745, 2139095040
        %v3567 = vshrl.u32 %v3566, 23
        %v3568 = vsub.s32 %v3567, 127
        %v3569 = vand.u32 2147483647, %v745
        %v3570 = vand.u32 %v3569, 8388607
        %v3571 = vor.u32 %v3570, 8388608
        %v3572 = vsub.s32 0, %v3571
        %v3573 = vadd.s32 %v3568, 1
        %vm3574 = vcmp.gt.s32.totalorder %v3573, 0
        %v3575 = vsel %vm3574, %v3573, 0
        %v3576 = vshrl.u32 %v3575, 5
        %v3577 = vand.u32 %v3575, 31
        %v3578 = vsub.s32 32, %v3577
        %v3579 = vshrl.u32 683565275, %v3578
        %v3580 = vshll.u32 683565275, %v3577
        %v3581 = vshrl.u32 2475754826, %v3578
        %v3582 = vor.u32 %v3580, %v3581
        %v3583 = vshll.u32 2475754826, %v3577
        %v3584 = vshrl.u32 2131351028, %v3578
        %v3585 = vor.u32 %v3583, %v3584
        %v3586 = vshll.u32 2131351028, %v3577
        %v3587 = vshrl.u32 2102212464, %v3578
        %v3588 = vor.u32 %v3586, %v3587
        %v3589 = vshll.u32 2102212464, %v3577
        %v3590 = vshrl.u32 920167782, %v3578
        %v3591 = vor.u32 %v3589, %v3590
        %v3592 = vshll.u32 920167782, %v3577
        %v3593 = vshrl.u32 1326507024, %v3578
        %v3594 = vor.u32 %v3592, %v3593
        %vm3595 = vcmp.lt.s32.totalorder %v3576, 1
        %vm3596 = vcmp.lt.s32.totalorder %v3576, 2
        %vm3597 = vcmp.lt.s32.totalorder %v3576, 3
        %vm3598 = vcmp.lt.s32.totalorder %v3576, 4
        %v3599 = vsel %vm3595, %v3579, %v3582
        %v3600 = vsel %vm3598, %v3588, 2102212464
        %v3601 = vsel %vm3597, %v3585, %v3600
        %v3602 = vsel %vm3596, %v3599, %v3601
        %v3603 = vsel %vm3595, %v3582, %v3585
        %v3604 = vsel %vm3598, %v3591, 920167782
        %v3605 = vsel %vm3597, %v3588, %v3604
        %v3606 = vsel %vm3596, %v3603, %v3605
        %v3607 = vsel %vm3595, %v3585, %v3588
        %v3608 = vsel %vm3598, %v3594, 1326507024
        %v3609 = vsel %vm3597, %v3591, %v3608
        %v3610 = vsel %vm3596, %v3607, %v3609
        %v3611 = vshll.u32 %v3571, 8
        %v3612 = vand.u32 %v3611, 65535
        %v3613 = vshrl.u32 %v3611, 16
        %v3614 = vand.u32 %v3610, 65535
        %v3615 = vshrl.u32 %v3610, 16
        %v3616 = vmul.u32 %v3612, %v3614
        %v3617 = vmul.u32 %v3612, %v3615
        %v3618 = vmul.u32 %v3613, %v3614
        %v3619 = vmul.u32 %v3613, %v3615
        %v3620 = vshll.u32 %v3617, 16
        %v3621 = vshrl.u32 %v3617, 16
        %v3622 = vshll.u32 %v3618, 16
        %v3623 = vshrl.u32 %v3618, 16
        %vm3624 = vc.u32 %v3616, %v3620
        %v3625 = vsel %vm3624, 1, 0
        %v3626 = vadd.s32 %v3616, %v3620
        %v3627 = vadd.s32 %v3619, %v3625
        %vm3628 = vc.u32 %v3626, %v3622
        %v3629 = vsel %vm3628, 1, 0
        %v3630 = vadd.s32 %v3626, %v3622
        %v3631 = vadd.s32 %v3627, %v3629
        %v3632 = vadd.s32 %v3631, %v3621
        %v3633 = vadd.s32 %v3632, %v3623
        %v3634 = vand.u32 %v3611, 65535
        %v3635 = vshrl.u32 %v3611, 16
        %v3636 = vand.u32 %v3606, 65535
        %v3637 = vshrl.u32 %v3606, 16
        %v3638 = vmul.u32 %v3634, %v3636
        %v3639 = vmul.u32 %v3634, %v3637
        %v3640 = vmul.u32 %v3635, %v3636
        %v3641 = vmul.u32 %v3635, %v3637
        %v3642 = vshll.u32 %v3639, 16
        %v3643 = vshrl.u32 %v3639, 16
        %v3644 = vshll.u32 %v3640, 16
        %v3645 = vshrl.u32 %v3640, 16
        %vm3646 = vc.u32 %v3638, %v3642
        %v3647 = vsel %vm3646, 1, 0
        %v3648 = vadd.s32 %v3638, %v3642
        %v3649 = vadd.s32 %v3641, %v3647
        %vm3650 = vc.u32 %v3648, %v3644
        %v3651 = vsel %vm3650, 1, 0
        %v3652 = vadd.s32 %v3648, %v3644
        %v3653 = vadd.s32 %v3649, %v3651
        %v3654 = vadd.s32 %v3653, %v3643
        %v3655 = vadd.s32 %v3654, %v3645
        %v3656 = vmul.u32 %v3611, %v3602
        %v3657 = vadd.s32 %v3633, %v3652
        %vm3658 = vc.u32 %v3633, %v3652
        %v3659 = vadd.s32 %v3655, 1
        %v3660 = vsel %vm3658, %v3659, %v3655
        %v3661 = vadd.s32 %v3656, %v3660
        %v3662 = vadd.s32 %v3661, 536870912
        %v3663 = vshrl.u32 %v3662, 30
        %v3664 = vshll.u32 %v3663, 30
        %v3665 = vsub.s32 %v3661, %v3664
        %vm3666 = vcmp.lt.s32.totalorder %v3665, 0
        %v3667 = vsub.s32 0, %v3665
        %v3668 = vsel %vm3666, %v3667, %v3665
        %v3669 = vclz %v3668
        %v3670 = vsub.s32 %v3669, 2
        %vm3671 = vcmp.gt.s32.totalorder 0, %v3670
        %v3672 = vsel %vm3671, 0, %v3670
        %v3673 = vsub.s32 32, %v3672
        %v3674 = vshll.u32 %v3665, %v3672
        %v3675 = vshrl.u32 %v3657, %v3673
        %v3676 = vor.u32 %v3674, %v3675
        %v3677 = vsub.s32 4294967266, %v3672
        %v3678 = vadd.s32 %v3677, 127
        %v3679 = vshll.u32 %v3678, 23
        %v3680 = vor.u32 4788187, %v3679
        %v3681 = vand.u32 2147483647, %v3680
        %v3683 = vcvt.s32.f32 %v3676
        %v3684 = vmul.f32 %v3683, %v3681
        %v3685 = vxor.u32 %v3684, 2147483648
        %v3686 = vsel %vm3565, %v3685, %v3684
        %v3687 = vsub.s32 4, %v3663
        %v3688 = vsel %vm3565, %v3687, %v3663
        %v3689 = vsel %vm3564, %v745, %v3686
        %v3690 = vsel %vm3564, 0, %v3688
        %v3691 = vmul.f32 %v3689, %v3689
        %v3692 = vmul.f32 %v3691, -0.001358992
        %v3693 = vadd.f32 %v3692, 0.041655596
        %v3694 = vmul.f32 %v3691, %v3693
        %v3695 = vadd.f32 %v3694, -0.4999988
        %v3696 = vmul.f32 %v3691, %v3695
        %v3697 = vadd.f32 1.0, %v3696
        %v3698 = vmul.f32 %v3689, %v3689
        %v3699 = vmul.f32 %v3698, -0.00019511016
        %v3700 = vadd.f32 %v3699, 0.008332121
        %v3701 = vmul.f32 %v3698, %v3700
        %v3702 = vadd.f32 %v3701, -0.16666654
        %v3703 = vmul.f32 %v3698, %v3702
        %v3704 = vadd.f32 %v3703, 1.0
        %v3705 = vmul.f32 %v3704, %v3689
        %vm3706 = vweird.f32 %v745
        %v3707 = vand.u32 %v3690, 3
        %vm3708 = vcmp.lt.s32.totalorder %v3707, 2
        %vm3709 = vcmp.eq.s32.totalorder %v3707, 0
        %v3710 = vxor.u32 %v3705, 2147483648
        %v3711 = vsel %vm3709, %v3697, %v3710
        %vm3712 = vcmp.eq.s32.totalorder %v3707, 2
        %v3713 = vxor.u32 %v3697, 2147483648
        %v3714 = vsel %vm3712, %v3713, %v3705
        %v3715 = vsel %vm3708, %v3711, %v3714
        %v3716 = vsel %vm3706, nan, %v3715
        %v3717 = vand.u32 2147483647, %v746
        %vm3718 = vcmp.le.f32.partialorder %v3717, 0.7853982
        %vm3719 = vcmp.lt.s32.totalorder %v746, 0
        %v3720 = vand.u32 %v746, 2139095040
        %v3721 = vshrl.u32 %v3720, 23
        %v3722 = vsub.s32 %v3721, 127
        %v3723 = vand.u32 2147483647, %v746
        %v3724 = vand.u32 %v3723, 8388607
        %v3725 = vor.u32 %v3724, 8388608
        %v3726 = vsub.s32 0, %v3725
        %v3727 = vadd.s32 %v3722, 1
        %vm3728 = vcmp.gt.s32.totalorder %v3727, 0
        %v3729 = vsel %vm3728, %v3727, 0
        %v3730 = vshrl.u32 %v3729, 5
        %v3731 = vand.u32 %v3729, 31
        %v3732 = vsub.s32 32, %v3731
        %v3733 = vshrl.u32 683565275, %v3732
        %v3734 = vshll.u32 683565275, %v3731
        %v3735 = vshrl.u32 2475754826, %v3732
        %v3736 = vor.u32 %v3734, %v3735
        %v3737 = vshll.u32 2475754826, %v3731
        %v3738 = vshrl.u32 2131351028, %v3732
        %v3739 = vor.u32 %v3737, %v3738
        %v3740 = vshll.u32 2131351028, %v3731
        %v3741 = vshrl.u32 2102212464, %v3732
        %v3742 = vor.u32 %v3740, %v3741
        %v3743 = vshll.u32 2102212464, %v3731
        %v3744 = vshrl.u32 920167782, %v3732
        %v3745 = vor.u32 %v3743, %v3744
        %v3746 = vshll.u32 920167782, %v3731
        %v3747 = vshrl.u32 1326507024, %v3732
        %v3748 = vor.u32 %v3746, %v3747
        %vm3749 = vcmp.lt.s32.totalorder %v3730, 1
        %vm3750 = vcmp.lt.s32.totalorder %v3730, 2
        %vm3751 = vcmp.lt.s32.totalorder %v3730, 3
        %vm3752 = vcmp.lt.s32.totalorder %v3730, 4
        %v3753 = vsel %vm3749, %v3733, %v3736
        %v3754 = vsel %vm3752, %v3742, 2102212464
        %v3755 = vsel %vm3751, %v3739, %v3754
        %v3756 = vsel %vm3750, %v3753, %v3755
        %v3757 = vsel %vm3749, %v3736, %v3739
        %v3758 = vsel %vm3752, %v3745, 920167782
        %v3759 = vsel %vm3751, %v3742, %v3758
        %v3760 = vsel %vm3750, %v3757, %v3759
        %v3761 = vsel %vm3749, %v3739, %v3742
        %v3762 = vsel %vm3752, %v3748, 1326507024
        %v3763 = vsel %vm3751, %v3745, %v3762
        %v3764 = vsel %vm3750, %v3761, %v3763
        %v3765 = vshll.u32 %v3725, 8
        %v3766 = vand.u32 %v3765, 65535
        %v3767 = vshrl.u32 %v3765, 16
        %v3768 = vand.u32 %v3764, 65535
        %v3769 = vshrl.u32 %v3764, 16
        %v3770 = vmul.u32 %v3766, %v3768
        %v3771 = vmul.u32 %v3766, %v3769
        %v3772 = vmul.u32 %v3767, %v3768
        %v3773 = vmul.u32 %v3767, %v3769
        %v3774 = vshll.u32 %v3771, 16
        %v3775 = vshrl.u32 %v3771, 16
        %v3776 = vshll.u32 %v3772, 16
        %v3777 = vshrl.u32 %v3772, 16
        %vm3778 = vc.u32 %v3770, %v3774
        %v3779 = vsel %vm3778, 1, 0
        %v3780 = vadd.s32 %v3770, %v3774
        %v3781 = vadd.s32 %v3773, %v3779
        %vm3782 = vc.u32 %v3780, %v3776
        %v3783 = vsel %vm3782, 1, 0
        %v3784 = vadd.s32 %v3780, %v3776
        %v3785 = vadd.s32 %v3781, %v3783
        %v3786 = vadd.s32 %v3785, %v3775
        %v3787 = vadd.s32 %v3786, %v3777
        %v3788 = vand.u32 %v3765, 65535
        %v3789 = vshrl.u32 %v3765, 16
        %v3790 = vand.u32 %v3760, 65535
        %v3791 = vshrl.u32 %v3760, 16
        %v3792 = vmul.u32 %v3788, %v3790
        %v3793 = vmul.u32 %v3788, %v3791
        %v3794 = vmul.u32 %v3789, %v3790
        %v3795 = vmul.u32 %v3789, %v3791
        %v3796 = vshll.u32 %v3793, 16
        %v3797 = vshrl.u32 %v3793, 16
        %v3798 = vshll.u32 %v3794, 16
        %v3799 = vshrl.u32 %v3794, 16
        %vm3800 = vc.u32 %v3792, %v3796
        %v3801 = vsel %vm3800, 1, 0
        %v3802 = vadd.s32 %v3792, %v3796
        %v3803 = vadd.s32 %v3795, %v3801
        %vm3804 = vc.u32 %v3802, %v3798
        %v3805 = vsel %vm3804, 1, 0
        %v3806 = vadd.s32 %v3802, %v3798
        %v3807 = vadd.s32 %v3803, %v3805
        %v3808 = vadd.s32 %v3807, %v3797
        %v3809 = vadd.s32 %v3808, %v3799
        %v3810 = vmul.u32 %v3765, %v3756
        %v3811 = vadd.s32 %v3787, %v3806
        %vm3812 = vc.u32 %v3787, %v3806
        %v3813 = vadd.s32 %v3809, 1
        %v3814 = vsel %vm3812, %v3813, %v3809
        %v3815 = vadd.s32 %v3810, %v3814
        %v3816 = vadd.s32 %v3815, 536870912
        %v3817 = vshrl.u32 %v3816, 30
        %v3818 = vshll.u32 %v3817, 30
        %v3819 = vsub.s32 %v3815, %v3818
        %vm3820 = vcmp.lt.s32.totalorder %v3819, 0
        %v3821 = vsub.s32 0, %v3819
        %v3822 = vsel %vm3820, %v3821, %v3819
        %v3823 = vclz %v3822
        %v3824 = vsub.s32 %v3823, 2
        %vm3825 = vcmp.gt.s32.totalorder 0, %v3824
        %v3826 = vsel %vm3825, 0, %v3824
        %v3827 = vsub.s32 32, %v3826
        %v3828 = vshll.u32 %v3819, %v3826
        %v3829 = vshrl.u32 %v3811, %v3827
        %v3830 = vor.u32 %v3828, %v3829
        %v3831 = vsub.s32 4294967266, %v3826
        %v3832 = vadd.s32 %v3831, 127
        %v3833 = vshll.u32 %v3832, 23
        %v3834 = vor.u32 4788187, %v3833
        %v3835 = vand.u32 2147483647, %v3834
        %v3837 = vcvt.s32.f32 %v3830
        %v3838 = vmul.f32 %v3837, %v3835
        %v3839 = vxor.u32 %v3838, 2147483648
        %v3840 = vsel %vm3719, %v3839, %v3838
        %v3841 = vsub.s32 4, %v3817
        %v3842 = vsel %vm3719, %v3841, %v3817
        %v3843 = vsel %vm3718, %v746, %v3840
        %v3844 = vsel %vm3718, 0, %v3842
        %v3845 = vmul.f32 %v3843, %v3843
        %v3846 = vmul.f32 %v3845, -0.001358992
        %v3847 = vadd.f32 %v3846, 0.041655596
        %v3848 = vmul.f32 %v3845, %v3847
        %v3849 = vadd.f32 %v3848, -0.4999988
        %v3850 = vmul.f32 %v3845, %v3849
        %v3851 = vadd.f32 1.0, %v3850
        %v3852 = vmul.f32 %v3843, %v3843
        %v3853 = vmul.f32 %v3852, -0.00019511016
        %v3854 = vadd.f32 %v3853, 0.008332121
        %v3855 = vmul.f32 %v3852, %v3854
        %v3856 = vadd.f32 %v3855, -0.16666654
        %v3857 = vmul.f32 %v3852, %v3856
        %v3858 = vadd.f32 %v3857, 1.0
        %v3859 = vmul.f32 %v3858, %v3843
        %vm3860 = vweird.f32 %v746
        %v3861 = vand.u32 %v3844, 3
        %vm3862 = vcmp.lt.s32.totalorder %v3861, 2
        %vm3863 = vcmp.eq.s32.totalorder %v3861, 0
        %v3864 = vxor.u32 %v3859, 2147483648
        %v3865 = vsel %vm3863, %v3851, %v3864
        %vm3866 = vcmp.eq.s32.totalorder %v3861, 2
        %v3867 = vxor.u32 %v3851, 2147483648
        %v3868 = vsel %vm3866, %v3867, %v3859
        %v3869 = vsel %vm3862, %v3865, %v3868
        %v3870 = vsel %vm3860, nan, %v3869
        %v3871 = vand.u32 2147483647, %v747
        %vm3872 = vcmp.le.f32.partialorder %v3871, 0.7853982
        %vm3873 = vcmp.lt.s32.totalorder %v747, 0
        %v3874 = vand.u32 %v747, 2139095040
        %v3875 = vshrl.u32 %v3874, 23
        %v3876 = vsub.s32 %v3875, 127
        %v3877 = vand.u32 2147483647, %v747
        %v3878 = vand.u32 %v3877, 8388607
        %v3879 = vor.u32 %v3878, 8388608
        %v3880 = vsub.s32 0, %v3879
        %v3881 = vadd.s32 %v3876, 1
        %vm3882 = vcmp.gt.s32.totalorder %v3881, 0
        %v3883 = vsel %vm3882, %v3881, 0
        %v3884 = vshrl.u32 %v3883, 5
        %v3885 = vand.u32 %v3883, 31
        %v3886 = vsub.s32 32, %v3885
        %v3887 = vshrl.u32 683565275, %v3886
        %v3888 = vshll.u32 683565275, %v3885
        %v3889 = vshrl.u32 2475754826, %v3886
        %v3890 = vor.u32 %v3888, %v3889
        %v3891 = vshll.u32 2475754826, %v3885
        %v3892 = vshrl.u32 2131351028, %v3886
        %v3893 = vor.u32 %v3891, %v3892
        %v3894 = vshll.u32 2131351028, %v3885
        %v3895 = vshrl.u32 2102212464, %v3886
        %v3896 = vor.u32 %v3894, %v3895
        %v3897 = vshll.u32 2102212464, %v3885
        %v3898 = vshrl.u32 920167782, %v3886
        %v3899 = vor.u32 %v3897, %v3898
        %v3900 = vshll.u32 920167782, %v3885
        %v3901 = vshrl.u32 1326507024, %v3886
        %v3902 = vor.u32 %v3900, %v3901
        %vm3903 = vcmp.lt.s32.totalorder %v3884, 1
        %vm3904 = vcmp.lt.s32.totalorder %v3884, 2
        %vm3905 = vcmp.lt.s32.totalorder %v3884, 3
        %vm3906 = vcmp.lt.s32.totalorder %v3884, 4
        %v3907 = vsel %vm3903, %v3887, %v3890
        %v3908 = vsel %vm3906, %v3896, 2102212464
        %v3909 = vsel %vm3905, %v3893, %v3908
        %v3910 = vsel %vm3904, %v3907, %v3909
        %v3911 = vsel %vm3903, %v3890, %v3893
        %v3912 = vsel %vm3906, %v3899, 920167782
        %v3913 = vsel %vm3905, %v3896, %v3912
        %v3914 = vsel %vm3904, %v3911, %v3913
        %v3915 = vsel %vm3903, %v3893, %v3896
        %v3916 = vsel %vm3906, %v3902, 1326507024
        %v3917 = vsel %vm3905, %v3899, %v3916
        %v3918 = vsel %vm3904, %v3915, %v3917
        %v3919 = vshll.u32 %v3879, 8
        %v3920 = vand.u32 %v3919, 65535
        %v3921 = vshrl.u32 %v3919, 16
        %v3922 = vand.u32 %v3918, 65535
        %v3923 = vshrl.u32 %v3918, 16
        %v3924 = vmul.u32 %v3920, %v3922
        %v3925 = vmul.u32 %v3920, %v3923
        %v3926 = vmul.u32 %v3921, %v3922
        %v3927 = vmul.u32 %v3921, %v3923
        %v3928 = vshll.u32 %v3925, 16
        %v3929 = vshrl.u32 %v3925, 16
        %v3930 = vshll.u32 %v3926, 16
        %v3931 = vshrl.u32 %v3926, 16
        %vm3932 = vc.u32 %v3924, %v3928
        %v3933 = vsel %vm3932, 1, 0
        %v3934 = vadd.s32 %v3924, %v3928
        %v3935 = vadd.s32 %v3927, %v3933
        %vm3936 = vc.u32 %v3934, %v3930
        %v3937 = vsel %vm3936, 1, 0
        %v3938 = vadd.s32 %v3934, %v3930
        %v3939 = vadd.s32 %v3935, %v3937
        %v3940 = vadd.s32 %v3939, %v3929
        %v3941 = vadd.s32 %v3940, %v3931
        %v3942 = vand.u32 %v3919, 65535
        %v3943 = vshrl.u32 %v3919, 16
        %v3944 = vand.u32 %v3914, 65535
        %v3945 = vshrl.u32 %v3914, 16
        %v3946 = vmul.u32 %v3942, %v3944
        %v3947 = vmul.u32 %v3942, %v3945
        %v3948 = vmul.u32 %v3943, %v3944
        %v3949 = vmul.u32 %v3943, %v3945
        %v3950 = vshll.u32 %v3947, 16
        %v3951 = vshrl.u32 %v3947, 16
        %v3952 = vshll.u32 %v3948, 16
        %v3953 = vshrl.u32 %v3948, 16
        %vm3954 = vc.u32 %v3946, %v3950
        %v3955 = vsel %vm3954, 1, 0
        %v3956 = vadd.s32 %v3946, %v3950
        %v3957 = vadd.s32 %v3949, %v3955
        %vm3958 = vc.u32 %v3956, %v3952
        %v3959 = vsel %vm3958, 1, 0
        %v3960 = vadd.s32 %v3956, %v3952
        %v3961 = vadd.s32 %v3957, %v3959
        %v3962 = vadd.s32 %v3961, %v3951
        %v3963 = vadd.s32 %v3962, %v3953
        %v3964 = vmul.u32 %v3919, %v3910
        %v3965 = vadd.s32 %v3941, %v3960
        %vm3966 = vc.u32 %v3941, %v3960
        %v3967 = vadd.s32 %v3963, 1
        %v3968 = vsel %vm3966, %v3967, %v3963
        %v3969 = vadd.s32 %v3964, %v3968
        %v3970 = vadd.s32 %v3969, 536870912
        %v3971 = vshrl.u32 %v3970, 30
        %v3972 = vshll.u32 %v3971, 30
        %v3973 = vsub.s32 %v3969, %v3972
        %vm3974 = vcmp.lt.s32.totalorder %v3973, 0
        %v3975 = vsub.s32 0, %v3973
        %v3976 = vsel %vm3974, %v3975, %v3973
        %v3977 = vclz %v3976
        %v3978 = vsub.s32 %v3977, 2
        %vm3979 = vcmp.gt.s32.totalorder 0, %v3978
        %v3980 = vsel %vm3979, 0, %v3978
        %v3981 = vsub.s32 32, %v3980
        %v3982 = vshll.u32 %v3973, %v3980
        %v3983 = vshrl.u32 %v3965, %v3981
        %v3984 = vor.u32 %v3982, %v3983
        %v3985 = vsub.s32 4294967266, %v3980
        %v3986 = vadd.s32 %v3985, 127
        %v3987 = vshll.u32 %v3986, 23
        %v3988 = vor.u32 4788187, %v3987
        %v3989 = vand.u32 2147483647, %v3988
        %v3991 = vcvt.s32.f32 %v3984
        %v3992 = vmul.f32 %v3991, %v3989
        %v3993 = vxor.u32 %v3992, 2147483648
        %v3994 = vsel %vm3873, %v3993, %v3992
        %v3995 = vsub.s32 4, %v3971
        %v3996 = vsel %vm3873, %v3995, %v3971
        %v3997 = vsel %vm3872, %v747, %v3994
        %v3998 = vsel %vm3872, 0, %v3996
        %v3999 = vmul.f32 %v3997, %v3997
        %v4000 = vmul.f32 %v3999, -0.001358992
        %v4001 = vadd.f32 %v4000, 0.041655596
        %v4002 = vmul.f32 %v3999, %v4001
        %v4003 = vadd.f32 %v4002, -0.4999988
        %v4004 = vmul.f32 %v3999, %v4003
        %v4005 = vadd.f32 1.0, %v4004
        %v4006 = vmul.f32 %v3997, %v3997
        %v4007 = vmul.f32 %v4006, -0.00019511016
        %v4008 = vadd.f32 %v4007, 0.008332121
        %v4009 = vmul.f32 %v4006, %v4008
        %v4010 = vadd.f32 %v4009, -0.16666654
        %v4011 = vmul.f32 %v4006, %v4010
        %v4012 = vadd.f32 %v4011, 1.0
        %v4013 = vmul.f32 %v4012, %v3997
        %vm4014 = vweird.f32 %v747
        %v4015 = vand.u32 %v3998, 3
        %vm4016 = vcmp.lt.s32.totalorder %v4015, 2
        %vm4017 = vcmp.eq.s32.totalorder %v4015, 0
        %v4018 = vxor.u32 %v4013, 2147483648
        %v4019 = vsel %vm4017, %v4005, %v4018
        %vm4020 = vcmp.eq.s32.totalorder %v4015, 2
        %v4021 = vxor.u32 %v4005, 2147483648
        %v4022 = vsel %vm4020, %v4021, %v4013
        %v4023 = vsel %vm4016, %v4019, %v4022
        %v4024 = vsel %vm4014, nan, %v4023
        %v4025 = vand.u32 2147483647, %v748
        %vm4026 = vcmp.le.f32.partialorder %v4025, 0.7853982
        %vm4027 = vcmp.lt.s32.totalorder %v748, 0
        %v4028 = vand.u32 %v748, 2139095040
        %v4029 = vshrl.u32 %v4028, 23
        %v4030 = vsub.s32 %v4029, 127
        %v4031 = vand.u32 2147483647, %v748
        %v4032 = vand.u32 %v4031, 8388607
        %v4033 = vor.u32 %v4032, 8388608
        %v4034 = vsub.s32 0, %v4033
        %v4035 = vadd.s32 %v4030, 1
        %vm4036 = vcmp.gt.s32.totalorder %v4035, 0
        %v4037 = vsel %vm4036, %v4035, 0
        %v4038 = vshrl.u32 %v4037, 5
        %v4039 = vand.u32 %v4037, 31
        %v4040 = vsub.s32 32, %v4039
        %v4041 = vshrl.u32 683565275, %v4040
        %v4042 = vshll.u32 683565275, %v4039
        %v4043 = vshrl.u32 2475754826, %v4040
        %v4044 = vor.u32 %v4042, %v4043
        %v4045 = vshll.u32 2475754826, %v4039
        %v4046 = vshrl.u32 2131351028, %v4040
        %v4047 = vor.u32 %v4045, %v4046
        %v4048 = vshll.u32 2131351028, %v4039
        %v4049 = vshrl.u32 2102212464, %v4040
        %v4050 = vor.u32 %v4048, %v4049
        %v4051 = vshll.u32 2102212464, %v4039
        %v4052 = vshrl.u32 920167782, %v4040
        %v4053 = vor.u32 %v4051, %v4052
        %v4054 = vshll.u32 920167782, %v4039
        %v4055 = vshrl.u32 1326507024, %v4040
        %v4056 = vor.u32 %v4054, %v4055
        %vm4057 = vcmp.lt.s32.totalorder %v4038, 1
        %vm4058 = vcmp.lt.s32.totalorder %v4038, 2
        %vm4059 = vcmp.lt.s32.totalorder %v4038, 3
        %vm4060 = vcmp.lt.s32.totalorder %v4038, 4
        %v4061 = vsel %vm4057, %v4041, %v4044
        %v4062 = vsel %vm4060, %v4050, 2102212464
        %v4063 = vsel %vm4059, %v4047, %v4062
        %v4064 = vsel %vm4058, %v4061, %v4063
        %v4065 = vsel %vm4057, %v4044, %v4047
        %v4066 = vsel %vm4060, %v4053, 920167782
        %v4067 = vsel %vm4059, %v4050, %v4066
        %v4068 = vsel %vm4058, %v4065, %v4067
        %v4069 = vsel %vm4057, %v4047, %v4050
        %v4070 = vsel %vm4060, %v4056, 1326507024
        %v4071 = vsel %vm4059, %v4053, %v4070
        %v4072 = vsel %vm4058, %v4069, %v4071
        %v4073 = vshll.u32 %v4033, 8
        %v4074 = vand.u32 %v4073, 65535
        %v4075 = vshrl.u32 %v4073, 16
        %v4076 = vand.u32 %v4072, 65535
        %v4077 = vshrl.u32 %v4072, 16
        %v4078 = vmul.u32 %v4074, %v4076
        %v4079 = vmul.u32 %v4074, %v4077
        %v4080 = vmul.u32 %v4075, %v4076
        %v4081 = vmul.u32 %v4075, %v4077
        %v4082 = vshll.u32 %v4079, 16
        %v4083 = vshrl.u32 %v4079, 16
        %v4084 = vshll.u32 %v4080, 16
        %v4085 = vshrl.u32 %v4080, 16
        %vm4086 = vc.u32 %v4078, %v4082
        %v4087 = vsel %vm4086, 1, 0
        %v4088 = vadd.s32 %v4078, %v4082
        %v4089 = vadd.s32 %v4081, %v4087
        %vm4090 = vc.u32 %v4088, %v4084
        %v4091 = vsel %vm4090, 1, 0
        %v4092 = vadd.s32 %v4088, %v4084
        %v4093 = vadd.s32 %v4089, %v4091
        %v4094 = vadd.s32 %v4093, %v4083
        %v4095 = vadd.s32 %v4094, %v4085
        %v4096 = vand.u32 %v4073, 65535
        %v4097 = vshrl.u32 %v4073, 16
        %v4098 = vand.u32 %v4068, 65535
        %v4099 = vshrl.u32 %v4068, 16
        %v4100 = vmul.u32 %v4096, %v4098
        %v4101 = vmul.u32 %v4096, %v4099
        %v4102 = vmul.u32 %v4097, %v4098
        %v4103 = vmul.u32 %v4097, %v4099
        %v4104 = vshll.u32 %v4101, 16
        %v4105 = vshrl.u32 %v4101, 16
        %v4106 = vshll.u32 %v4102, 16
        %v4107 = vshrl.u32 %v4102, 16
        %vm4108 = vc.u32 %v4100, %v4104
        %v4109 = vsel %vm4108, 1, 0
        %v4110 = vadd.s32 %v4100, %v4104
        %v4111 = vadd.s32 %v4103, %v4109
        %vm4112 = vc.u32 %v4110, %v4106
        %v4113 = vsel %vm4112, 1, 0
        %v4114 = vadd.s32 %v4110, %v4106
        %v4115 = vadd.s32 %v4111, %v4113
        %v4116 = vadd.s32 %v4115, %v4105
        %v4117 = vadd.s32 %v4116, %v4107
        %v4118 = vmul.u32 %v4073, %v4064
        %v4119 = vadd.s32 %v4095, %v4114
        %vm4120 = vc.u32 %v4095, %v4114
        %v4121 = vadd.s32 %v4117, 1
        %v4122 = vsel %vm4120, %v4121, %v4117
        %v4123 = vadd.s32 %v4118, %v4122
        %v4124 = vadd.s32 %v4123, 536870912
        %v4125 = vshrl.u32 %v4124, 30
        %v4126 = vshll.u32 %v4125, 30
        %v4127 = vsub.s32 %v4123, %v4126
        %vm4128 = vcmp.lt.s32.totalorder %v4127, 0
        %v4129 = vsub.s32 0, %v4127
        %v4130 = vsel %vm4128, %v4129, %v4127
        %v4131 = vclz %v4130
        %v4132 = vsub.s32 %v4131, 2
        %vm4133 = vcmp.gt.s32.totalorder 0, %v4132
        %v4134 = vsel %vm4133, 0, %v4132
        %v4135 = vsub.s32 32, %v4134
        %v4136 = vshll.u32 %v4127, %v4134
        %v4137 = vshrl.u32 %v4119, %v4135
        %v4138 = vor.u32 %v4136, %v4137
        %v4139 = vsub.s32 4294967266, %v4134
        %v4140 = vadd.s32 %v4139, 127
        %v4141 = vshll.u32 %v4140, 23
        %v4142 = vor.u32 4788187, %v4141
        %v4143 = vand.u32 2147483647, %v4142
        %v4145 = vcvt.s32.f32 %v4138
        %v4146 = vmul.f32 %v4145, %v4143
        %v4147 = vxor.u32 %v4146, 2147483648
        %v4148 = vsel %vm4027, %v4147, %v4146
        %v4149 = vsub.s32 4, %v4125
        %v4150 = vsel %vm4027, %v4149, %v4125
        %v4151 = vsel %vm4026, %v748, %v4148
        %v4152 = vsel %vm4026, 0, %v4150
        %v4153 = vmul.f32 %v4151, %v4151
        %v4154 = vmul.f32 %v4153, -0.001358992
        %v4155 = vadd.f32 %v4154, 0.041655596
        %v4156 = vmul.f32 %v4153, %v4155
        %v4157 = vadd.f32 %v4156, -0.4999988
        %v4158 = vmul.f32 %v4153, %v4157
        %v4159 = vadd.f32 1.0, %v4158
        %v4160 = vmul.f32 %v4151, %v4151
        %v4161 = vmul.f32 %v4160, -0.00019511016
        %v4162 = vadd.f32 %v4161, 0.008332121
        %v4163 = vmul.f32 %v4160, %v4162
        %v4164 = vadd.f32 %v4163, -0.16666654
        %v4165 = vmul.f32 %v4160, %v4164
        %v4166 = vadd.f32 %v4165, 1.0
        %v4167 = vmul.f32 %v4166, %v4151
        %vm4168 = vweird.f32 %v748
        %v4169 = vand.u32 %v4152, 3
        %vm4170 = vcmp.lt.s32.totalorder %v4169, 2
        %vm4171 = vcmp.eq.s32.totalorder %v4169, 0
        %v4172 = vxor.u32 %v4167, 2147483648
        %v4173 = vsel %vm4171, %v4159, %v4172
        %vm4174 = vcmp.eq.s32.totalorder %v4169, 2
        %v4175 = vxor.u32 %v4159, 2147483648
        %v4176 = vsel %vm4174, %v4175, %v4167
        %v4177 = vsel %vm4170, %v4173, %v4176
        %v4178 = vsel %vm4168, nan, %v4177
        %v4179 = vand.u32 2147483647, %v749
        %vm4180 = vcmp.le.f32.partialorder %v4179, 0.7853982
        %vm4181 = vcmp.lt.s32.totalorder %v749, 0
        %v4182 = vand.u32 %v749, 2139095040
        %v4183 = vshrl.u32 %v4182, 23
        %v4184 = vsub.s32 %v4183, 127
        %v4185 = vand.u32 2147483647, %v749
        %v4186 = vand.u32 %v4185, 8388607
        %v4187 = vor.u32 %v4186, 8388608
        %v4188 = vsub.s32 0, %v4187
        %v4189 = vadd.s32 %v4184, 1
        %vm4190 = vcmp.gt.s32.totalorder %v4189, 0
        %v4191 = vsel %vm4190, %v4189, 0
        %v4192 = vshrl.u32 %v4191, 5
        %v4193 = vand.u32 %v4191, 31
        %v4194 = vsub.s32 32, %v4193
        %v4195 = vshrl.u32 683565275, %v4194
        %v4196 = vshll.u32 683565275, %v4193
        %v4197 = vshrl.u32 2475754826, %v4194
        %v4198 = vor.u32 %v4196, %v4197
        %v4199 = vshll.u32 2475754826, %v4193
        %v4200 = vshrl.u32 2131351028, %v4194
        %v4201 = vor.u32 %v4199, %v4200
        %v4202 = vshll.u32 2131351028, %v4193
        %v4203 = vshrl.u32 2102212464, %v4194
        %v4204 = vor.u32 %v4202, %v4203
        %v4205 = vshll.u32 2102212464, %v4193
        %v4206 = vshrl.u32 920167782, %v4194
        %v4207 = vor.u32 %v4205, %v4206
        %v4208 = vshll.u32 920167782, %v4193
        %v4209 = vshrl.u32 1326507024, %v4194
        %v4210 = vor.u32 %v4208, %v4209
        %vm4211 = vcmp.lt.s32.totalorder %v4192, 1
        %vm4212 = vcmp.lt.s32.totalorder %v4192, 2
        %vm4213 = vcmp.lt.s32.totalorder %v4192, 3
        %vm4214 = vcmp.lt.s32.totalorder %v4192, 4
        %v4215 = vsel %vm4211, %v4195, %v4198
        %v4216 = vsel %vm4214, %v4204, 2102212464
        %v4217 = vsel %vm4213, %v4201, %v4216
        %v4218 = vsel %vm4212, %v4215, %v4217
        %v4219 = vsel %vm4211, %v4198, %v4201
        %v4220 = vsel %vm4214, %v4207, 920167782
        %v4221 = vsel %vm4213, %v4204, %v4220
        %v4222 = vsel %vm4212, %v4219, %v4221
        %v4223 = vsel %vm4211, %v4201, %v4204
        %v4224 = vsel %vm4214, %v4210, 1326507024
        %v4225 = vsel %vm4213, %v4207, %v4224
        %v4226 = vsel %vm4212, %v4223, %v4225
        %v4227 = vshll.u32 %v4187, 8
        %v4228 = vand.u32 %v4227, 65535
        %v4229 = vshrl.u32 %v4227, 16
        %v4230 = vand.u32 %v4226, 65535
        %v4231 = vshrl.u32 %v4226, 16
        %v4232 = vmul.u32 %v4228, %v4230
        %v4233 = vmul.u32 %v4228, %v4231
        %v4234 = vmul.u32 %v4229, %v4230
        %v4235 = vmul.u32 %v4229, %v4231
        %v4236 = vshll.u32 %v4233, 16
        %v4237 = vshrl.u32 %v4233, 16
        %v4238 = vshll.u32 %v4234, 16
        %v4239 = vshrl.u32 %v4234, 16
        %vm4240 = vc.u32 %v4232, %v4236
        %v4241 = vsel %vm4240, 1, 0
        %v4242 = vadd.s32 %v4232, %v4236
        %v4243 = vadd.s32 %v4235, %v4241
        %vm4244 = vc.u32 %v4242, %v4238
        %v4245 = vsel %vm4244, 1, 0
        %v4246 = vadd.s32 %v4242, %v4238
        %v4247 = vadd.s32 %v4243, %v4245
        %v4248 = vadd.s32 %v4247, %v4237
        %v4249 = vadd.s32 %v4248, %v4239
        %v4250 = vand.u32 %v4227, 65535
        %v4251 = vshrl.u32 %v4227, 16
        %v4252 = vand.u32 %v4222, 65535
        %v4253 = vshrl.u32 %v4222, 16
        %v4254 = vmul.u32 %v4250, %v4252
        %v4255 = vmul.u32 %v4250, %v4253
        %v4256 = vmul.u32 %v4251, %v4252
        %v4257 = vmul.u32 %v4251, %v4253
        %v4258 = vshll.u32 %v4255, 16
        %v4259 = vshrl.u32 %v4255, 16
        %v4260 = vshll.u32 %v4256, 16
        %v4261 = vshrl.u32 %v4256, 16
        %vm4262 = vc.u32 %v4254, %v4258
        %v4263 = vsel %vm4262, 1, 0
        %v4264 = vadd.s32 %v4254, %v4258
        %v4265 = vadd.s32 %v4257, %v4263
        %vm4266 = vc.u32 %v4264, %v4260
        %v4267 = vsel %vm4266, 1, 0
        %v4268 = vadd.s32 %v4264, %v4260
        %v4269 = vadd.s32 %v4265, %v4267
        %v4270 = vadd.s32 %v4269, %v4259
        %v4271 = vadd.s32 %v4270, %v4261
        %v4272 = vmul.u32 %v4227, %v4218
        %v4273 = vadd.s32 %v4249, %v4268
        %vm4274 = vc.u32 %v4249, %v4268
        %v4275 = vadd.s32 %v4271, 1
        %v4276 = vsel %vm4274, %v4275, %v4271
        %v4277 = vadd.s32 %v4272, %v4276
        %v4278 = vadd.s32 %v4277, 536870912
        %v4279 = vshrl.u32 %v4278, 30
        %v4280 = vshll.u32 %v4279, 30
        %v4281 = vsub.s32 %v4277, %v4280
        %vm4282 = vcmp.lt.s32.totalorder %v4281, 0
        %v4283 = vsub.s32 0, %v4281
        %v4284 = vsel %vm4282, %v4283, %v4281
        %v4285 = vclz %v4284
        %v4286 = vsub.s32 %v4285, 2
        %vm4287 = vcmp.gt.s32.totalorder 0, %v4286
        %v4288 = vsel %vm4287, 0, %v4286
        %v4289 = vsub.s32 32, %v4288
        %v4290 = vshll.u32 %v4281, %v4288
        %v4291 = vshrl.u32 %v4273, %v4289
        %v4292 = vor.u32 %v4290, %v4291
        %v4293 = vsub.s32 4294967266, %v4288
        %v4294 = vadd.s32 %v4293, 127
        %v4295 = vshll.u32 %v4294, 23
        %v4296 = vor.u32 4788187, %v4295
        %v4297 = vand.u32 2147483647, %v4296
        %v4299 = vcvt.s32.f32 %v4292
        %v4300 = vmul.f32 %v4299, %v4297
        %v4301 = vxor.u32 %v4300, 2147483648
        %v4302 = vsel %vm4181, %v4301, %v4300
        %v4303 = vsub.s32 4, %v4279
        %v4304 = vsel %vm4181, %v4303, %v4279
        %v4305 = vsel %vm4180, %v749, %v4302
        %v4306 = vsel %vm4180, 0, %v4304
        %v4307 = vmul.f32 %v4305, %v4305
        %v4308 = vmul.f32 %v4307, -0.001358992
        %v4309 = vadd.f32 %v4308, 0.041655596
        %v4310 = vmul.f32 %v4307, %v4309
        %v4311 = vadd.f32 %v4310, -0.4999988
        %v4312 = vmul.f32 %v4307, %v4311
        %v4313 = vadd.f32 1.0, %v4312
        %v4314 = vmul.f32 %v4305, %v4305
        %v4315 = vmul.f32 %v4314, -0.00019511016
        %v4316 = vadd.f32 %v4315, 0.008332121
        %v4317 = vmul.f32 %v4314, %v4316
        %v4318 = vadd.f32 %v4317, -0.16666654
        %v4319 = vmul.f32 %v4314, %v4318
        %v4320 = vadd.f32 %v4319, 1.0
        %v4321 = vmul.f32 %v4320, %v4305
        %vm4322 = vweird.f32 %v749
        %v4323 = vand.u32 %v4306, 3
        %vm4324 = vcmp.lt.s32.totalorder %v4323, 2
        %vm4325 = vcmp.eq.s32.totalorder %v4323, 0
        %v4326 = vxor.u32 %v4321, 2147483648
        %v4327 = vsel %vm4325, %v4313, %v4326
        %vm4328 = vcmp.eq.s32.totalorder %v4323, 2
        %v4329 = vxor.u32 %v4313, 2147483648
        %v4330 = vsel %vm4328, %v4329, %v4321
        %v4331 = vsel %vm4324, %v4327, %v4330
        %v4332 = vsel %vm4322, nan, %v4331
        %v4333 = vand.u32 2147483647, %v750
        %vm4334 = vcmp.le.f32.partialorder %v4333, 0.7853982
        %vm4335 = vcmp.lt.s32.totalorder %v750, 0
        %v4336 = vand.u32 %v750, 2139095040
        %v4337 = vshrl.u32 %v4336, 23
        %v4338 = vsub.s32 %v4337, 127
        %v4339 = vand.u32 2147483647, %v750
        %v4340 = vand.u32 %v4339, 8388607
        %v4341 = vor.u32 %v4340, 8388608
        %v4342 = vsub.s32 0, %v4341
        %v4343 = vadd.s32 %v4338, 1
        %vm4344 = vcmp.gt.s32.totalorder %v4343, 0
        %v4345 = vsel %vm4344, %v4343, 0
        %v4346 = vshrl.u32 %v4345, 5
        %v4347 = vand.u32 %v4345, 31
        %v4348 = vsub.s32 32, %v4347
        %v4349 = vshrl.u32 683565275, %v4348
        %v4350 = vshll.u32 683565275, %v4347
        %v4351 = vshrl.u32 2475754826, %v4348
        %v4352 = vor.u32 %v4350, %v4351
        %v4353 = vshll.u32 2475754826, %v4347
        %v4354 = vshrl.u32 2131351028, %v4348
        %v4355 = vor.u32 %v4353, %v4354
        %v4356 = vshll.u32 2131351028, %v4347
        %v4357 = vshrl.u32 2102212464, %v4348
        %v4358 = vor.u32 %v4356, %v4357
        %v4359 = vshll.u32 2102212464, %v4347
        %v4360 = vshrl.u32 920167782, %v4348
        %v4361 = vor.u32 %v4359, %v4360
        %v4362 = vshll.u32 920167782, %v4347
        %v4363 = vshrl.u32 1326507024, %v4348
        %v4364 = vor.u32 %v4362, %v4363
        %vm4365 = vcmp.lt.s32.totalorder %v4346, 1
        %vm4366 = vcmp.lt.s32.totalorder %v4346, 2
        %vm4367 = vcmp.lt.s32.totalorder %v4346, 3
        %vm4368 = vcmp.lt.s32.totalorder %v4346, 4
        %v4369 = vsel %vm4365, %v4349, %v4352
        %v4370 = vsel %vm4368, %v4358, 2102212464
        %v4371 = vsel %vm4367, %v4355, %v4370
        %v4372 = vsel %vm4366, %v4369, %v4371
        %v4373 = vsel %vm4365, %v4352, %v4355
        %v4374 = vsel %vm4368, %v4361, 920167782
        %v4375 = vsel %vm4367, %v4358, %v4374
        %v4376 = vsel %vm4366, %v4373, %v4375
        %v4377 = vsel %vm4365, %v4355, %v4358
        %v4378 = vsel %vm4368, %v4364, 1326507024
        %v4379 = vsel %vm4367, %v4361, %v4378
        %v4380 = vsel %vm4366, %v4377, %v4379
        %v4381 = vshll.u32 %v4341, 8
        %v4382 = vand.u32 %v4381, 65535
        %v4383 = vshrl.u32 %v4381, 16
        %v4384 = vand.u32 %v4380, 65535
        %v4385 = vshrl.u32 %v4380, 16
        %v4386 = vmul.u32 %v4382, %v4384
        %v4387 = vmul.u32 %v4382, %v4385
        %v4388 = vmul.u32 %v4383, %v4384
        %v4389 = vmul.u32 %v4383, %v4385
        %v4390 = vshll.u32 %v4387, 16
        %v4391 = vshrl.u32 %v4387, 16
        %v4392 = vshll.u32 %v4388, 16
        %v4393 = vshrl.u32 %v4388, 16
        %vm4394 = vc.u32 %v4386, %v4390
        %v4395 = vsel %vm4394, 1, 0
        %v4396 = vadd.s32 %v4386, %v4390
        %v4397 = vadd.s32 %v4389, %v4395
        %vm4398 = vc.u32 %v4396, %v4392
        %v4399 = vsel %vm4398, 1, 0
        %v4400 = vadd.s32 %v4396, %v4392
        %v4401 = vadd.s32 %v4397, %v4399
        %v4402 = vadd.s32 %v4401, %v4391
        %v4403 = vadd.s32 %v4402, %v4393
        %v4404 = vand.u32 %v4381, 65535
        %v4405 = vshrl.u32 %v4381, 16
        %v4406 = vand.u32 %v4376, 65535
        %v4407 = vshrl.u32 %v4376, 16
        %v4408 = vmul.u32 %v4404, %v4406
        %v4409 = vmul.u32 %v4404, %v4407
        %v4410 = vmul.u32 %v4405, %v4406
        %v4411 = vmul.u32 %v4405, %v4407
        %v4412 = vshll.u32 %v4409, 16
        %v4413 = vshrl.u32 %v4409, 16
        %v4414 = vshll.u32 %v4410, 16
        %v4415 = vshrl.u32 %v4410, 16
        %vm4416 = vc.u32 %v4408, %v4412
        %v4417 = vsel %vm4416, 1, 0
        %v4418 = vadd.s32 %v4408, %v4412
        %v4419 = vadd.s32 %v4411, %v4417
        %vm4420 = vc.u32 %v4418, %v4414
        %v4421 = vsel %vm4420, 1, 0
        %v4422 = vadd.s32 %v4418, %v4414
        %v4423 = vadd.s32 %v4419, %v4421
        %v4424 = vadd.s32 %v4423, %v4413
        %v4425 = vadd.s32 %v4424, %v4415
        %v4426 = vmul.u32 %v4381, %v4372
        %v4427 = vadd.s32 %v4403, %v4422
        %vm4428 = vc.u32 %v4403, %v4422
        %v4429 = vadd.s32 %v4425, 1
        %v4430 = vsel %vm4428, %v4429, %v4425
        %v4431 = vadd.s32 %v4426, %v4430
        %v4432 = vadd.s32 %v4431, 536870912
        %v4433 = vshrl.u32 %v4432, 30
        %v4434 = vshll.u32 %v4433, 30
        %v4435 = vsub.s32 %v4431, %v4434
        %vm4436 = vcmp.lt.s32.totalorder %v4435, 0
        %v4437 = vsub.s32 0, %v4435
        %v4438 = vsel %vm4436, %v4437, %v4435
        %v4439 = vclz %v4438
        %v4440 = vsub.s32 %v4439, 2
        %vm4441 = vcmp.gt.s32.totalorder 0, %v4440
        %v4442 = vsel %vm4441, 0, %v4440
        %v4443 = vsub.s32 32, %v4442
        %v4444 = vshll.u32 %v4435, %v4442
        %v4445 = vshrl.u32 %v4427, %v4443
        %v4446 = vor.u32 %v4444, %v4445
        %v4447 = vsub.s32 4294967266, %v4442
        %v4448 = vadd.s32 %v4447, 127
        %v4449 = vshll.u32 %v4448, 23
        %v4450 = vor.u32 4788187, %v4449
        %v4451 = vand.u32 2147483647, %v4450
        %v4453 = vcvt.s32.f32 %v4446
        %v4454 = vmul.f32 %v4453, %v4451
        %v4455 = vxor.u32 %v4454, 2147483648
        %v4456 = vsel %vm4335, %v4455, %v4454
        %v4457 = vsub.s32 4, %v4433
        %v4458 = vsel %vm4335, %v4457, %v4433
        %v4459 = vsel %vm4334, %v750, %v4456
        %v4460 = vsel %vm4334, 0, %v4458
        %v4461 = vmul.f32 %v4459, %v4459
        %v4462 = vmul.f32 %v4461, -0.001358992
        %v4463 = vadd.f32 %v4462, 0.041655596
        %v4464 = vmul.f32 %v4461, %v4463
        %v4465 = vadd.f32 %v4464, -0.4999988
        %v4466 = vmul.f32 %v4461, %v4465
        %v4467 = vadd.f32 1.0, %v4466
        %v4468 = vmul.f32 %v4459, %v4459
        %v4469 = vmul.f32 %v4468, -0.00019511016
        %v4470 = vadd.f32 %v4469, 0.008332121
        %v4471 = vmul.f32 %v4468, %v4470
        %v4472 = vadd.f32 %v4471, -0.16666654
        %v4473 = vmul.f32 %v4468, %v4472
        %v4474 = vadd.f32 %v4473, 1.0
        %v4475 = vmul.f32 %v4474, %v4459
        %vm4476 = vweird.f32 %v750
        %v4477 = vand.u32 %v4460, 3
        %vm4478 = vcmp.lt.s32.totalorder %v4477, 2
        %vm4479 = vcmp.eq.s32.totalorder %v4477, 0
        %v4480 = vxor.u32 %v4475, 2147483648
        %v4481 = vsel %vm4479, %v4467, %v4480
        %vm4482 = vcmp.eq.s32.totalorder %v4477, 2
        %v4483 = vxor.u32 %v4467, 2147483648
        %v4484 = vsel %vm4482, %v4483, %v4475
        %v4485 = vsel %vm4478, %v4481, %v4484
        %v4486 = vsel %vm4476, nan, %v4485
        %v4487 = vand.u32 2147483647, %v751
        %vm4488 = vcmp.le.f32.partialorder %v4487, 0.7853982
        %vm4489 = vcmp.lt.s32.totalorder %v751, 0
        %v4490 = vand.u32 %v751, 2139095040
        %v4491 = vshrl.u32 %v4490, 23
        %v4492 = vsub.s32 %v4491, 127
        %v4493 = vand.u32 2147483647, %v751
        %v4494 = vand.u32 %v4493, 8388607
        %v4495 = vor.u32 %v4494, 8388608
        %v4496 = vsub.s32 0, %v4495
        %v4497 = vadd.s32 %v4492, 1
        %vm4498 = vcmp.gt.s32.totalorder %v4497, 0
        %v4499 = vsel %vm4498, %v4497, 0
        %v4500 = vshrl.u32 %v4499, 5
        %v4501 = vand.u32 %v4499, 31
        %v4502 = vsub.s32 32, %v4501
        %v4503 = vshrl.u32 683565275, %v4502
        %v4504 = vshll.u32 683565275, %v4501
        %v4505 = vshrl.u32 2475754826, %v4502
        %v4506 = vor.u32 %v4504, %v4505
        %v4507 = vshll.u32 2475754826, %v4501
        %v4508 = vshrl.u32 2131351028, %v4502
        %v4509 = vor.u32 %v4507, %v4508
        %v4510 = vshll.u32 2131351028, %v4501
        %v4511 = vshrl.u32 2102212464, %v4502
        %v4512 = vor.u32 %v4510, %v4511
        %v4513 = vshll.u32 2102212464, %v4501
        %v4514 = vshrl.u32 920167782, %v4502
        %v4515 = vor.u32 %v4513, %v4514
        %v4516 = vshll.u32 920167782, %v4501
        %v4517 = vshrl.u32 1326507024, %v4502
        %v4518 = vor.u32 %v4516, %v4517
        %vm4519 = vcmp.lt.s32.totalorder %v4500, 1
        %vm4520 = vcmp.lt.s32.totalorder %v4500, 2
        %vm4521 = vcmp.lt.s32.totalorder %v4500, 3
        %vm4522 = vcmp.lt.s32.totalorder %v4500, 4
        %v4523 = vsel %vm4519, %v4503, %v4506
        %v4524 = vsel %vm4522, %v4512, 2102212464
        %v4525 = vsel %vm4521, %v4509, %v4524
        %v4526 = vsel %vm4520, %v4523, %v4525
        %v4527 = vsel %vm4519, %v4506, %v4509
        %v4528 = vsel %vm4522, %v4515, 920167782
        %v4529 = vsel %vm4521, %v4512, %v4528
        %v4530 = vsel %vm4520, %v4527, %v4529
        %v4531 = vsel %vm4519, %v4509, %v4512
        %v4532 = vsel %vm4522, %v4518, 1326507024
        %v4533 = vsel %vm4521, %v4515, %v4532
        %v4534 = vsel %vm4520, %v4531, %v4533
        %v4535 = vshll.u32 %v4495, 8
        %v4536 = vand.u32 %v4535, 65535
        %v4537 = vshrl.u32 %v4535, 16
        %v4538 = vand.u32 %v4534, 65535
        %v4539 = vshrl.u32 %v4534, 16
        %v4540 = vmul.u32 %v4536, %v4538
        %v4541 = vmul.u32 %v4536, %v4539
        %v4542 = vmul.u32 %v4537, %v4538
        %v4543 = vmul.u32 %v4537, %v4539
        %v4544 = vshll.u32 %v4541, 16
        %v4545 = vshrl.u32 %v4541, 16
        %v4546 = vshll.u32 %v4542, 16
        %v4547 = vshrl.u32 %v4542, 16
        %vm4548 = vc.u32 %v4540, %v4544
        %v4549 = vsel %vm4548, 1, 0
        %v4550 = vadd.s32 %v4540, %v4544
        %v4551 = vadd.s32 %v4543, %v4549
        %vm4552 = vc.u32 %v4550, %v4546
        %v4553 = vsel %vm4552, 1, 0
        %v4554 = vadd.s32 %v4550, %v4546
        %v4555 = vadd.s32 %v4551, %v4553
        %v4556 = vadd.s32 %v4555, %v4545
        %v4557 = vadd.s32 %v4556, %v4547
        %v4558 = vand.u32 %v4535, 65535
        %v4559 = vshrl.u32 %v4535, 16
        %v4560 = vand.u32 %v4530, 65535
        %v4561 = vshrl.u32 %v4530, 16
        %v4562 = vmul.u32 %v4558, %v4560
        %v4563 = vmul.u32 %v4558, %v4561
        %v4564 = vmul.u32 %v4559, %v4560
        %v4565 = vmul.u32 %v4559, %v4561
        %v4566 = vshll.u32 %v4563, 16
        %v4567 = vshrl.u32 %v4563, 16
        %v4568 = vshll.u32 %v4564, 16
        %v4569 = vshrl.u32 %v4564, 16
        %vm4570 = vc.u32 %v4562, %v4566
        %v4571 = vsel %vm4570, 1, 0
        %v4572 = vadd.s32 %v4562, %v4566
        %v4573 = vadd.s32 %v4565, %v4571
        %vm4574 = vc.u32 %v4572, %v4568
        %v4575 = vsel %vm4574, 1, 0
        %v4576 = vadd.s32 %v4572, %v4568
        %v4577 = vadd.s32 %v4573, %v4575
        %v4578 = vadd.s32 %v4577, %v4567
        %v4579 = vadd.s32 %v4578, %v4569
        %v4580 = vmul.u32 %v4535, %v4526
        %v4581 = vadd.s32 %v4557, %v4576
        %vm4582 = vc.u32 %v4557, %v4576
        %v4583 = vadd.s32 %v4579, 1
        %v4584 = vsel %vm4582, %v4583, %v4579
        %v4585 = vadd.s32 %v4580, %v4584
        %v4586 = vadd.s32 %v4585, 536870912
        %v4587 = vshrl.u32 %v4586, 30
        %v4588 = vshll.u32 %v4587, 30
        %v4589 = vsub.s32 %v4585, %v4588
        %vm4590 = vcmp.lt.s32.totalorder %v4589, 0
        %v4591 = vsub.s32 0, %v4589
        %v4592 = vsel %vm4590, %v4591, %v4589
        %v4593 = vclz %v4592
        %v4594 = vsub.s32 %v4593, 2
        %vm4595 = vcmp.gt.s32.totalorder 0, %v4594
        %v4596 = vsel %vm4595, 0, %v4594
        %v4597 = vsub.s32 32, %v4596
        %v4598 = vshll.u32 %v4589, %v4596
        %v4599 = vshrl.u32 %v4581, %v4597
        %v4600 = vor.u32 %v4598, %v4599
        %v4601 = vsub.s32 4294967266, %v4596
        %v4602 = vadd.s32 %v4601, 127
        %v4603 = vshll.u32 %v4602, 23
        %v4604 = vor.u32 4788187, %v4603
        %v4605 = vand.u32 2147483647, %v4604
        %v4607 = vcvt.s32.f32 %v4600
        %v4608 = vmul.f32 %v4607, %v4605
        %v4609 = vxor.u32 %v4608, 2147483648
        %v4610 = vsel %vm4489, %v4609, %v4608
        %v4611 = vsub.s32 4, %v4587
        %v4612 = vsel %vm4489, %v4611, %v4587
        %v4613 = vsel %vm4488, %v751, %v4610
        %v4614 = vsel %vm4488, 0, %v4612
        %v4615 = vmul.f32 %v4613, %v4613
        %v4616 = vmul.f32 %v4615, -0.001358992
        %v4617 = vadd.f32 %v4616, 0.041655596
        %v4618 = vmul.f32 %v4615, %v4617
        %v4619 = vadd.f32 %v4618, -0.4999988
        %v4620 = vmul.f32 %v4615, %v4619
        %v4621 = vadd.f32 1.0, %v4620
        %v4622 = vmul.f32 %v4613, %v4613
        %v4623 = vmul.f32 %v4622, -0.00019511016
        %v4624 = vadd.f32 %v4623, 0.008332121
        %v4625 = vmul.f32 %v4622, %v4624
        %v4626 = vadd.f32 %v4625, -0.16666654
        %v4627 = vmul.f32 %v4622, %v4626
        %v4628 = vadd.f32 %v4627, 1.0
        %v4629 = vmul.f32 %v4628, %v4613
        %vm4630 = vweird.f32 %v751
        %v4631 = vand.u32 %v4614, 3
        %vm4632 = vcmp.lt.s32.totalorder %v4631, 2
        %vm4633 = vcmp.eq.s32.totalorder %v4631, 0
        %v4634 = vxor.u32 %v4629, 2147483648
        %v4635 = vsel %vm4633, %v4621, %v4634
        %vm4636 = vcmp.eq.s32.totalorder %v4631, 2
        %v4637 = vxor.u32 %v4621, 2147483648
        %v4638 = vsel %vm4636, %v4637, %v4629
        %v4639 = vsel %vm4632, %v4635, %v4638
        %v4640 = vsel %vm4630, nan, %v4639
        %v4641 = vand.u32 2147483647, %v752
        %vm4642 = vcmp.le.f32.partialorder %v4641, 0.7853982
        %vm4643 = vcmp.lt.s32.totalorder %v752, 0
        %v4644 = vand.u32 %v752, 2139095040
        %v4645 = vshrl.u32 %v4644, 23
        %v4646 = vsub.s32 %v4645, 127
        %v4647 = vand.u32 2147483647, %v752
        %v4648 = vand.u32 %v4647, 8388607
        %v4649 = vor.u32 %v4648, 8388608
        %v4650 = vsub.s32 0, %v4649
        %v4651 = vadd.s32 %v4646, 1
        %vm4652 = vcmp.gt.s32.totalorder %v4651, 0
        %v4653 = vsel %vm4652, %v4651, 0
        %v4654 = vshrl.u32 %v4653, 5
        %v4655 = vand.u32 %v4653, 31
        %v4656 = vsub.s32 32, %v4655
        %v4657 = vshrl.u32 683565275, %v4656
        %v4658 = vshll.u32 683565275, %v4655
        %v4659 = vshrl.u32 2475754826, %v4656
        %v4660 = vor.u32 %v4658, %v4659
        %v4661 = vshll.u32 2475754826, %v4655
        %v4662 = vshrl.u32 2131351028, %v4656
        %v4663 = vor.u32 %v4661, %v4662
        %v4664 = vshll.u32 2131351028, %v4655
        %v4665 = vshrl.u32 2102212464, %v4656
        %v4666 = vor.u32 %v4664, %v4665
        %v4667 = vshll.u32 2102212464, %v4655
        %v4668 = vshrl.u32 920167782, %v4656
        %v4669 = vor.u32 %v4667, %v4668
        %v4670 = vshll.u32 920167782, %v4655
        %v4671 = vshrl.u32 1326507024, %v4656
        %v4672 = vor.u32 %v4670, %v4671
        %vm4673 = vcmp.lt.s32.totalorder %v4654, 1
        %vm4674 = vcmp.lt.s32.totalorder %v4654, 2
        %vm4675 = vcmp.lt.s32.totalorder %v4654, 3
        %vm4676 = vcmp.lt.s32.totalorder %v4654, 4
        %v4677 = vsel %vm4673, %v4657, %v4660
        %v4678 = vsel %vm4676, %v4666, 2102212464
        %v4679 = vsel %vm4675, %v4663, %v4678
        %v4680 = vsel %vm4674, %v4677, %v4679
        %v4681 = vsel %vm4673, %v4660, %v4663
        %v4682 = vsel %vm4676, %v4669, 920167782
        %v4683 = vsel %vm4675, %v4666, %v4682
        %v4684 = vsel %vm4674, %v4681, %v4683
        %v4685 = vsel %vm4673, %v4663, %v4666
        %v4686 = vsel %vm4676, %v4672, 1326507024
        %v4687 = vsel %vm4675, %v4669, %v4686
        %v4688 = vsel %vm4674, %v4685, %v4687
        %v4689 = vshll.u32 %v4649, 8
        %v4690 = vand.u32 %v4689, 65535
        %v4691 = vshrl.u32 %v4689, 16
        %v4692 = vand.u32 %v4688, 65535
        %v4693 = vshrl.u32 %v4688, 16
        %v4694 = vmul.u32 %v4690, %v4692
        %v4695 = vmul.u32 %v4690, %v4693
        %v4696 = vmul.u32 %v4691, %v4692
        %v4697 = vmul.u32 %v4691, %v4693
        %v4698 = vshll.u32 %v4695, 16
        %v4699 = vshrl.u32 %v4695, 16
        %v4700 = vshll.u32 %v4696, 16
        %v4701 = vshrl.u32 %v4696, 16
        %vm4702 = vc.u32 %v4694, %v4698
        %v4703 = vsel %vm4702, 1, 0
        %v4704 = vadd.s32 %v4694, %v4698
        %v4705 = vadd.s32 %v4697, %v4703
        %vm4706 = vc.u32 %v4704, %v4700
        %v4707 = vsel %vm4706, 1, 0
        %v4708 = vadd.s32 %v4704, %v4700
        %v4709 = vadd.s32 %v4705, %v4707
        %v4710 = vadd.s32 %v4709, %v4699
        %v4711 = vadd.s32 %v4710, %v4701
        %v4712 = vand.u32 %v4689, 65535
        %v4713 = vshrl.u32 %v4689, 16
        %v4714 = vand.u32 %v4684, 65535
        %v4715 = vshrl.u32 %v4684, 16
        %v4716 = vmul.u32 %v4712, %v4714
        %v4717 = vmul.u32 %v4712, %v4715
        %v4718 = vmul.u32 %v4713, %v4714
        %v4719 = vmul.u32 %v4713, %v4715
        %v4720 = vshll.u32 %v4717, 16
        %v4721 = vshrl.u32 %v4717, 16
        %v4722 = vshll.u32 %v4718, 16
        %v4723 = vshrl.u32 %v4718, 16
        %vm4724 = vc.u32 %v4716, %v4720
        %v4725 = vsel %vm4724, 1, 0
        %v4726 = vadd.s32 %v4716, %v4720
        %v4727 = vadd.s32 %v4719, %v4725
        %vm4728 = vc.u32 %v4726, %v4722
        %v4729 = vsel %vm4728, 1, 0
        %v4730 = vadd.s32 %v4726, %v4722
        %v4731 = vadd.s32 %v4727, %v4729
        %v4732 = vadd.s32 %v4731, %v4721
        %v4733 = vadd.s32 %v4732, %v4723
        %v4734 = vmul.u32 %v4689, %v4680
        %v4735 = vadd.s32 %v4711, %v4730
        %vm4736 = vc.u32 %v4711, %v4730
        %v4737 = vadd.s32 %v4733, 1
        %v4738 = vsel %vm4736, %v4737, %v4733
        %v4739 = vadd.s32 %v4734, %v4738
        %v4740 = vadd.s32 %v4739, 536870912
        %v4741 = vshrl.u32 %v4740, 30
        %v4742 = vshll.u32 %v4741, 30
        %v4743 = vsub.s32 %v4739, %v4742
        %vm4744 = vcmp.lt.s32.totalorder %v4743, 0
        %v4745 = vsub.s32 0, %v4743
        %v4746 = vsel %vm4744, %v4745, %v4743
        %v4747 = vclz %v4746
        %v4748 = vsub.s32 %v4747, 2
        %vm4749 = vcmp.gt.s32.totalorder 0, %v4748
        %v4750 = vsel %vm4749, 0, %v4748
        %v4751 = vsub.s32 32, %v4750
        %v4752 = vshll.u32 %v4743, %v4750
        %v4753 = vshrl.u32 %v4735, %v4751
        %v4754 = vor.u32 %v4752, %v4753
        %v4755 = vsub.s32 4294967266, %v4750
        %v4756 = vadd.s32 %v4755, 127
        %v4757 = vshll.u32 %v4756, 23
        %v4758 = vor.u32 4788187, %v4757
        %v4759 = vand.u32 2147483647, %v4758
        %v4761 = vcvt.s32.f32 %v4754
        %v4762 = vmul.f32 %v4761, %v4759
        %v4763 = vxor.u32 %v4762, 2147483648
        %v4764 = vsel %vm4643, %v4763, %v4762
        %v4765 = vsub.s32 4, %v4741
        %v4766 = vsel %vm4643, %v4765, %v4741
        %v4767 = vsel %vm4642, %v752, %v4764
        %v4768 = vsel %vm4642, 0, %v4766
        %v4769 = vmul.f32 %v4767, %v4767
        %v4770 = vmul.f32 %v4769, -0.001358992
        %v4771 = vadd.f32 %v4770, 0.041655596
        %v4772 = vmul.f32 %v4769, %v4771
        %v4773 = vadd.f32 %v4772, -0.4999988
        %v4774 = vmul.f32 %v4769, %v4773
        %v4775 = vadd.f32 1.0, %v4774
        %v4776 = vmul.f32 %v4767, %v4767
        %v4777 = vmul.f32 %v4776, -0.00019511016
        %v4778 = vadd.f32 %v4777, 0.008332121
        %v4779 = vmul.f32 %v4776, %v4778
        %v4780 = vadd.f32 %v4779, -0.16666654
        %v4781 = vmul.f32 %v4776, %v4780
        %v4782 = vadd.f32 %v4781, 1.0
        %v4783 = vmul.f32 %v4782, %v4767
        %vm4784 = vweird.f32 %v752
        %v4785 = vand.u32 %v4768, 3
        %vm4786 = vcmp.lt.s32.totalorder %v4785, 2
        %vm4787 = vcmp.eq.s32.totalorder %v4785, 0
        %v4788 = vxor.u32 %v4783, 2147483648
        %v4789 = vsel %vm4787, %v4775, %v4788
        %vm4790 = vcmp.eq.s32.totalorder %v4785, 2
        %v4791 = vxor.u32 %v4775, 2147483648
        %v4792 = vsel %vm4790, %v4791, %v4783
        %v4793 = vsel %vm4786, %v4789, %v4792
        %v4794 = vsel %vm4784, nan, %v4793
        %v4795 = vand.u32 2147483647, %v753
        %vm4796 = vcmp.le.f32.partialorder %v4795, 0.7853982
        %vm4797 = vcmp.lt.s32.totalorder %v753, 0
        %v4798 = vand.u32 %v753, 2139095040
        %v4799 = vshrl.u32 %v4798, 23
        %v4800 = vsub.s32 %v4799, 127
        %v4801 = vand.u32 2147483647, %v753
        %v4802 = vand.u32 %v4801, 8388607
        %v4803 = vor.u32 %v4802, 8388608
        %v4804 = vsub.s32 0, %v4803
        %v4805 = vadd.s32 %v4800, 1
        %vm4806 = vcmp.gt.s32.totalorder %v4805, 0
        %v4807 = vsel %vm4806, %v4805, 0
        %v4808 = vshrl.u32 %v4807, 5
        %v4809 = vand.u32 %v4807, 31
        %v4810 = vsub.s32 32, %v4809
        %v4811 = vshrl.u32 683565275, %v4810
        %v4812 = vshll.u32 683565275, %v4809
        %v4813 = vshrl.u32 2475754826, %v4810
        %v4814 = vor.u32 %v4812, %v4813
        %v4815 = vshll.u32 2475754826, %v4809
        %v4816 = vshrl.u32 2131351028, %v4810
        %v4817 = vor.u32 %v4815, %v4816
        %v4818 = vshll.u32 2131351028, %v4809
        %v4819 = vshrl.u32 2102212464, %v4810
        %v4820 = vor.u32 %v4818, %v4819
        %v4821 = vshll.u32 2102212464, %v4809
        %v4822 = vshrl.u32 920167782, %v4810
        %v4823 = vor.u32 %v4821, %v4822
        %v4824 = vshll.u32 920167782, %v4809
        %v4825 = vshrl.u32 1326507024, %v4810
        %v4826 = vor.u32 %v4824, %v4825
        %vm4827 = vcmp.lt.s32.totalorder %v4808, 1
        %vm4828 = vcmp.lt.s32.totalorder %v4808, 2
        %vm4829 = vcmp.lt.s32.totalorder %v4808, 3
        %vm4830 = vcmp.lt.s32.totalorder %v4808, 4
        %v4831 = vsel %vm4827, %v4811, %v4814
        %v4832 = vsel %vm4830, %v4820, 2102212464
        %v4833 = vsel %vm4829, %v4817, %v4832
        %v4834 = vsel %vm4828, %v4831, %v4833
        %v4835 = vsel %vm4827, %v4814, %v4817
        %v4836 = vsel %vm4830, %v4823, 920167782
        %v4837 = vsel %vm4829, %v4820, %v4836
        %v4838 = vsel %vm4828, %v4835, %v4837
        %v4839 = vsel %vm4827, %v4817, %v4820
        %v4840 = vsel %vm4830, %v4826, 1326507024
        %v4841 = vsel %vm4829, %v4823, %v4840
        %v4842 = vsel %vm4828, %v4839, %v4841
        %v4843 = vshll.u32 %v4803, 8
        %v4844 = vand.u32 %v4843, 65535
        %v4845 = vshrl.u32 %v4843, 16
        %v4846 = vand.u32 %v4842, 65535
        %v4847 = vshrl.u32 %v4842, 16
        %v4848 = vmul.u32 %v4844, %v4846
        %v4849 = vmul.u32 %v4844, %v4847
        %v4850 = vmul.u32 %v4845, %v4846
        %v4851 = vmul.u32 %v4845, %v4847
        %v4852 = vshll.u32 %v4849, 16
        %v4853 = vshrl.u32 %v4849, 16
        %v4854 = vshll.u32 %v4850, 16
        %v4855 = vshrl.u32 %v4850, 16
        %vm4856 = vc.u32 %v4848, %v4852
        %v4857 = vsel %vm4856, 1, 0
        %v4858 = vadd.s32 %v4848, %v4852
        %v4859 = vadd.s32 %v4851, %v4857
        %vm4860 = vc.u32 %v4858, %v4854
        %v4861 = vsel %vm4860, 1, 0
        %v4862 = vadd.s32 %v4858, %v4854
        %v4863 = vadd.s32 %v4859, %v4861
        %v4864 = vadd.s32 %v4863, %v4853
        %v4865 = vadd.s32 %v4864, %v4855
        %v4866 = vand.u32 %v4843, 65535
        %v4867 = vshrl.u32 %v4843, 16
        %v4868 = vand.u32 %v4838, 65535
        %v4869 = vshrl.u32 %v4838, 16
        %v4870 = vmul.u32 %v4866, %v4868
        %v4871 = vmul.u32 %v4866, %v4869
        %v4872 = vmul.u32 %v4867, %v4868
        %v4873 = vmul.u32 %v4867, %v4869
        %v4874 = vshll.u32 %v4871, 16
        %v4875 = vshrl.u32 %v4871, 16
        %v4876 = vshll.u32 %v4872, 16
        %v4877 = vshrl.u32 %v4872, 16
        %vm4878 = vc.u32 %v4870, %v4874
        %v4879 = vsel %vm4878, 1, 0
        %v4880 = vadd.s32 %v4870, %v4874
        %v4881 = vadd.s32 %v4873, %v4879
        %vm4882 = vc.u32 %v4880, %v4876
        %v4883 = vsel %vm4882, 1, 0
        %v4884 = vadd.s32 %v4880, %v4876
        %v4885 = vadd.s32 %v4881, %v4883
        %v4886 = vadd.s32 %v4885, %v4875
        %v4887 = vadd.s32 %v4886, %v4877
        %v4888 = vmul.u32 %v4843, %v4834
        %v4889 = vadd.s32 %v4865, %v4884
        %vm4890 = vc.u32 %v4865, %v4884
        %v4891 = vadd.s32 %v4887, 1
        %v4892 = vsel %vm4890, %v4891, %v4887
        %v4893 = vadd.s32 %v4888, %v4892
        %v4894 = vadd.s32 %v4893, 536870912
        %v4895 = vshrl.u32 %v4894, 30
        %v4896 = vshll.u32 %v4895, 30
        %v4897 = vsub.s32 %v4893, %v4896
        %vm4898 = vcmp.lt.s32.totalorder %v4897, 0
        %v4899 = vsub.s32 0, %v4897
        %v4900 = vsel %vm4898, %v4899, %v4897
        %v4901 = vclz %v4900
        %v4902 = vsub.s32 %v4901, 2
        %vm4903 = vcmp.gt.s32.totalorder 0, %v4902
        %v4904 = vsel %vm4903, 0, %v4902
        %v4905 = vsub.s32 32, %v4904
        %v4906 = vshll.u32 %v4897, %v4904
        %v4907 = vshrl.u32 %v4889, %v4905
        %v4908 = vor.u32 %v4906, %v4907
        %v4909 = vsub.s32 4294967266, %v4904
        %v4910 = vadd.s32 %v4909, 127
        %v4911 = vshll.u32 %v4910, 23
        %v4912 = vor.u32 4788187, %v4911
        %v4913 = vand.u32 2147483647, %v4912
        %v4915 = vcvt.s32.f32 %v4908
        %v4916 = vmul.f32 %v4915, %v4913
        %v4917 = vxor.u32 %v4916, 2147483648
        %v4918 = vsel %vm4797, %v4917, %v4916
        %v4919 = vsub.s32 4, %v4895
        %v4920 = vsel %vm4797, %v4919, %v4895
        %v4921 = vsel %vm4796, %v753, %v4918
        %v4922 = vsel %vm4796, 0, %v4920
        %v4923 = vmul.f32 %v4921, %v4921
        %v4924 = vmul.f32 %v4923, -0.001358992
        %v4925 = vadd.f32 %v4924, 0.041655596
        %v4926 = vmul.f32 %v4923, %v4925
        %v4927 = vadd.f32 %v4926, -0.4999988
        %v4928 = vmul.f32 %v4923, %v4927
        %v4929 = vadd.f32 1.0, %v4928
        %v4930 = vmul.f32 %v4921, %v4921
        %v4931 = vmul.f32 %v4930, -0.00019511016
        %v4932 = vadd.f32 %v4931, 0.008332121
        %v4933 = vmul.f32 %v4930, %v4932
        %v4934 = vadd.f32 %v4933, -0.16666654
        %v4935 = vmul.f32 %v4930, %v4934
        %v4936 = vadd.f32 %v4935, 1.0
        %v4937 = vmul.f32 %v4936, %v4921
        %vm4938 = vweird.f32 %v753
        %v4939 = vand.u32 %v4922, 3
        %vm4940 = vcmp.lt.s32.totalorder %v4939, 2
        %vm4941 = vcmp.eq.s32.totalorder %v4939, 0
        %v4942 = vxor.u32 %v4937, 2147483648
        %v4943 = vsel %vm4941, %v4929, %v4942
        %vm4944 = vcmp.eq.s32.totalorder %v4939, 2
        %v4945 = vxor.u32 %v4929, 2147483648
        %v4946 = vsel %vm4944, %v4945, %v4937
        %v4947 = vsel %vm4940, %v4943, %v4946
        %v4948 = vsel %vm4938, nan, %v4947
        %v4949 = vand.u32 2147483647, %v754
        %vm4950 = vcmp.le.f32.partialorder %v4949, 0.7853982
        %vm4951 = vcmp.lt.s32.totalorder %v754, 0
        %v4952 = vand.u32 %v754, 2139095040
        %v4953 = vshrl.u32 %v4952, 23
        %v4954 = vsub.s32 %v4953, 127
        %v4955 = vand.u32 2147483647, %v754
        %v4956 = vand.u32 %v4955, 8388607
        %v4957 = vor.u32 %v4956, 8388608
        %v4958 = vsub.s32 0, %v4957
        %v4959 = vadd.s32 %v4954, 1
        %vm4960 = vcmp.gt.s32.totalorder %v4959, 0
        %v4961 = vsel %vm4960, %v4959, 0
        %v4962 = vshrl.u32 %v4961, 5
        %v4963 = vand.u32 %v4961, 31
        %v4964 = vsub.s32 32, %v4963
        %v4965 = vshrl.u32 683565275, %v4964
        %v4966 = vshll.u32 683565275, %v4963
        %v4967 = vshrl.u32 2475754826, %v4964
        %v4968 = vor.u32 %v4966, %v4967
        %v4969 = vshll.u32 2475754826, %v4963
        %v4970 = vshrl.u32 2131351028, %v4964
        %v4971 = vor.u32 %v4969, %v4970
        %v4972 = vshll.u32 2131351028, %v4963
        %v4973 = vshrl.u32 2102212464, %v4964
        %v4974 = vor.u32 %v4972, %v4973
        %v4975 = vshll.u32 2102212464, %v4963
        %v4976 = vshrl.u32 920167782, %v4964
        %v4977 = vor.u32 %v4975, %v4976
        %v4978 = vshll.u32 920167782, %v4963
        %v4979 = vshrl.u32 1326507024, %v4964
        %v4980 = vor.u32 %v4978, %v4979
        %vm4981 = vcmp.lt.s32.totalorder %v4962, 1
        %vm4982 = vcmp.lt.s32.totalorder %v4962, 2
        %vm4983 = vcmp.lt.s32.totalorder %v4962, 3
        %vm4984 = vcmp.lt.s32.totalorder %v4962, 4
        %v4985 = vsel %vm4981, %v4965, %v4968
        %v4986 = vsel %vm4984, %v4974, 2102212464
        %v4987 = vsel %vm4983, %v4971, %v4986
        %v4988 = vsel %vm4982, %v4985, %v4987
        %v4989 = vsel %vm4981, %v4968, %v4971
        %v4990 = vsel %vm4984, %v4977, 920167782
        %v4991 = vsel %vm4983, %v4974, %v4990
        %v4992 = vsel %vm4982, %v4989, %v4991
        %v4993 = vsel %vm4981, %v4971, %v4974
        %v4994 = vsel %vm4984, %v4980, 1326507024
        %v4995 = vsel %vm4983, %v4977, %v4994
        %v4996 = vsel %vm4982, %v4993, %v4995
        %v4997 = vshll.u32 %v4957, 8
        %v4998 = vand.u32 %v4997, 65535
        %v4999 = vshrl.u32 %v4997, 16
        %v5000 = vand.u32 %v4996, 65535
        %v5001 = vshrl.u32 %v4996, 16
        %v5002 = vmul.u32 %v4998, %v5000
        %v5003 = vmul.u32 %v4998, %v5001
        %v5004 = vmul.u32 %v4999, %v5000
        %v5005 = vmul.u32 %v4999, %v5001
        %v5006 = vshll.u32 %v5003, 16
        %v5007 = vshrl.u32 %v5003, 16
        %v5008 = vshll.u32 %v5004, 16
        %v5009 = vshrl.u32 %v5004, 16
        %vm5010 = vc.u32 %v5002, %v5006
        %v5011 = vsel %vm5010, 1, 0
        %v5012 = vadd.s32 %v5002, %v5006
        %v5013 = vadd.s32 %v5005, %v5011
        %vm5014 = vc.u32 %v5012, %v5008
        %v5015 = vsel %vm5014, 1, 0
        %v5016 = vadd.s32 %v5012, %v5008
        %v5017 = vadd.s32 %v5013, %v5015
        %v5018 = vadd.s32 %v5017, %v5007
        %v5019 = vadd.s32 %v5018, %v5009
        %v5020 = vand.u32 %v4997, 65535
        %v5021 = vshrl.u32 %v4997, 16
        %v5022 = vand.u32 %v4992, 65535
        %v5023 = vshrl.u32 %v4992, 16
        %v5024 = vmul.u32 %v5020, %v5022
        %v5025 = vmul.u32 %v5020, %v5023
        %v5026 = vmul.u32 %v5021, %v5022
        %v5027 = vmul.u32 %v5021, %v5023
        %v5028 = vshll.u32 %v5025, 16
        %v5029 = vshrl.u32 %v5025, 16
        %v5030 = vshll.u32 %v5026, 16
        %v5031 = vshrl.u32 %v5026, 16
        %vm5032 = vc.u32 %v5024, %v5028
        %v5033 = vsel %vm5032, 1, 0
        %v5034 = vadd.s32 %v5024, %v5028
        %v5035 = vadd.s32 %v5027, %v5033
        %vm5036 = vc.u32 %v5034, %v5030
        %v5037 = vsel %vm5036, 1, 0
        %v5038 = vadd.s32 %v5034, %v5030
        %v5039 = vadd.s32 %v5035, %v5037
        %v5040 = vadd.s32 %v5039, %v5029
        %v5041 = vadd.s32 %v5040, %v5031
        %v5042 = vmul.u32 %v4997, %v4988
        %v5043 = vadd.s32 %v5019, %v5038
        %vm5044 = vc.u32 %v5019, %v5038
        %v5045 = vadd.s32 %v5041, 1
        %v5046 = vsel %vm5044, %v5045, %v5041
        %v5047 = vadd.s32 %v5042, %v5046
        %v5048 = vadd.s32 %v5047, 536870912
        %v5049 = vshrl.u32 %v5048, 30
        %v5050 = vshll.u32 %v5049, 30
        %v5051 = vsub.s32 %v5047, %v5050
        %vm5052 = vcmp.lt.s32.totalorder %v5051, 0
        %v5053 = vsub.s32 0, %v5051
        %v5054 = vsel %vm5052, %v5053, %v5051
        %v5055 = vclz %v5054
        %v5056 = vsub.s32 %v5055, 2
        %vm5057 = vcmp.gt.s32.totalorder 0, %v5056
        %v5058 = vsel %vm5057, 0, %v5056
        %v5059 = vsub.s32 32, %v5058
        %v5060 = vshll.u32 %v5051, %v5058
        %v5061 = vshrl.u32 %v5043, %v5059
        %v5062 = vor.u32 %v5060, %v5061
        %v5063 = vsub.s32 4294967266, %v5058
        %v5064 = vadd.s32 %v5063, 127
        %v5065 = vshll.u32 %v5064, 23
        %v5066 = vor.u32 4788187, %v5065
        %v5067 = vand.u32 2147483647, %v5066
        %v5069 = vcvt.s32.f32 %v5062
        %v5070 = vmul.f32 %v5069, %v5067
        %v5071 = vxor.u32 %v5070, 2147483648
        %v5072 = vsel %vm4951, %v5071, %v5070
        %v5073 = vsub.s32 4, %v5049
        %v5074 = vsel %vm4951, %v5073, %v5049
        %v5075 = vsel %vm4950, %v754, %v5072
        %v5076 = vsel %vm4950, 0, %v5074
        %v5077 = vmul.f32 %v5075, %v5075
        %v5078 = vmul.f32 %v5077, -0.001358992
        %v5079 = vadd.f32 %v5078, 0.041655596
        %v5080 = vmul.f32 %v5077, %v5079
        %v5081 = vadd.f32 %v5080, -0.4999988
        %v5082 = vmul.f32 %v5077, %v5081
        %v5083 = vadd.f32 1.0, %v5082
        %v5084 = vmul.f32 %v5075, %v5075
        %v5085 = vmul.f32 %v5084, -0.00019511016
        %v5086 = vadd.f32 %v5085, 0.008332121
        %v5087 = vmul.f32 %v5084, %v5086
        %v5088 = vadd.f32 %v5087, -0.16666654
        %v5089 = vmul.f32 %v5084, %v5088
        %v5090 = vadd.f32 %v5089, 1.0
        %v5091 = vmul.f32 %v5090, %v5075
        %vm5092 = vweird.f32 %v754
        %v5093 = vand.u32 %v5076, 3
        %vm5094 = vcmp.lt.s32.totalorder %v5093, 2
        %vm5095 = vcmp.eq.s32.totalorder %v5093, 0
        %v5096 = vxor.u32 %v5091, 2147483648
        %v5097 = vsel %vm5095, %v5083, %v5096
        %vm5098 = vcmp.eq.s32.totalorder %v5093, 2
        %v5099 = vxor.u32 %v5083, 2147483648
        %v5100 = vsel %vm5098, %v5099, %v5091
        %v5101 = vsel %vm5094, %v5097, %v5100
        %v5102 = vsel %vm5092, nan, %v5101
        %v5103 = vand.u32 2147483647, %v755
        %vm5104 = vcmp.le.f32.partialorder %v5103, 0.7853982
        %vm5105 = vcmp.lt.s32.totalorder %v755, 0
        %v5106 = vand.u32 %v755, 2139095040
        %v5107 = vshrl.u32 %v5106, 23
        %v5108 = vsub.s32 %v5107, 127
        %v5109 = vand.u32 2147483647, %v755
        %v5110 = vand.u32 %v5109, 8388607
        %v5111 = vor.u32 %v5110, 8388608
        %v5112 = vsub.s32 0, %v5111
        %v5113 = vadd.s32 %v5108, 1
        %vm5114 = vcmp.gt.s32.totalorder %v5113, 0
        %v5115 = vsel %vm5114, %v5113, 0
        %v5116 = vshrl.u32 %v5115, 5
        %v5117 = vand.u32 %v5115, 31
        %v5118 = vsub.s32 32, %v5117
        %v5119 = vshrl.u32 683565275, %v5118
        %v5120 = vshll.u32 683565275, %v5117
        %v5121 = vshrl.u32 2475754826, %v5118
        %v5122 = vor.u32 %v5120, %v5121
        %v5123 = vshll.u32 2475754826, %v5117
        %v5124 = vshrl.u32 2131351028, %v5118
        %v5125 = vor.u32 %v5123, %v5124
        %v5126 = vshll.u32 2131351028, %v5117
        %v5127 = vshrl.u32 2102212464, %v5118
        %v5128 = vor.u32 %v5126, %v5127
        %v5129 = vshll.u32 2102212464, %v5117
        %v5130 = vshrl.u32 920167782, %v5118
        %v5131 = vor.u32 %v5129, %v5130
        %v5132 = vshll.u32 920167782, %v5117
        %v5133 = vshrl.u32 1326507024, %v5118
        %v5134 = vor.u32 %v5132, %v5133
        %vm5135 = vcmp.lt.s32.totalorder %v5116, 1
        %vm5136 = vcmp.lt.s32.totalorder %v5116, 2
        %vm5137 = vcmp.lt.s32.totalorder %v5116, 3
        %vm5138 = vcmp.lt.s32.totalorder %v5116, 4
        %v5139 = vsel %vm5135, %v5119, %v5122
        %v5140 = vsel %vm5138, %v5128, 2102212464
        %v5141 = vsel %vm5137, %v5125, %v5140
        %v5142 = vsel %vm5136, %v5139, %v5141
        %v5143 = vsel %vm5135, %v5122, %v5125
        %v5144 = vsel %vm5138, %v5131, 920167782
        %v5145 = vsel %vm5137, %v5128, %v5144
        %v5146 = vsel %vm5136, %v5143, %v5145
        %v5147 = vsel %vm5135, %v5125, %v5128
        %v5148 = vsel %vm5138, %v5134, 1326507024
        %v5149 = vsel %vm5137, %v5131, %v5148
        %v5150 = vsel %vm5136, %v5147, %v5149
        %v5151 = vshll.u32 %v5111, 8
        %v5152 = vand.u32 %v5151, 65535
        %v5153 = vshrl.u32 %v5151, 16
        %v5154 = vand.u32 %v5150, 65535
        %v5155 = vshrl.u32 %v5150, 16
        %v5156 = vmul.u32 %v5152, %v5154
        %v5157 = vmul.u32 %v5152, %v5155
        %v5158 = vmul.u32 %v5153, %v5154
        %v5159 = vmul.u32 %v5153, %v5155
        %v5160 = vshll.u32 %v5157, 16
        %v5161 = vshrl.u32 %v5157, 16
        %v5162 = vshll.u32 %v5158, 16
        %v5163 = vshrl.u32 %v5158, 16
        %vm5164 = vc.u32 %v5156, %v5160
        %v5165 = vsel %vm5164, 1, 0
        %v5166 = vadd.s32 %v5156, %v5160
        %v5167 = vadd.s32 %v5159, %v5165
        %vm5168 = vc.u32 %v5166, %v5162
        %v5169 = vsel %vm5168, 1, 0
        %v5170 = vadd.s32 %v5166, %v5162
        %v5171 = vadd.s32 %v5167, %v5169
        %v5172 = vadd.s32 %v5171, %v5161
        %v5173 = vadd.s32 %v5172, %v5163
        %v5174 = vand.u32 %v5151, 65535
        %v5175 = vshrl.u32 %v5151, 16
        %v5176 = vand.u32 %v5146, 65535
        %v5177 = vshrl.u32 %v5146, 16
        %v5178 = vmul.u32 %v5174, %v5176
        %v5179 = vmul.u32 %v5174, %v5177
        %v5180 = vmul.u32 %v5175, %v5176
        %v5181 = vmul.u32 %v5175, %v5177
        %v5182 = vshll.u32 %v5179, 16
        %v5183 = vshrl.u32 %v5179, 16
        %v5184 = vshll.u32 %v5180, 16
        %v5185 = vshrl.u32 %v5180, 16
        %vm5186 = vc.u32 %v5178, %v5182
        %v5187 = vsel %vm5186, 1, 0
        %v5188 = vadd.s32 %v5178, %v5182
        %v5189 = vadd.s32 %v5181, %v5187
        %vm5190 = vc.u32 %v5188, %v5184
        %v5191 = vsel %vm5190, 1, 0
        %v5192 = vadd.s32 %v5188, %v5184
        %v5193 = vadd.s32 %v5189, %v5191
        %v5194 = vadd.s32 %v5193, %v5183
        %v5195 = vadd.s32 %v5194, %v5185
        %v5196 = vmul.u32 %v5151, %v5142
        %v5197 = vadd.s32 %v5173, %v5192
        %vm5198 = vc.u32 %v5173, %v5192
        %v5199 = vadd.s32 %v5195, 1
        %v5200 = vsel %vm5198, %v5199, %v5195
        %v5201 = vadd.s32 %v5196, %v5200
        %v5202 = vadd.s32 %v5201, 536870912
        %v5203 = vshrl.u32 %v5202, 30
        %v5204 = vshll.u32 %v5203, 30
        %v5205 = vsub.s32 %v5201, %v5204
        %vm5206 = vcmp.lt.s32.totalorder %v5205, 0
        %v5207 = vsub.s32 0, %v5205
        %v5208 = vsel %vm5206, %v5207, %v5205
        %v5209 = vclz %v5208
        %v5210 = vsub.s32 %v5209, 2
        %vm5211 = vcmp.gt.s32.totalorder 0, %v5210
        %v5212 = vsel %vm5211, 0, %v5210
        %v5213 = vsub.s32 32, %v5212
        %v5214 = vshll.u32 %v5205, %v5212
        %v5215 = vshrl.u32 %v5197, %v5213
        %v5216 = vor.u32 %v5214, %v5215
        %v5217 = vsub.s32 4294967266, %v5212
        %v5218 = vadd.s32 %v5217, 127
        %v5219 = vshll.u32 %v5218, 23
        %v5220 = vor.u32 4788187, %v5219
        %v5221 = vand.u32 2147483647, %v5220
        %v5223 = vcvt.s32.f32 %v5216
        %v5224 = vmul.f32 %v5223, %v5221
        %v5225 = vxor.u32 %v5224, 2147483648
        %v5226 = vsel %vm5105, %v5225, %v5224
        %v5227 = vsub.s32 4, %v5203
        %v5228 = vsel %vm5105, %v5227, %v5203
        %v5229 = vsel %vm5104, %v755, %v5226
        %v5230 = vsel %vm5104, 0, %v5228
        %v5231 = vmul.f32 %v5229, %v5229
        %v5232 = vmul.f32 %v5231, -0.001358992
        %v5233 = vadd.f32 %v5232, 0.041655596
        %v5234 = vmul.f32 %v5231, %v5233
        %v5235 = vadd.f32 %v5234, -0.4999988
        %v5236 = vmul.f32 %v5231, %v5235
        %v5237 = vadd.f32 1.0, %v5236
        %v5238 = vmul.f32 %v5229, %v5229
        %v5239 = vmul.f32 %v5238, -0.00019511016
        %v5240 = vadd.f32 %v5239, 0.008332121
        %v5241 = vmul.f32 %v5238, %v5240
        %v5242 = vadd.f32 %v5241, -0.16666654
        %v5243 = vmul.f32 %v5238, %v5242
        %v5244 = vadd.f32 %v5243, 1.0
        %v5245 = vmul.f32 %v5244, %v5229
        %vm5246 = vweird.f32 %v755
        %v5247 = vand.u32 %v5230, 3
        %vm5248 = vcmp.lt.s32.totalorder %v5247, 2
        %vm5249 = vcmp.eq.s32.totalorder %v5247, 0
        %v5250 = vxor.u32 %v5245, 2147483648
        %v5251 = vsel %vm5249, %v5237, %v5250
        %vm5252 = vcmp.eq.s32.totalorder %v5247, 2
        %v5253 = vxor.u32 %v5237, 2147483648
        %v5254 = vsel %vm5252, %v5253, %v5245
        %v5255 = vsel %vm5248, %v5251, %v5254
        %v5256 = vsel %vm5246, nan, %v5255
        %v5257 = vand.u32 2147483647, %v756
        %vm5258 = vcmp.le.f32.partialorder %v5257, 0.7853982
        %vm5259 = vcmp.lt.s32.totalorder %v756, 0
        %v5260 = vand.u32 %v756, 2139095040
        %v5261 = vshrl.u32 %v5260, 23
        %v5262 = vsub.s32 %v5261, 127
        %v5263 = vand.u32 2147483647, %v756
        %v5264 = vand.u32 %v5263, 8388607
        %v5265 = vor.u32 %v5264, 8388608
        %v5266 = vsub.s32 0, %v5265
        %v5267 = vadd.s32 %v5262, 1
        %vm5268 = vcmp.gt.s32.totalorder %v5267, 0
        %v5269 = vsel %vm5268, %v5267, 0
        %v5270 = vshrl.u32 %v5269, 5
        %v5271 = vand.u32 %v5269, 31
        %v5272 = vsub.s32 32, %v5271
        %v5273 = vshrl.u32 683565275, %v5272
        %v5274 = vshll.u32 683565275, %v5271
        %v5275 = vshrl.u32 2475754826, %v5272
        %v5276 = vor.u32 %v5274, %v5275
        %v5277 = vshll.u32 2475754826, %v5271
        %v5278 = vshrl.u32 2131351028, %v5272
        %v5279 = vor.u32 %v5277, %v5278
        %v5280 = vshll.u32 2131351028, %v5271
        %v5281 = vshrl.u32 2102212464, %v5272
        %v5282 = vor.u32 %v5280, %v5281
        %v5283 = vshll.u32 2102212464, %v5271
        %v5284 = vshrl.u32 920167782, %v5272
        %v5285 = vor.u32 %v5283, %v5284
        %v5286 = vshll.u32 920167782, %v5271
        %v5287 = vshrl.u32 1326507024, %v5272
        %v5288 = vor.u32 %v5286, %v5287
        %vm5289 = vcmp.lt.s32.totalorder %v5270, 1
        %vm5290 = vcmp.lt.s32.totalorder %v5270, 2
        %vm5291 = vcmp.lt.s32.totalorder %v5270, 3
        %vm5292 = vcmp.lt.s32.totalorder %v5270, 4
        %v5293 = vsel %vm5289, %v5273, %v5276
        %v5294 = vsel %vm5292, %v5282, 2102212464
        %v5295 = vsel %vm5291, %v5279, %v5294
        %v5296 = vsel %vm5290, %v5293, %v5295
        %v5297 = vsel %vm5289, %v5276, %v5279
        %v5298 = vsel %vm5292, %v5285, 920167782
        %v5299 = vsel %vm5291, %v5282, %v5298
        %v5300 = vsel %vm5290, %v5297, %v5299
        %v5301 = vsel %vm5289, %v5279, %v5282
        %v5302 = vsel %vm5292, %v5288, 1326507024
        %v5303 = vsel %vm5291, %v5285, %v5302
        %v5304 = vsel %vm5290, %v5301, %v5303
        %v5305 = vshll.u32 %v5265, 8
        %v5306 = vand.u32 %v5305, 65535
        %v5307 = vshrl.u32 %v5305, 16
        %v5308 = vand.u32 %v5304, 65535
        %v5309 = vshrl.u32 %v5304, 16
        %v5310 = vmul.u32 %v5306, %v5308
        %v5311 = vmul.u32 %v5306, %v5309
        %v5312 = vmul.u32 %v5307, %v5308
        %v5313 = vmul.u32 %v5307, %v5309
        %v5314 = vshll.u32 %v5311, 16
        %v5315 = vshrl.u32 %v5311, 16
        %v5316 = vshll.u32 %v5312, 16
        %v5317 = vshrl.u32 %v5312, 16
        %vm5318 = vc.u32 %v5310, %v5314
        %v5319 = vsel %vm5318, 1, 0
        %v5320 = vadd.s32 %v5310, %v5314
        %v5321 = vadd.s32 %v5313, %v5319
        %vm5322 = vc.u32 %v5320, %v5316
        %v5323 = vsel %vm5322, 1, 0
        %v5324 = vadd.s32 %v5320, %v5316
        %v5325 = vadd.s32 %v5321, %v5323
        %v5326 = vadd.s32 %v5325, %v5315
        %v5327 = vadd.s32 %v5326, %v5317
        %v5328 = vand.u32 %v5305, 65535
        %v5329 = vshrl.u32 %v5305, 16
        %v5330 = vand.u32 %v5300, 65535
        %v5331 = vshrl.u32 %v5300, 16
        %v5332 = vmul.u32 %v5328, %v5330
        %v5333 = vmul.u32 %v5328, %v5331
        %v5334 = vmul.u32 %v5329, %v5330
        %v5335 = vmul.u32 %v5329, %v5331
        %v5336 = vshll.u32 %v5333, 16
        %v5337 = vshrl.u32 %v5333, 16
        %v5338 = vshll.u32 %v5334, 16
        %v5339 = vshrl.u32 %v5334, 16
        %vm5340 = vc.u32 %v5332, %v5336
        %v5341 = vsel %vm5340, 1, 0
        %v5342 = vadd.s32 %v5332, %v5336
        %v5343 = vadd.s32 %v5335, %v5341
        %vm5344 = vc.u32 %v5342, %v5338
        %v5345 = vsel %vm5344, 1, 0
        %v5346 = vadd.s32 %v5342, %v5338
        %v5347 = vadd.s32 %v5343, %v5345
        %v5348 = vadd.s32 %v5347, %v5337
        %v5349 = vadd.s32 %v5348, %v5339
        %v5350 = vmul.u32 %v5305, %v5296
        %v5351 = vadd.s32 %v5327, %v5346
        %vm5352 = vc.u32 %v5327, %v5346
        %v5353 = vadd.s32 %v5349, 1
        %v5354 = vsel %vm5352, %v5353, %v5349
        %v5355 = vadd.s32 %v5350, %v5354
        %v5356 = vadd.s32 %v5355, 536870912
        %v5357 = vshrl.u32 %v5356, 30
        %v5358 = vshll.u32 %v5357, 30
        %v5359 = vsub.s32 %v5355, %v5358
        %vm5360 = vcmp.lt.s32.totalorder %v5359, 0
        %v5361 = vsub.s32 0, %v5359
        %v5362 = vsel %vm5360, %v5361, %v5359
        %v5363 = vclz %v5362
        %v5364 = vsub.s32 %v5363, 2
        %vm5365 = vcmp.gt.s32.totalorder 0, %v5364
        %v5366 = vsel %vm5365, 0, %v5364
        %v5367 = vsub.s32 32, %v5366
        %v5368 = vshll.u32 %v5359, %v5366
        %v5369 = vshrl.u32 %v5351, %v5367
        %v5370 = vor.u32 %v5368, %v5369
        %v5371 = vsub.s32 4294967266, %v5366
        %v5372 = vadd.s32 %v5371, 127
        %v5373 = vshll.u32 %v5372, 23
        %v5374 = vor.u32 4788187, %v5373
        %v5375 = vand.u32 2147483647, %v5374
        %v5377 = vcvt.s32.f32 %v5370
        %v5378 = vmul.f32 %v5377, %v5375
        %v5379 = vxor.u32 %v5378, 2147483648
        %v5380 = vsel %vm5259, %v5379, %v5378
        %v5381 = vsub.s32 4, %v5357
        %v5382 = vsel %vm5259, %v5381, %v5357
        %v5383 = vsel %vm5258, %v756, %v5380
        %v5384 = vsel %vm5258, 0, %v5382
        %v5385 = vmul.f32 %v5383, %v5383
        %v5386 = vmul.f32 %v5385, -0.001358992
        %v5387 = vadd.f32 %v5386, 0.041655596
        %v5388 = vmul.f32 %v5385, %v5387
        %v5389 = vadd.f32 %v5388, -0.4999988
        %v5390 = vmul.f32 %v5385, %v5389
        %v5391 = vadd.f32 1.0, %v5390
        %v5392 = vmul.f32 %v5383, %v5383
        %v5393 = vmul.f32 %v5392, -0.00019511016
        %v5394 = vadd.f32 %v5393, 0.008332121
        %v5395 = vmul.f32 %v5392, %v5394
        %v5396 = vadd.f32 %v5395, -0.16666654
        %v5397 = vmul.f32 %v5392, %v5396
        %v5398 = vadd.f32 %v5397, 1.0
        %v5399 = vmul.f32 %v5398, %v5383
        %vm5400 = vweird.f32 %v756
        %v5401 = vand.u32 %v5384, 3
        %vm5402 = vcmp.lt.s32.totalorder %v5401, 2
        %vm5403 = vcmp.eq.s32.totalorder %v5401, 0
        %v5404 = vxor.u32 %v5399, 2147483648
        %v5405 = vsel %vm5403, %v5391, %v5404
        %vm5406 = vcmp.eq.s32.totalorder %v5401, 2
        %v5407 = vxor.u32 %v5391, 2147483648
        %v5408 = vsel %vm5406, %v5407, %v5399
        %v5409 = vsel %vm5402, %v5405, %v5408
        %v5410 = vsel %vm5400, nan, %v5409
        %v5411 = vand.u32 2147483647, %v757
        %vm5412 = vcmp.le.f32.partialorder %v5411, 0.7853982
        %vm5413 = vcmp.lt.s32.totalorder %v757, 0
        %v5414 = vand.u32 %v757, 2139095040
        %v5415 = vshrl.u32 %v5414, 23
        %v5416 = vsub.s32 %v5415, 127
        %v5417 = vand.u32 2147483647, %v757
        %v5418 = vand.u32 %v5417, 8388607
        %v5419 = vor.u32 %v5418, 8388608
        %v5420 = vsub.s32 0, %v5419
        %v5421 = vadd.s32 %v5416, 1
        %vm5422 = vcmp.gt.s32.totalorder %v5421, 0
        %v5423 = vsel %vm5422, %v5421, 0
        %v5424 = vshrl.u32 %v5423, 5
        %v5425 = vand.u32 %v5423, 31
        %v5426 = vsub.s32 32, %v5425
        %v5427 = vshrl.u32 683565275, %v5426
        %v5428 = vshll.u32 683565275, %v5425
        %v5429 = vshrl.u32 2475754826, %v5426
        %v5430 = vor.u32 %v5428, %v5429
        %v5431 = vshll.u32 2475754826, %v5425
        %v5432 = vshrl.u32 2131351028, %v5426
        %v5433 = vor.u32 %v5431, %v5432
        %v5434 = vshll.u32 2131351028, %v5425
        %v5435 = vshrl.u32 2102212464, %v5426
        %v5436 = vor.u32 %v5434, %v5435
        %v5437 = vshll.u32 2102212464, %v5425
        %v5438 = vshrl.u32 920167782, %v5426
        %v5439 = vor.u32 %v5437, %v5438
        %v5440 = vshll.u32 920167782, %v5425
        %v5441 = vshrl.u32 1326507024, %v5426
        %v5442 = vor.u32 %v5440, %v5441
        %vm5443 = vcmp.lt.s32.totalorder %v5424, 1
        %vm5444 = vcmp.lt.s32.totalorder %v5424, 2
        %vm5445 = vcmp.lt.s32.totalorder %v5424, 3
        %vm5446 = vcmp.lt.s32.totalorder %v5424, 4
        %v5447 = vsel %vm5443, %v5427, %v5430
        %v5448 = vsel %vm5446, %v5436, 2102212464
        %v5449 = vsel %vm5445, %v5433, %v5448
        %v5450 = vsel %vm5444, %v5447, %v5449
        %v5451 = vsel %vm5443, %v5430, %v5433
        %v5452 = vsel %vm5446, %v5439, 920167782
        %v5453 = vsel %vm5445, %v5436, %v5452
        %v5454 = vsel %vm5444, %v5451, %v5453
        %v5455 = vsel %vm5443, %v5433, %v5436
        %v5456 = vsel %vm5446, %v5442, 1326507024
        %v5457 = vsel %vm5445, %v5439, %v5456
        %v5458 = vsel %vm5444, %v5455, %v5457
        %v5459 = vshll.u32 %v5419, 8
        %v5460 = vand.u32 %v5459, 65535
        %v5461 = vshrl.u32 %v5459, 16
        %v5462 = vand.u32 %v5458, 65535
        %v5463 = vshrl.u32 %v5458, 16
        %v5464 = vmul.u32 %v5460, %v5462
        %v5465 = vmul.u32 %v5460, %v5463
        %v5466 = vmul.u32 %v5461, %v5462
        %v5467 = vmul.u32 %v5461, %v5463
        %v5468 = vshll.u32 %v5465, 16
        %v5469 = vshrl.u32 %v5465, 16
        %v5470 = vshll.u32 %v5466, 16
        %v5471 = vshrl.u32 %v5466, 16
        %vm5472 = vc.u32 %v5464, %v5468
        %v5473 = vsel %vm5472, 1, 0
        %v5474 = vadd.s32 %v5464, %v5468
        %v5475 = vadd.s32 %v5467, %v5473
        %vm5476 = vc.u32 %v5474, %v5470
        %v5477 = vsel %vm5476, 1, 0
        %v5478 = vadd.s32 %v5474, %v5470
        %v5479 = vadd.s32 %v5475, %v5477
        %v5480 = vadd.s32 %v5479, %v5469
        %v5481 = vadd.s32 %v5480, %v5471
        %v5482 = vand.u32 %v5459, 65535
        %v5483 = vshrl.u32 %v5459, 16
        %v5484 = vand.u32 %v5454, 65535
        %v5485 = vshrl.u32 %v5454, 16
        %v5486 = vmul.u32 %v5482, %v5484
        %v5487 = vmul.u32 %v5482, %v5485
        %v5488 = vmul.u32 %v5483, %v5484
        %v5489 = vmul.u32 %v5483, %v5485
        %v5490 = vshll.u32 %v5487, 16
        %v5491 = vshrl.u32 %v5487, 16
        %v5492 = vshll.u32 %v5488, 16
        %v5493 = vshrl.u32 %v5488, 16
        %vm5494 = vc.u32 %v5486, %v5490
        %v5495 = vsel %vm5494, 1, 0
        %v5496 = vadd.s32 %v5486, %v5490
        %v5497 = vadd.s32 %v5489, %v5495
        %vm5498 = vc.u32 %v5496, %v5492
        %v5499 = vsel %vm5498, 1, 0
        %v5500 = vadd.s32 %v5496, %v5492
        %v5501 = vadd.s32 %v5497, %v5499
        %v5502 = vadd.s32 %v5501, %v5491
        %v5503 = vadd.s32 %v5502, %v5493
        %v5504 = vmul.u32 %v5459, %v5450
        %v5505 = vadd.s32 %v5481, %v5500
        %vm5506 = vc.u32 %v5481, %v5500
        %v5507 = vadd.s32 %v5503, 1
        %v5508 = vsel %vm5506, %v5507, %v5503
        %v5509 = vadd.s32 %v5504, %v5508
        %v5510 = vadd.s32 %v5509, 536870912
        %v5511 = vshrl.u32 %v5510, 30
        %v5512 = vshll.u32 %v5511, 30
        %v5513 = vsub.s32 %v5509, %v5512
        %vm5514 = vcmp.lt.s32.totalorder %v5513, 0
        %v5515 = vsub.s32 0, %v5513
        %v5516 = vsel %vm5514, %v5515, %v5513
        %v5517 = vclz %v5516
        %v5518 = vsub.s32 %v5517, 2
        %vm5519 = vcmp.gt.s32.totalorder 0, %v5518
        %v5520 = vsel %vm5519, 0, %v5518
        %v5521 = vsub.s32 32, %v5520
        %v5522 = vshll.u32 %v5513, %v5520
        %v5523 = vshrl.u32 %v5505, %v5521
        %v5524 = vor.u32 %v5522, %v5523
        %v5525 = vsub.s32 4294967266, %v5520
        %v5526 = vadd.s32 %v5525, 127
        %v5527 = vshll.u32 %v5526, 23
        %v5528 = vor.u32 4788187, %v5527
        %v5529 = vand.u32 2147483647, %v5528
        %v5531 = vcvt.s32.f32 %v5524
        %v5532 = vmul.f32 %v5531, %v5529
        %v5533 = vxor.u32 %v5532, 2147483648
        %v5534 = vsel %vm5413, %v5533, %v5532
        %v5535 = vsub.s32 4, %v5511
        %v5536 = vsel %vm5413, %v5535, %v5511
        %v5537 = vsel %vm5412, %v757, %v5534
        %v5538 = vsel %vm5412, 0, %v5536
        %v5539 = vmul.f32 %v5537, %v5537
        %v5540 = vmul.f32 %v5539, -0.001358992
        %v5541 = vadd.f32 %v5540, 0.041655596
        %v5542 = vmul.f32 %v5539, %v5541
        %v5543 = vadd.f32 %v5542, -0.4999988
        %v5544 = vmul.f32 %v5539, %v5543
        %v5545 = vadd.f32 1.0, %v5544
        %v5546 = vmul.f32 %v5537, %v5537
        %v5547 = vmul.f32 %v5546, -0.00019511016
        %v5548 = vadd.f32 %v5547, 0.008332121
        %v5549 = vmul.f32 %v5546, %v5548
        %v5550 = vadd.f32 %v5549, -0.16666654
        %v5551 = vmul.f32 %v5546, %v5550
        %v5552 = vadd.f32 %v5551, 1.0
        %v5553 = vmul.f32 %v5552, %v5537
        %vm5554 = vweird.f32 %v757
        %v5555 = vand.u32 %v5538, 3
        %vm5556 = vcmp.lt.s32.totalorder %v5555, 2
        %vm5557 = vcmp.eq.s32.totalorder %v5555, 0
        %v5558 = vxor.u32 %v5553, 2147483648
        %v5559 = vsel %vm5557, %v5545, %v5558
        %vm5560 = vcmp.eq.s32.totalorder %v5555, 2
        %v5561 = vxor.u32 %v5545, 2147483648
        %v5562 = vsel %vm5560, %v5561, %v5553
        %v5563 = vsel %vm5556, %v5559, %v5562
        %v5564 = vsel %vm5554, nan, %v5563
        %v5565 = vand.u32 2147483647, %v758
        %vm5566 = vcmp.le.f32.partialorder %v5565, 0.7853982
        %vm5567 = vcmp.lt.s32.totalorder %v758, 0
        %v5568 = vand.u32 %v758, 2139095040
        %v5569 = vshrl.u32 %v5568, 23
        %v5570 = vsub.s32 %v5569, 127
        %v5571 = vand.u32 2147483647, %v758
        %v5572 = vand.u32 %v5571, 8388607
        %v5573 = vor.u32 %v5572, 8388608
        %v5574 = vsub.s32 0, %v5573
        %v5575 = vadd.s32 %v5570, 1
        %vm5576 = vcmp.gt.s32.totalorder %v5575, 0
        %v5577 = vsel %vm5576, %v5575, 0
        %v5578 = vshrl.u32 %v5577, 5
        %v5579 = vand.u32 %v5577, 31
        %v5580 = vsub.s32 32, %v5579
        %v5581 = vshrl.u32 683565275, %v5580
        %v5582 = vshll.u32 683565275, %v5579
        %v5583 = vshrl.u32 2475754826, %v5580
        %v5584 = vor.u32 %v5582, %v5583
        %v5585 = vshll.u32 2475754826, %v5579
        %v5586 = vshrl.u32 2131351028, %v5580
        %v5587 = vor.u32 %v5585, %v5586
        %v5588 = vshll.u32 2131351028, %v5579
        %v5589 = vshrl.u32 2102212464, %v5580
        %v5590 = vor.u32 %v5588, %v5589
        %v5591 = vshll.u32 2102212464, %v5579
        %v5592 = vshrl.u32 920167782, %v5580
        %v5593 = vor.u32 %v5591, %v5592
        %v5594 = vshll.u32 920167782, %v5579
        %v5595 = vshrl.u32 1326507024, %v5580
        %v5596 = vor.u32 %v5594, %v5595
        %vm5597 = vcmp.lt.s32.totalorder %v5578, 1
        %vm5598 = vcmp.lt.s32.totalorder %v5578, 2
        %vm5599 = vcmp.lt.s32.totalorder %v5578, 3
        %vm5600 = vcmp.lt.s32.totalorder %v5578, 4
        %v5601 = vsel %vm5597, %v5581, %v5584
        %v5602 = vsel %vm5600, %v5590, 2102212464
        %v5603 = vsel %vm5599, %v5587, %v5602
        %v5604 = vsel %vm5598, %v5601, %v5603
        %v5605 = vsel %vm5597, %v5584, %v5587
        %v5606 = vsel %vm5600, %v5593, 920167782
        %v5607 = vsel %vm5599, %v5590, %v5606
        %v5608 = vsel %vm5598, %v5605, %v5607
        %v5609 = vsel %vm5597, %v5587, %v5590
        %v5610 = vsel %vm5600, %v5596, 1326507024
        %v5611 = vsel %vm5599, %v5593, %v5610
        %v5612 = vsel %vm5598, %v5609, %v5611
        %v5613 = vshll.u32 %v5573, 8
        %v5614 = vand.u32 %v5613, 65535
        %v5615 = vshrl.u32 %v5613, 16
        %v5616 = vand.u32 %v5612, 65535
        %v5617 = vshrl.u32 %v5612, 16
        %v5618 = vmul.u32 %v5614, %v5616
        %v5619 = vmul.u32 %v5614, %v5617
        %v5620 = vmul.u32 %v5615, %v5616
        %v5621 = vmul.u32 %v5615, %v5617
        %v5622 = vshll.u32 %v5619, 16
        %v5623 = vshrl.u32 %v5619, 16
        %v5624 = vshll.u32 %v5620, 16
        %v5625 = vshrl.u32 %v5620, 16
        %vm5626 = vc.u32 %v5618, %v5622
        %v5627 = vsel %vm5626, 1, 0
        %v5628 = vadd.s32 %v5618, %v5622
        %v5629 = vadd.s32 %v5621, %v5627
        %vm5630 = vc.u32 %v5628, %v5624
        %v5631 = vsel %vm5630, 1, 0
        %v5632 = vadd.s32 %v5628, %v5624
        %v5633 = vadd.s32 %v5629, %v5631
        %v5634 = vadd.s32 %v5633, %v5623
        %v5635 = vadd.s32 %v5634, %v5625
        %v5636 = vand.u32 %v5613, 65535
        %v5637 = vshrl.u32 %v5613, 16
        %v5638 = vand.u32 %v5608, 65535
        %v5639 = vshrl.u32 %v5608, 16
        %v5640 = vmul.u32 %v5636, %v5638
        %v5641 = vmul.u32 %v5636, %v5639
        %v5642 = vmul.u32 %v5637, %v5638
        %v5643 = vmul.u32 %v5637, %v5639
        %v5644 = vshll.u32 %v5641, 16
        %v5645 = vshrl.u32 %v5641, 16
        %v5646 = vshll.u32 %v5642, 16
        %v5647 = vshrl.u32 %v5642, 16
        %vm5648 = vc.u32 %v5640, %v5644
        %v5649 = vsel %vm5648, 1, 0
        %v5650 = vadd.s32 %v5640, %v5644
        %v5651 = vadd.s32 %v5643, %v5649
        %vm5652 = vc.u32 %v5650, %v5646
        %v5653 = vsel %vm5652, 1, 0
        %v5654 = vadd.s32 %v5650, %v5646
        %v5655 = vadd.s32 %v5651, %v5653
        %v5656 = vadd.s32 %v5655, %v5645
        %v5657 = vadd.s32 %v5656, %v5647
        %v5658 = vmul.u32 %v5613, %v5604
        %v5659 = vadd.s32 %v5635, %v5654
        %vm5660 = vc.u32 %v5635, %v5654
        %v5661 = vadd.s32 %v5657, 1
        %v5662 = vsel %vm5660, %v5661, %v5657
        %v5663 = vadd.s32 %v5658, %v5662
        %v5664 = vadd.s32 %v5663, 536870912
        %v5665 = vshrl.u32 %v5664, 30
        %v5666 = vshll.u32 %v5665, 30
        %v5667 = vsub.s32 %v5663, %v5666
        %vm5668 = vcmp.lt.s32.totalorder %v5667, 0
        %v5669 = vsub.s32 0, %v5667
        %v5670 = vsel %vm5668, %v5669, %v5667
        %v5671 = vclz %v5670
        %v5672 = vsub.s32 %v5671, 2
        %vm5673 = vcmp.gt.s32.totalorder 0, %v5672
        %v5674 = vsel %vm5673, 0, %v5672
        %v5675 = vsub.s32 32, %v5674
        %v5676 = vshll.u32 %v5667, %v5674
        %v5677 = vshrl.u32 %v5659, %v5675
        %v5678 = vor.u32 %v5676, %v5677
        %v5679 = vsub.s32 4294967266, %v5674
        %v5680 = vadd.s32 %v5679, 127
        %v5681 = vshll.u32 %v5680, 23
        %v5682 = vor.u32 4788187, %v5681
        %v5683 = vand.u32 2147483647, %v5682
        %v5685 = vcvt.s32.f32 %v5678
        %v5686 = vmul.f32 %v5685, %v5683
        %v5687 = vxor.u32 %v5686, 2147483648
        %v5688 = vsel %vm5567, %v5687, %v5686
        %v5689 = vsub.s32 4, %v5665
        %v5690 = vsel %vm5567, %v5689, %v5665
        %v5691 = vsel %vm5566, %v758, %v5688
        %v5692 = vsel %vm5566, 0, %v5690
        %v5693 = vmul.f32 %v5691, %v5691
        %v5694 = vmul.f32 %v5693, -0.001358992
        %v5695 = vadd.f32 %v5694, 0.041655596
        %v5696 = vmul.f32 %v5693, %v5695
        %v5697 = vadd.f32 %v5696, -0.4999988
        %v5698 = vmul.f32 %v5693, %v5697
        %v5699 = vadd.f32 1.0, %v5698
        %v5700 = vmul.f32 %v5691, %v5691
        %v5701 = vmul.f32 %v5700, -0.00019511016
        %v5702 = vadd.f32 %v5701, 0.008332121
        %v5703 = vmul.f32 %v5700, %v5702
        %v5704 = vadd.f32 %v5703, -0.16666654
        %v5705 = vmul.f32 %v5700, %v5704
        %v5706 = vadd.f32 %v5705, 1.0
        %v5707 = vmul.f32 %v5706, %v5691
        %vm5708 = vweird.f32 %v758
        %v5709 = vand.u32 %v5692, 3
        %vm5710 = vcmp.lt.s32.totalorder %v5709, 2
        %vm5711 = vcmp.eq.s32.totalorder %v5709, 0
        %v5712 = vxor.u32 %v5707, 2147483648
        %v5713 = vsel %vm5711, %v5699, %v5712
        %vm5714 = vcmp.eq.s32.totalorder %v5709, 2
        %v5715 = vxor.u32 %v5699, 2147483648
        %v5716 = vsel %vm5714, %v5715, %v5707
        %v5717 = vsel %vm5710, %v5713, %v5716
        %v5718 = vsel %vm5708, nan, %v5717
        %v5719 = vand.u32 2147483647, %v759
        %vm5720 = vcmp.le.f32.partialorder %v5719, 0.7853982
        %vm5721 = vcmp.lt.s32.totalorder %v759, 0
        %v5722 = vand.u32 %v759, 2139095040
        %v5723 = vshrl.u32 %v5722, 23
        %v5724 = vsub.s32 %v5723, 127
        %v5725 = vand.u32 2147483647, %v759
        %v5726 = vand.u32 %v5725, 8388607
        %v5727 = vor.u32 %v5726, 8388608
        %v5728 = vsub.s32 0, %v5727
        %v5729 = vadd.s32 %v5724, 1
        %vm5730 = vcmp.gt.s32.totalorder %v5729, 0
        %v5731 = vsel %vm5730, %v5729, 0
        %v5732 = vshrl.u32 %v5731, 5
        %v5733 = vand.u32 %v5731, 31
        %v5734 = vsub.s32 32, %v5733
        %v5735 = vshrl.u32 683565275, %v5734
        %v5736 = vshll.u32 683565275, %v5733
        %v5737 = vshrl.u32 2475754826, %v5734
        %v5738 = vor.u32 %v5736, %v5737
        %v5739 = vshll.u32 2475754826, %v5733
        %v5740 = vshrl.u32 2131351028, %v5734
        %v5741 = vor.u32 %v5739, %v5740
        %v5742 = vshll.u32 2131351028, %v5733
        %v5743 = vshrl.u32 2102212464, %v5734
        %v5744 = vor.u32 %v5742, %v5743
        %v5745 = vshll.u32 2102212464, %v5733
        %v5746 = vshrl.u32 920167782, %v5734
        %v5747 = vor.u32 %v5745, %v5746
        %v5748 = vshll.u32 920167782, %v5733
        %v5749 = vshrl.u32 1326507024, %v5734
        %v5750 = vor.u32 %v5748, %v5749
        %vm5751 = vcmp.lt.s32.totalorder %v5732, 1
        %vm5752 = vcmp.lt.s32.totalorder %v5732, 2
        %vm5753 = vcmp.lt.s32.totalorder %v5732, 3
        %vm5754 = vcmp.lt.s32.totalorder %v5732, 4
        %v5755 = vsel %vm5751, %v5735, %v5738
        %v5756 = vsel %vm5754, %v5744, 2102212464
        %v5757 = vsel %vm5753, %v5741, %v5756
        %v5758 = vsel %vm5752, %v5755, %v5757
        %v5759 = vsel %vm5751, %v5738, %v5741
        %v5760 = vsel %vm5754, %v5747, 920167782
        %v5761 = vsel %vm5753, %v5744, %v5760
        %v5762 = vsel %vm5752, %v5759, %v5761
        %v5763 = vsel %vm5751, %v5741, %v5744
        %v5764 = vsel %vm5754, %v5750, 1326507024
        %v5765 = vsel %vm5753, %v5747, %v5764
        %v5766 = vsel %vm5752, %v5763, %v5765
        %v5767 = vshll.u32 %v5727, 8
        %v5768 = vand.u32 %v5767, 65535
        %v5769 = vshrl.u32 %v5767, 16
        %v5770 = vand.u32 %v5766, 65535
        %v5771 = vshrl.u32 %v5766, 16
        %v5772 = vmul.u32 %v5768, %v5770
        %v5773 = vmul.u32 %v5768, %v5771
        %v5774 = vmul.u32 %v5769, %v5770
        %v5775 = vmul.u32 %v5769, %v5771
        %v5776 = vshll.u32 %v5773, 16
        %v5777 = vshrl.u32 %v5773, 16
        %v5778 = vshll.u32 %v5774, 16
        %v5779 = vshrl.u32 %v5774, 16
        %vm5780 = vc.u32 %v5772, %v5776
        %v5781 = vsel %vm5780, 1, 0
        %v5782 = vadd.s32 %v5772, %v5776
        %v5783 = vadd.s32 %v5775, %v5781
        %vm5784 = vc.u32 %v5782, %v5778
        %v5785 = vsel %vm5784, 1, 0
        %v5786 = vadd.s32 %v5782, %v5778
        %v5787 = vadd.s32 %v5783, %v5785
        %v5788 = vadd.s32 %v5787, %v5777
        %v5789 = vadd.s32 %v5788, %v5779
        %v5790 = vand.u32 %v5767, 65535
        %v5791 = vshrl.u32 %v5767, 16
        %v5792 = vand.u32 %v5762, 65535
        %v5793 = vshrl.u32 %v5762, 16
        %v5794 = vmul.u32 %v5790, %v5792
        %v5795 = vmul.u32 %v5790, %v5793
        %v5796 = vmul.u32 %v5791, %v5792
        %v5797 = vmul.u32 %v5791, %v5793
        %v5798 = vshll.u32 %v5795, 16
        %v5799 = vshrl.u32 %v5795, 16
        %v5800 = vshll.u32 %v5796, 16
        %v5801 = vshrl.u32 %v5796, 16
        %vm5802 = vc.u32 %v5794, %v5798
        %v5803 = vsel %vm5802, 1, 0
        %v5804 = vadd.s32 %v5794, %v5798
        %v5805 = vadd.s32 %v5797, %v5803
        %vm5806 = vc.u32 %v5804, %v5800
        %v5807 = vsel %vm5806, 1, 0
        %v5808 = vadd.s32 %v5804, %v5800
        %v5809 = vadd.s32 %v5805, %v5807
        %v5810 = vadd.s32 %v5809, %v5799
        %v5811 = vadd.s32 %v5810, %v5801
        %v5812 = vmul.u32 %v5767, %v5758
        %v5813 = vadd.s32 %v5789, %v5808
        %vm5814 = vc.u32 %v5789, %v5808
        %v5815 = vadd.s32 %v5811, 1
        %v5816 = vsel %vm5814, %v5815, %v5811
        %v5817 = vadd.s32 %v5812, %v5816
        %v5818 = vadd.s32 %v5817, 536870912
        %v5819 = vshrl.u32 %v5818, 30
        %v5820 = vshll.u32 %v5819, 30
        %v5821 = vsub.s32 %v5817, %v5820
        %vm5822 = vcmp.lt.s32.totalorder %v5821, 0
        %v5823 = vsub.s32 0, %v5821
        %v5824 = vsel %vm5822, %v5823, %v5821
        %v5825 = vclz %v5824
        %v5826 = vsub.s32 %v5825, 2
        %vm5827 = vcmp.gt.s32.totalorder 0, %v5826
        %v5828 = vsel %vm5827, 0, %v5826
        %v5829 = vsub.s32 32, %v5828
        %v5830 = vshll.u32 %v5821, %v5828
        %v5831 = vshrl.u32 %v5813, %v5829
        %v5832 = vor.u32 %v5830, %v5831
        %v5833 = vsub.s32 4294967266, %v5828
        %v5834 = vadd.s32 %v5833, 127
        %v5835 = vshll.u32 %v5834, 23
        %v5836 = vor.u32 4788187, %v5835
        %v5837 = vand.u32 2147483647, %v5836
        %v5839 = vcvt.s32.f32 %v5832
        %v5840 = vmul.f32 %v5839, %v5837
        %v5841 = vxor.u32 %v5840, 2147483648
        %v5842 = vsel %vm5721, %v5841, %v5840
        %v5843 = vsub.s32 4, %v5819
        %v5844 = vsel %vm5721, %v5843, %v5819
        %v5845 = vsel %vm5720, %v759, %v5842
        %v5846 = vsel %vm5720, 0, %v5844
        %v5847 = vmul.f32 %v5845, %v5845
        %v5848 = vmul.f32 %v5847, -0.001358992
        %v5849 = vadd.f32 %v5848, 0.041655596
        %v5850 = vmul.f32 %v5847, %v5849
        %v5851 = vadd.f32 %v5850, -0.4999988
        %v5852 = vmul.f32 %v5847, %v5851
        %v5853 = vadd.f32 1.0, %v5852
        %v5854 = vmul.f32 %v5845, %v5845
        %v5855 = vmul.f32 %v5854, -0.00019511016
        %v5856 = vadd.f32 %v5855, 0.008332121
        %v5857 = vmul.f32 %v5854, %v5856
        %v5858 = vadd.f32 %v5857, -0.16666654
        %v5859 = vmul.f32 %v5854, %v5858
        %v5860 = vadd.f32 %v5859, 1.0
        %v5861 = vmul.f32 %v5860, %v5845
        %vm5862 = vweird.f32 %v759
        %v5863 = vand.u32 %v5846, 3
        %vm5864 = vcmp.lt.s32.totalorder %v5863, 2
        %vm5865 = vcmp.eq.s32.totalorder %v5863, 0
        %v5866 = vxor.u32 %v5861, 2147483648
        %v5867 = vsel %vm5865, %v5853, %v5866
        %vm5868 = vcmp.eq.s32.totalorder %v5863, 2
        %v5869 = vxor.u32 %v5853, 2147483648
        %v5870 = vsel %vm5868, %v5869, %v5861
        %v5871 = vsel %vm5864, %v5867, %v5870
        %v5872 = vsel %vm5862, nan, %v5871
        %v5873 = vand.u32 2147483647, %v760
        %vm5874 = vcmp.le.f32.partialorder %v5873, 0.7853982
        %vm5875 = vcmp.lt.s32.totalorder %v760, 0
        %v5876 = vand.u32 %v760, 2139095040
        %v5877 = vshrl.u32 %v5876, 23
        %v5878 = vsub.s32 %v5877, 127
        %v5879 = vand.u32 2147483647, %v760
        %v5880 = vand.u32 %v5879, 8388607
        %v5881 = vor.u32 %v5880, 8388608
        %v5882 = vsub.s32 0, %v5881
        %v5883 = vadd.s32 %v5878, 1
        %vm5884 = vcmp.gt.s32.totalorder %v5883, 0
        %v5885 = vsel %vm5884, %v5883, 0
        %v5886 = vshrl.u32 %v5885, 5
        %v5887 = vand.u32 %v5885, 31
        %v5888 = vsub.s32 32, %v5887
        %v5889 = vshrl.u32 683565275, %v5888
        %v5890 = vshll.u32 683565275, %v5887
        %v5891 = vshrl.u32 2475754826, %v5888
        %v5892 = vor.u32 %v5890, %v5891
        %v5893 = vshll.u32 2475754826, %v5887
        %v5894 = vshrl.u32 2131351028, %v5888
        %v5895 = vor.u32 %v5893, %v5894
        %v5896 = vshll.u32 2131351028, %v5887
        %v5897 = vshrl.u32 2102212464, %v5888
        %v5898 = vor.u32 %v5896, %v5897
        %v5899 = vshll.u32 2102212464, %v5887
        %v5900 = vshrl.u32 920167782, %v5888
        %v5901 = vor.u32 %v5899, %v5900
        %v5902 = vshll.u32 920167782, %v5887
        %v5903 = vshrl.u32 1326507024, %v5888
        %v5904 = vor.u32 %v5902, %v5903
        %vm5905 = vcmp.lt.s32.totalorder %v5886, 1
        %vm5906 = vcmp.lt.s32.totalorder %v5886, 2
        %vm5907 = vcmp.lt.s32.totalorder %v5886, 3
        %vm5908 = vcmp.lt.s32.totalorder %v5886, 4
        %v5909 = vsel %vm5905, %v5889, %v5892
        %v5910 = vsel %vm5908, %v5898, 2102212464
        %v5911 = vsel %vm5907, %v5895, %v5910
        %v5912 = vsel %vm5906, %v5909, %v5911
        %v5913 = vsel %vm5905, %v5892, %v5895
        %v5914 = vsel %vm5908, %v5901, 920167782
        %v5915 = vsel %vm5907, %v5898, %v5914
        %v5916 = vsel %vm5906, %v5913, %v5915
        %v5917 = vsel %vm5905, %v5895, %v5898
        %v5918 = vsel %vm5908, %v5904, 1326507024
        %v5919 = vsel %vm5907, %v5901, %v5918
        %v5920 = vsel %vm5906, %v5917, %v5919
        %v5921 = vshll.u32 %v5881, 8
        %v5922 = vand.u32 %v5921, 65535
        %v5923 = vshrl.u32 %v5921, 16
        %v5924 = vand.u32 %v5920, 65535
        %v5925 = vshrl.u32 %v5920, 16
        %v5926 = vmul.u32 %v5922, %v5924
        %v5927 = vmul.u32 %v5922, %v5925
        %v5928 = vmul.u32 %v5923, %v5924
        %v5929 = vmul.u32 %v5923, %v5925
        %v5930 = vshll.u32 %v5927, 16
        %v5931 = vshrl.u32 %v5927, 16
        %v5932 = vshll.u32 %v5928, 16
        %v5933 = vshrl.u32 %v5928, 16
        %vm5934 = vc.u32 %v5926, %v5930
        %v5935 = vsel %vm5934, 1, 0
        %v5936 = vadd.s32 %v5926, %v5930
        %v5937 = vadd.s32 %v5929, %v5935
        %vm5938 = vc.u32 %v5936, %v5932
        %v5939 = vsel %vm5938, 1, 0
        %v5940 = vadd.s32 %v5936, %v5932
        %v5941 = vadd.s32 %v5937, %v5939
        %v5942 = vadd.s32 %v5941, %v5931
        %v5943 = vadd.s32 %v5942, %v5933
        %v5944 = vand.u32 %v5921, 65535
        %v5945 = vshrl.u32 %v5921, 16
        %v5946 = vand.u32 %v5916, 65535
        %v5947 = vshrl.u32 %v5916, 16
        %v5948 = vmul.u32 %v5944, %v5946
        %v5949 = vmul.u32 %v5944, %v5947
        %v5950 = vmul.u32 %v5945, %v5946
        %v5951 = vmul.u32 %v5945, %v5947
        %v5952 = vshll.u32 %v5949, 16
        %v5953 = vshrl.u32 %v5949, 16
        %v5954 = vshll.u32 %v5950, 16
        %v5955 = vshrl.u32 %v5950, 16
        %vm5956 = vc.u32 %v5948, %v5952
        %v5957 = vsel %vm5956, 1, 0
        %v5958 = vadd.s32 %v5948, %v5952
        %v5959 = vadd.s32 %v5951, %v5957
        %vm5960 = vc.u32 %v5958, %v5954
        %v5961 = vsel %vm5960, 1, 0
        %v5962 = vadd.s32 %v5958, %v5954
        %v5963 = vadd.s32 %v5959, %v5961
        %v5964 = vadd.s32 %v5963, %v5953
        %v5965 = vadd.s32 %v5964, %v5955
        %v5966 = vmul.u32 %v5921, %v5912
        %v5967 = vadd.s32 %v5943, %v5962
        %vm5968 = vc.u32 %v5943, %v5962
        %v5969 = vadd.s32 %v5965, 1
        %v5970 = vsel %vm5968, %v5969, %v5965
        %v5971 = vadd.s32 %v5966, %v5970
        %v5972 = vadd.s32 %v5971, 536870912
        %v5973 = vshrl.u32 %v5972, 30
        %v5974 = vshll.u32 %v5973, 30
        %v5975 = vsub.s32 %v5971, %v5974
        %vm5976 = vcmp.lt.s32.totalorder %v5975, 0
        %v5977 = vsub.s32 0, %v5975
        %v5978 = vsel %vm5976, %v5977, %v5975
        %v5979 = vclz %v5978
        %v5980 = vsub.s32 %v5979, 2
        %vm5981 = vcmp.gt.s32.totalorder 0, %v5980
        %v5982 = vsel %vm5981, 0, %v5980
        %v5983 = vsub.s32 32, %v5982
        %v5984 = vshll.u32 %v5975, %v5982
        %v5985 = vshrl.u32 %v5967, %v5983
        %v5986 = vor.u32 %v5984, %v5985
        %v5987 = vsub.s32 4294967266, %v5982
        %v5988 = vadd.s32 %v5987, 127
        %v5989 = vshll.u32 %v5988, 23
        %v5990 = vor.u32 4788187, %v5989
        %v5991 = vand.u32 2147483647, %v5990
        %v5993 = vcvt.s32.f32 %v5986
        %v5994 = vmul.f32 %v5993, %v5991
        %v5995 = vxor.u32 %v5994, 2147483648
        %v5996 = vsel %vm5875, %v5995, %v5994
        %v5997 = vsub.s32 4, %v5973
        %v5998 = vsel %vm5875, %v5997, %v5973
        %v5999 = vsel %vm5874, %v760, %v5996
        %v6000 = vsel %vm5874, 0, %v5998
        %v6001 = vmul.f32 %v5999, %v5999
        %v6002 = vmul.f32 %v6001, -0.001358992
        %v6003 = vadd.f32 %v6002, 0.041655596
        %v6004 = vmul.f32 %v6001, %v6003
        %v6005 = vadd.f32 %v6004, -0.4999988
        %v6006 = vmul.f32 %v6001, %v6005
        %v6007 = vadd.f32 1.0, %v6006
        %v6008 = vmul.f32 %v5999, %v5999
        %v6009 = vmul.f32 %v6008, -0.00019511016
        %v6010 = vadd.f32 %v6009, 0.008332121
        %v6011 = vmul.f32 %v6008, %v6010
        %v6012 = vadd.f32 %v6011, -0.16666654
        %v6013 = vmul.f32 %v6008, %v6012
        %v6014 = vadd.f32 %v6013, 1.0
        %v6015 = vmul.f32 %v6014, %v5999
        %vm6016 = vweird.f32 %v760
        %v6017 = vand.u32 %v6000, 3
        %vm6018 = vcmp.lt.s32.totalorder %v6017, 2
        %vm6019 = vcmp.eq.s32.totalorder %v6017, 0
        %v6020 = vxor.u32 %v6015, 2147483648
        %v6021 = vsel %vm6019, %v6007, %v6020
        %vm6022 = vcmp.eq.s32.totalorder %v6017, 2
        %v6023 = vxor.u32 %v6007, 2147483648
        %v6024 = vsel %vm6022, %v6023, %v6015
        %v6025 = vsel %vm6018, %v6021, %v6024
        %v6026 = vsel %vm6016, nan, %v6025
        %v6027 = vand.u32 2147483647, %v761
        %vm6028 = vcmp.le.f32.partialorder %v6027, 0.7853982
        %vm6029 = vcmp.lt.s32.totalorder %v761, 0
        %v6030 = vand.u32 %v761, 2139095040
        %v6031 = vshrl.u32 %v6030, 23
        %v6032 = vsub.s32 %v6031, 127
        %v6033 = vand.u32 2147483647, %v761
        %v6034 = vand.u32 %v6033, 8388607
        %v6035 = vor.u32 %v6034, 8388608
        %v6036 = vsub.s32 0, %v6035
        %v6037 = vadd.s32 %v6032, 1
        %vm6038 = vcmp.gt.s32.totalorder %v6037, 0
        %v6039 = vsel %vm6038, %v6037, 0
        %v6040 = vshrl.u32 %v6039, 5
        %v6041 = vand.u32 %v6039, 31
        %v6042 = vsub.s32 32, %v6041
        %v6043 = vshrl.u32 683565275, %v6042
        %v6044 = vshll.u32 683565275, %v6041
        %v6045 = vshrl.u32 2475754826, %v6042
        %v6046 = vor.u32 %v6044, %v6045
        %v6047 = vshll.u32 2475754826, %v6041
        %v6048 = vshrl.u32 2131351028, %v6042
        %v6049 = vor.u32 %v6047, %v6048
        %v6050 = vshll.u32 2131351028, %v6041
        %v6051 = vshrl.u32 2102212464, %v6042
        %v6052 = vor.u32 %v6050, %v6051
        %v6053 = vshll.u32 2102212464, %v6041
        %v6054 = vshrl.u32 920167782, %v6042
        %v6055 = vor.u32 %v6053, %v6054
        %v6056 = vshll.u32 920167782, %v6041
        %v6057 = vshrl.u32 1326507024, %v6042
        %v6058 = vor.u32 %v6056, %v6057
        %vm6059 = vcmp.lt.s32.totalorder %v6040, 1
        %vm6060 = vcmp.lt.s32.totalorder %v6040, 2
        %vm6061 = vcmp.lt.s32.totalorder %v6040, 3
        %vm6062 = vcmp.lt.s32.totalorder %v6040, 4
        %v6063 = vsel %vm6059, %v6043, %v6046
        %v6064 = vsel %vm6062, %v6052, 2102212464
        %v6065 = vsel %vm6061, %v6049, %v6064
        %v6066 = vsel %vm6060, %v6063, %v6065
        %v6067 = vsel %vm6059, %v6046, %v6049
        %v6068 = vsel %vm6062, %v6055, 920167782
        %v6069 = vsel %vm6061, %v6052, %v6068
        %v6070 = vsel %vm6060, %v6067, %v6069
        %v6071 = vsel %vm6059, %v6049, %v6052
        %v6072 = vsel %vm6062, %v6058, 1326507024
        %v6073 = vsel %vm6061, %v6055, %v6072
        %v6074 = vsel %vm6060, %v6071, %v6073
        %v6075 = vshll.u32 %v6035, 8
        %v6076 = vand.u32 %v6075, 65535
        %v6077 = vshrl.u32 %v6075, 16
        %v6078 = vand.u32 %v6074, 65535
        %v6079 = vshrl.u32 %v6074, 16
        %v6080 = vmul.u32 %v6076, %v6078
        %v6081 = vmul.u32 %v6076, %v6079
        %v6082 = vmul.u32 %v6077, %v6078
        %v6083 = vmul.u32 %v6077, %v6079
        %v6084 = vshll.u32 %v6081, 16
        %v6085 = vshrl.u32 %v6081, 16
        %v6086 = vshll.u32 %v6082, 16
        %v6087 = vshrl.u32 %v6082, 16
        %vm6088 = vc.u32 %v6080, %v6084
        %v6089 = vsel %vm6088, 1, 0
        %v6090 = vadd.s32 %v6080, %v6084
        %v6091 = vadd.s32 %v6083, %v6089
        %vm6092 = vc.u32 %v6090, %v6086
        %v6093 = vsel %vm6092, 1, 0
        %v6094 = vadd.s32 %v6090, %v6086
        %v6095 = vadd.s32 %v6091, %v6093
        %v6096 = vadd.s32 %v6095, %v6085
        %v6097 = vadd.s32 %v6096, %v6087
        %v6098 = vand.u32 %v6075, 65535
        %v6099 = vshrl.u32 %v6075, 16
        %v6100 = vand.u32 %v6070, 65535
        %v6101 = vshrl.u32 %v6070, 16
        %v6102 = vmul.u32 %v6098, %v6100
        %v6103 = vmul.u32 %v6098, %v6101
        %v6104 = vmul.u32 %v6099, %v6100
        %v6105 = vmul.u32 %v6099, %v6101
        %v6106 = vshll.u32 %v6103, 16
        %v6107 = vshrl.u32 %v6103, 16
        %v6108 = vshll.u32 %v6104, 16
        %v6109 = vshrl.u32 %v6104, 16
        %vm6110 = vc.u32 %v6102, %v6106
        %v6111 = vsel %vm6110, 1, 0
        %v6112 = vadd.s32 %v6102, %v6106
        %v6113 = vadd.s32 %v6105, %v6111
        %vm6114 = vc.u32 %v6112, %v6108
        %v6115 = vsel %vm6114, 1, 0
        %v6116 = vadd.s32 %v6112, %v6108
        %v6117 = vadd.s32 %v6113, %v6115
        %v6118 = vadd.s32 %v6117, %v6107
        %v6119 = vadd.s32 %v6118, %v6109
        %v6120 = vmul.u32 %v6075, %v6066
        %v6121 = vadd.s32 %v6097, %v6116
        %vm6122 = vc.u32 %v6097, %v6116
        %v6123 = vadd.s32 %v6119, 1
        %v6124 = vsel %vm6122, %v6123, %v6119
        %v6125 = vadd.s32 %v6120, %v6124
        %v6126 = vadd.s32 %v6125, 536870912
        %v6127 = vshrl.u32 %v6126, 30
        %v6128 = vshll.u32 %v6127, 30
        %v6129 = vsub.s32 %v6125, %v6128
        %vm6130 = vcmp.lt.s32.totalorder %v6129, 0
        %v6131 = vsub.s32 0, %v6129
        %v6132 = vsel %vm6130, %v6131, %v6129
        %v6133 = vclz %v6132
        %v6134 = vsub.s32 %v6133, 2
        %vm6135 = vcmp.gt.s32.totalorder 0, %v6134
        %v6136 = vsel %vm6135, 0, %v6134
        %v6137 = vsub.s32 32, %v6136
        %v6138 = vshll.u32 %v6129, %v6136
        %v6139 = vshrl.u32 %v6121, %v6137
        %v6140 = vor.u32 %v6138, %v6139
        %v6141 = vsub.s32 4294967266, %v6136
        %v6142 = vadd.s32 %v6141, 127
        %v6143 = vshll.u32 %v6142, 23
        %v6144 = vor.u32 4788187, %v6143
        %v6145 = vand.u32 2147483647, %v6144
        %v6147 = vcvt.s32.f32 %v6140
        %v6148 = vmul.f32 %v6147, %v6145
        %v6149 = vxor.u32 %v6148, 2147483648
        %v6150 = vsel %vm6029, %v6149, %v6148
        %v6151 = vsub.s32 4, %v6127
        %v6152 = vsel %vm6029, %v6151, %v6127
        %v6153 = vsel %vm6028, %v761, %v6150
        %v6154 = vsel %vm6028, 0, %v6152
        %v6155 = vmul.f32 %v6153, %v6153
        %v6156 = vmul.f32 %v6155, -0.001358992
        %v6157 = vadd.f32 %v6156, 0.041655596
        %v6158 = vmul.f32 %v6155, %v6157
        %v6159 = vadd.f32 %v6158, -0.4999988
        %v6160 = vmul.f32 %v6155, %v6159
        %v6161 = vadd.f32 1.0, %v6160
        %v6162 = vmul.f32 %v6153, %v6153
        %v6163 = vmul.f32 %v6162, -0.00019511016
        %v6164 = vadd.f32 %v6163, 0.008332121
        %v6165 = vmul.f32 %v6162, %v6164
        %v6166 = vadd.f32 %v6165, -0.16666654
        %v6167 = vmul.f32 %v6162, %v6166
        %v6168 = vadd.f32 %v6167, 1.0
        %v6169 = vmul.f32 %v6168, %v6153
        %vm6170 = vweird.f32 %v761
        %v6171 = vand.u32 %v6154, 3
        %vm6172 = vcmp.lt.s32.totalorder %v6171, 2
        %vm6173 = vcmp.eq.s32.totalorder %v6171, 0
        %v6174 = vxor.u32 %v6169, 2147483648
        %v6175 = vsel %vm6173, %v6161, %v6174
        %vm6176 = vcmp.eq.s32.totalorder %v6171, 2
        %v6177 = vxor.u32 %v6161, 2147483648
        %v6178 = vsel %vm6176, %v6177, %v6169
        %v6179 = vsel %vm6172, %v6175, %v6178
        %v6180 = vsel %vm6170, nan, %v6179
        %v6181 = vand.u32 2147483647, %v762
        %vm6182 = vcmp.le.f32.partialorder %v6181, 0.7853982
        %vm6183 = vcmp.lt.s32.totalorder %v762, 0
        %v6184 = vand.u32 %v762, 2139095040
        %v6185 = vshrl.u32 %v6184, 23
        %v6186 = vsub.s32 %v6185, 127
        %v6187 = vand.u32 2147483647, %v762
        %v6188 = vand.u32 %v6187, 8388607
        %v6189 = vor.u32 %v6188, 8388608
        %v6190 = vsub.s32 0, %v6189
        %v6191 = vadd.s32 %v6186, 1
        %vm6192 = vcmp.gt.s32.totalorder %v6191, 0
        %v6193 = vsel %vm6192, %v6191, 0
        %v6194 = vshrl.u32 %v6193, 5
        %v6195 = vand.u32 %v6193, 31
        %v6196 = vsub.s32 32, %v6195
        %v6197 = vshrl.u32 683565275, %v6196
        %v6198 = vshll.u32 683565275, %v6195
        %v6199 = vshrl.u32 2475754826, %v6196
        %v6200 = vor.u32 %v6198, %v6199
        %v6201 = vshll.u32 2475754826, %v6195
        %v6202 = vshrl.u32 2131351028, %v6196
        %v6203 = vor.u32 %v6201, %v6202
        %v6204 = vshll.u32 2131351028, %v6195
        %v6205 = vshrl.u32 2102212464, %v6196
        %v6206 = vor.u32 %v6204, %v6205
        %v6207 = vshll.u32 2102212464, %v6195
        %v6208 = vshrl.u32 920167782, %v6196
        %v6209 = vor.u32 %v6207, %v6208
        %v6210 = vshll.u32 920167782, %v6195
        %v6211 = vshrl.u32 1326507024, %v6196
        %v6212 = vor.u32 %v6210, %v6211
        %vm6213 = vcmp.lt.s32.totalorder %v6194, 1
        %vm6214 = vcmp.lt.s32.totalorder %v6194, 2
        %vm6215 = vcmp.lt.s32.totalorder %v6194, 3
        %vm6216 = vcmp.lt.s32.totalorder %v6194, 4
        %v6217 = vsel %vm6213, %v6197, %v6200
        %v6218 = vsel %vm6216, %v6206, 2102212464
        %v6219 = vsel %vm6215, %v6203, %v6218
        %v6220 = vsel %vm6214, %v6217, %v6219
        %v6221 = vsel %vm6213, %v6200, %v6203
        %v6222 = vsel %vm6216, %v6209, 920167782
        %v6223 = vsel %vm6215, %v6206, %v6222
        %v6224 = vsel %vm6214, %v6221, %v6223
        %v6225 = vsel %vm6213, %v6203, %v6206
        %v6226 = vsel %vm6216, %v6212, 1326507024
        %v6227 = vsel %vm6215, %v6209, %v6226
        %v6228 = vsel %vm6214, %v6225, %v6227
        %v6229 = vshll.u32 %v6189, 8
        %v6230 = vand.u32 %v6229, 65535
        %v6231 = vshrl.u32 %v6229, 16
        %v6232 = vand.u32 %v6228, 65535
        %v6233 = vshrl.u32 %v6228, 16
        %v6234 = vmul.u32 %v6230, %v6232
        %v6235 = vmul.u32 %v6230, %v6233
        %v6236 = vmul.u32 %v6231, %v6232
        %v6237 = vmul.u32 %v6231, %v6233
        %v6238 = vshll.u32 %v6235, 16
        %v6239 = vshrl.u32 %v6235, 16
        %v6240 = vshll.u32 %v6236, 16
        %v6241 = vshrl.u32 %v6236, 16
        %vm6242 = vc.u32 %v6234, %v6238
        %v6243 = vsel %vm6242, 1, 0
        %v6244 = vadd.s32 %v6234, %v6238
        %v6245 = vadd.s32 %v6237, %v6243
        %vm6246 = vc.u32 %v6244, %v6240
        %v6247 = vsel %vm6246, 1, 0
        %v6248 = vadd.s32 %v6244, %v6240
        %v6249 = vadd.s32 %v6245, %v6247
        %v6250 = vadd.s32 %v6249, %v6239
        %v6251 = vadd.s32 %v6250, %v6241
        %v6252 = vand.u32 %v6229, 65535
        %v6253 = vshrl.u32 %v6229, 16
        %v6254 = vand.u32 %v6224, 65535
        %v6255 = vshrl.u32 %v6224, 16
        %v6256 = vmul.u32 %v6252, %v6254
        %v6257 = vmul.u32 %v6252, %v6255
        %v6258 = vmul.u32 %v6253, %v6254
        %v6259 = vmul.u32 %v6253, %v6255
        %v6260 = vshll.u32 %v6257, 16
        %v6261 = vshrl.u32 %v6257, 16
        %v6262 = vshll.u32 %v6258, 16
        %v6263 = vshrl.u32 %v6258, 16
        %vm6264 = vc.u32 %v6256, %v6260
        %v6265 = vsel %vm6264, 1, 0
        %v6266 = vadd.s32 %v6256, %v6260
        %v6267 = vadd.s32 %v6259, %v6265
        %vm6268 = vc.u32 %v6266, %v6262
        %v6269 = vsel %vm6268, 1, 0
        %v6270 = vadd.s32 %v6266, %v6262
        %v6271 = vadd.s32 %v6267, %v6269
        %v6272 = vadd.s32 %v6271, %v6261
        %v6273 = vadd.s32 %v6272, %v6263
        %v6274 = vmul.u32 %v6229, %v6220
        %v6275 = vadd.s32 %v6251, %v6270
        %vm6276 = vc.u32 %v6251, %v6270
        %v6277 = vadd.s32 %v6273, 1
        %v6278 = vsel %vm6276, %v6277, %v6273
        %v6279 = vadd.s32 %v6274, %v6278
        %v6280 = vadd.s32 %v6279, 536870912
        %v6281 = vshrl.u32 %v6280, 30
        %v6282 = vshll.u32 %v6281, 30
        %v6283 = vsub.s32 %v6279, %v6282
        %vm6284 = vcmp.lt.s32.totalorder %v6283, 0
        %v6285 = vsub.s32 0, %v6283
        %v6286 = vsel %vm6284, %v6285, %v6283
        %v6287 = vclz %v6286
        %v6288 = vsub.s32 %v6287, 2
        %vm6289 = vcmp.gt.s32.totalorder 0, %v6288
        %v6290 = vsel %vm6289, 0, %v6288
        %v6291 = vsub.s32 32, %v6290
        %v6292 = vshll.u32 %v6283, %v6290
        %v6293 = vshrl.u32 %v6275, %v6291
        %v6294 = vor.u32 %v6292, %v6293
        %v6295 = vsub.s32 4294967266, %v6290
        %v6296 = vadd.s32 %v6295, 127
        %v6297 = vshll.u32 %v6296, 23
        %v6298 = vor.u32 4788187, %v6297
        %v6299 = vand.u32 2147483647, %v6298
        %v6301 = vcvt.s32.f32 %v6294
        %v6302 = vmul.f32 %v6301, %v6299
        %v6303 = vxor.u32 %v6302, 2147483648
        %v6304 = vsel %vm6183, %v6303, %v6302
        %v6305 = vsub.s32 4, %v6281
        %v6306 = vsel %vm6183, %v6305, %v6281
        %v6307 = vsel %vm6182, %v762, %v6304
        %v6308 = vsel %vm6182, 0, %v6306
        %v6309 = vmul.f32 %v6307, %v6307
        %v6310 = vmul.f32 %v6309, -0.001358992
        %v6311 = vadd.f32 %v6310, 0.041655596
        %v6312 = vmul.f32 %v6309, %v6311
        %v6313 = vadd.f32 %v6312, -0.4999988
        %v6314 = vmul.f32 %v6309, %v6313
        %v6315 = vadd.f32 1.0, %v6314
        %v6316 = vmul.f32 %v6307, %v6307
        %v6317 = vmul.f32 %v6316, -0.00019511016
        %v6318 = vadd.f32 %v6317, 0.008332121
        %v6319 = vmul.f32 %v6316, %v6318
        %v6320 = vadd.f32 %v6319, -0.16666654
        %v6321 = vmul.f32 %v6316, %v6320
        %v6322 = vadd.f32 %v6321, 1.0
        %v6323 = vmul.f32 %v6322, %v6307
        %vm6324 = vweird.f32 %v762
        %v6325 = vand.u32 %v6308, 3
        %vm6326 = vcmp.lt.s32.totalorder %v6325, 2
        %vm6327 = vcmp.eq.s32.totalorder %v6325, 0
        %v6328 = vxor.u32 %v6323, 2147483648
        %v6329 = vsel %vm6327, %v6315, %v6328
        %vm6330 = vcmp.eq.s32.totalorder %v6325, 2
        %v6331 = vxor.u32 %v6315, 2147483648
        %v6332 = vsel %vm6330, %v6331, %v6323
        %v6333 = vsel %vm6326, %v6329, %v6332
        %v6334 = vsel %vm6324, nan, %v6333
        %v6335 = vand.u32 2147483647, %v763
        %vm6336 = vcmp.le.f32.partialorder %v6335, 0.7853982
        %vm6337 = vcmp.lt.s32.totalorder %v763, 0
        %v6338 = vand.u32 %v763, 2139095040
        %v6339 = vshrl.u32 %v6338, 23
        %v6340 = vsub.s32 %v6339, 127
        %v6341 = vand.u32 2147483647, %v763
        %v6342 = vand.u32 %v6341, 8388607
        %v6343 = vor.u32 %v6342, 8388608
        %v6344 = vsub.s32 0, %v6343
        %v6345 = vadd.s32 %v6340, 1
        %vm6346 = vcmp.gt.s32.totalorder %v6345, 0
        %v6347 = vsel %vm6346, %v6345, 0
        %v6348 = vshrl.u32 %v6347, 5
        %v6349 = vand.u32 %v6347, 31
        %v6350 = vsub.s32 32, %v6349
        %v6351 = vshrl.u32 683565275, %v6350
        %v6352 = vshll.u32 683565275, %v6349
        %v6353 = vshrl.u32 2475754826, %v6350
        %v6354 = vor.u32 %v6352, %v6353
        %v6355 = vshll.u32 2475754826, %v6349
        %v6356 = vshrl.u32 2131351028, %v6350
        %v6357 = vor.u32 %v6355, %v6356
        %v6358 = vshll.u32 2131351028, %v6349
        %v6359 = vshrl.u32 2102212464, %v6350
        %v6360 = vor.u32 %v6358, %v6359
        %v6361 = vshll.u32 2102212464, %v6349
        %v6362 = vshrl.u32 920167782, %v6350
        %v6363 = vor.u32 %v6361, %v6362
        %v6364 = vshll.u32 920167782, %v6349
        %v6365 = vshrl.u32 1326507024, %v6350
        %v6366 = vor.u32 %v6364, %v6365
        %vm6367 = vcmp.lt.s32.totalorder %v6348, 1
        %vm6368 = vcmp.lt.s32.totalorder %v6348, 2
        %vm6369 = vcmp.lt.s32.totalorder %v6348, 3
        %vm6370 = vcmp.lt.s32.totalorder %v6348, 4
        %v6371 = vsel %vm6367, %v6351, %v6354
        %v6372 = vsel %vm6370, %v6360, 2102212464
        %v6373 = vsel %vm6369, %v6357, %v6372
        %v6374 = vsel %vm6368, %v6371, %v6373
        %v6375 = vsel %vm6367, %v6354, %v6357
        %v6376 = vsel %vm6370, %v6363, 920167782
        %v6377 = vsel %vm6369, %v6360, %v6376
        %v6378 = vsel %vm6368, %v6375, %v6377
        %v6379 = vsel %vm6367, %v6357, %v6360
        %v6380 = vsel %vm6370, %v6366, 1326507024
        %v6381 = vsel %vm6369, %v6363, %v6380
        %v6382 = vsel %vm6368, %v6379, %v6381
        %v6383 = vshll.u32 %v6343, 8
        %v6384 = vand.u32 %v6383, 65535
        %v6385 = vshrl.u32 %v6383, 16
        %v6386 = vand.u32 %v6382, 65535
        %v6387 = vshrl.u32 %v6382, 16
        %v6388 = vmul.u32 %v6384, %v6386
        %v6389 = vmul.u32 %v6384, %v6387
        %v6390 = vmul.u32 %v6385, %v6386
        %v6391 = vmul.u32 %v6385, %v6387
        %v6392 = vshll.u32 %v6389, 16
        %v6393 = vshrl.u32 %v6389, 16
        %v6394 = vshll.u32 %v6390, 16
        %v6395 = vshrl.u32 %v6390, 16
        %vm6396 = vc.u32 %v6388, %v6392
        %v6397 = vsel %vm6396, 1, 0
        %v6398 = vadd.s32 %v6388, %v6392
        %v6399 = vadd.s32 %v6391, %v6397
        %vm6400 = vc.u32 %v6398, %v6394
        %v6401 = vsel %vm6400, 1, 0
        %v6402 = vadd.s32 %v6398, %v6394
        %v6403 = vadd.s32 %v6399, %v6401
        %v6404 = vadd.s32 %v6403, %v6393
        %v6405 = vadd.s32 %v6404, %v6395
        %v6406 = vand.u32 %v6383, 65535
        %v6407 = vshrl.u32 %v6383, 16
        %v6408 = vand.u32 %v6378, 65535
        %v6409 = vshrl.u32 %v6378, 16
        %v6410 = vmul.u32 %v6406, %v6408
        %v6411 = vmul.u32 %v6406, %v6409
        %v6412 = vmul.u32 %v6407, %v6408
        %v6413 = vmul.u32 %v6407, %v6409
        %v6414 = vshll.u32 %v6411, 16
        %v6415 = vshrl.u32 %v6411, 16
        %v6416 = vshll.u32 %v6412, 16
        %v6417 = vshrl.u32 %v6412, 16
        %vm6418 = vc.u32 %v6410, %v6414
        %v6419 = vsel %vm6418, 1, 0
        %v6420 = vadd.s32 %v6410, %v6414
        %v6421 = vadd.s32 %v6413, %v6419
        %vm6422 = vc.u32 %v6420, %v6416
        %v6423 = vsel %vm6422, 1, 0
        %v6424 = vadd.s32 %v6420, %v6416
        %v6425 = vadd.s32 %v6421, %v6423
        %v6426 = vadd.s32 %v6425, %v6415
        %v6427 = vadd.s32 %v6426, %v6417
        %v6428 = vmul.u32 %v6383, %v6374
        %v6429 = vadd.s32 %v6405, %v6424
        %vm6430 = vc.u32 %v6405, %v6424
        %v6431 = vadd.s32 %v6427, 1
        %v6432 = vsel %vm6430, %v6431, %v6427
        %v6433 = vadd.s32 %v6428, %v6432
        %v6434 = vadd.s32 %v6433, 536870912
        %v6435 = vshrl.u32 %v6434, 30
        %v6436 = vshll.u32 %v6435, 30
        %v6437 = vsub.s32 %v6433, %v6436
        %vm6438 = vcmp.lt.s32.totalorder %v6437, 0
        %v6439 = vsub.s32 0, %v6437
        %v6440 = vsel %vm6438, %v6439, %v6437
        %v6441 = vclz %v6440
        %v6442 = vsub.s32 %v6441, 2
        %vm6443 = vcmp.gt.s32.totalorder 0, %v6442
        %v6444 = vsel %vm6443, 0, %v6442
        %v6445 = vsub.s32 32, %v6444
        %v6446 = vshll.u32 %v6437, %v6444
        %v6447 = vshrl.u32 %v6429, %v6445
        %v6448 = vor.u32 %v6446, %v6447
        %v6449 = vsub.s32 4294967266, %v6444
        %v6450 = vadd.s32 %v6449, 127
        %v6451 = vshll.u32 %v6450, 23
        %v6452 = vor.u32 4788187, %v6451
        %v6453 = vand.u32 2147483647, %v6452
        %v6455 = vcvt.s32.f32 %v6448
        %v6456 = vmul.f32 %v6455, %v6453
        %v6457 = vxor.u32 %v6456, 2147483648
        %v6458 = vsel %vm6337, %v6457, %v6456
        %v6459 = vsub.s32 4, %v6435
        %v6460 = vsel %vm6337, %v6459, %v6435
        %v6461 = vsel %vm6336, %v763, %v6458
        %v6462 = vsel %vm6336, 0, %v6460
        %v6463 = vmul.f32 %v6461, %v6461
        %v6464 = vmul.f32 %v6463, -0.001358992
        %v6465 = vadd.f32 %v6464, 0.041655596
        %v6466 = vmul.f32 %v6463, %v6465
        %v6467 = vadd.f32 %v6466, -0.4999988
        %v6468 = vmul.f32 %v6463, %v6467
        %v6469 = vadd.f32 1.0, %v6468
        %v6470 = vmul.f32 %v6461, %v6461
        %v6471 = vmul.f32 %v6470, -0.00019511016
        %v6472 = vadd.f32 %v6471, 0.008332121
        %v6473 = vmul.f32 %v6470, %v6472
        %v6474 = vadd.f32 %v6473, -0.16666654
        %v6475 = vmul.f32 %v6470, %v6474
        %v6476 = vadd.f32 %v6475, 1.0
        %v6477 = vmul.f32 %v6476, %v6461
        %vm6478 = vweird.f32 %v763
        %v6479 = vand.u32 %v6462, 3
        %vm6480 = vcmp.lt.s32.totalorder %v6479, 2
        %vm6481 = vcmp.eq.s32.totalorder %v6479, 0
        %v6482 = vxor.u32 %v6477, 2147483648
        %v6483 = vsel %vm6481, %v6469, %v6482
        %vm6484 = vcmp.eq.s32.totalorder %v6479, 2
        %v6485 = vxor.u32 %v6469, 2147483648
        %v6486 = vsel %vm6484, %v6485, %v6477
        %v6487 = vsel %vm6480, %v6483, %v6486
        %v6488 = vsel %vm6478, nan, %v6487
        %v6489 = vand.u32 2147483647, %v764
        %vm6490 = vcmp.le.f32.partialorder %v6489, 0.7853982
        %vm6491 = vcmp.lt.s32.totalorder %v764, 0
        %v6492 = vand.u32 %v764, 2139095040
        %v6493 = vshrl.u32 %v6492, 23
        %v6494 = vsub.s32 %v6493, 127
        %v6495 = vand.u32 2147483647, %v764
        %v6496 = vand.u32 %v6495, 8388607
        %v6497 = vor.u32 %v6496, 8388608
        %v6498 = vsub.s32 0, %v6497
        %v6499 = vadd.s32 %v6494, 1
        %vm6500 = vcmp.gt.s32.totalorder %v6499, 0
        %v6501 = vsel %vm6500, %v6499, 0
        %v6502 = vshrl.u32 %v6501, 5
        %v6503 = vand.u32 %v6501, 31
        %v6504 = vsub.s32 32, %v6503
        %v6505 = vshrl.u32 683565275, %v6504
        %v6506 = vshll.u32 683565275, %v6503
        %v6507 = vshrl.u32 2475754826, %v6504
        %v6508 = vor.u32 %v6506, %v6507
        %v6509 = vshll.u32 2475754826, %v6503
        %v6510 = vshrl.u32 2131351028, %v6504
        %v6511 = vor.u32 %v6509, %v6510
        %v6512 = vshll.u32 2131351028, %v6503
        %v6513 = vshrl.u32 2102212464, %v6504
        %v6514 = vor.u32 %v6512, %v6513
        %v6515 = vshll.u32 2102212464, %v6503
        %v6516 = vshrl.u32 920167782, %v6504
        %v6517 = vor.u32 %v6515, %v6516
        %v6518 = vshll.u32 920167782, %v6503
        %v6519 = vshrl.u32 1326507024, %v6504
        %v6520 = vor.u32 %v6518, %v6519
        %vm6521 = vcmp.lt.s32.totalorder %v6502, 1
        %vm6522 = vcmp.lt.s32.totalorder %v6502, 2
        %vm6523 = vcmp.lt.s32.totalorder %v6502, 3
        %vm6524 = vcmp.lt.s32.totalorder %v6502, 4
        %v6525 = vsel %vm6521, %v6505, %v6508
        %v6526 = vsel %vm6524, %v6514, 2102212464
        %v6527 = vsel %vm6523, %v6511, %v6526
        %v6528 = vsel %vm6522, %v6525, %v6527
        %v6529 = vsel %vm6521, %v6508, %v6511
        %v6530 = vsel %vm6524, %v6517, 920167782
        %v6531 = vsel %vm6523, %v6514, %v6530
        %v6532 = vsel %vm6522, %v6529, %v6531
        %v6533 = vsel %vm6521, %v6511, %v6514
        %v6534 = vsel %vm6524, %v6520, 1326507024
        %v6535 = vsel %vm6523, %v6517, %v6534
        %v6536 = vsel %vm6522, %v6533, %v6535
        %v6537 = vshll.u32 %v6497, 8
        %v6538 = vand.u32 %v6537, 65535
        %v6539 = vshrl.u32 %v6537, 16
        %v6540 = vand.u32 %v6536, 65535
        %v6541 = vshrl.u32 %v6536, 16
        %v6542 = vmul.u32 %v6538, %v6540
        %v6543 = vmul.u32 %v6538, %v6541
        %v6544 = vmul.u32 %v6539, %v6540
        %v6545 = vmul.u32 %v6539, %v6541
        %v6546 = vshll.u32 %v6543, 16
        %v6547 = vshrl.u32 %v6543, 16
        %v6548 = vshll.u32 %v6544, 16
        %v6549 = vshrl.u32 %v6544, 16
        %vm6550 = vc.u32 %v6542, %v6546
        %v6551 = vsel %vm6550, 1, 0
        %v6552 = vadd.s32 %v6542, %v6546
        %v6553 = vadd.s32 %v6545, %v6551
        %vm6554 = vc.u32 %v6552, %v6548
        %v6555 = vsel %vm6554, 1, 0
        %v6556 = vadd.s32 %v6552, %v6548
        %v6557 = vadd.s32 %v6553, %v6555
        %v6558 = vadd.s32 %v6557, %v6547
        %v6559 = vadd.s32 %v6558, %v6549
        %v6560 = vand.u32 %v6537, 65535
        %v6561 = vshrl.u32 %v6537, 16
        %v6562 = vand.u32 %v6532, 65535
        %v6563 = vshrl.u32 %v6532, 16
        %v6564 = vmul.u32 %v6560, %v6562
        %v6565 = vmul.u32 %v6560, %v6563
        %v6566 = vmul.u32 %v6561, %v6562
        %v6567 = vmul.u32 %v6561, %v6563
        %v6568 = vshll.u32 %v6565, 16
        %v6569 = vshrl.u32 %v6565, 16
        %v6570 = vshll.u32 %v6566, 16
        %v6571 = vshrl.u32 %v6566, 16
        %vm6572 = vc.u32 %v6564, %v6568
        %v6573 = vsel %vm6572, 1, 0
        %v6574 = vadd.s32 %v6564, %v6568
        %v6575 = vadd.s32 %v6567, %v6573
        %vm6576 = vc.u32 %v6574, %v6570
        %v6577 = vsel %vm6576, 1, 0
        %v6578 = vadd.s32 %v6574, %v6570
        %v6579 = vadd.s32 %v6575, %v6577
        %v6580 = vadd.s32 %v6579, %v6569
        %v6581 = vadd.s32 %v6580, %v6571
        %v6582 = vmul.u32 %v6537, %v6528
        %v6583 = vadd.s32 %v6559, %v6578
        %vm6584 = vc.u32 %v6559, %v6578
        %v6585 = vadd.s32 %v6581, 1
        %v6586 = vsel %vm6584, %v6585, %v6581
        %v6587 = vadd.s32 %v6582, %v6586
        %v6588 = vadd.s32 %v6587, 536870912
        %v6589 = vshrl.u32 %v6588, 30
        %v6590 = vshll.u32 %v6589, 30
        %v6591 = vsub.s32 %v6587, %v6590
        %vm6592 = vcmp.lt.s32.totalorder %v6591, 0
        %v6593 = vsub.s32 0, %v6591
        %v6594 = vsel %vm6592, %v6593, %v6591
        %v6595 = vclz %v6594
        %v6596 = vsub.s32 %v6595, 2
        %vm6597 = vcmp.gt.s32.totalorder 0, %v6596
        %v6598 = vsel %vm6597, 0, %v6596
        %v6599 = vsub.s32 32, %v6598
        %v6600 = vshll.u32 %v6591, %v6598
        %v6601 = vshrl.u32 %v6583, %v6599
        %v6602 = vor.u32 %v6600, %v6601
        %v6603 = vsub.s32 4294967266, %v6598
        %v6604 = vadd.s32 %v6603, 127
        %v6605 = vshll.u32 %v6604, 23
        %v6606 = vor.u32 4788187, %v6605
        %v6607 = vand.u32 2147483647, %v6606
        %v6609 = vcvt.s32.f32 %v6602
        %v6610 = vmul.f32 %v6609, %v6607
        %v6611 = vxor.u32 %v6610, 2147483648
        %v6612 = vsel %vm6491, %v6611, %v6610
        %v6613 = vsub.s32 4, %v6589
        %v6614 = vsel %vm6491, %v6613, %v6589
        %v6615 = vsel %vm6490, %v764, %v6612
        %v6616 = vsel %vm6490, 0, %v6614
        %v6617 = vmul.f32 %v6615, %v6615
        %v6618 = vmul.f32 %v6617, -0.001358992
        %v6619 = vadd.f32 %v6618, 0.041655596
        %v6620 = vmul.f32 %v6617, %v6619
        %v6621 = vadd.f32 %v6620, -0.4999988
        %v6622 = vmul.f32 %v6617, %v6621
        %v6623 = vadd.f32 1.0, %v6622
        %v6624 = vmul.f32 %v6615, %v6615
        %v6625 = vmul.f32 %v6624, -0.00019511016
        %v6626 = vadd.f32 %v6625, 0.008332121
        %v6627 = vmul.f32 %v6624, %v6626
        %v6628 = vadd.f32 %v6627, -0.16666654
        %v6629 = vmul.f32 %v6624, %v6628
        %v6630 = vadd.f32 %v6629, 1.0
        %v6631 = vmul.f32 %v6630, %v6615
        %vm6632 = vweird.f32 %v764
        %v6633 = vand.u32 %v6616, 3
        %vm6634 = vcmp.lt.s32.totalorder %v6633, 2
        %vm6635 = vcmp.eq.s32.totalorder %v6633, 0
        %v6636 = vxor.u32 %v6631, 2147483648
        %v6637 = vsel %vm6635, %v6623, %v6636
        %vm6638 = vcmp.eq.s32.totalorder %v6633, 2
        %v6639 = vxor.u32 %v6623, 2147483648
        %v6640 = vsel %vm6638, %v6639, %v6631
        %v6641 = vsel %vm6634, %v6637, %v6640
        %v6642 = vsel %vm6632, nan, %v6641
        %v6643 = vand.u32 2147483647, %v765
        %vm6644 = vcmp.le.f32.partialorder %v6643, 0.7853982
        %vm6645 = vcmp.lt.s32.totalorder %v765, 0
        %v6646 = vand.u32 %v765, 2139095040
        %v6647 = vshrl.u32 %v6646, 23
        %v6648 = vsub.s32 %v6647, 127
        %v6649 = vand.u32 2147483647, %v765
        %v6650 = vand.u32 %v6649, 8388607
        %v6651 = vor.u32 %v6650, 8388608
        %v6652 = vsub.s32 0, %v6651
        %v6653 = vadd.s32 %v6648, 1
        %vm6654 = vcmp.gt.s32.totalorder %v6653, 0
        %v6655 = vsel %vm6654, %v6653, 0
        %v6656 = vshrl.u32 %v6655, 5
        %v6657 = vand.u32 %v6655, 31
        %v6658 = vsub.s32 32, %v6657
        %v6659 = vshrl.u32 683565275, %v6658
        %v6660 = vshll.u32 683565275, %v6657
        %v6661 = vshrl.u32 2475754826, %v6658
        %v6662 = vor.u32 %v6660, %v6661
        %v6663 = vshll.u32 2475754826, %v6657
        %v6664 = vshrl.u32 2131351028, %v6658
        %v6665 = vor.u32 %v6663, %v6664
        %v6666 = vshll.u32 2131351028, %v6657
        %v6667 = vshrl.u32 2102212464, %v6658
        %v6668 = vor.u32 %v6666, %v6667
        %v6669 = vshll.u32 2102212464, %v6657
        %v6670 = vshrl.u32 920167782, %v6658
        %v6671 = vor.u32 %v6669, %v6670
        %v6672 = vshll.u32 920167782, %v6657
        %v6673 = vshrl.u32 1326507024, %v6658
        %v6674 = vor.u32 %v6672, %v6673
        %vm6675 = vcmp.lt.s32.totalorder %v6656, 1
        %vm6676 = vcmp.lt.s32.totalorder %v6656, 2
        %vm6677 = vcmp.lt.s32.totalorder %v6656, 3
        %vm6678 = vcmp.lt.s32.totalorder %v6656, 4
        %v6679 = vsel %vm6675, %v6659, %v6662
        %v6680 = vsel %vm6678, %v6668, 2102212464
        %v6681 = vsel %vm6677, %v6665, %v6680
        %v6682 = vsel %vm6676, %v6679, %v6681
        %v6683 = vsel %vm6675, %v6662, %v6665
        %v6684 = vsel %vm6678, %v6671, 920167782
        %v6685 = vsel %vm6677, %v6668, %v6684
        %v6686 = vsel %vm6676, %v6683, %v6685
        %v6687 = vsel %vm6675, %v6665, %v6668
        %v6688 = vsel %vm6678, %v6674, 1326507024
        %v6689 = vsel %vm6677, %v6671, %v6688
        %v6690 = vsel %vm6676, %v6687, %v6689
        %v6691 = vshll.u32 %v6651, 8
        %v6692 = vand.u32 %v6691, 65535
        %v6693 = vshrl.u32 %v6691, 16
        %v6694 = vand.u32 %v6690, 65535
        %v6695 = vshrl.u32 %v6690, 16
        %v6696 = vmul.u32 %v6692, %v6694
        %v6697 = vmul.u32 %v6692, %v6695
        %v6698 = vmul.u32 %v6693, %v6694
        %v6699 = vmul.u32 %v6693, %v6695
        %v6700 = vshll.u32 %v6697, 16
        %v6701 = vshrl.u32 %v6697, 16
        %v6702 = vshll.u32 %v6698, 16
        %v6703 = vshrl.u32 %v6698, 16
        %vm6704 = vc.u32 %v6696, %v6700
        %v6705 = vsel %vm6704, 1, 0
        %v6706 = vadd.s32 %v6696, %v6700
        %v6707 = vadd.s32 %v6699, %v6705
        %vm6708 = vc.u32 %v6706, %v6702
        %v6709 = vsel %vm6708, 1, 0
        %v6710 = vadd.s32 %v6706, %v6702
        %v6711 = vadd.s32 %v6707, %v6709
        %v6712 = vadd.s32 %v6711, %v6701
        %v6713 = vadd.s32 %v6712, %v6703
        %v6714 = vand.u32 %v6691, 65535
        %v6715 = vshrl.u32 %v6691, 16
        %v6716 = vand.u32 %v6686, 65535
        %v6717 = vshrl.u32 %v6686, 16
        %v6718 = vmul.u32 %v6714, %v6716
        %v6719 = vmul.u32 %v6714, %v6717
        %v6720 = vmul.u32 %v6715, %v6716
        %v6721 = vmul.u32 %v6715, %v6717
        %v6722 = vshll.u32 %v6719, 16
        %v6723 = vshrl.u32 %v6719, 16
        %v6724 = vshll.u32 %v6720, 16
        %v6725 = vshrl.u32 %v6720, 16
        %vm6726 = vc.u32 %v6718, %v6722
        %v6727 = vsel %vm6726, 1, 0
        %v6728 = vadd.s32 %v6718, %v6722
        %v6729 = vadd.s32 %v6721, %v6727
        %vm6730 = vc.u32 %v6728, %v6724
        %v6731 = vsel %vm6730, 1, 0
        %v6732 = vadd.s32 %v6728, %v6724
        %v6733 = vadd.s32 %v6729, %v6731
        %v6734 = vadd.s32 %v6733, %v6723
        %v6735 = vadd.s32 %v6734, %v6725
        %v6736 = vmul.u32 %v6691, %v6682
        %v6737 = vadd.s32 %v6713, %v6732
        %vm6738 = vc.u32 %v6713, %v6732
        %v6739 = vadd.s32 %v6735, 1
        %v6740 = vsel %vm6738, %v6739, %v6735
        %v6741 = vadd.s32 %v6736, %v6740
        %v6742 = vadd.s32 %v6741, 536870912
        %v6743 = vshrl.u32 %v6742, 30
        %v6744 = vshll.u32 %v6743, 30
        %v6745 = vsub.s32 %v6741, %v6744
        %vm6746 = vcmp.lt.s32.totalorder %v6745, 0
        %v6747 = vsub.s32 0, %v6745
        %v6748 = vsel %vm6746, %v6747, %v6745
        %v6749 = vclz %v6748
        %v6750 = vsub.s32 %v6749, 2
        %vm6751 = vcmp.gt.s32.totalorder 0, %v6750
        %v6752 = vsel %vm6751, 0, %v6750
        %v6753 = vsub.s32 32, %v6752
        %v6754 = vshll.u32 %v6745, %v6752
        %v6755 = vshrl.u32 %v6737, %v6753
        %v6756 = vor.u32 %v6754, %v6755
        %v6757 = vsub.s32 4294967266, %v6752
        %v6758 = vadd.s32 %v6757, 127
        %v6759 = vshll.u32 %v6758, 23
        %v6760 = vor.u32 4788187, %v6759
        %v6761 = vand.u32 2147483647, %v6760
        %v6763 = vcvt.s32.f32 %v6756
        %v6764 = vmul.f32 %v6763, %v6761
        %v6765 = vxor.u32 %v6764, 2147483648
        %v6766 = vsel %vm6645, %v6765, %v6764
        %v6767 = vsub.s32 4, %v6743
        %v6768 = vsel %vm6645, %v6767, %v6743
        %v6769 = vsel %vm6644, %v765, %v6766
        %v6770 = vsel %vm6644, 0, %v6768
        %v6771 = vmul.f32 %v6769, %v6769
        %v6772 = vmul.f32 %v6771, -0.001358992
        %v6773 = vadd.f32 %v6772, 0.041655596
        %v6774 = vmul.f32 %v6771, %v6773
        %v6775 = vadd.f32 %v6774, -0.4999988
        %v6776 = vmul.f32 %v6771, %v6775
        %v6777 = vadd.f32 1.0, %v6776
        %v6778 = vmul.f32 %v6769, %v6769
        %v6779 = vmul.f32 %v6778, -0.00019511016
        %v6780 = vadd.f32 %v6779, 0.008332121
        %v6781 = vmul.f32 %v6778, %v6780
        %v6782 = vadd.f32 %v6781, -0.16666654
        %v6783 = vmul.f32 %v6778, %v6782
        %v6784 = vadd.f32 %v6783, 1.0
        %v6785 = vmul.f32 %v6784, %v6769
        %vm6786 = vweird.f32 %v765
        %v6787 = vand.u32 %v6770, 3
        %vm6788 = vcmp.lt.s32.totalorder %v6787, 2
        %vm6789 = vcmp.eq.s32.totalorder %v6787, 0
        %v6790 = vxor.u32 %v6785, 2147483648
        %v6791 = vsel %vm6789, %v6777, %v6790
        %vm6792 = vcmp.eq.s32.totalorder %v6787, 2
        %v6793 = vxor.u32 %v6777, 2147483648
        %v6794 = vsel %vm6792, %v6793, %v6785
        %v6795 = vsel %vm6788, %v6791, %v6794
        %v6796 = vsel %vm6786, nan, %v6795
        %v6797 = vand.u32 2147483647, %v766
        %vm6798 = vcmp.le.f32.partialorder %v6797, 0.7853982
        %vm6799 = vcmp.lt.s32.totalorder %v766, 0
        %v6800 = vand.u32 %v766, 2139095040
        %v6801 = vshrl.u32 %v6800, 23
        %v6802 = vsub.s32 %v6801, 127
        %v6803 = vand.u32 2147483647, %v766
        %v6804 = vand.u32 %v6803, 8388607
        %v6805 = vor.u32 %v6804, 8388608
        %v6806 = vsub.s32 0, %v6805
        %v6807 = vadd.s32 %v6802, 1
        %vm6808 = vcmp.gt.s32.totalorder %v6807, 0
        %v6809 = vsel %vm6808, %v6807, 0
        %v6810 = vshrl.u32 %v6809, 5
        %v6811 = vand.u32 %v6809, 31
        %v6812 = vsub.s32 32, %v6811
        %v6813 = vshrl.u32 683565275, %v6812
        %v6814 = vshll.u32 683565275, %v6811
        %v6815 = vshrl.u32 2475754826, %v6812
        %v6816 = vor.u32 %v6814, %v6815
        %v6817 = vshll.u32 2475754826, %v6811
        %v6818 = vshrl.u32 2131351028, %v6812
        %v6819 = vor.u32 %v6817, %v6818
        %v6820 = vshll.u32 2131351028, %v6811
        %v6821 = vshrl.u32 2102212464, %v6812
        %v6822 = vor.u32 %v6820, %v6821
        %v6823 = vshll.u32 2102212464, %v6811
        %v6824 = vshrl.u32 920167782, %v6812
        %v6825 = vor.u32 %v6823, %v6824
        %v6826 = vshll.u32 920167782, %v6811
        %v6827 = vshrl.u32 1326507024, %v6812
        %v6828 = vor.u32 %v6826, %v6827
        %vm6829 = vcmp.lt.s32.totalorder %v6810, 1
        %vm6830 = vcmp.lt.s32.totalorder %v6810, 2
        %vm6831 = vcmp.lt.s32.totalorder %v6810, 3
        %vm6832 = vcmp.lt.s32.totalorder %v6810, 4
        %v6833 = vsel %vm6829, %v6813, %v6816
        %v6834 = vsel %vm6832, %v6822, 2102212464
        %v6835 = vsel %vm6831, %v6819, %v6834
        %v6836 = vsel %vm6830, %v6833, %v6835
        %v6837 = vsel %vm6829, %v6816, %v6819
        %v6838 = vsel %vm6832, %v6825, 920167782
        %v6839 = vsel %vm6831, %v6822, %v6838
        %v6840 = vsel %vm6830, %v6837, %v6839
        %v6841 = vsel %vm6829, %v6819, %v6822
        %v6842 = vsel %vm6832, %v6828, 1326507024
        %v6843 = vsel %vm6831, %v6825, %v6842
        %v6844 = vsel %vm6830, %v6841, %v6843
        %v6845 = vshll.u32 %v6805, 8
        %v6846 = vand.u32 %v6845, 65535
        %v6847 = vshrl.u32 %v6845, 16
        %v6848 = vand.u32 %v6844, 65535
        %v6849 = vshrl.u32 %v6844, 16
        %v6850 = vmul.u32 %v6846, %v6848
        %v6851 = vmul.u32 %v6846, %v6849
        %v6852 = vmul.u32 %v6847, %v6848
        %v6853 = vmul.u32 %v6847, %v6849
        %v6854 = vshll.u32 %v6851, 16
        %v6855 = vshrl.u32 %v6851, 16
        %v6856 = vshll.u32 %v6852, 16
        %v6857 = vshrl.u32 %v6852, 16
        %vm6858 = vc.u32 %v6850, %v6854
        %v6859 = vsel %vm6858, 1, 0
        %v6860 = vadd.s32 %v6850, %v6854
        %v6861 = vadd.s32 %v6853, %v6859
        %vm6862 = vc.u32 %v6860, %v6856
        %v6863 = vsel %vm6862, 1, 0
        %v6864 = vadd.s32 %v6860, %v6856
        %v6865 = vadd.s32 %v6861, %v6863
        %v6866 = vadd.s32 %v6865, %v6855
        %v6867 = vadd.s32 %v6866, %v6857
        %v6868 = vand.u32 %v6845, 65535
        %v6869 = vshrl.u32 %v6845, 16
        %v6870 = vand.u32 %v6840, 65535
        %v6871 = vshrl.u32 %v6840, 16
        %v6872 = vmul.u32 %v6868, %v6870
        %v6873 = vmul.u32 %v6868, %v6871
        %v6874 = vmul.u32 %v6869, %v6870
        %v6875 = vmul.u32 %v6869, %v6871
        %v6876 = vshll.u32 %v6873, 16
        %v6877 = vshrl.u32 %v6873, 16
        %v6878 = vshll.u32 %v6874, 16
        %v6879 = vshrl.u32 %v6874, 16
        %vm6880 = vc.u32 %v6872, %v6876
        %v6881 = vsel %vm6880, 1, 0
        %v6882 = vadd.s32 %v6872, %v6876
        %v6883 = vadd.s32 %v6875, %v6881
        %vm6884 = vc.u32 %v6882, %v6878
        %v6885 = vsel %vm6884, 1, 0
        %v6886 = vadd.s32 %v6882, %v6878
        %v6887 = vadd.s32 %v6883, %v6885
        %v6888 = vadd.s32 %v6887, %v6877
        %v6889 = vadd.s32 %v6888, %v6879
        %v6890 = vmul.u32 %v6845, %v6836
        %v6891 = vadd.s32 %v6867, %v6886
        %vm6892 = vc.u32 %v6867, %v6886
        %v6893 = vadd.s32 %v6889, 1
        %v6894 = vsel %vm6892, %v6893, %v6889
        %v6895 = vadd.s32 %v6890, %v6894
        %v6896 = vadd.s32 %v6895, 536870912
        %v6897 = vshrl.u32 %v6896, 30
        %v6898 = vshll.u32 %v6897, 30
        %v6899 = vsub.s32 %v6895, %v6898
        %vm6900 = vcmp.lt.s32.totalorder %v6899, 0
        %v6901 = vsub.s32 0, %v6899
        %v6902 = vsel %vm6900, %v6901, %v6899
        %v6903 = vclz %v6902
        %v6904 = vsub.s32 %v6903, 2
        %vm6905 = vcmp.gt.s32.totalorder 0, %v6904
        %v6906 = vsel %vm6905, 0, %v6904
        %v6907 = vsub.s32 32, %v6906
        %v6908 = vshll.u32 %v6899, %v6906
        %v6909 = vshrl.u32 %v6891, %v6907
        %v6910 = vor.u32 %v6908, %v6909
        %v6911 = vsub.s32 4294967266, %v6906
        %v6912 = vadd.s32 %v6911, 127
        %v6913 = vshll.u32 %v6912, 23
        %v6914 = vor.u32 4788187, %v6913
        %v6915 = vand.u32 2147483647, %v6914
        %v6917 = vcvt.s32.f32 %v6910
        %v6918 = vmul.f32 %v6917, %v6915
        %v6919 = vxor.u32 %v6918, 2147483648
        %v6920 = vsel %vm6799, %v6919, %v6918
        %v6921 = vsub.s32 4, %v6897
        %v6922 = vsel %vm6799, %v6921, %v6897
        %v6923 = vsel %vm6798, %v766, %v6920
        %v6924 = vsel %vm6798, 0, %v6922
        %v6925 = vmul.f32 %v6923, %v6923
        %v6926 = vmul.f32 %v6925, -0.001358992
        %v6927 = vadd.f32 %v6926, 0.041655596
        %v6928 = vmul.f32 %v6925, %v6927
        %v6929 = vadd.f32 %v6928, -0.4999988
        %v6930 = vmul.f32 %v6925, %v6929
        %v6931 = vadd.f32 1.0, %v6930
        %v6932 = vmul.f32 %v6923, %v6923
        %v6933 = vmul.f32 %v6932, -0.00019511016
        %v6934 = vadd.f32 %v6933, 0.008332121
        %v6935 = vmul.f32 %v6932, %v6934
        %v6936 = vadd.f32 %v6935, -0.16666654
        %v6937 = vmul.f32 %v6932, %v6936
        %v6938 = vadd.f32 %v6937, 1.0
        %v6939 = vmul.f32 %v6938, %v6923
        %vm6940 = vweird.f32 %v766
        %v6941 = vand.u32 %v6924, 3
        %vm6942 = vcmp.lt.s32.totalorder %v6941, 2
        %vm6943 = vcmp.eq.s32.totalorder %v6941, 0
        %v6944 = vxor.u32 %v6939, 2147483648
        %v6945 = vsel %vm6943, %v6931, %v6944
        %vm6946 = vcmp.eq.s32.totalorder %v6941, 2
        %v6947 = vxor.u32 %v6931, 2147483648
        %v6948 = vsel %vm6946, %v6947, %v6939
        %v6949 = vsel %vm6942, %v6945, %v6948
        %v6950 = vsel %vm6940, nan, %v6949
        %v6951 = vand.u32 2147483647, %v767
        %vm6952 = vcmp.le.f32.partialorder %v6951, 0.7853982
        %vm6953 = vcmp.lt.s32.totalorder %v767, 0
        %v6954 = vand.u32 %v767, 2139095040
        %v6955 = vshrl.u32 %v6954, 23
        %v6956 = vsub.s32 %v6955, 127
        %v6957 = vand.u32 2147483647, %v767
        %v6958 = vand.u32 %v6957, 8388607
        %v6959 = vor.u32 %v6958, 8388608
        %v6960 = vsub.s32 0, %v6959
        %v6961 = vadd.s32 %v6956, 1
        %vm6962 = vcmp.gt.s32.totalorder %v6961, 0
        %v6963 = vsel %vm6962, %v6961, 0
        %v6964 = vshrl.u32 %v6963, 5
        %v6965 = vand.u32 %v6963, 31
        %v6966 = vsub.s32 32, %v6965
        %v6967 = vshrl.u32 683565275, %v6966
        %v6968 = vshll.u32 683565275, %v6965
        %v6969 = vshrl.u32 2475754826, %v6966
        %v6970 = vor.u32 %v6968, %v6969
        %v6971 = vshll.u32 2475754826, %v6965
        %v6972 = vshrl.u32 2131351028, %v6966
        %v6973 = vor.u32 %v6971, %v6972
        %v6974 = vshll.u32 2131351028, %v6965
        %v6975 = vshrl.u32 2102212464, %v6966
        %v6976 = vor.u32 %v6974, %v6975
        %v6977 = vshll.u32 2102212464, %v6965
        %v6978 = vshrl.u32 920167782, %v6966
        %v6979 = vor.u32 %v6977, %v6978
        %v6980 = vshll.u32 920167782, %v6965
        %v6981 = vshrl.u32 1326507024, %v6966
        %v6982 = vor.u32 %v6980, %v6981
        %vm6983 = vcmp.lt.s32.totalorder %v6964, 1
        %vm6984 = vcmp.lt.s32.totalorder %v6964, 2
        %vm6985 = vcmp.lt.s32.totalorder %v6964, 3
        %vm6986 = vcmp.lt.s32.totalorder %v6964, 4
        %v6987 = vsel %vm6983, %v6967, %v6970
        %v6988 = vsel %vm6986, %v6976, 2102212464
        %v6989 = vsel %vm6985, %v6973, %v6988
        %v6990 = vsel %vm6984, %v6987, %v6989
        %v6991 = vsel %vm6983, %v6970, %v6973
        %v6992 = vsel %vm6986, %v6979, 920167782
        %v6993 = vsel %vm6985, %v6976, %v6992
        %v6994 = vsel %vm6984, %v6991, %v6993
        %v6995 = vsel %vm6983, %v6973, %v6976
        %v6996 = vsel %vm6986, %v6982, 1326507024
        %v6997 = vsel %vm6985, %v6979, %v6996
        %v6998 = vsel %vm6984, %v6995, %v6997
        %v6999 = vshll.u32 %v6959, 8
        %v7000 = vand.u32 %v6999, 65535
        %v7001 = vshrl.u32 %v6999, 16
        %v7002 = vand.u32 %v6998, 65535
        %v7003 = vshrl.u32 %v6998, 16
        %v7004 = vmul.u32 %v7000, %v7002
        %v7005 = vmul.u32 %v7000, %v7003
        %v7006 = vmul.u32 %v7001, %v7002
        %v7007 = vmul.u32 %v7001, %v7003
        %v7008 = vshll.u32 %v7005, 16
        %v7009 = vshrl.u32 %v7005, 16
        %v7010 = vshll.u32 %v7006, 16
        %v7011 = vshrl.u32 %v7006, 16
        %vm7012 = vc.u32 %v7004, %v7008
        %v7013 = vsel %vm7012, 1, 0
        %v7014 = vadd.s32 %v7004, %v7008
        %v7015 = vadd.s32 %v7007, %v7013
        %vm7016 = vc.u32 %v7014, %v7010
        %v7017 = vsel %vm7016, 1, 0
        %v7018 = vadd.s32 %v7014, %v7010
        %v7019 = vadd.s32 %v7015, %v7017
        %v7020 = vadd.s32 %v7019, %v7009
        %v7021 = vadd.s32 %v7020, %v7011
        %v7022 = vand.u32 %v6999, 65535
        %v7023 = vshrl.u32 %v6999, 16
        %v7024 = vand.u32 %v6994, 65535
        %v7025 = vshrl.u32 %v6994, 16
        %v7026 = vmul.u32 %v7022, %v7024
        %v7027 = vmul.u32 %v7022, %v7025
        %v7028 = vmul.u32 %v7023, %v7024
        %v7029 = vmul.u32 %v7023, %v7025
        %v7030 = vshll.u32 %v7027, 16
        %v7031 = vshrl.u32 %v7027, 16
        %v7032 = vshll.u32 %v7028, 16
        %v7033 = vshrl.u32 %v7028, 16
        %vm7034 = vc.u32 %v7026, %v7030
        %v7035 = vsel %vm7034, 1, 0
        %v7036 = vadd.s32 %v7026, %v7030
        %v7037 = vadd.s32 %v7029, %v7035
        %vm7038 = vc.u32 %v7036, %v7032
        %v7039 = vsel %vm7038, 1, 0
        %v7040 = vadd.s32 %v7036, %v7032
        %v7041 = vadd.s32 %v7037, %v7039
        %v7042 = vadd.s32 %v7041, %v7031
        %v7043 = vadd.s32 %v7042, %v7033
        %v7044 = vmul.u32 %v6999, %v6990
        %v7045 = vadd.s32 %v7021, %v7040
        %vm7046 = vc.u32 %v7021, %v7040
        %v7047 = vadd.s32 %v7043, 1
        %v7048 = vsel %vm7046, %v7047, %v7043
        %v7049 = vadd.s32 %v7044, %v7048
        %v7050 = vadd.s32 %v7049, 536870912
        %v7051 = vshrl.u32 %v7050, 30
        %v7052 = vshll.u32 %v7051, 30
        %v7053 = vsub.s32 %v7049, %v7052
        %vm7054 = vcmp.lt.s32.totalorder %v7053, 0
        %v7055 = vsub.s32 0, %v7053
        %v7056 = vsel %vm7054, %v7055, %v7053
        %v7057 = vclz %v7056
        %v7058 = vsub.s32 %v7057, 2
        %vm7059 = vcmp.gt.s32.totalorder 0, %v7058
        %v7060 = vsel %vm7059, 0, %v7058
        %v7061 = vsub.s32 32, %v7060
        %v7062 = vshll.u32 %v7053, %v7060
        %v7063 = vshrl.u32 %v7045, %v7061
        %v7064 = vor.u32 %v7062, %v7063
        %v7065 = vsub.s32 4294967266, %v7060
        %v7066 = vadd.s32 %v7065, 127
        %v7067 = vshll.u32 %v7066, 23
        %v7068 = vor.u32 4788187, %v7067
        %v7069 = vand.u32 2147483647, %v7068
        %v7071 = vcvt.s32.f32 %v7064
        %v7072 = vmul.f32 %v7071, %v7069
        %v7073 = vxor.u32 %v7072, 2147483648
        %v7074 = vsel %vm6953, %v7073, %v7072
        %v7075 = vsub.s32 4, %v7051
        %v7076 = vsel %vm6953, %v7075, %v7051
        %v7077 = vsel %vm6952, %v767, %v7074
        %v7078 = vsel %vm6952, 0, %v7076
        %v7079 = vmul.f32 %v7077, %v7077
        %v7080 = vmul.f32 %v7079, -0.001358992
        %v7081 = vadd.f32 %v7080, 0.041655596
        %v7082 = vmul.f32 %v7079, %v7081
        %v7083 = vadd.f32 %v7082, -0.4999988
        %v7084 = vmul.f32 %v7079, %v7083
        %v7085 = vadd.f32 1.0, %v7084
        %v7086 = vmul.f32 %v7077, %v7077
        %v7087 = vmul.f32 %v7086, -0.00019511016
        %v7088 = vadd.f32 %v7087, 0.008332121
        %v7089 = vmul.f32 %v7086, %v7088
        %v7090 = vadd.f32 %v7089, -0.16666654
        %v7091 = vmul.f32 %v7086, %v7090
        %v7092 = vadd.f32 %v7091, 1.0
        %v7093 = vmul.f32 %v7092, %v7077
        %vm7094 = vweird.f32 %v767
        %v7095 = vand.u32 %v7078, 3
        %vm7096 = vcmp.lt.s32.totalorder %v7095, 2
        %vm7097 = vcmp.eq.s32.totalorder %v7095, 0
        %v7098 = vxor.u32 %v7093, 2147483648
        %v7099 = vsel %vm7097, %v7085, %v7098
        %vm7100 = vcmp.eq.s32.totalorder %v7095, 2
        %v7101 = vxor.u32 %v7085, 2147483648
        %v7102 = vsel %vm7100, %v7101, %v7093
        %v7103 = vsel %vm7096, %v7099, %v7102
        %v7104 = vsel %vm7094, nan, %v7103
        %v7105 = vand.u32 2147483647, %v768
        %vm7106 = vcmp.le.f32.partialorder %v7105, 0.7853982
        %vm7107 = vcmp.lt.s32.totalorder %v768, 0
        %v7108 = vand.u32 %v768, 2139095040
        %v7109 = vshrl.u32 %v7108, 23
        %v7110 = vsub.s32 %v7109, 127
        %v7111 = vand.u32 2147483647, %v768
        %v7112 = vand.u32 %v7111, 8388607
        %v7113 = vor.u32 %v7112, 8388608
        %v7114 = vsub.s32 0, %v7113
        %v7115 = vadd.s32 %v7110, 1
        %vm7116 = vcmp.gt.s32.totalorder %v7115, 0
        %v7117 = vsel %vm7116, %v7115, 0
        %v7118 = vshrl.u32 %v7117, 5
        %v7119 = vand.u32 %v7117, 31
        %v7120 = vsub.s32 32, %v7119
        %v7121 = vshrl.u32 683565275, %v7120
        %v7122 = vshll.u32 683565275, %v7119
        %v7123 = vshrl.u32 2475754826, %v7120
        %v7124 = vor.u32 %v7122, %v7123
        %v7125 = vshll.u32 2475754826, %v7119
        %v7126 = vshrl.u32 2131351028, %v7120
        %v7127 = vor.u32 %v7125, %v7126
        %v7128 = vshll.u32 2131351028, %v7119
        %v7129 = vshrl.u32 2102212464, %v7120
        %v7130 = vor.u32 %v7128, %v7129
        %v7131 = vshll.u32 2102212464, %v7119
        %v7132 = vshrl.u32 920167782, %v7120
        %v7133 = vor.u32 %v7131, %v7132
        %v7134 = vshll.u32 920167782, %v7119
        %v7135 = vshrl.u32 1326507024, %v7120
        %v7136 = vor.u32 %v7134, %v7135
        %vm7137 = vcmp.lt.s32.totalorder %v7118, 1
        %vm7138 = vcmp.lt.s32.totalorder %v7118, 2
        %vm7139 = vcmp.lt.s32.totalorder %v7118, 3
        %vm7140 = vcmp.lt.s32.totalorder %v7118, 4
        %v7141 = vsel %vm7137, %v7121, %v7124
        %v7142 = vsel %vm7140, %v7130, 2102212464
        %v7143 = vsel %vm7139, %v7127, %v7142
        %v7144 = vsel %vm7138, %v7141, %v7143
        %v7145 = vsel %vm7137, %v7124, %v7127
        %v7146 = vsel %vm7140, %v7133, 920167782
        %v7147 = vsel %vm7139, %v7130, %v7146
        %v7148 = vsel %vm7138, %v7145, %v7147
        %v7149 = vsel %vm7137, %v7127, %v7130
        %v7150 = vsel %vm7140, %v7136, 1326507024
        %v7151 = vsel %vm7139, %v7133, %v7150
        %v7152 = vsel %vm7138, %v7149, %v7151
        %v7153 = vshll.u32 %v7113, 8
        %v7154 = vand.u32 %v7153, 65535
        %v7155 = vshrl.u32 %v7153, 16
        %v7156 = vand.u32 %v7152, 65535
        %v7157 = vshrl.u32 %v7152, 16
        %v7158 = vmul.u32 %v7154, %v7156
        %v7159 = vmul.u32 %v7154, %v7157
        %v7160 = vmul.u32 %v7155, %v7156
        %v7161 = vmul.u32 %v7155, %v7157
        %v7162 = vshll.u32 %v7159, 16
        %v7163 = vshrl.u32 %v7159, 16
        %v7164 = vshll.u32 %v7160, 16
        %v7165 = vshrl.u32 %v7160, 16
        %vm7166 = vc.u32 %v7158, %v7162
        %v7167 = vsel %vm7166, 1, 0
        %v7168 = vadd.s32 %v7158, %v7162
        %v7169 = vadd.s32 %v7161, %v7167
        %vm7170 = vc.u32 %v7168, %v7164
        %v7171 = vsel %vm7170, 1, 0
        %v7172 = vadd.s32 %v7168, %v7164
        %v7173 = vadd.s32 %v7169, %v7171
        %v7174 = vadd.s32 %v7173, %v7163
        %v7175 = vadd.s32 %v7174, %v7165
        %v7176 = vand.u32 %v7153, 65535
        %v7177 = vshrl.u32 %v7153, 16
        %v7178 = vand.u32 %v7148, 65535
        %v7179 = vshrl.u32 %v7148, 16
        %v7180 = vmul.u32 %v7176, %v7178
        %v7181 = vmul.u32 %v7176, %v7179
        %v7182 = vmul.u32 %v7177, %v7178
        %v7183 = vmul.u32 %v7177, %v7179
        %v7184 = vshll.u32 %v7181, 16
        %v7185 = vshrl.u32 %v7181, 16
        %v7186 = vshll.u32 %v7182, 16
        %v7187 = vshrl.u32 %v7182, 16
        %vm7188 = vc.u32 %v7180, %v7184
        %v7189 = vsel %vm7188, 1, 0
        %v7190 = vadd.s32 %v7180, %v7184
        %v7191 = vadd.s32 %v7183, %v7189
        %vm7192 = vc.u32 %v7190, %v7186
        %v7193 = vsel %vm7192, 1, 0
        %v7194 = vadd.s32 %v7190, %v7186
        %v7195 = vadd.s32 %v7191, %v7193
        %v7196 = vadd.s32 %v7195, %v7185
        %v7197 = vadd.s32 %v7196, %v7187
        %v7198 = vmul.u32 %v7153, %v7144
        %v7199 = vadd.s32 %v7175, %v7194
        %vm7200 = vc.u32 %v7175, %v7194
        %v7201 = vadd.s32 %v7197, 1
        %v7202 = vsel %vm7200, %v7201, %v7197
        %v7203 = vadd.s32 %v7198, %v7202
        %v7204 = vadd.s32 %v7203, 536870912
        %v7205 = vshrl.u32 %v7204, 30
        %v7206 = vshll.u32 %v7205, 30
        %v7207 = vsub.s32 %v7203, %v7206
        %vm7208 = vcmp.lt.s32.totalorder %v7207, 0
        %v7209 = vsub.s32 0, %v7207
        %v7210 = vsel %vm7208, %v7209, %v7207
        %v7211 = vclz %v7210
        %v7212 = vsub.s32 %v7211, 2
        %vm7213 = vcmp.gt.s32.totalorder 0, %v7212
        %v7214 = vsel %vm7213, 0, %v7212
        %v7215 = vsub.s32 32, %v7214
        %v7216 = vshll.u32 %v7207, %v7214
        %v7217 = vshrl.u32 %v7199, %v7215
        %v7218 = vor.u32 %v7216, %v7217
        %v7219 = vsub.s32 4294967266, %v7214
        %v7220 = vadd.s32 %v7219, 127
        %v7221 = vshll.u32 %v7220, 23
        %v7222 = vor.u32 4788187, %v7221
        %v7223 = vand.u32 2147483647, %v7222
        %v7225 = vcvt.s32.f32 %v7218
        %v7226 = vmul.f32 %v7225, %v7223
        %v7227 = vxor.u32 %v7226, 2147483648
        %v7228 = vsel %vm7107, %v7227, %v7226
        %v7229 = vsub.s32 4, %v7205
        %v7230 = vsel %vm7107, %v7229, %v7205
        %v7231 = vsel %vm7106, %v768, %v7228
        %v7232 = vsel %vm7106, 0, %v7230
        %v7233 = vmul.f32 %v7231, %v7231
        %v7234 = vmul.f32 %v7233, -0.001358992
        %v7235 = vadd.f32 %v7234, 0.041655596
        %v7236 = vmul.f32 %v7233, %v7235
        %v7237 = vadd.f32 %v7236, -0.4999988
        %v7238 = vmul.f32 %v7233, %v7237
        %v7239 = vadd.f32 1.0, %v7238
        %v7240 = vmul.f32 %v7231, %v7231
        %v7241 = vmul.f32 %v7240, -0.00019511016
        %v7242 = vadd.f32 %v7241, 0.008332121
        %v7243 = vmul.f32 %v7240, %v7242
        %v7244 = vadd.f32 %v7243, -0.16666654
        %v7245 = vmul.f32 %v7240, %v7244
        %v7246 = vadd.f32 %v7245, 1.0
        %v7247 = vmul.f32 %v7246, %v7231
        %vm7248 = vweird.f32 %v768
        %v7249 = vand.u32 %v7232, 3
        %vm7250 = vcmp.lt.s32.totalorder %v7249, 2
        %vm7251 = vcmp.eq.s32.totalorder %v7249, 0
        %v7252 = vxor.u32 %v7247, 2147483648
        %v7253 = vsel %vm7251, %v7239, %v7252
        %vm7254 = vcmp.eq.s32.totalorder %v7249, 2
        %v7255 = vxor.u32 %v7239, 2147483648
        %v7256 = vsel %vm7254, %v7255, %v7247
        %v7257 = vsel %vm7250, %v7253, %v7256
        %v7258 = vsel %vm7248, nan, %v7257
        %v7259 = vand.u32 2147483647, %v769
        %vm7260 = vcmp.le.f32.partialorder %v7259, 0.7853982
        %vm7261 = vcmp.lt.s32.totalorder %v769, 0
        %v7262 = vand.u32 %v769, 2139095040
        %v7263 = vshrl.u32 %v7262, 23
        %v7264 = vsub.s32 %v7263, 127
        %v7265 = vand.u32 2147483647, %v769
        %v7266 = vand.u32 %v7265, 8388607
        %v7267 = vor.u32 %v7266, 8388608
        %v7268 = vsub.s32 0, %v7267
        %v7269 = vadd.s32 %v7264, 1
        %vm7270 = vcmp.gt.s32.totalorder %v7269, 0
        %v7271 = vsel %vm7270, %v7269, 0
        %v7272 = vshrl.u32 %v7271, 5
        %v7273 = vand.u32 %v7271, 31
        %v7274 = vsub.s32 32, %v7273
        %v7275 = vshrl.u32 683565275, %v7274
        %v7276 = vshll.u32 683565275, %v7273
        %v7277 = vshrl.u32 2475754826, %v7274
        %v7278 = vor.u32 %v7276, %v7277
        %v7279 = vshll.u32 2475754826, %v7273
        %v7280 = vshrl.u32 2131351028, %v7274
        %v7281 = vor.u32 %v7279, %v7280
        %v7282 = vshll.u32 2131351028, %v7273
        %v7283 = vshrl.u32 2102212464, %v7274
        %v7284 = vor.u32 %v7282, %v7283
        %v7285 = vshll.u32 2102212464, %v7273
        %v7286 = vshrl.u32 920167782, %v7274
        %v7287 = vor.u32 %v7285, %v7286
        %v7288 = vshll.u32 920167782, %v7273
        %v7289 = vshrl.u32 1326507024, %v7274
        %v7290 = vor.u32 %v7288, %v7289
        %vm7291 = vcmp.lt.s32.totalorder %v7272, 1
        %vm7292 = vcmp.lt.s32.totalorder %v7272, 2
        %vm7293 = vcmp.lt.s32.totalorder %v7272, 3
        %vm7294 = vcmp.lt.s32.totalorder %v7272, 4
        %v7295 = vsel %vm7291, %v7275, %v7278
        %v7296 = vsel %vm7294, %v7284, 2102212464
        %v7297 = vsel %vm7293, %v7281, %v7296
        %v7298 = vsel %vm7292, %v7295, %v7297
        %v7299 = vsel %vm7291, %v7278, %v7281
        %v7300 = vsel %vm7294, %v7287, 920167782
        %v7301 = vsel %vm7293, %v7284, %v7300
        %v7302 = vsel %vm7292, %v7299, %v7301
        %v7303 = vsel %vm7291, %v7281, %v7284
        %v7304 = vsel %vm7294, %v7290, 1326507024
        %v7305 = vsel %vm7293, %v7287, %v7304
        %v7306 = vsel %vm7292, %v7303, %v7305
        %v7307 = vshll.u32 %v7267, 8
        %v7308 = vand.u32 %v7307, 65535
        %v7309 = vshrl.u32 %v7307, 16
        %v7310 = vand.u32 %v7306, 65535
        %v7311 = vshrl.u32 %v7306, 16
        %v7312 = vmul.u32 %v7308, %v7310
        %v7313 = vmul.u32 %v7308, %v7311
        %v7314 = vmul.u32 %v7309, %v7310
        %v7315 = vmul.u32 %v7309, %v7311
        %v7316 = vshll.u32 %v7313, 16
        %v7317 = vshrl.u32 %v7313, 16
        %v7318 = vshll.u32 %v7314, 16
        %v7319 = vshrl.u32 %v7314, 16
        %vm7320 = vc.u32 %v7312, %v7316
        %v7321 = vsel %vm7320, 1, 0
        %v7322 = vadd.s32 %v7312, %v7316
        %v7323 = vadd.s32 %v7315, %v7321
        %vm7324 = vc.u32 %v7322, %v7318
        %v7325 = vsel %vm7324, 1, 0
        %v7326 = vadd.s32 %v7322, %v7318
        %v7327 = vadd.s32 %v7323, %v7325
        %v7328 = vadd.s32 %v7327, %v7317
        %v7329 = vadd.s32 %v7328, %v7319
        %v7330 = vand.u32 %v7307, 65535
        %v7331 = vshrl.u32 %v7307, 16
        %v7332 = vand.u32 %v7302, 65535
        %v7333 = vshrl.u32 %v7302, 16
        %v7334 = vmul.u32 %v7330, %v7332
        %v7335 = vmul.u32 %v7330, %v7333
        %v7336 = vmul.u32 %v7331, %v7332
        %v7337 = vmul.u32 %v7331, %v7333
        %v7338 = vshll.u32 %v7335, 16
        %v7339 = vshrl.u32 %v7335, 16
        %v7340 = vshll.u32 %v7336, 16
        %v7341 = vshrl.u32 %v7336, 16
        %vm7342 = vc.u32 %v7334, %v7338
        %v7343 = vsel %vm7342, 1, 0
        %v7344 = vadd.s32 %v7334, %v7338
        %v7345 = vadd.s32 %v7337, %v7343
        %vm7346 = vc.u32 %v7344, %v7340
        %v7347 = vsel %vm7346, 1, 0
        %v7348 = vadd.s32 %v7344, %v7340
        %v7349 = vadd.s32 %v7345, %v7347
        %v7350 = vadd.s32 %v7349, %v7339
        %v7351 = vadd.s32 %v7350, %v7341
        %v7352 = vmul.u32 %v7307, %v7298
        %v7353 = vadd.s32 %v7329, %v7348
        %vm7354 = vc.u32 %v7329, %v7348
        %v7355 = vadd.s32 %v7351, 1
        %v7356 = vsel %vm7354, %v7355, %v7351
        %v7357 = vadd.s32 %v7352, %v7356
        %v7358 = vadd.s32 %v7357, 536870912
        %v7359 = vshrl.u32 %v7358, 30
        %v7360 = vshll.u32 %v7359, 30
        %v7361 = vsub.s32 %v7357, %v7360
        %vm7362 = vcmp.lt.s32.totalorder %v7361, 0
        %v7363 = vsub.s32 0, %v7361
        %v7364 = vsel %vm7362, %v7363, %v7361
        %v7365 = vclz %v7364
        %v7366 = vsub.s32 %v7365, 2
        %vm7367 = vcmp.gt.s32.totalorder 0, %v7366
        %v7368 = vsel %vm7367, 0, %v7366
        %v7369 = vsub.s32 32, %v7368
        %v7370 = vshll.u32 %v7361, %v7368
        %v7371 = vshrl.u32 %v7353, %v7369
        %v7372 = vor.u32 %v7370, %v7371
        %v7373 = vsub.s32 4294967266, %v7368
        %v7374 = vadd.s32 %v7373, 127
        %v7375 = vshll.u32 %v7374, 23
        %v7376 = vor.u32 4788187, %v7375
        %v7377 = vand.u32 2147483647, %v7376
        %v7379 = vcvt.s32.f32 %v7372
        %v7380 = vmul.f32 %v7379, %v7377
        %v7381 = vxor.u32 %v7380, 2147483648
        %v7382 = vsel %vm7261, %v7381, %v7380
        %v7383 = vsub.s32 4, %v7359
        %v7384 = vsel %vm7261, %v7383, %v7359
        %v7385 = vsel %vm7260, %v769, %v7382
        %v7386 = vsel %vm7260, 0, %v7384
        %v7387 = vmul.f32 %v7385, %v7385
        %v7388 = vmul.f32 %v7387, -0.001358992
        %v7389 = vadd.f32 %v7388, 0.041655596
        %v7390 = vmul.f32 %v7387, %v7389
        %v7391 = vadd.f32 %v7390, -0.4999988
        %v7392 = vmul.f32 %v7387, %v7391
        %v7393 = vadd.f32 1.0, %v7392
        %v7394 = vmul.f32 %v7385, %v7385
        %v7395 = vmul.f32 %v7394, -0.00019511016
        %v7396 = vadd.f32 %v7395, 0.008332121
        %v7397 = vmul.f32 %v7394, %v7396
        %v7398 = vadd.f32 %v7397, -0.16666654
        %v7399 = vmul.f32 %v7394, %v7398
        %v7400 = vadd.f32 %v7399, 1.0
        %v7401 = vmul.f32 %v7400, %v7385
        %vm7402 = vweird.f32 %v769
        %v7403 = vand.u32 %v7386, 3
        %vm7404 = vcmp.lt.s32.totalorder %v7403, 2
        %vm7405 = vcmp.eq.s32.totalorder %v7403, 0
        %v7406 = vxor.u32 %v7401, 2147483648
        %v7407 = vsel %vm7405, %v7393, %v7406
        %vm7408 = vcmp.eq.s32.totalorder %v7403, 2
        %v7409 = vxor.u32 %v7393, 2147483648
        %v7410 = vsel %vm7408, %v7409, %v7401
        %v7411 = vsel %vm7404, %v7407, %v7410
        %v7412 = vsel %vm7402, nan, %v7411
        %v7413 = vand.u32 2147483647, %v770
        %vm7414 = vcmp.le.f32.partialorder %v7413, 0.7853982
        %vm7415 = vcmp.lt.s32.totalorder %v770, 0
        %v7416 = vand.u32 %v770, 2139095040
        %v7417 = vshrl.u32 %v7416, 23
        %v7418 = vsub.s32 %v7417, 127
        %v7419 = vand.u32 2147483647, %v770
        %v7420 = vand.u32 %v7419, 8388607
        %v7421 = vor.u32 %v7420, 8388608
        %v7422 = vsub.s32 0, %v7421
        %v7423 = vadd.s32 %v7418, 1
        %vm7424 = vcmp.gt.s32.totalorder %v7423, 0
        %v7425 = vsel %vm7424, %v7423, 0
        %v7426 = vshrl.u32 %v7425, 5
        %v7427 = vand.u32 %v7425, 31
        %v7428 = vsub.s32 32, %v7427
        %v7429 = vshrl.u32 683565275, %v7428
        %v7430 = vshll.u32 683565275, %v7427
        %v7431 = vshrl.u32 2475754826, %v7428
        %v7432 = vor.u32 %v7430, %v7431
        %v7433 = vshll.u32 2475754826, %v7427
        %v7434 = vshrl.u32 2131351028, %v7428
        %v7435 = vor.u32 %v7433, %v7434
        %v7436 = vshll.u32 2131351028, %v7427
        %v7437 = vshrl.u32 2102212464, %v7428
        %v7438 = vor.u32 %v7436, %v7437
        %v7439 = vshll.u32 2102212464, %v7427
        %v7440 = vshrl.u32 920167782, %v7428
        %v7441 = vor.u32 %v7439, %v7440
        %v7442 = vshll.u32 920167782, %v7427
        %v7443 = vshrl.u32 1326507024, %v7428
        %v7444 = vor.u32 %v7442, %v7443
        %vm7445 = vcmp.lt.s32.totalorder %v7426, 1
        %vm7446 = vcmp.lt.s32.totalorder %v7426, 2
        %vm7447 = vcmp.lt.s32.totalorder %v7426, 3
        %vm7448 = vcmp.lt.s32.totalorder %v7426, 4
        %v7449 = vsel %vm7445, %v7429, %v7432
        %v7450 = vsel %vm7448, %v7438, 2102212464
        %v7451 = vsel %vm7447, %v7435, %v7450
        %v7452 = vsel %vm7446, %v7449, %v7451
        %v7453 = vsel %vm7445, %v7432, %v7435
        %v7454 = vsel %vm7448, %v7441, 920167782
        %v7455 = vsel %vm7447, %v7438, %v7454
        %v7456 = vsel %vm7446, %v7453, %v7455
        %v7457 = vsel %vm7445, %v7435, %v7438
        %v7458 = vsel %vm7448, %v7444, 1326507024
        %v7459 = vsel %vm7447, %v7441, %v7458
        %v7460 = vsel %vm7446, %v7457, %v7459
        %v7461 = vshll.u32 %v7421, 8
        %v7462 = vand.u32 %v7461, 65535
        %v7463 = vshrl.u32 %v7461, 16
        %v7464 = vand.u32 %v7460, 65535
        %v7465 = vshrl.u32 %v7460, 16
        %v7466 = vmul.u32 %v7462, %v7464
        %v7467 = vmul.u32 %v7462, %v7465
        %v7468 = vmul.u32 %v7463, %v7464
        %v7469 = vmul.u32 %v7463, %v7465
        %v7470 = vshll.u32 %v7467, 16
        %v7471 = vshrl.u32 %v7467, 16
        %v7472 = vshll.u32 %v7468, 16
        %v7473 = vshrl.u32 %v7468, 16
        %vm7474 = vc.u32 %v7466, %v7470
        %v7475 = vsel %vm7474, 1, 0
        %v7476 = vadd.s32 %v7466, %v7470
        %v7477 = vadd.s32 %v7469, %v7475
        %vm7478 = vc.u32 %v7476, %v7472
        %v7479 = vsel %vm7478, 1, 0
        %v7480 = vadd.s32 %v7476, %v7472
        %v7481 = vadd.s32 %v7477, %v7479
        %v7482 = vadd.s32 %v7481, %v7471
        %v7483 = vadd.s32 %v7482, %v7473
        %v7484 = vand.u32 %v7461, 65535
        %v7485 = vshrl.u32 %v7461, 16
        %v7486 = vand.u32 %v7456, 65535
        %v7487 = vshrl.u32 %v7456, 16
        %v7488 = vmul.u32 %v7484, %v7486
        %v7489 = vmul.u32 %v7484, %v7487
        %v7490 = vmul.u32 %v7485, %v7486
        %v7491 = vmul.u32 %v7485, %v7487
        %v7492 = vshll.u32 %v7489, 16
        %v7493 = vshrl.u32 %v7489, 16
        %v7494 = vshll.u32 %v7490, 16
        %v7495 = vshrl.u32 %v7490, 16
        %vm7496 = vc.u32 %v7488, %v7492
        %v7497 = vsel %vm7496, 1, 0
        %v7498 = vadd.s32 %v7488, %v7492
        %v7499 = vadd.s32 %v7491, %v7497
        %vm7500 = vc.u32 %v7498, %v7494
        %v7501 = vsel %vm7500, 1, 0
        %v7502 = vadd.s32 %v7498, %v7494
        %v7503 = vadd.s32 %v7499, %v7501
        %v7504 = vadd.s32 %v7503, %v7493
        %v7505 = vadd.s32 %v7504, %v7495
        %v7506 = vmul.u32 %v7461, %v7452
        %v7507 = vadd.s32 %v7483, %v7502
        %vm7508 = vc.u32 %v7483, %v7502
        %v7509 = vadd.s32 %v7505, 1
        %v7510 = vsel %vm7508, %v7509, %v7505
        %v7511 = vadd.s32 %v7506, %v7510
        %v7512 = vadd.s32 %v7511, 536870912
        %v7513 = vshrl.u32 %v7512, 30
        %v7514 = vshll.u32 %v7513, 30
        %v7515 = vsub.s32 %v7511, %v7514
        %vm7516 = vcmp.lt.s32.totalorder %v7515, 0
        %v7517 = vsub.s32 0, %v7515
        %v7518 = vsel %vm7516, %v7517, %v7515
        %v7519 = vclz %v7518
        %v7520 = vsub.s32 %v7519, 2
        %vm7521 = vcmp.gt.s32.totalorder 0, %v7520
        %v7522 = vsel %vm7521, 0, %v7520
        %v7523 = vsub.s32 32, %v7522
        %v7524 = vshll.u32 %v7515, %v7522
        %v7525 = vshrl.u32 %v7507, %v7523
        %v7526 = vor.u32 %v7524, %v7525
        %v7527 = vsub.s32 4294967266, %v7522
        %v7528 = vadd.s32 %v7527, 127
        %v7529 = vshll.u32 %v7528, 23
        %v7530 = vor.u32 4788187, %v7529
        %v7531 = vand.u32 2147483647, %v7530
        %v7533 = vcvt.s32.f32 %v7526
        %v7534 = vmul.f32 %v7533, %v7531
        %v7535 = vxor.u32 %v7534, 2147483648
        %v7536 = vsel %vm7415, %v7535, %v7534
        %v7537 = vsub.s32 4, %v7513
        %v7538 = vsel %vm7415, %v7537, %v7513
        %v7539 = vsel %vm7414, %v770, %v7536
        %v7540 = vsel %vm7414, 0, %v7538
        %v7541 = vmul.f32 %v7539, %v7539
        %v7542 = vmul.f32 %v7541, -0.001358992
        %v7543 = vadd.f32 %v7542, 0.041655596
        %v7544 = vmul.f32 %v7541, %v7543
        %v7545 = vadd.f32 %v7544, -0.4999988
        %v7546 = vmul.f32 %v7541, %v7545
        %v7547 = vadd.f32 1.0, %v7546
        %v7548 = vmul.f32 %v7539, %v7539
        %v7549 = vmul.f32 %v7548, -0.00019511016
        %v7550 = vadd.f32 %v7549, 0.008332121
        %v7551 = vmul.f32 %v7548, %v7550
        %v7552 = vadd.f32 %v7551, -0.16666654
        %v7553 = vmul.f32 %v7548, %v7552
        %v7554 = vadd.f32 %v7553, 1.0
        %v7555 = vmul.f32 %v7554, %v7539
        %vm7556 = vweird.f32 %v770
        %v7557 = vand.u32 %v7540, 3
        %vm7558 = vcmp.lt.s32.totalorder %v7557, 2
        %vm7559 = vcmp.eq.s32.totalorder %v7557, 0
        %v7560 = vxor.u32 %v7555, 2147483648
        %v7561 = vsel %vm7559, %v7547, %v7560
        %vm7562 = vcmp.eq.s32.totalorder %v7557, 2
        %v7563 = vxor.u32 %v7547, 2147483648
        %v7564 = vsel %vm7562, %v7563, %v7555
        %v7565 = vsel %vm7558, %v7561, %v7564
        %v7566 = vsel %vm7556, nan, %v7565
        %v7567 = vand.u32 2147483647, %v771
        %vm7568 = vcmp.le.f32.partialorder %v7567, 0.7853982
        %vm7569 = vcmp.lt.s32.totalorder %v771, 0
        %v7570 = vand.u32 %v771, 2139095040
        %v7571 = vshrl.u32 %v7570, 23
        %v7572 = vsub.s32 %v7571, 127
        %v7573 = vand.u32 2147483647, %v771
        %v7574 = vand.u32 %v7573, 8388607
        %v7575 = vor.u32 %v7574, 8388608
        %v7576 = vsub.s32 0, %v7575
        %v7577 = vadd.s32 %v7572, 1
        %vm7578 = vcmp.gt.s32.totalorder %v7577, 0
        %v7579 = vsel %vm7578, %v7577, 0
        %v7580 = vshrl.u32 %v7579, 5
        %v7581 = vand.u32 %v7579, 31
        %v7582 = vsub.s32 32, %v7581
        %v7583 = vshrl.u32 683565275, %v7582
        %v7584 = vshll.u32 683565275, %v7581
        %v7585 = vshrl.u32 2475754826, %v7582
        %v7586 = vor.u32 %v7584, %v7585
        %v7587 = vshll.u32 2475754826, %v7581
        %v7588 = vshrl.u32 2131351028, %v7582
        %v7589 = vor.u32 %v7587, %v7588
        %v7590 = vshll.u32 2131351028, %v7581
        %v7591 = vshrl.u32 2102212464, %v7582
        %v7592 = vor.u32 %v7590, %v7591
        %v7593 = vshll.u32 2102212464, %v7581
        %v7594 = vshrl.u32 920167782, %v7582
        %v7595 = vor.u32 %v7593, %v7594
        %v7596 = vshll.u32 920167782, %v7581
        %v7597 = vshrl.u32 1326507024, %v7582
        %v7598 = vor.u32 %v7596, %v7597
        %vm7599 = vcmp.lt.s32.totalorder %v7580, 1
        %vm7600 = vcmp.lt.s32.totalorder %v7580, 2
        %vm7601 = vcmp.lt.s32.totalorder %v7580, 3
        %vm7602 = vcmp.lt.s32.totalorder %v7580, 4
        %v7603 = vsel %vm7599, %v7583, %v7586
        %v7604 = vsel %vm7602, %v7592, 2102212464
        %v7605 = vsel %vm7601, %v7589, %v7604
        %v7606 = vsel %vm7600, %v7603, %v7605
        %v7607 = vsel %vm7599, %v7586, %v7589
        %v7608 = vsel %vm7602, %v7595, 920167782
        %v7609 = vsel %vm7601, %v7592, %v7608
        %v7610 = vsel %vm7600, %v7607, %v7609
        %v7611 = vsel %vm7599, %v7589, %v7592
        %v7612 = vsel %vm7602, %v7598, 1326507024
        %v7613 = vsel %vm7601, %v7595, %v7612
        %v7614 = vsel %vm7600, %v7611, %v7613
        %v7615 = vshll.u32 %v7575, 8
        %v7616 = vand.u32 %v7615, 65535
        %v7617 = vshrl.u32 %v7615, 16
        %v7618 = vand.u32 %v7614, 65535
        %v7619 = vshrl.u32 %v7614, 16
        %v7620 = vmul.u32 %v7616, %v7618
        %v7621 = vmul.u32 %v7616, %v7619
        %v7622 = vmul.u32 %v7617, %v7618
        %v7623 = vmul.u32 %v7617, %v7619
        %v7624 = vshll.u32 %v7621, 16
        %v7625 = vshrl.u32 %v7621, 16
        %v7626 = vshll.u32 %v7622, 16
        %v7627 = vshrl.u32 %v7622, 16
        %vm7628 = vc.u32 %v7620, %v7624
        %v7629 = vsel %vm7628, 1, 0
        %v7630 = vadd.s32 %v7620, %v7624
        %v7631 = vadd.s32 %v7623, %v7629
        %vm7632 = vc.u32 %v7630, %v7626
        %v7633 = vsel %vm7632, 1, 0
        %v7634 = vadd.s32 %v7630, %v7626
        %v7635 = vadd.s32 %v7631, %v7633
        %v7636 = vadd.s32 %v7635, %v7625
        %v7637 = vadd.s32 %v7636, %v7627
        %v7638 = vand.u32 %v7615, 65535
        %v7639 = vshrl.u32 %v7615, 16
        %v7640 = vand.u32 %v7610, 65535
        %v7641 = vshrl.u32 %v7610, 16
        %v7642 = vmul.u32 %v7638, %v7640
        %v7643 = vmul.u32 %v7638, %v7641
        %v7644 = vmul.u32 %v7639, %v7640
        %v7645 = vmul.u32 %v7639, %v7641
        %v7646 = vshll.u32 %v7643, 16
        %v7647 = vshrl.u32 %v7643, 16
        %v7648 = vshll.u32 %v7644, 16
        %v7649 = vshrl.u32 %v7644, 16
        %vm7650 = vc.u32 %v7642, %v7646
        %v7651 = vsel %vm7650, 1, 0
        %v7652 = vadd.s32 %v7642, %v7646
        %v7653 = vadd.s32 %v7645, %v7651
        %vm7654 = vc.u32 %v7652, %v7648
        %v7655 = vsel %vm7654, 1, 0
        %v7656 = vadd.s32 %v7652, %v7648
        %v7657 = vadd.s32 %v7653, %v7655
        %v7658 = vadd.s32 %v7657, %v7647
        %v7659 = vadd.s32 %v7658, %v7649
        %v7660 = vmul.u32 %v7615, %v7606
        %v7661 = vadd.s32 %v7637, %v7656
        %vm7662 = vc.u32 %v7637, %v7656
        %v7663 = vadd.s32 %v7659, 1
        %v7664 = vsel %vm7662, %v7663, %v7659
        %v7665 = vadd.s32 %v7660, %v7664
        %v7666 = vadd.s32 %v7665, 536870912
        %v7667 = vshrl.u32 %v7666, 30
        %v7668 = vshll.u32 %v7667, 30
        %v7669 = vsub.s32 %v7665, %v7668
        %vm7670 = vcmp.lt.s32.totalorder %v7669, 0
        %v7671 = vsub.s32 0, %v7669
        %v7672 = vsel %vm7670, %v7671, %v7669
        %v7673 = vclz %v7672
        %v7674 = vsub.s32 %v7673, 2
        %vm7675 = vcmp.gt.s32.totalorder 0, %v7674
        %v7676 = vsel %vm7675, 0, %v7674
        %v7677 = vsub.s32 32, %v7676
        %v7678 = vshll.u32 %v7669, %v7676
        %v7679 = vshrl.u32 %v7661, %v7677
        %v7680 = vor.u32 %v7678, %v7679
        %v7681 = vsub.s32 4294967266, %v7676
        %v7682 = vadd.s32 %v7681, 127
        %v7683 = vshll.u32 %v7682, 23
        %v7684 = vor.u32 4788187, %v7683
        %v7685 = vand.u32 2147483647, %v7684
        %v7687 = vcvt.s32.f32 %v7680
        %v7688 = vmul.f32 %v7687, %v7685
        %v7689 = vxor.u32 %v7688, 2147483648
        %v7690 = vsel %vm7569, %v7689, %v7688
        %v7691 = vsub.s32 4, %v7667
        %v7692 = vsel %vm7569, %v7691, %v7667
        %v7693 = vsel %vm7568, %v771, %v7690
        %v7694 = vsel %vm7568, 0, %v7692
        %v7695 = vmul.f32 %v7693, %v7693
        %v7696 = vmul.f32 %v7695, -0.001358992
        %v7697 = vadd.f32 %v7696, 0.041655596
        %v7698 = vmul.f32 %v7695, %v7697
        %v7699 = vadd.f32 %v7698, -0.4999988
        %v7700 = vmul.f32 %v7695, %v7699
        %v7701 = vadd.f32 1.0, %v7700
        %v7702 = vmul.f32 %v7693, %v7693
        %v7703 = vmul.f32 %v7702, -0.00019511016
        %v7704 = vadd.f32 %v7703, 0.008332121
        %v7705 = vmul.f32 %v7702, %v7704
        %v7706 = vadd.f32 %v7705, -0.16666654
        %v7707 = vmul.f32 %v7702, %v7706
        %v7708 = vadd.f32 %v7707, 1.0
        %v7709 = vmul.f32 %v7708, %v7693
        %vm7710 = vweird.f32 %v771
        %v7711 = vand.u32 %v7694, 3
        %vm7712 = vcmp.lt.s32.totalorder %v7711, 2
        %vm7713 = vcmp.eq.s32.totalorder %v7711, 0
        %v7714 = vxor.u32 %v7709, 2147483648
        %v7715 = vsel %vm7713, %v7701, %v7714
        %vm7716 = vcmp.eq.s32.totalorder %v7711, 2
        %v7717 = vxor.u32 %v7701, 2147483648
        %v7718 = vsel %vm7716, %v7717, %v7709
        %v7719 = vsel %vm7712, %v7715, %v7718
        %v7720 = vsel %vm7710, nan, %v7719
        %v7721 = vand.u32 2147483647, %v772
        %vm7722 = vcmp.le.f32.partialorder %v7721, 0.7853982
        %vm7723 = vcmp.lt.s32.totalorder %v772, 0
        %v7724 = vand.u32 %v772, 2139095040
        %v7725 = vshrl.u32 %v7724, 23
        %v7726 = vsub.s32 %v7725, 127
        %v7727 = vand.u32 2147483647, %v772
        %v7728 = vand.u32 %v7727, 8388607
        %v7729 = vor.u32 %v7728, 8388608
        %v7730 = vsub.s32 0, %v7729
        %v7731 = vadd.s32 %v7726, 1
        %vm7732 = vcmp.gt.s32.totalorder %v7731, 0
        %v7733 = vsel %vm7732, %v7731, 0
        %v7734 = vshrl.u32 %v7733, 5
        %v7735 = vand.u32 %v7733, 31
        %v7736 = vsub.s32 32, %v7735
        %v7737 = vshrl.u32 683565275, %v7736
        %v7738 = vshll.u32 683565275, %v7735
        %v7739 = vshrl.u32 2475754826, %v7736
        %v7740 = vor.u32 %v7738, %v7739
        %v7741 = vshll.u32 2475754826, %v7735
        %v7742 = vshrl.u32 2131351028, %v7736
        %v7743 = vor.u32 %v7741, %v7742
        %v7744 = vshll.u32 2131351028, %v7735
        %v7745 = vshrl.u32 2102212464, %v7736
        %v7746 = vor.u32 %v7744, %v7745
        %v7747 = vshll.u32 2102212464, %v7735
        %v7748 = vshrl.u32 920167782, %v7736
        %v7749 = vor.u32 %v7747, %v7748
        %v7750 = vshll.u32 920167782, %v7735
        %v7751 = vshrl.u32 1326507024, %v7736
        %v7752 = vor.u32 %v7750, %v7751
        %vm7753 = vcmp.lt.s32.totalorder %v7734, 1
        %vm7754 = vcmp.lt.s32.totalorder %v7734, 2
        %vm7755 = vcmp.lt.s32.totalorder %v7734, 3
        %vm7756 = vcmp.lt.s32.totalorder %v7734, 4
        %v7757 = vsel %vm7753, %v7737, %v7740
        %v7758 = vsel %vm7756, %v7746, 2102212464
        %v7759 = vsel %vm7755, %v7743, %v7758
        %v7760 = vsel %vm7754, %v7757, %v7759
        %v7761 = vsel %vm7753, %v7740, %v7743
        %v7762 = vsel %vm7756, %v7749, 920167782
        %v7763 = vsel %vm7755, %v7746, %v7762
        %v7764 = vsel %vm7754, %v7761, %v7763
        %v7765 = vsel %vm7753, %v7743, %v7746
        %v7766 = vsel %vm7756, %v7752, 1326507024
        %v7767 = vsel %vm7755, %v7749, %v7766
        %v7768 = vsel %vm7754, %v7765, %v7767
        %v7769 = vshll.u32 %v7729, 8
        %v7770 = vand.u32 %v7769, 65535
        %v7771 = vshrl.u32 %v7769, 16
        %v7772 = vand.u32 %v7768, 65535
        %v7773 = vshrl.u32 %v7768, 16
        %v7774 = vmul.u32 %v7770, %v7772
        %v7775 = vmul.u32 %v7770, %v7773
        %v7776 = vmul.u32 %v7771, %v7772
        %v7777 = vmul.u32 %v7771, %v7773
        %v7778 = vshll.u32 %v7775, 16
        %v7779 = vshrl.u32 %v7775, 16
        %v7780 = vshll.u32 %v7776, 16
        %v7781 = vshrl.u32 %v7776, 16
        %vm7782 = vc.u32 %v7774, %v7778
        %v7783 = vsel %vm7782, 1, 0
        %v7784 = vadd.s32 %v7774, %v7778
        %v7785 = vadd.s32 %v7777, %v7783
        %vm7786 = vc.u32 %v7784, %v7780
        %v7787 = vsel %vm7786, 1, 0
        %v7788 = vadd.s32 %v7784, %v7780
        %v7789 = vadd.s32 %v7785, %v7787
        %v7790 = vadd.s32 %v7789, %v7779
        %v7791 = vadd.s32 %v7790, %v7781
        %v7792 = vand.u32 %v7769, 65535
        %v7793 = vshrl.u32 %v7769, 16
        %v7794 = vand.u32 %v7764, 65535
        %v7795 = vshrl.u32 %v7764, 16
        %v7796 = vmul.u32 %v7792, %v7794
        %v7797 = vmul.u32 %v7792, %v7795
        %v7798 = vmul.u32 %v7793, %v7794
        %v7799 = vmul.u32 %v7793, %v7795
        %v7800 = vshll.u32 %v7797, 16
        %v7801 = vshrl.u32 %v7797, 16
        %v7802 = vshll.u32 %v7798, 16
        %v7803 = vshrl.u32 %v7798, 16
        %vm7804 = vc.u32 %v7796, %v7800
        %v7805 = vsel %vm7804, 1, 0
        %v7806 = vadd.s32 %v7796, %v7800
        %v7807 = vadd.s32 %v7799, %v7805
        %vm7808 = vc.u32 %v7806, %v7802
        %v7809 = vsel %vm7808, 1, 0
        %v7810 = vadd.s32 %v7806, %v7802
        %v7811 = vadd.s32 %v7807, %v7809
        %v7812 = vadd.s32 %v7811, %v7801
        %v7813 = vadd.s32 %v7812, %v7803
        %v7814 = vmul.u32 %v7769, %v7760
        %v7815 = vadd.s32 %v7791, %v7810
        %vm7816 = vc.u32 %v7791, %v7810
        %v7817 = vadd.s32 %v7813, 1
        %v7818 = vsel %vm7816, %v7817, %v7813
        %v7819 = vadd.s32 %v7814, %v7818
        %v7820 = vadd.s32 %v7819, 536870912
        %v7821 = vshrl.u32 %v7820, 30
        %v7822 = vshll.u32 %v7821, 30
        %v7823 = vsub.s32 %v7819, %v7822
        %vm7824 = vcmp.lt.s32.totalorder %v7823, 0
        %v7825 = vsub.s32 0, %v7823
        %v7826 = vsel %vm7824, %v7825, %v7823
        %v7827 = vclz %v7826
        %v7828 = vsub.s32 %v7827, 2
        %vm7829 = vcmp.gt.s32.totalorder 0, %v7828
        %v7830 = vsel %vm7829, 0, %v7828
        %v7831 = vsub.s32 32, %v7830
        %v7832 = vshll.u32 %v7823, %v7830
        %v7833 = vshrl.u32 %v7815, %v7831
        %v7834 = vor.u32 %v7832, %v7833
        %v7835 = vsub.s32 4294967266, %v7830
        %v7836 = vadd.s32 %v7835, 127
        %v7837 = vshll.u32 %v7836, 23
        %v7838 = vor.u32 4788187, %v7837
        %v7839 = vand.u32 2147483647, %v7838
        %v7841 = vcvt.s32.f32 %v7834
        %v7842 = vmul.f32 %v7841, %v7839
        %v7843 = vxor.u32 %v7842, 2147483648
        %v7844 = vsel %vm7723, %v7843, %v7842
        %v7845 = vsub.s32 4, %v7821
        %v7846 = vsel %vm7723, %v7845, %v7821
        %v7847 = vsel %vm7722, %v772, %v7844
        %v7848 = vsel %vm7722, 0, %v7846
        %v7849 = vmul.f32 %v7847, %v7847
        %v7850 = vmul.f32 %v7849, -0.001358992
        %v7851 = vadd.f32 %v7850, 0.041655596
        %v7852 = vmul.f32 %v7849, %v7851
        %v7853 = vadd.f32 %v7852, -0.4999988
        %v7854 = vmul.f32 %v7849, %v7853
        %v7855 = vadd.f32 1.0, %v7854
        %v7856 = vmul.f32 %v7847, %v7847
        %v7857 = vmul.f32 %v7856, -0.00019511016
        %v7858 = vadd.f32 %v7857, 0.008332121
        %v7859 = vmul.f32 %v7856, %v7858
        %v7860 = vadd.f32 %v7859, -0.16666654
        %v7861 = vmul.f32 %v7856, %v7860
        %v7862 = vadd.f32 %v7861, 1.0
        %v7863 = vmul.f32 %v7862, %v7847
        %vm7864 = vweird.f32 %v772
        %v7865 = vand.u32 %v7848, 3
        %vm7866 = vcmp.lt.s32.totalorder %v7865, 2
        %vm7867 = vcmp.eq.s32.totalorder %v7865, 0
        %v7868 = vxor.u32 %v7863, 2147483648
        %v7869 = vsel %vm7867, %v7855, %v7868
        %vm7870 = vcmp.eq.s32.totalorder %v7865, 2
        %v7871 = vxor.u32 %v7855, 2147483648
        %v7872 = vsel %vm7870, %v7871, %v7863
        %v7873 = vsel %vm7866, %v7869, %v7872
        %v7874 = vsel %vm7864, nan, %v7873
        %v7875 = vand.u32 2147483647, %v773
        %vm7876 = vcmp.le.f32.partialorder %v7875, 0.7853982
        %vm7877 = vcmp.lt.s32.totalorder %v773, 0
        %v7878 = vand.u32 %v773, 2139095040
        %v7879 = vshrl.u32 %v7878, 23
        %v7880 = vsub.s32 %v7879, 127
        %v7881 = vand.u32 2147483647, %v773
        %v7882 = vand.u32 %v7881, 8388607
        %v7883 = vor.u32 %v7882, 8388608
        %v7884 = vsub.s32 0, %v7883
        %v7885 = vadd.s32 %v7880, 1
        %vm7886 = vcmp.gt.s32.totalorder %v7885, 0
        %v7887 = vsel %vm7886, %v7885, 0
        %v7888 = vshrl.u32 %v7887, 5
        %v7889 = vand.u32 %v7887, 31
        %v7890 = vsub.s32 32, %v7889
        %v7891 = vshrl.u32 683565275, %v7890
        %v7892 = vshll.u32 683565275, %v7889
        %v7893 = vshrl.u32 2475754826, %v7890
        %v7894 = vor.u32 %v7892, %v7893
        %v7895 = vshll.u32 2475754826, %v7889
        %v7896 = vshrl.u32 2131351028, %v7890
        %v7897 = vor.u32 %v7895, %v7896
        %v7898 = vshll.u32 2131351028, %v7889
        %v7899 = vshrl.u32 2102212464, %v7890
        %v7900 = vor.u32 %v7898, %v7899
        %v7901 = vshll.u32 2102212464, %v7889
        %v7902 = vshrl.u32 920167782, %v7890
        %v7903 = vor.u32 %v7901, %v7902
        %v7904 = vshll.u32 920167782, %v7889
        %v7905 = vshrl.u32 1326507024, %v7890
        %v7906 = vor.u32 %v7904, %v7905
        %vm7907 = vcmp.lt.s32.totalorder %v7888, 1
        %vm7908 = vcmp.lt.s32.totalorder %v7888, 2
        %vm7909 = vcmp.lt.s32.totalorder %v7888, 3
        %vm7910 = vcmp.lt.s32.totalorder %v7888, 4
        %v7911 = vsel %vm7907, %v7891, %v7894
        %v7912 = vsel %vm7910, %v7900, 2102212464
        %v7913 = vsel %vm7909, %v7897, %v7912
        %v7914 = vsel %vm7908, %v7911, %v7913
        %v7915 = vsel %vm7907, %v7894, %v7897
        %v7916 = vsel %vm7910, %v7903, 920167782
        %v7917 = vsel %vm7909, %v7900, %v7916
        %v7918 = vsel %vm7908, %v7915, %v7917
        %v7919 = vsel %vm7907, %v7897, %v7900
        %v7920 = vsel %vm7910, %v7906, 1326507024
        %v7921 = vsel %vm7909, %v7903, %v7920
        %v7922 = vsel %vm7908, %v7919, %v7921
        %v7923 = vshll.u32 %v7883, 8
        %v7924 = vand.u32 %v7923, 65535
        %v7925 = vshrl.u32 %v7923, 16
        %v7926 = vand.u32 %v7922, 65535
        %v7927 = vshrl.u32 %v7922, 16
        %v7928 = vmul.u32 %v7924, %v7926
        %v7929 = vmul.u32 %v7924, %v7927
        %v7930 = vmul.u32 %v7925, %v7926
        %v7931 = vmul.u32 %v7925, %v7927
        %v7932 = vshll.u32 %v7929, 16
        %v7933 = vshrl.u32 %v7929, 16
        %v7934 = vshll.u32 %v7930, 16
        %v7935 = vshrl.u32 %v7930, 16
        %vm7936 = vc.u32 %v7928, %v7932
        %v7937 = vsel %vm7936, 1, 0
        %v7938 = vadd.s32 %v7928, %v7932
        %v7939 = vadd.s32 %v7931, %v7937
        %vm7940 = vc.u32 %v7938, %v7934
        %v7941 = vsel %vm7940, 1, 0
        %v7942 = vadd.s32 %v7938, %v7934
        %v7943 = vadd.s32 %v7939, %v7941
        %v7944 = vadd.s32 %v7943, %v7933
        %v7945 = vadd.s32 %v7944, %v7935
        %v7946 = vand.u32 %v7923, 65535
        %v7947 = vshrl.u32 %v7923, 16
        %v7948 = vand.u32 %v7918, 65535
        %v7949 = vshrl.u32 %v7918, 16
        %v7950 = vmul.u32 %v7946, %v7948
        %v7951 = vmul.u32 %v7946, %v7949
        %v7952 = vmul.u32 %v7947, %v7948
        %v7953 = vmul.u32 %v7947, %v7949
        %v7954 = vshll.u32 %v7951, 16
        %v7955 = vshrl.u32 %v7951, 16
        %v7956 = vshll.u32 %v7952, 16
        %v7957 = vshrl.u32 %v7952, 16
        %vm7958 = vc.u32 %v7950, %v7954
        %v7959 = vsel %vm7958, 1, 0
        %v7960 = vadd.s32 %v7950, %v7954
        %v7961 = vadd.s32 %v7953, %v7959
        %vm7962 = vc.u32 %v7960, %v7956
        %v7963 = vsel %vm7962, 1, 0
        %v7964 = vadd.s32 %v7960, %v7956
        %v7965 = vadd.s32 %v7961, %v7963
        %v7966 = vadd.s32 %v7965, %v7955
        %v7967 = vadd.s32 %v7966, %v7957
        %v7968 = vmul.u32 %v7923, %v7914
        %v7969 = vadd.s32 %v7945, %v7964
        %vm7970 = vc.u32 %v7945, %v7964
        %v7971 = vadd.s32 %v7967, 1
        %v7972 = vsel %vm7970, %v7971, %v7967
        %v7973 = vadd.s32 %v7968, %v7972
        %v7974 = vadd.s32 %v7973, 536870912
        %v7975 = vshrl.u32 %v7974, 30
        %v7976 = vshll.u32 %v7975, 30
        %v7977 = vsub.s32 %v7973, %v7976
        %vm7978 = vcmp.lt.s32.totalorder %v7977, 0
        %v7979 = vsub.s32 0, %v7977
        %v7980 = vsel %vm7978, %v7979, %v7977
        %v7981 = vclz %v7980
        %v7982 = vsub.s32 %v7981, 2
        %vm7983 = vcmp.gt.s32.totalorder 0, %v7982
        %v7984 = vsel %vm7983, 0, %v7982
        %v7985 = vsub.s32 32, %v7984
        %v7986 = vshll.u32 %v7977, %v7984
        %v7987 = vshrl.u32 %v7969, %v7985
        %v7988 = vor.u32 %v7986, %v7987
        %v7989 = vsub.s32 4294967266, %v7984
        %v7990 = vadd.s32 %v7989, 127
        %v7991 = vshll.u32 %v7990, 23
        %v7992 = vor.u32 4788187, %v7991
        %v7993 = vand.u32 2147483647, %v7992
        %v7995 = vcvt.s32.f32 %v7988
        %v7996 = vmul.f32 %v7995, %v7993
        %v7997 = vxor.u32 %v7996, 2147483648
        %v7998 = vsel %vm7877, %v7997, %v7996
        %v7999 = vsub.s32 4, %v7975
        %v8000 = vsel %vm7877, %v7999, %v7975
        %v8001 = vsel %vm7876, %v773, %v7998
        %v8002 = vsel %vm7876, 0, %v8000
        %v8003 = vmul.f32 %v8001, %v8001
        %v8004 = vmul.f32 %v8003, -0.001358992
        %v8005 = vadd.f32 %v8004, 0.041655596
        %v8006 = vmul.f32 %v8003, %v8005
        %v8007 = vadd.f32 %v8006, -0.4999988
        %v8008 = vmul.f32 %v8003, %v8007
        %v8009 = vadd.f32 1.0, %v8008
        %v8010 = vmul.f32 %v8001, %v8001
        %v8011 = vmul.f32 %v8010, -0.00019511016
        %v8012 = vadd.f32 %v8011, 0.008332121
        %v8013 = vmul.f32 %v8010, %v8012
        %v8014 = vadd.f32 %v8013, -0.16666654
        %v8015 = vmul.f32 %v8010, %v8014
        %v8016 = vadd.f32 %v8015, 1.0
        %v8017 = vmul.f32 %v8016, %v8001
        %vm8018 = vweird.f32 %v773
        %v8019 = vand.u32 %v8002, 3
        %vm8020 = vcmp.lt.s32.totalorder %v8019, 2
        %vm8021 = vcmp.eq.s32.totalorder %v8019, 0
        %v8022 = vxor.u32 %v8017, 2147483648
        %v8023 = vsel %vm8021, %v8009, %v8022
        %vm8024 = vcmp.eq.s32.totalorder %v8019, 2
        %v8025 = vxor.u32 %v8009, 2147483648
        %v8026 = vsel %vm8024, %v8025, %v8017
        %v8027 = vsel %vm8020, %v8023, %v8026
        %v8028 = vsel %vm8018, nan, %v8027
        %v8029 = vand.u32 2147483647, %v774
        %vm8030 = vcmp.le.f32.partialorder %v8029, 0.7853982
        %vm8031 = vcmp.lt.s32.totalorder %v774, 0
        %v8032 = vand.u32 %v774, 2139095040
        %v8033 = vshrl.u32 %v8032, 23
        %v8034 = vsub.s32 %v8033, 127
        %v8035 = vand.u32 2147483647, %v774
        %v8036 = vand.u32 %v8035, 8388607
        %v8037 = vor.u32 %v8036, 8388608
        %v8038 = vsub.s32 0, %v8037
        %v8039 = vadd.s32 %v8034, 1
        %vm8040 = vcmp.gt.s32.totalorder %v8039, 0
        %v8041 = vsel %vm8040, %v8039, 0
        %v8042 = vshrl.u32 %v8041, 5
        %v8043 = vand.u32 %v8041, 31
        %v8044 = vsub.s32 32, %v8043
        %v8045 = vshrl.u32 683565275, %v8044
        %v8046 = vshll.u32 683565275, %v8043
        %v8047 = vshrl.u32 2475754826, %v8044
        %v8048 = vor.u32 %v8046, %v8047
        %v8049 = vshll.u32 2475754826, %v8043
        %v8050 = vshrl.u32 2131351028, %v8044
        %v8051 = vor.u32 %v8049, %v8050
        %v8052 = vshll.u32 2131351028, %v8043
        %v8053 = vshrl.u32 2102212464, %v8044
        %v8054 = vor.u32 %v8052, %v8053
        %v8055 = vshll.u32 2102212464, %v8043
        %v8056 = vshrl.u32 920167782, %v8044
        %v8057 = vor.u32 %v8055, %v8056
        %v8058 = vshll.u32 920167782, %v8043
        %v8059 = vshrl.u32 1326507024, %v8044
        %v8060 = vor.u32 %v8058, %v8059
        %vm8061 = vcmp.lt.s32.totalorder %v8042, 1
        %vm8062 = vcmp.lt.s32.totalorder %v8042, 2
        %vm8063 = vcmp.lt.s32.totalorder %v8042, 3
        %vm8064 = vcmp.lt.s32.totalorder %v8042, 4
        %v8065 = vsel %vm8061, %v8045, %v8048
        %v8066 = vsel %vm8064, %v8054, 2102212464
        %v8067 = vsel %vm8063, %v8051, %v8066
        %v8068 = vsel %vm8062, %v8065, %v8067
        %v8069 = vsel %vm8061, %v8048, %v8051
        %v8070 = vsel %vm8064, %v8057, 920167782
        %v8071 = vsel %vm8063, %v8054, %v8070
        %v8072 = vsel %vm8062, %v8069, %v8071
        %v8073 = vsel %vm8061, %v8051, %v8054
        %v8074 = vsel %vm8064, %v8060, 1326507024
        %v8075 = vsel %vm8063, %v8057, %v8074
        %v8076 = vsel %vm8062, %v8073, %v8075
        %v8077 = vshll.u32 %v8037, 8
        %v8078 = vand.u32 %v8077, 65535
        %v8079 = vshrl.u32 %v8077, 16
        %v8080 = vand.u32 %v8076, 65535
        %v8081 = vshrl.u32 %v8076, 16
        %v8082 = vmul.u32 %v8078, %v8080
        %v8083 = vmul.u32 %v8078, %v8081
        %v8084 = vmul.u32 %v8079, %v8080
        %v8085 = vmul.u32 %v8079, %v8081
        %v8086 = vshll.u32 %v8083, 16
        %v8087 = vshrl.u32 %v8083, 16
        %v8088 = vshll.u32 %v8084, 16
        %v8089 = vshrl.u32 %v8084, 16
        %vm8090 = vc.u32 %v8082, %v8086
        %v8091 = vsel %vm8090, 1, 0
        %v8092 = vadd.s32 %v8082, %v8086
        %v8093 = vadd.s32 %v8085, %v8091
        %vm8094 = vc.u32 %v8092, %v8088
        %v8095 = vsel %vm8094, 1, 0
        %v8096 = vadd.s32 %v8092, %v8088
        %v8097 = vadd.s32 %v8093, %v8095
        %v8098 = vadd.s32 %v8097, %v8087
        %v8099 = vadd.s32 %v8098, %v8089
        %v8100 = vand.u32 %v8077, 65535
        %v8101 = vshrl.u32 %v8077, 16
        %v8102 = vand.u32 %v8072, 65535
        %v8103 = vshrl.u32 %v8072, 16
        %v8104 = vmul.u32 %v8100, %v8102
        %v8105 = vmul.u32 %v8100, %v8103
        %v8106 = vmul.u32 %v8101, %v8102
        %v8107 = vmul.u32 %v8101, %v8103
        %v8108 = vshll.u32 %v8105, 16
        %v8109 = vshrl.u32 %v8105, 16
        %v8110 = vshll.u32 %v8106, 16
        %v8111 = vshrl.u32 %v8106, 16
        %vm8112 = vc.u32 %v8104, %v8108
        %v8113 = vsel %vm8112, 1, 0
        %v8114 = vadd.s32 %v8104, %v8108
        %v8115 = vadd.s32 %v8107, %v8113
        %vm8116 = vc.u32 %v8114, %v8110
        %v8117 = vsel %vm8116, 1, 0
        %v8118 = vadd.s32 %v8114, %v8110
        %v8119 = vadd.s32 %v8115, %v8117
        %v8120 = vadd.s32 %v8119, %v8109
        %v8121 = vadd.s32 %v8120, %v8111
        %v8122 = vmul.u32 %v8077, %v8068
        %v8123 = vadd.s32 %v8099, %v8118
        %vm8124 = vc.u32 %v8099, %v8118
        %v8125 = vadd.s32 %v8121, 1
        %v8126 = vsel %vm8124, %v8125, %v8121
        %v8127 = vadd.s32 %v8122, %v8126
        %v8128 = vadd.s32 %v8127, 536870912
        %v8129 = vshrl.u32 %v8128, 30
        %v8130 = vshll.u32 %v8129, 30
        %v8131 = vsub.s32 %v8127, %v8130
        %vm8132 = vcmp.lt.s32.totalorder %v8131, 0
        %v8133 = vsub.s32 0, %v8131
        %v8134 = vsel %vm8132, %v8133, %v8131
        %v8135 = vclz %v8134
        %v8136 = vsub.s32 %v8135, 2
        %vm8137 = vcmp.gt.s32.totalorder 0, %v8136
        %v8138 = vsel %vm8137, 0, %v8136
        %v8139 = vsub.s32 32, %v8138
        %v8140 = vshll.u32 %v8131, %v8138
        %v8141 = vshrl.u32 %v8123, %v8139
        %v8142 = vor.u32 %v8140, %v8141
        %v8143 = vsub.s32 4294967266, %v8138
        %v8144 = vadd.s32 %v8143, 127
        %v8145 = vshll.u32 %v8144, 23
        %v8146 = vor.u32 4788187, %v8145
        %v8147 = vand.u32 2147483647, %v8146
        %v8149 = vcvt.s32.f32 %v8142
        %v8150 = vmul.f32 %v8149, %v8147
        %v8151 = vxor.u32 %v8150, 2147483648
        %v8152 = vsel %vm8031, %v8151, %v8150
        %v8153 = vsub.s32 4, %v8129
        %v8154 = vsel %vm8031, %v8153, %v8129
        %v8155 = vsel %vm8030, %v774, %v8152
        %v8156 = vsel %vm8030, 0, %v8154
        %v8157 = vmul.f32 %v8155, %v8155
        %v8158 = vmul.f32 %v8157, -0.001358992
        %v8159 = vadd.f32 %v8158, 0.041655596
        %v8160 = vmul.f32 %v8157, %v8159
        %v8161 = vadd.f32 %v8160, -0.4999988
        %v8162 = vmul.f32 %v8157, %v8161
        %v8163 = vadd.f32 1.0, %v8162
        %v8164 = vmul.f32 %v8155, %v8155
        %v8165 = vmul.f32 %v8164, -0.00019511016
        %v8166 = vadd.f32 %v8165, 0.008332121
        %v8167 = vmul.f32 %v8164, %v8166
        %v8168 = vadd.f32 %v8167, -0.16666654
        %v8169 = vmul.f32 %v8164, %v8168
        %v8170 = vadd.f32 %v8169, 1.0
        %v8171 = vmul.f32 %v8170, %v8155
        %vm8172 = vweird.f32 %v774
        %v8173 = vand.u32 %v8156, 3
        %vm8174 = vcmp.lt.s32.totalorder %v8173, 2
        %vm8175 = vcmp.eq.s32.totalorder %v8173, 0
        %v8176 = vxor.u32 %v8171, 2147483648
        %v8177 = vsel %vm8175, %v8163, %v8176
        %vm8178 = vcmp.eq.s32.totalorder %v8173, 2
        %v8179 = vxor.u32 %v8163, 2147483648
        %v8180 = vsel %vm8178, %v8179, %v8171
        %v8181 = vsel %vm8174, %v8177, %v8180
        %v8182 = vsel %vm8172, nan, %v8181
        %v8183 = vand.u32 2147483647, %v775
        %vm8184 = vcmp.le.f32.partialorder %v8183, 0.7853982
        %vm8185 = vcmp.lt.s32.totalorder %v775, 0
        %v8186 = vand.u32 %v775, 2139095040
        %v8187 = vshrl.u32 %v8186, 23
        %v8188 = vsub.s32 %v8187, 127
        %v8189 = vand.u32 2147483647, %v775
        %v8190 = vand.u32 %v8189, 8388607
        %v8191 = vor.u32 %v8190, 8388608
        %v8192 = vsub.s32 0, %v8191
        %v8193 = vadd.s32 %v8188, 1
        %vm8194 = vcmp.gt.s32.totalorder %v8193, 0
        %v8195 = vsel %vm8194, %v8193, 0
        %v8196 = vshrl.u32 %v8195, 5
        %v8197 = vand.u32 %v8195, 31
        %v8198 = vsub.s32 32, %v8197
        %v8199 = vshrl.u32 683565275, %v8198
        %v8200 = vshll.u32 683565275, %v8197
        %v8201 = vshrl.u32 2475754826, %v8198
        %v8202 = vor.u32 %v8200, %v8201
        %v8203 = vshll.u32 2475754826, %v8197
        %v8204 = vshrl.u32 2131351028, %v8198
        %v8205 = vor.u32 %v8203, %v8204
        %v8206 = vshll.u32 2131351028, %v8197
        %v8207 = vshrl.u32 2102212464, %v8198
        %v8208 = vor.u32 %v8206, %v8207
        %v8209 = vshll.u32 2102212464, %v8197
        %v8210 = vshrl.u32 920167782, %v8198
        %v8211 = vor.u32 %v8209, %v8210
        %v8212 = vshll.u32 920167782, %v8197
        %v8213 = vshrl.u32 1326507024, %v8198
        %v8214 = vor.u32 %v8212, %v8213
        %vm8215 = vcmp.lt.s32.totalorder %v8196, 1
        %vm8216 = vcmp.lt.s32.totalorder %v8196, 2
        %vm8217 = vcmp.lt.s32.totalorder %v8196, 3
        %vm8218 = vcmp.lt.s32.totalorder %v8196, 4
        %v8219 = vsel %vm8215, %v8199, %v8202
        %v8220 = vsel %vm8218, %v8208, 2102212464
        %v8221 = vsel %vm8217, %v8205, %v8220
        %v8222 = vsel %vm8216, %v8219, %v8221
        %v8223 = vsel %vm8215, %v8202, %v8205
        %v8224 = vsel %vm8218, %v8211, 920167782
        %v8225 = vsel %vm8217, %v8208, %v8224
        %v8226 = vsel %vm8216, %v8223, %v8225
        %v8227 = vsel %vm8215, %v8205, %v8208
        %v8228 = vsel %vm8218, %v8214, 1326507024
        %v8229 = vsel %vm8217, %v8211, %v8228
        %v8230 = vsel %vm8216, %v8227, %v8229
        %v8231 = vshll.u32 %v8191, 8
        %v8232 = vand.u32 %v8231, 65535
        %v8233 = vshrl.u32 %v8231, 16
        %v8234 = vand.u32 %v8230, 65535
        %v8235 = vshrl.u32 %v8230, 16
        %v8236 = vmul.u32 %v8232, %v8234
        %v8237 = vmul.u32 %v8232, %v8235
        %v8238 = vmul.u32 %v8233, %v8234
        %v8239 = vmul.u32 %v8233, %v8235
        %v8240 = vshll.u32 %v8237, 16
        %v8241 = vshrl.u32 %v8237, 16
        %v8242 = vshll.u32 %v8238, 16
        %v8243 = vshrl.u32 %v8238, 16
        %vm8244 = vc.u32 %v8236, %v8240
        %v8245 = vsel %vm8244, 1, 0
        %v8246 = vadd.s32 %v8236, %v8240
        %v8247 = vadd.s32 %v8239, %v8245
        %vm8248 = vc.u32 %v8246, %v8242
        %v8249 = vsel %vm8248, 1, 0
        %v8250 = vadd.s32 %v8246, %v8242
        %v8251 = vadd.s32 %v8247, %v8249
        %v8252 = vadd.s32 %v8251, %v8241
        %v8253 = vadd.s32 %v8252, %v8243
        %v8254 = vand.u32 %v8231, 65535
        %v8255 = vshrl.u32 %v8231, 16
        %v8256 = vand.u32 %v8226, 65535
        %v8257 = vshrl.u32 %v8226, 16
        %v8258 = vmul.u32 %v8254, %v8256
        %v8259 = vmul.u32 %v8254, %v8257
        %v8260 = vmul.u32 %v8255, %v8256
        %v8261 = vmul.u32 %v8255, %v8257
        %v8262 = vshll.u32 %v8259, 16
        %v8263 = vshrl.u32 %v8259, 16
        %v8264 = vshll.u32 %v8260, 16
        %v8265 = vshrl.u32 %v8260, 16
        %vm8266 = vc.u32 %v8258, %v8262
        %v8267 = vsel %vm8266, 1, 0
        %v8268 = vadd.s32 %v8258, %v8262
        %v8269 = vadd.s32 %v8261, %v8267
        %vm8270 = vc.u32 %v8268, %v8264
        %v8271 = vsel %vm8270, 1, 0
        %v8272 = vadd.s32 %v8268, %v8264
        %v8273 = vadd.s32 %v8269, %v8271
        %v8274 = vadd.s32 %v8273, %v8263
        %v8275 = vadd.s32 %v8274, %v8265
        %v8276 = vmul.u32 %v8231, %v8222
        %v8277 = vadd.s32 %v8253, %v8272
        %vm8278 = vc.u32 %v8253, %v8272
        %v8279 = vadd.s32 %v8275, 1
        %v8280 = vsel %vm8278, %v8279, %v8275
        %v8281 = vadd.s32 %v8276, %v8280
        %v8282 = vadd.s32 %v8281, 536870912
        %v8283 = vshrl.u32 %v8282, 30
        %v8284 = vshll.u32 %v8283, 30
        %v8285 = vsub.s32 %v8281, %v8284
        %vm8286 = vcmp.lt.s32.totalorder %v8285, 0
        %v8287 = vsub.s32 0, %v8285
        %v8288 = vsel %vm8286, %v8287, %v8285
        %v8289 = vclz %v8288
        %v8290 = vsub.s32 %v8289, 2
        %vm8291 = vcmp.gt.s32.totalorder 0, %v8290
        %v8292 = vsel %vm8291, 0, %v8290
        %v8293 = vsub.s32 32, %v8292
        %v8294 = vshll.u32 %v8285, %v8292
        %v8295 = vshrl.u32 %v8277, %v8293
        %v8296 = vor.u32 %v8294, %v8295
        %v8297 = vsub.s32 4294967266, %v8292
        %v8298 = vadd.s32 %v8297, 127
        %v8299 = vshll.u32 %v8298, 23
        %v8300 = vor.u32 4788187, %v8299
        %v8301 = vand.u32 2147483647, %v8300
        %v8303 = vcvt.s32.f32 %v8296
        %v8304 = vmul.f32 %v8303, %v8301
        %v8305 = vxor.u32 %v8304, 2147483648
        %v8306 = vsel %vm8185, %v8305, %v8304
        %v8307 = vsub.s32 4, %v8283
        %v8308 = vsel %vm8185, %v8307, %v8283
        %v8309 = vsel %vm8184, %v775, %v8306
        %v8310 = vsel %vm8184, 0, %v8308
        %v8311 = vmul.f32 %v8309, %v8309
        %v8312 = vmul.f32 %v8311, -0.001358992
        %v8313 = vadd.f32 %v8312, 0.041655596
        %v8314 = vmul.f32 %v8311, %v8313
        %v8315 = vadd.f32 %v8314, -0.4999988
        %v8316 = vmul.f32 %v8311, %v8315
        %v8317 = vadd.f32 1.0, %v8316
        %v8318 = vmul.f32 %v8309, %v8309
        %v8319 = vmul.f32 %v8318, -0.00019511016
        %v8320 = vadd.f32 %v8319, 0.008332121
        %v8321 = vmul.f32 %v8318, %v8320
        %v8322 = vadd.f32 %v8321, -0.16666654
        %v8323 = vmul.f32 %v8318, %v8322
        %v8324 = vadd.f32 %v8323, 1.0
        %v8325 = vmul.f32 %v8324, %v8309
        %vm8326 = vweird.f32 %v775
        %v8327 = vand.u32 %v8310, 3
        %vm8328 = vcmp.lt.s32.totalorder %v8327, 2
        %vm8329 = vcmp.eq.s32.totalorder %v8327, 0
        %v8330 = vxor.u32 %v8325, 2147483648
        %v8331 = vsel %vm8329, %v8317, %v8330
        %vm8332 = vcmp.eq.s32.totalorder %v8327, 2
        %v8333 = vxor.u32 %v8317, 2147483648
        %v8334 = vsel %vm8332, %v8333, %v8325
        %v8335 = vsel %vm8328, %v8331, %v8334
        %v8336 = vsel %vm8326, nan, %v8335
        %v8337 = vand.u32 2147483647, %v776
        %vm8338 = vcmp.le.f32.partialorder %v8337, 0.7853982
        %vm8339 = vcmp.lt.s32.totalorder %v776, 0
        %v8340 = vand.u32 %v776, 2139095040
        %v8341 = vshrl.u32 %v8340, 23
        %v8342 = vsub.s32 %v8341, 127
        %v8343 = vand.u32 2147483647, %v776
        %v8344 = vand.u32 %v8343, 8388607
        %v8345 = vor.u32 %v8344, 8388608
        %v8346 = vsub.s32 0, %v8345
        %v8347 = vadd.s32 %v8342, 1
        %vm8348 = vcmp.gt.s32.totalorder %v8347, 0
        %v8349 = vsel %vm8348, %v8347, 0
        %v8350 = vshrl.u32 %v8349, 5
        %v8351 = vand.u32 %v8349, 31
        %v8352 = vsub.s32 32, %v8351
        %v8353 = vshrl.u32 683565275, %v8352
        %v8354 = vshll.u32 683565275, %v8351
        %v8355 = vshrl.u32 2475754826, %v8352
        %v8356 = vor.u32 %v8354, %v8355
        %v8357 = vshll.u32 2475754826, %v8351
        %v8358 = vshrl.u32 2131351028, %v8352
        %v8359 = vor.u32 %v8357, %v8358
        %v8360 = vshll.u32 2131351028, %v8351
        %v8361 = vshrl.u32 2102212464, %v8352
        %v8362 = vor.u32 %v8360, %v8361
        %v8363 = vshll.u32 2102212464, %v8351
        %v8364 = vshrl.u32 920167782, %v8352
        %v8365 = vor.u32 %v8363, %v8364
        %v8366 = vshll.u32 920167782, %v8351
        %v8367 = vshrl.u32 1326507024, %v8352
        %v8368 = vor.u32 %v8366, %v8367
        %vm8369 = vcmp.lt.s32.totalorder %v8350, 1
        %vm8370 = vcmp.lt.s32.totalorder %v8350, 2
        %vm8371 = vcmp.lt.s32.totalorder %v8350, 3
        %vm8372 = vcmp.lt.s32.totalorder %v8350, 4
        %v8373 = vsel %vm8369, %v8353, %v8356
        %v8374 = vsel %vm8372, %v8362, 2102212464
        %v8375 = vsel %vm8371, %v8359, %v8374
        %v8376 = vsel %vm8370, %v8373, %v8375
        %v8377 = vsel %vm8369, %v8356, %v8359
        %v8378 = vsel %vm8372, %v8365, 920167782
        %v8379 = vsel %vm8371, %v8362, %v8378
        %v8380 = vsel %vm8370, %v8377, %v8379
        %v8381 = vsel %vm8369, %v8359, %v8362
        %v8382 = vsel %vm8372, %v8368, 1326507024
        %v8383 = vsel %vm8371, %v8365, %v8382
        %v8384 = vsel %vm8370, %v8381, %v8383
        %v8385 = vshll.u32 %v8345, 8
        %v8386 = vand.u32 %v8385, 65535
        %v8387 = vshrl.u32 %v8385, 16
        %v8388 = vand.u32 %v8384, 65535
        %v8389 = vshrl.u32 %v8384, 16
        %v8390 = vmul.u32 %v8386, %v8388
        %v8391 = vmul.u32 %v8386, %v8389
        %v8392 = vmul.u32 %v8387, %v8388
        %v8393 = vmul.u32 %v8387, %v8389
        %v8394 = vshll.u32 %v8391, 16
        %v8395 = vshrl.u32 %v8391, 16
        %v8396 = vshll.u32 %v8392, 16
        %v8397 = vshrl.u32 %v8392, 16
        %vm8398 = vc.u32 %v8390, %v8394
        %v8399 = vsel %vm8398, 1, 0
        %v8400 = vadd.s32 %v8390, %v8394
        %v8401 = vadd.s32 %v8393, %v8399
        %vm8402 = vc.u32 %v8400, %v8396
        %v8403 = vsel %vm8402, 1, 0
        %v8404 = vadd.s32 %v8400, %v8396
        %v8405 = vadd.s32 %v8401, %v8403
        %v8406 = vadd.s32 %v8405, %v8395
        %v8407 = vadd.s32 %v8406, %v8397
        %v8408 = vand.u32 %v8385, 65535
        %v8409 = vshrl.u32 %v8385, 16
        %v8410 = vand.u32 %v8380, 65535
        %v8411 = vshrl.u32 %v8380, 16
        %v8412 = vmul.u32 %v8408, %v8410
        %v8413 = vmul.u32 %v8408, %v8411
        %v8414 = vmul.u32 %v8409, %v8410
        %v8415 = vmul.u32 %v8409, %v8411
        %v8416 = vshll.u32 %v8413, 16
        %v8417 = vshrl.u32 %v8413, 16
        %v8418 = vshll.u32 %v8414, 16
        %v8419 = vshrl.u32 %v8414, 16
        %vm8420 = vc.u32 %v8412, %v8416
        %v8421 = vsel %vm8420, 1, 0
        %v8422 = vadd.s32 %v8412, %v8416
        %v8423 = vadd.s32 %v8415, %v8421
        %vm8424 = vc.u32 %v8422, %v8418
        %v8425 = vsel %vm8424, 1, 0
        %v8426 = vadd.s32 %v8422, %v8418
        %v8427 = vadd.s32 %v8423, %v8425
        %v8428 = vadd.s32 %v8427, %v8417
        %v8429 = vadd.s32 %v8428, %v8419
        %v8430 = vmul.u32 %v8385, %v8376
        %v8431 = vadd.s32 %v8407, %v8426
        %vm8432 = vc.u32 %v8407, %v8426
        %v8433 = vadd.s32 %v8429, 1
        %v8434 = vsel %vm8432, %v8433, %v8429
        %v8435 = vadd.s32 %v8430, %v8434
        %v8436 = vadd.s32 %v8435, 536870912
        %v8437 = vshrl.u32 %v8436, 30
        %v8438 = vshll.u32 %v8437, 30
        %v8439 = vsub.s32 %v8435, %v8438
        %vm8440 = vcmp.lt.s32.totalorder %v8439, 0
        %v8441 = vsub.s32 0, %v8439
        %v8442 = vsel %vm8440, %v8441, %v8439
        %v8443 = vclz %v8442
        %v8444 = vsub.s32 %v8443, 2
        %vm8445 = vcmp.gt.s32.totalorder 0, %v8444
        %v8446 = vsel %vm8445, 0, %v8444
        %v8447 = vsub.s32 32, %v8446
        %v8448 = vshll.u32 %v8439, %v8446
        %v8449 = vshrl.u32 %v8431, %v8447
        %v8450 = vor.u32 %v8448, %v8449
        %v8451 = vsub.s32 4294967266, %v8446
        %v8452 = vadd.s32 %v8451, 127
        %v8453 = vshll.u32 %v8452, 23
        %v8454 = vor.u32 4788187, %v8453
        %v8455 = vand.u32 2147483647, %v8454
        %v8457 = vcvt.s32.f32 %v8450
        %v8458 = vmul.f32 %v8457, %v8455
        %v8459 = vxor.u32 %v8458, 2147483648
        %v8460 = vsel %vm8339, %v8459, %v8458
        %v8461 = vsub.s32 4, %v8437
        %v8462 = vsel %vm8339, %v8461, %v8437
        %v8463 = vsel %vm8338, %v776, %v8460
        %v8464 = vsel %vm8338, 0, %v8462
        %v8465 = vmul.f32 %v8463, %v8463
        %v8466 = vmul.f32 %v8465, -0.001358992
        %v8467 = vadd.f32 %v8466, 0.041655596
        %v8468 = vmul.f32 %v8465, %v8467
        %v8469 = vadd.f32 %v8468, -0.4999988
        %v8470 = vmul.f32 %v8465, %v8469
        %v8471 = vadd.f32 1.0, %v8470
        %v8472 = vmul.f32 %v8463, %v8463
        %v8473 = vmul.f32 %v8472, -0.00019511016
        %v8474 = vadd.f32 %v8473, 0.008332121
        %v8475 = vmul.f32 %v8472, %v8474
        %v8476 = vadd.f32 %v8475, -0.16666654
        %v8477 = vmul.f32 %v8472, %v8476
        %v8478 = vadd.f32 %v8477, 1.0
        %v8479 = vmul.f32 %v8478, %v8463
        %vm8480 = vweird.f32 %v776
        %v8481 = vand.u32 %v8464, 3
        %vm8482 = vcmp.lt.s32.totalorder %v8481, 2
        %vm8483 = vcmp.eq.s32.totalorder %v8481, 0
        %v8484 = vxor.u32 %v8479, 2147483648
        %v8485 = vsel %vm8483, %v8471, %v8484
        %vm8486 = vcmp.eq.s32.totalorder %v8481, 2
        %v8487 = vxor.u32 %v8471, 2147483648
        %v8488 = vsel %vm8486, %v8487, %v8479
        %v8489 = vsel %vm8482, %v8485, %v8488
        %v8490 = vsel %vm8480, nan, %v8489
        %v8491 = vand.u32 2147483647, %v777
        %vm8492 = vcmp.le.f32.partialorder %v8491, 0.7853982
        %vm8493 = vcmp.lt.s32.totalorder %v777, 0
        %v8494 = vand.u32 %v777, 2139095040
        %v8495 = vshrl.u32 %v8494, 23
        %v8496 = vsub.s32 %v8495, 127
        %v8497 = vand.u32 2147483647, %v777
        %v8498 = vand.u32 %v8497, 8388607
        %v8499 = vor.u32 %v8498, 8388608
        %v8500 = vsub.s32 0, %v8499
        %v8501 = vadd.s32 %v8496, 1
        %vm8502 = vcmp.gt.s32.totalorder %v8501, 0
        %v8503 = vsel %vm8502, %v8501, 0
        %v8504 = vshrl.u32 %v8503, 5
        %v8505 = vand.u32 %v8503, 31
        %v8506 = vsub.s32 32, %v8505
        %v8507 = vshrl.u32 683565275, %v8506
        %v8508 = vshll.u32 683565275, %v8505
        %v8509 = vshrl.u32 2475754826, %v8506
        %v8510 = vor.u32 %v8508, %v8509
        %v8511 = vshll.u32 2475754826, %v8505
        %v8512 = vshrl.u32 2131351028, %v8506
        %v8513 = vor.u32 %v8511, %v8512
        %v8514 = vshll.u32 2131351028, %v8505
        %v8515 = vshrl.u32 2102212464, %v8506
        %v8516 = vor.u32 %v8514, %v8515
        %v8517 = vshll.u32 2102212464, %v8505
        %v8518 = vshrl.u32 920167782, %v8506
        %v8519 = vor.u32 %v8517, %v8518
        %v8520 = vshll.u32 920167782, %v8505
        %v8521 = vshrl.u32 1326507024, %v8506
        %v8522 = vor.u32 %v8520, %v8521
        %vm8523 = vcmp.lt.s32.totalorder %v8504, 1
        %vm8524 = vcmp.lt.s32.totalorder %v8504, 2
        %vm8525 = vcmp.lt.s32.totalorder %v8504, 3
        %vm8526 = vcmp.lt.s32.totalorder %v8504, 4
        %v8527 = vsel %vm8523, %v8507, %v8510
        %v8528 = vsel %vm8526, %v8516, 2102212464
        %v8529 = vsel %vm8525, %v8513, %v8528
        %v8530 = vsel %vm8524, %v8527, %v8529
        %v8531 = vsel %vm8523, %v8510, %v8513
        %v8532 = vsel %vm8526, %v8519, 920167782
        %v8533 = vsel %vm8525, %v8516, %v8532
        %v8534 = vsel %vm8524, %v8531, %v8533
        %v8535 = vsel %vm8523, %v8513, %v8516
        %v8536 = vsel %vm8526, %v8522, 1326507024
        %v8537 = vsel %vm8525, %v8519, %v8536
        %v8538 = vsel %vm8524, %v8535, %v8537
        %v8539 = vshll.u32 %v8499, 8
        %v8540 = vand.u32 %v8539, 65535
        %v8541 = vshrl.u32 %v8539, 16
        %v8542 = vand.u32 %v8538, 65535
        %v8543 = vshrl.u32 %v8538, 16
        %v8544 = vmul.u32 %v8540, %v8542
        %v8545 = vmul.u32 %v8540, %v8543
        %v8546 = vmul.u32 %v8541, %v8542
        %v8547 = vmul.u32 %v8541, %v8543
        %v8548 = vshll.u32 %v8545, 16
        %v8549 = vshrl.u32 %v8545, 16
        %v8550 = vshll.u32 %v8546, 16
        %v8551 = vshrl.u32 %v8546, 16
        %vm8552 = vc.u32 %v8544, %v8548
        %v8553 = vsel %vm8552, 1, 0
        %v8554 = vadd.s32 %v8544, %v8548
        %v8555 = vadd.s32 %v8547, %v8553
        %vm8556 = vc.u32 %v8554, %v8550
        %v8557 = vsel %vm8556, 1, 0
        %v8558 = vadd.s32 %v8554, %v8550
        %v8559 = vadd.s32 %v8555, %v8557
        %v8560 = vadd.s32 %v8559, %v8549
        %v8561 = vadd.s32 %v8560, %v8551
        %v8562 = vand.u32 %v8539, 65535
        %v8563 = vshrl.u32 %v8539, 16
        %v8564 = vand.u32 %v8534, 65535
        %v8565 = vshrl.u32 %v8534, 16
        %v8566 = vmul.u32 %v8562, %v8564
        %v8567 = vmul.u32 %v8562, %v8565
        %v8568 = vmul.u32 %v8563, %v8564
        %v8569 = vmul.u32 %v8563, %v8565
        %v8570 = vshll.u32 %v8567, 16
        %v8571 = vshrl.u32 %v8567, 16
        %v8572 = vshll.u32 %v8568, 16
        %v8573 = vshrl.u32 %v8568, 16
        %vm8574 = vc.u32 %v8566, %v8570
        %v8575 = vsel %vm8574, 1, 0
        %v8576 = vadd.s32 %v8566, %v8570
        %v8577 = vadd.s32 %v8569, %v8575
        %vm8578 = vc.u32 %v8576, %v8572
        %v8579 = vsel %vm8578, 1, 0
        %v8580 = vadd.s32 %v8576, %v8572
        %v8581 = vadd.s32 %v8577, %v8579
        %v8582 = vadd.s32 %v8581, %v8571
        %v8583 = vadd.s32 %v8582, %v8573
        %v8584 = vmul.u32 %v8539, %v8530
        %v8585 = vadd.s32 %v8561, %v8580
        %vm8586 = vc.u32 %v8561, %v8580
        %v8587 = vadd.s32 %v8583, 1
        %v8588 = vsel %vm8586, %v8587, %v8583
        %v8589 = vadd.s32 %v8584, %v8588
        %v8590 = vadd.s32 %v8589, 536870912
        %v8591 = vshrl.u32 %v8590, 30
        %v8592 = vshll.u32 %v8591, 30
        %v8593 = vsub.s32 %v8589, %v8592
        %vm8594 = vcmp.lt.s32.totalorder %v8593, 0
        %v8595 = vsub.s32 0, %v8593
        %v8596 = vsel %vm8594, %v8595, %v8593
        %v8597 = vclz %v8596
        %v8598 = vsub.s32 %v8597, 2
        %vm8599 = vcmp.gt.s32.totalorder 0, %v8598
        %v8600 = vsel %vm8599, 0, %v8598
        %v8601 = vsub.s32 32, %v8600
        %v8602 = vshll.u32 %v8593, %v8600
        %v8603 = vshrl.u32 %v8585, %v8601
        %v8604 = vor.u32 %v8602, %v8603
        %v8605 = vsub.s32 4294967266, %v8600
        %v8606 = vadd.s32 %v8605, 127
        %v8607 = vshll.u32 %v8606, 23
        %v8608 = vor.u32 4788187, %v8607
        %v8609 = vand.u32 2147483647, %v8608
        %v8611 = vcvt.s32.f32 %v8604
        %v8612 = vmul.f32 %v8611, %v8609
        %v8613 = vxor.u32 %v8612, 2147483648
        %v8614 = vsel %vm8493, %v8613, %v8612
        %v8615 = vsub.s32 4, %v8591
        %v8616 = vsel %vm8493, %v8615, %v8591
        %v8617 = vsel %vm8492, %v777, %v8614
        %v8618 = vsel %vm8492, 0, %v8616
        %v8619 = vmul.f32 %v8617, %v8617
        %v8620 = vmul.f32 %v8619, -0.001358992
        %v8621 = vadd.f32 %v8620, 0.041655596
        %v8622 = vmul.f32 %v8619, %v8621
        %v8623 = vadd.f32 %v8622, -0.4999988
        %v8624 = vmul.f32 %v8619, %v8623
        %v8625 = vadd.f32 1.0, %v8624
        %v8626 = vmul.f32 %v8617, %v8617
        %v8627 = vmul.f32 %v8626, -0.00019511016
        %v8628 = vadd.f32 %v8627, 0.008332121
        %v8629 = vmul.f32 %v8626, %v8628
        %v8630 = vadd.f32 %v8629, -0.16666654
        %v8631 = vmul.f32 %v8626, %v8630
        %v8632 = vadd.f32 %v8631, 1.0
        %v8633 = vmul.f32 %v8632, %v8617
        %vm8634 = vweird.f32 %v777
        %v8635 = vand.u32 %v8618, 3
        %vm8636 = vcmp.lt.s32.totalorder %v8635, 2
        %vm8637 = vcmp.eq.s32.totalorder %v8635, 0
        %v8638 = vxor.u32 %v8633, 2147483648
        %v8639 = vsel %vm8637, %v8625, %v8638
        %vm8640 = vcmp.eq.s32.totalorder %v8635, 2
        %v8641 = vxor.u32 %v8625, 2147483648
        %v8642 = vsel %vm8640, %v8641, %v8633
        %v8643 = vsel %vm8636, %v8639, %v8642
        %v8644 = vsel %vm8634, nan, %v8643
        %v8645 = vand.u32 2147483647, %v778
        %vm8646 = vcmp.le.f32.partialorder %v8645, 0.7853982
        %vm8647 = vcmp.lt.s32.totalorder %v778, 0
        %v8648 = vand.u32 %v778, 2139095040
        %v8649 = vshrl.u32 %v8648, 23
        %v8650 = vsub.s32 %v8649, 127
        %v8651 = vand.u32 2147483647, %v778
        %v8652 = vand.u32 %v8651, 8388607
        %v8653 = vor.u32 %v8652, 8388608
        %v8654 = vsub.s32 0, %v8653
        %v8655 = vadd.s32 %v8650, 1
        %vm8656 = vcmp.gt.s32.totalorder %v8655, 0
        %v8657 = vsel %vm8656, %v8655, 0
        %v8658 = vshrl.u32 %v8657, 5
        %v8659 = vand.u32 %v8657, 31
        %v8660 = vsub.s32 32, %v8659
        %v8661 = vshrl.u32 683565275, %v8660
        %v8662 = vshll.u32 683565275, %v8659
        %v8663 = vshrl.u32 2475754826, %v8660
        %v8664 = vor.u32 %v8662, %v8663
        %v8665 = vshll.u32 2475754826, %v8659
        %v8666 = vshrl.u32 2131351028, %v8660
        %v8667 = vor.u32 %v8665, %v8666
        %v8668 = vshll.u32 2131351028, %v8659
        %v8669 = vshrl.u32 2102212464, %v8660
        %v8670 = vor.u32 %v8668, %v8669
        %v8671 = vshll.u32 2102212464, %v8659
        %v8672 = vshrl.u32 920167782, %v8660
        %v8673 = vor.u32 %v8671, %v8672
        %v8674 = vshll.u32 920167782, %v8659
        %v8675 = vshrl.u32 1326507024, %v8660
        %v8676 = vor.u32 %v8674, %v8675
        %vm8677 = vcmp.lt.s32.totalorder %v8658, 1
        %vm8678 = vcmp.lt.s32.totalorder %v8658, 2
        %vm8679 = vcmp.lt.s32.totalorder %v8658, 3
        %vm8680 = vcmp.lt.s32.totalorder %v8658, 4
        %v8681 = vsel %vm8677, %v8661, %v8664
        %v8682 = vsel %vm8680, %v8670, 2102212464
        %v8683 = vsel %vm8679, %v8667, %v8682
        %v8684 = vsel %vm8678, %v8681, %v8683
        %v8685 = vsel %vm8677, %v8664, %v8667
        %v8686 = vsel %vm8680, %v8673, 920167782
        %v8687 = vsel %vm8679, %v8670, %v8686
        %v8688 = vsel %vm8678, %v8685, %v8687
        %v8689 = vsel %vm8677, %v8667, %v8670
        %v8690 = vsel %vm8680, %v8676, 1326507024
        %v8691 = vsel %vm8679, %v8673, %v8690
        %v8692 = vsel %vm8678, %v8689, %v8691
        %v8693 = vshll.u32 %v8653, 8
        %v8694 = vand.u32 %v8693, 65535
        %v8695 = vshrl.u32 %v8693, 16
        %v8696 = vand.u32 %v8692, 65535
        %v8697 = vshrl.u32 %v8692, 16
        %v8698 = vmul.u32 %v8694, %v8696
        %v8699 = vmul.u32 %v8694, %v8697
        %v8700 = vmul.u32 %v8695, %v8696
        %v8701 = vmul.u32 %v8695, %v8697
        %v8702 = vshll.u32 %v8699, 16
        %v8703 = vshrl.u32 %v8699, 16
        %v8704 = vshll.u32 %v8700, 16
        %v8705 = vshrl.u32 %v8700, 16
        %vm8706 = vc.u32 %v8698, %v8702
        %v8707 = vsel %vm8706, 1, 0
        %v8708 = vadd.s32 %v8698, %v8702
        %v8709 = vadd.s32 %v8701, %v8707
        %vm8710 = vc.u32 %v8708, %v8704
        %v8711 = vsel %vm8710, 1, 0
        %v8712 = vadd.s32 %v8708, %v8704
        %v8713 = vadd.s32 %v8709, %v8711
        %v8714 = vadd.s32 %v8713, %v8703
        %v8715 = vadd.s32 %v8714, %v8705
        %v8716 = vand.u32 %v8693, 65535
        %v8717 = vshrl.u32 %v8693, 16
        %v8718 = vand.u32 %v8688, 65535
        %v8719 = vshrl.u32 %v8688, 16
        %v8720 = vmul.u32 %v8716, %v8718
        %v8721 = vmul.u32 %v8716, %v8719
        %v8722 = vmul.u32 %v8717, %v8718
        %v8723 = vmul.u32 %v8717, %v8719
        %v8724 = vshll.u32 %v8721, 16
        %v8725 = vshrl.u32 %v8721, 16
        %v8726 = vshll.u32 %v8722, 16
        %v8727 = vshrl.u32 %v8722, 16
        %vm8728 = vc.u32 %v8720, %v8724
        %v8729 = vsel %vm8728, 1, 0
        %v8730 = vadd.s32 %v8720, %v8724
        %v8731 = vadd.s32 %v8723, %v8729
        %vm8732 = vc.u32 %v8730, %v8726
        %v8733 = vsel %vm8732, 1, 0
        %v8734 = vadd.s32 %v8730, %v8726
        %v8735 = vadd.s32 %v8731, %v8733
        %v8736 = vadd.s32 %v8735, %v8725
        %v8737 = vadd.s32 %v8736, %v8727
        %v8738 = vmul.u32 %v8693, %v8684
        %v8739 = vadd.s32 %v8715, %v8734
        %vm8740 = vc.u32 %v8715, %v8734
        %v8741 = vadd.s32 %v8737, 1
        %v8742 = vsel %vm8740, %v8741, %v8737
        %v8743 = vadd.s32 %v8738, %v8742
        %v8744 = vadd.s32 %v8743, 536870912
        %v8745 = vshrl.u32 %v8744, 30
        %v8746 = vshll.u32 %v8745, 30
        %v8747 = vsub.s32 %v8743, %v8746
        %vm8748 = vcmp.lt.s32.totalorder %v8747, 0
        %v8749 = vsub.s32 0, %v8747
        %v8750 = vsel %vm8748, %v8749, %v8747
        %v8751 = vclz %v8750
        %v8752 = vsub.s32 %v8751, 2
        %vm8753 = vcmp.gt.s32.totalorder 0, %v8752
        %v8754 = vsel %vm8753, 0, %v8752
        %v8755 = vsub.s32 32, %v8754
        %v8756 = vshll.u32 %v8747, %v8754
        %v8757 = vshrl.u32 %v8739, %v8755
        %v8758 = vor.u32 %v8756, %v8757
        %v8759 = vsub.s32 4294967266, %v8754
        %v8760 = vadd.s32 %v8759, 127
        %v8761 = vshll.u32 %v8760, 23
        %v8762 = vor.u32 4788187, %v8761
        %v8763 = vand.u32 2147483647, %v8762
        %v8765 = vcvt.s32.f32 %v8758
        %v8766 = vmul.f32 %v8765, %v8763
        %v8767 = vxor.u32 %v8766, 2147483648
        %v8768 = vsel %vm8647, %v8767, %v8766
        %v8769 = vsub.s32 4, %v8745
        %v8770 = vsel %vm8647, %v8769, %v8745
        %v8771 = vsel %vm8646, %v778, %v8768
        %v8772 = vsel %vm8646, 0, %v8770
        %v8773 = vmul.f32 %v8771, %v8771
        %v8774 = vmul.f32 %v8773, -0.001358992
        %v8775 = vadd.f32 %v8774, 0.041655596
        %v8776 = vmul.f32 %v8773, %v8775
        %v8777 = vadd.f32 %v8776, -0.4999988
        %v8778 = vmul.f32 %v8773, %v8777
        %v8779 = vadd.f32 1.0, %v8778
        %v8780 = vmul.f32 %v8771, %v8771
        %v8781 = vmul.f32 %v8780, -0.00019511016
        %v8782 = vadd.f32 %v8781, 0.008332121
        %v8783 = vmul.f32 %v8780, %v8782
        %v8784 = vadd.f32 %v8783, -0.16666654
        %v8785 = vmul.f32 %v8780, %v8784
        %v8786 = vadd.f32 %v8785, 1.0
        %v8787 = vmul.f32 %v8786, %v8771
        %vm8788 = vweird.f32 %v778
        %v8789 = vand.u32 %v8772, 3
        %vm8790 = vcmp.lt.s32.totalorder %v8789, 2
        %vm8791 = vcmp.eq.s32.totalorder %v8789, 0
        %v8792 = vxor.u32 %v8787, 2147483648
        %v8793 = vsel %vm8791, %v8779, %v8792
        %vm8794 = vcmp.eq.s32.totalorder %v8789, 2
        %v8795 = vxor.u32 %v8779, 2147483648
        %v8796 = vsel %vm8794, %v8795, %v8787
        %v8797 = vsel %vm8790, %v8793, %v8796
        %v8798 = vsel %vm8788, nan, %v8797
        %v8799 = vand.u32 2147483647, %v779
        %vm8800 = vcmp.le.f32.partialorder %v8799, 0.7853982
        %vm8801 = vcmp.lt.s32.totalorder %v779, 0
        %v8802 = vand.u32 %v779, 2139095040
        %v8803 = vshrl.u32 %v8802, 23
        %v8804 = vsub.s32 %v8803, 127
        %v8805 = vand.u32 2147483647, %v779
        %v8806 = vand.u32 %v8805, 8388607
        %v8807 = vor.u32 %v8806, 8388608
        %v8808 = vsub.s32 0, %v8807
        %v8809 = vadd.s32 %v8804, 1
        %vm8810 = vcmp.gt.s32.totalorder %v8809, 0
        %v8811 = vsel %vm8810, %v8809, 0
        %v8812 = vshrl.u32 %v8811, 5
        %v8813 = vand.u32 %v8811, 31
        %v8814 = vsub.s32 32, %v8813
        %v8815 = vshrl.u32 683565275, %v8814
        %v8816 = vshll.u32 683565275, %v8813
        %v8817 = vshrl.u32 2475754826, %v8814
        %v8818 = vor.u32 %v8816, %v8817
        %v8819 = vshll.u32 2475754826, %v8813
        %v8820 = vshrl.u32 2131351028, %v8814
        %v8821 = vor.u32 %v8819, %v8820
        %v8822 = vshll.u32 2131351028, %v8813
        %v8823 = vshrl.u32 2102212464, %v8814
        %v8824 = vor.u32 %v8822, %v8823
        %v8825 = vshll.u32 2102212464, %v8813
        %v8826 = vshrl.u32 920167782, %v8814
        %v8827 = vor.u32 %v8825, %v8826
        %v8828 = vshll.u32 920167782, %v8813
        %v8829 = vshrl.u32 1326507024, %v8814
        %v8830 = vor.u32 %v8828, %v8829
        %vm8831 = vcmp.lt.s32.totalorder %v8812, 1
        %vm8832 = vcmp.lt.s32.totalorder %v8812, 2
        %vm8833 = vcmp.lt.s32.totalorder %v8812, 3
        %vm8834 = vcmp.lt.s32.totalorder %v8812, 4
        %v8835 = vsel %vm8831, %v8815, %v8818
        %v8836 = vsel %vm8834, %v8824, 2102212464
        %v8837 = vsel %vm8833, %v8821, %v8836
        %v8838 = vsel %vm8832, %v8835, %v8837
        %v8839 = vsel %vm8831, %v8818, %v8821
        %v8840 = vsel %vm8834, %v8827, 920167782
        %v8841 = vsel %vm8833, %v8824, %v8840
        %v8842 = vsel %vm8832, %v8839, %v8841
        %v8843 = vsel %vm8831, %v8821, %v8824
        %v8844 = vsel %vm8834, %v8830, 1326507024
        %v8845 = vsel %vm8833, %v8827, %v8844
        %v8846 = vsel %vm8832, %v8843, %v8845
        %v8847 = vshll.u32 %v8807, 8
        %v8848 = vand.u32 %v8847, 65535
        %v8849 = vshrl.u32 %v8847, 16
        %v8850 = vand.u32 %v8846, 65535
        %v8851 = vshrl.u32 %v8846, 16
        %v8852 = vmul.u32 %v8848, %v8850
        %v8853 = vmul.u32 %v8848, %v8851
        %v8854 = vmul.u32 %v8849, %v8850
        %v8855 = vmul.u32 %v8849, %v8851
        %v8856 = vshll.u32 %v8853, 16
        %v8857 = vshrl.u32 %v8853, 16
        %v8858 = vshll.u32 %v8854, 16
        %v8859 = vshrl.u32 %v8854, 16
        %vm8860 = vc.u32 %v8852, %v8856
        %v8861 = vsel %vm8860, 1, 0
        %v8862 = vadd.s32 %v8852, %v8856
        %v8863 = vadd.s32 %v8855, %v8861
        %vm8864 = vc.u32 %v8862, %v8858
        %v8865 = vsel %vm8864, 1, 0
        %v8866 = vadd.s32 %v8862, %v8858
        %v8867 = vadd.s32 %v8863, %v8865
        %v8868 = vadd.s32 %v8867, %v8857
        %v8869 = vadd.s32 %v8868, %v8859
        %v8870 = vand.u32 %v8847, 65535
        %v8871 = vshrl.u32 %v8847, 16
        %v8872 = vand.u32 %v8842, 65535
        %v8873 = vshrl.u32 %v8842, 16
        %v8874 = vmul.u32 %v8870, %v8872
        %v8875 = vmul.u32 %v8870, %v8873
        %v8876 = vmul.u32 %v8871, %v8872
        %v8877 = vmul.u32 %v8871, %v8873
        %v8878 = vshll.u32 %v8875, 16
        %v8879 = vshrl.u32 %v8875, 16
        %v8880 = vshll.u32 %v8876, 16
        %v8881 = vshrl.u32 %v8876, 16
        %vm8882 = vc.u32 %v8874, %v8878
        %v8883 = vsel %vm8882, 1, 0
        %v8884 = vadd.s32 %v8874, %v8878
        %v8885 = vadd.s32 %v8877, %v8883
        %vm8886 = vc.u32 %v8884, %v8880
        %v8887 = vsel %vm8886, 1, 0
        %v8888 = vadd.s32 %v8884, %v8880
        %v8889 = vadd.s32 %v8885, %v8887
        %v8890 = vadd.s32 %v8889, %v8879
        %v8891 = vadd.s32 %v8890, %v8881
        %v8892 = vmul.u32 %v8847, %v8838
        %v8893 = vadd.s32 %v8869, %v8888
        %vm8894 = vc.u32 %v8869, %v8888
        %v8895 = vadd.s32 %v8891, 1
        %v8896 = vsel %vm8894, %v8895, %v8891
        %v8897 = vadd.s32 %v8892, %v8896
        %v8898 = vadd.s32 %v8897, 536870912
        %v8899 = vshrl.u32 %v8898, 30
        %v8900 = vshll.u32 %v8899, 30
        %v8901 = vsub.s32 %v8897, %v8900
        %vm8902 = vcmp.lt.s32.totalorder %v8901, 0
        %v8903 = vsub.s32 0, %v8901
        %v8904 = vsel %vm8902, %v8903, %v8901
        %v8905 = vclz %v8904
        %v8906 = vsub.s32 %v8905, 2
        %vm8907 = vcmp.gt.s32.totalorder 0, %v8906
        %v8908 = vsel %vm8907, 0, %v8906
        %v8909 = vsub.s32 32, %v8908
        %v8910 = vshll.u32 %v8901, %v8908
        %v8911 = vshrl.u32 %v8893, %v8909
        %v8912 = vor.u32 %v8910, %v8911
        %v8913 = vsub.s32 4294967266, %v8908
        %v8914 = vadd.s32 %v8913, 127
        %v8915 = vshll.u32 %v8914, 23
        %v8916 = vor.u32 4788187, %v8915
        %v8917 = vand.u32 2147483647, %v8916
        %v8919 = vcvt.s32.f32 %v8912
        %v8920 = vmul.f32 %v8919, %v8917
        %v8921 = vxor.u32 %v8920, 2147483648
        %v8922 = vsel %vm8801, %v8921, %v8920
        %v8923 = vsub.s32 4, %v8899
        %v8924 = vsel %vm8801, %v8923, %v8899
        %v8925 = vsel %vm8800, %v779, %v8922
        %v8926 = vsel %vm8800, 0, %v8924
        %v8927 = vmul.f32 %v8925, %v8925
        %v8928 = vmul.f32 %v8927, -0.001358992
        %v8929 = vadd.f32 %v8928, 0.041655596
        %v8930 = vmul.f32 %v8927, %v8929
        %v8931 = vadd.f32 %v8930, -0.4999988
        %v8932 = vmul.f32 %v8927, %v8931
        %v8933 = vadd.f32 1.0, %v8932
        %v8934 = vmul.f32 %v8925, %v8925
        %v8935 = vmul.f32 %v8934, -0.00019511016
        %v8936 = vadd.f32 %v8935, 0.008332121
        %v8937 = vmul.f32 %v8934, %v8936
        %v8938 = vadd.f32 %v8937, -0.16666654
        %v8939 = vmul.f32 %v8934, %v8938
        %v8940 = vadd.f32 %v8939, 1.0
        %v8941 = vmul.f32 %v8940, %v8925
        %vm8942 = vweird.f32 %v779
        %v8943 = vand.u32 %v8926, 3
        %vm8944 = vcmp.lt.s32.totalorder %v8943, 2
        %vm8945 = vcmp.eq.s32.totalorder %v8943, 0
        %v8946 = vxor.u32 %v8941, 2147483648
        %v8947 = vsel %vm8945, %v8933, %v8946
        %vm8948 = vcmp.eq.s32.totalorder %v8943, 2
        %v8949 = vxor.u32 %v8933, 2147483648
        %v8950 = vsel %vm8948, %v8949, %v8941
        %v8951 = vsel %vm8944, %v8947, %v8950
        %v8952 = vsel %vm8942, nan, %v8951
        %v8953 = vand.u32 2147483647, %v780
        %vm8954 = vcmp.le.f32.partialorder %v8953, 0.7853982
        %vm8955 = vcmp.lt.s32.totalorder %v780, 0
        %v8956 = vand.u32 %v780, 2139095040
        %v8957 = vshrl.u32 %v8956, 23
        %v8958 = vsub.s32 %v8957, 127
        %v8959 = vand.u32 2147483647, %v780
        %v8960 = vand.u32 %v8959, 8388607
        %v8961 = vor.u32 %v8960, 8388608
        %v8962 = vsub.s32 0, %v8961
        %v8963 = vadd.s32 %v8958, 1
        %vm8964 = vcmp.gt.s32.totalorder %v8963, 0
        %v8965 = vsel %vm8964, %v8963, 0
        %v8966 = vshrl.u32 %v8965, 5
        %v8967 = vand.u32 %v8965, 31
        %v8968 = vsub.s32 32, %v8967
        %v8969 = vshrl.u32 683565275, %v8968
        %v8970 = vshll.u32 683565275, %v8967
        %v8971 = vshrl.u32 2475754826, %v8968
        %v8972 = vor.u32 %v8970, %v8971
        %v8973 = vshll.u32 2475754826, %v8967
        %v8974 = vshrl.u32 2131351028, %v8968
        %v8975 = vor.u32 %v8973, %v8974
        %v8976 = vshll.u32 2131351028, %v8967
        %v8977 = vshrl.u32 2102212464, %v8968
        %v8978 = vor.u32 %v8976, %v8977
        %v8979 = vshll.u32 2102212464, %v8967
        %v8980 = vshrl.u32 920167782, %v8968
        %v8981 = vor.u32 %v8979, %v8980
        %v8982 = vshll.u32 920167782, %v8967
        %v8983 = vshrl.u32 1326507024, %v8968
        %v8984 = vor.u32 %v8982, %v8983
        %vm8985 = vcmp.lt.s32.totalorder %v8966, 1
        %vm8986 = vcmp.lt.s32.totalorder %v8966, 2
        %vm8987 = vcmp.lt.s32.totalorder %v8966, 3
        %vm8988 = vcmp.lt.s32.totalorder %v8966, 4
        %v8989 = vsel %vm8985, %v8969, %v8972
        %v8990 = vsel %vm8988, %v8978, 2102212464
        %v8991 = vsel %vm8987, %v8975, %v8990
        %v8992 = vsel %vm8986, %v8989, %v8991
        %v8993 = vsel %vm8985, %v8972, %v8975
        %v8994 = vsel %vm8988, %v8981, 920167782
        %v8995 = vsel %vm8987, %v8978, %v8994
        %v8996 = vsel %vm8986, %v8993, %v8995
        %v8997 = vsel %vm8985, %v8975, %v8978
        %v8998 = vsel %vm8988, %v8984, 1326507024
        %v8999 = vsel %vm8987, %v8981, %v8998
        %v9000 = vsel %vm8986, %v8997, %v8999
        %v9001 = vshll.u32 %v8961, 8
        %v9002 = vand.u32 %v9001, 65535
        %v9003 = vshrl.u32 %v9001, 16
        %v9004 = vand.u32 %v9000, 65535
        %v9005 = vshrl.u32 %v9000, 16
        %v9006 = vmul.u32 %v9002, %v9004
        %v9007 = vmul.u32 %v9002, %v9005
        %v9008 = vmul.u32 %v9003, %v9004
        %v9009 = vmul.u32 %v9003, %v9005
        %v9010 = vshll.u32 %v9007, 16
        %v9011 = vshrl.u32 %v9007, 16
        %v9012 = vshll.u32 %v9008, 16
        %v9013 = vshrl.u32 %v9008, 16
        %vm9014 = vc.u32 %v9006, %v9010
        %v9015 = vsel %vm9014, 1, 0
        %v9016 = vadd.s32 %v9006, %v9010
        %v9017 = vadd.s32 %v9009, %v9015
        %vm9018 = vc.u32 %v9016, %v9012
        %v9019 = vsel %vm9018, 1, 0
        %v9020 = vadd.s32 %v9016, %v9012
        %v9021 = vadd.s32 %v9017, %v9019
        %v9022 = vadd.s32 %v9021, %v9011
        %v9023 = vadd.s32 %v9022, %v9013
        %v9024 = vand.u32 %v9001, 65535
        %v9025 = vshrl.u32 %v9001, 16
        %v9026 = vand.u32 %v8996, 65535
        %v9027 = vshrl.u32 %v8996, 16
        %v9028 = vmul.u32 %v9024, %v9026
        %v9029 = vmul.u32 %v9024, %v9027
        %v9030 = vmul.u32 %v9025, %v9026
        %v9031 = vmul.u32 %v9025, %v9027
        %v9032 = vshll.u32 %v9029, 16
        %v9033 = vshrl.u32 %v9029, 16
        %v9034 = vshll.u32 %v9030, 16
        %v9035 = vshrl.u32 %v9030, 16
        %vm9036 = vc.u32 %v9028, %v9032
        %v9037 = vsel %vm9036, 1, 0
        %v9038 = vadd.s32 %v9028, %v9032
        %v9039 = vadd.s32 %v9031, %v9037
        %vm9040 = vc.u32 %v9038, %v9034
        %v9041 = vsel %vm9040, 1, 0
        %v9042 = vadd.s32 %v9038, %v9034
        %v9043 = vadd.s32 %v9039, %v9041
        %v9044 = vadd.s32 %v9043, %v9033
        %v9045 = vadd.s32 %v9044, %v9035
        %v9046 = vmul.u32 %v9001, %v8992
        %v9047 = vadd.s32 %v9023, %v9042
        %vm9048 = vc.u32 %v9023, %v9042
        %v9049 = vadd.s32 %v9045, 1
        %v9050 = vsel %vm9048, %v9049, %v9045
        %v9051 = vadd.s32 %v9046, %v9050
        %v9052 = vadd.s32 %v9051, 536870912
        %v9053 = vshrl.u32 %v9052, 30
        %v9054 = vshll.u32 %v9053, 30
        %v9055 = vsub.s32 %v9051, %v9054
        %vm9056 = vcmp.lt.s32.totalorder %v9055, 0
        %v9057 = vsub.s32 0, %v9055
        %v9058 = vsel %vm9056, %v9057, %v9055
        %v9059 = vclz %v9058
        %v9060 = vsub.s32 %v9059, 2
        %vm9061 = vcmp.gt.s32.totalorder 0, %v9060
        %v9062 = vsel %vm9061, 0, %v9060
        %v9063 = vsub.s32 32, %v9062
        %v9064 = vshll.u32 %v9055, %v9062
        %v9065 = vshrl.u32 %v9047, %v9063
        %v9066 = vor.u32 %v9064, %v9065
        %v9067 = vsub.s32 4294967266, %v9062
        %v9068 = vadd.s32 %v9067, 127
        %v9069 = vshll.u32 %v9068, 23
        %v9070 = vor.u32 4788187, %v9069
        %v9071 = vand.u32 2147483647, %v9070
        %v9073 = vcvt.s32.f32 %v9066
        %v9074 = vmul.f32 %v9073, %v9071
        %v9075 = vxor.u32 %v9074, 2147483648
        %v9076 = vsel %vm8955, %v9075, %v9074
        %v9077 = vsub.s32 4, %v9053
        %v9078 = vsel %vm8955, %v9077, %v9053
        %v9079 = vsel %vm8954, %v780, %v9076
        %v9080 = vsel %vm8954, 0, %v9078
        %v9081 = vmul.f32 %v9079, %v9079
        %v9082 = vmul.f32 %v9081, -0.001358992
        %v9083 = vadd.f32 %v9082, 0.041655596
        %v9084 = vmul.f32 %v9081, %v9083
        %v9085 = vadd.f32 %v9084, -0.4999988
        %v9086 = vmul.f32 %v9081, %v9085
        %v9087 = vadd.f32 1.0, %v9086
        %v9088 = vmul.f32 %v9079, %v9079
        %v9089 = vmul.f32 %v9088, -0.00019511016
        %v9090 = vadd.f32 %v9089, 0.008332121
        %v9091 = vmul.f32 %v9088, %v9090
        %v9092 = vadd.f32 %v9091, -0.16666654
        %v9093 = vmul.f32 %v9088, %v9092
        %v9094 = vadd.f32 %v9093, 1.0
        %v9095 = vmul.f32 %v9094, %v9079
        %vm9096 = vweird.f32 %v780
        %v9097 = vand.u32 %v9080, 3
        %vm9098 = vcmp.lt.s32.totalorder %v9097, 2
        %vm9099 = vcmp.eq.s32.totalorder %v9097, 0
        %v9100 = vxor.u32 %v9095, 2147483648
        %v9101 = vsel %vm9099, %v9087, %v9100
        %vm9102 = vcmp.eq.s32.totalorder %v9097, 2
        %v9103 = vxor.u32 %v9087, 2147483648
        %v9104 = vsel %vm9102, %v9103, %v9095
        %v9105 = vsel %vm9098, %v9101, %v9104
        %v9106 = vsel %vm9096, nan, %v9105
        %v9107 = vand.u32 2147483647, %v781
        %vm9108 = vcmp.le.f32.partialorder %v9107, 0.7853982
        %vm9109 = vcmp.lt.s32.totalorder %v781, 0
        %v9110 = vand.u32 %v781, 2139095040
        %v9111 = vshrl.u32 %v9110, 23
        %v9112 = vsub.s32 %v9111, 127
        %v9113 = vand.u32 2147483647, %v781
        %v9114 = vand.u32 %v9113, 8388607
        %v9115 = vor.u32 %v9114, 8388608
        %v9116 = vsub.s32 0, %v9115
        %v9117 = vadd.s32 %v9112, 1
        %vm9118 = vcmp.gt.s32.totalorder %v9117, 0
        %v9119 = vsel %vm9118, %v9117, 0
        %v9120 = vshrl.u32 %v9119, 5
        %v9121 = vand.u32 %v9119, 31
        %v9122 = vsub.s32 32, %v9121
        %v9123 = vshrl.u32 683565275, %v9122
        %v9124 = vshll.u32 683565275, %v9121
        %v9125 = vshrl.u32 2475754826, %v9122
        %v9126 = vor.u32 %v9124, %v9125
        %v9127 = vshll.u32 2475754826, %v9121
        %v9128 = vshrl.u32 2131351028, %v9122
        %v9129 = vor.u32 %v9127, %v9128
        %v9130 = vshll.u32 2131351028, %v9121
        %v9131 = vshrl.u32 2102212464, %v9122
        %v9132 = vor.u32 %v9130, %v9131
        %v9133 = vshll.u32 2102212464, %v9121
        %v9134 = vshrl.u32 920167782, %v9122
        %v9135 = vor.u32 %v9133, %v9134
        %v9136 = vshll.u32 920167782, %v9121
        %v9137 = vshrl.u32 1326507024, %v9122
        %v9138 = vor.u32 %v9136, %v9137
        %vm9139 = vcmp.lt.s32.totalorder %v9120, 1
        %vm9140 = vcmp.lt.s32.totalorder %v9120, 2
        %vm9141 = vcmp.lt.s32.totalorder %v9120, 3
        %vm9142 = vcmp.lt.s32.totalorder %v9120, 4
        %v9143 = vsel %vm9139, %v9123, %v9126
        %v9144 = vsel %vm9142, %v9132, 2102212464
        %v9145 = vsel %vm9141, %v9129, %v9144
        %v9146 = vsel %vm9140, %v9143, %v9145
        %v9147 = vsel %vm9139, %v9126, %v9129
        %v9148 = vsel %vm9142, %v9135, 920167782
        %v9149 = vsel %vm9141, %v9132, %v9148
        %v9150 = vsel %vm9140, %v9147, %v9149
        %v9151 = vsel %vm9139, %v9129, %v9132
        %v9152 = vsel %vm9142, %v9138, 1326507024
        %v9153 = vsel %vm9141, %v9135, %v9152
        %v9154 = vsel %vm9140, %v9151, %v9153
        %v9155 = vshll.u32 %v9115, 8
        %v9156 = vand.u32 %v9155, 65535
        %v9157 = vshrl.u32 %v9155, 16
        %v9158 = vand.u32 %v9154, 65535
        %v9159 = vshrl.u32 %v9154, 16
        %v9160 = vmul.u32 %v9156, %v9158
        %v9161 = vmul.u32 %v9156, %v9159
        %v9162 = vmul.u32 %v9157, %v9158
        %v9163 = vmul.u32 %v9157, %v9159
        %v9164 = vshll.u32 %v9161, 16
        %v9165 = vshrl.u32 %v9161, 16
        %v9166 = vshll.u32 %v9162, 16
        %v9167 = vshrl.u32 %v9162, 16
        %vm9168 = vc.u32 %v9160, %v9164
        %v9169 = vsel %vm9168, 1, 0
        %v9170 = vadd.s32 %v9160, %v9164
        %v9171 = vadd.s32 %v9163, %v9169
        %vm9172 = vc.u32 %v9170, %v9166
        %v9173 = vsel %vm9172, 1, 0
        %v9174 = vadd.s32 %v9170, %v9166
        %v9175 = vadd.s32 %v9171, %v9173
        %v9176 = vadd.s32 %v9175, %v9165
        %v9177 = vadd.s32 %v9176, %v9167
        %v9178 = vand.u32 %v9155, 65535
        %v9179 = vshrl.u32 %v9155, 16
        %v9180 = vand.u32 %v9150, 65535
        %v9181 = vshrl.u32 %v9150, 16
        %v9182 = vmul.u32 %v9178, %v9180
        %v9183 = vmul.u32 %v9178, %v9181
        %v9184 = vmul.u32 %v9179, %v9180
        %v9185 = vmul.u32 %v9179, %v9181
        %v9186 = vshll.u32 %v9183, 16
        %v9187 = vshrl.u32 %v9183, 16
        %v9188 = vshll.u32 %v9184, 16
        %v9189 = vshrl.u32 %v9184, 16
        %vm9190 = vc.u32 %v9182, %v9186
        %v9191 = vsel %vm9190, 1, 0
        %v9192 = vadd.s32 %v9182, %v9186
        %v9193 = vadd.s32 %v9185, %v9191
        %vm9194 = vc.u32 %v9192, %v9188
        %v9195 = vsel %vm9194, 1, 0
        %v9196 = vadd.s32 %v9192, %v9188
        %v9197 = vadd.s32 %v9193, %v9195
        %v9198 = vadd.s32 %v9197, %v9187
        %v9199 = vadd.s32 %v9198, %v9189
        %v9200 = vmul.u32 %v9155, %v9146
        %v9201 = vadd.s32 %v9177, %v9196
        %vm9202 = vc.u32 %v9177, %v9196
        %v9203 = vadd.s32 %v9199, 1
        %v9204 = vsel %vm9202, %v9203, %v9199
        %v9205 = vadd.s32 %v9200, %v9204
        %v9206 = vadd.s32 %v9205, 536870912
        %v9207 = vshrl.u32 %v9206, 30
        %v9208 = vshll.u32 %v9207, 30
        %v9209 = vsub.s32 %v9205, %v9208
        %vm9210 = vcmp.lt.s32.totalorder %v9209, 0
        %v9211 = vsub.s32 0, %v9209
        %v9212 = vsel %vm9210, %v9211, %v9209
        %v9213 = vclz %v9212
        %v9214 = vsub.s32 %v9213, 2
        %vm9215 = vcmp.gt.s32.totalorder 0, %v9214
        %v9216 = vsel %vm9215, 0, %v9214
        %v9217 = vsub.s32 32, %v9216
        %v9218 = vshll.u32 %v9209, %v9216
        %v9219 = vshrl.u32 %v9201, %v9217
        %v9220 = vor.u32 %v9218, %v9219
        %v9221 = vsub.s32 4294967266, %v9216
        %v9222 = vadd.s32 %v9221, 127
        %v9223 = vshll.u32 %v9222, 23
        %v9224 = vor.u32 4788187, %v9223
        %v9225 = vand.u32 2147483647, %v9224
        %v9227 = vcvt.s32.f32 %v9220
        %v9228 = vmul.f32 %v9227, %v9225
        %v9229 = vxor.u32 %v9228, 2147483648
        %v9230 = vsel %vm9109, %v9229, %v9228
        %v9231 = vsub.s32 4, %v9207
        %v9232 = vsel %vm9109, %v9231, %v9207
        %v9233 = vsel %vm9108, %v781, %v9230
        %v9234 = vsel %vm9108, 0, %v9232
        %v9235 = vmul.f32 %v9233, %v9233
        %v9236 = vmul.f32 %v9235, -0.001358992
        %v9237 = vadd.f32 %v9236, 0.041655596
        %v9238 = vmul.f32 %v9235, %v9237
        %v9239 = vadd.f32 %v9238, -0.4999988
        %v9240 = vmul.f32 %v9235, %v9239
        %v9241 = vadd.f32 1.0, %v9240
        %v9242 = vmul.f32 %v9233, %v9233
        %v9243 = vmul.f32 %v9242, -0.00019511016
        %v9244 = vadd.f32 %v9243, 0.008332121
        %v9245 = vmul.f32 %v9242, %v9244
        %v9246 = vadd.f32 %v9245, -0.16666654
        %v9247 = vmul.f32 %v9242, %v9246
        %v9248 = vadd.f32 %v9247, 1.0
        %v9249 = vmul.f32 %v9248, %v9233
        %vm9250 = vweird.f32 %v781
        %v9251 = vand.u32 %v9234, 3
        %vm9252 = vcmp.lt.s32.totalorder %v9251, 2
        %vm9253 = vcmp.eq.s32.totalorder %v9251, 0
        %v9254 = vxor.u32 %v9249, 2147483648
        %v9255 = vsel %vm9253, %v9241, %v9254
        %vm9256 = vcmp.eq.s32.totalorder %v9251, 2
        %v9257 = vxor.u32 %v9241, 2147483648
        %v9258 = vsel %vm9256, %v9257, %v9249
        %v9259 = vsel %vm9252, %v9255, %v9258
        %v9260 = vsel %vm9250, nan, %v9259
        %v9261 = vand.u32 2147483647, %v782
        %vm9262 = vcmp.le.f32.partialorder %v9261, 0.7853982
        %vm9263 = vcmp.lt.s32.totalorder %v782, 0
        %v9264 = vand.u32 %v782, 2139095040
        %v9265 = vshrl.u32 %v9264, 23
        %v9266 = vsub.s32 %v9265, 127
        %v9267 = vand.u32 2147483647, %v782
        %v9268 = vand.u32 %v9267, 8388607
        %v9269 = vor.u32 %v9268, 8388608
        %v9270 = vsub.s32 0, %v9269
        %v9271 = vadd.s32 %v9266, 1
        %vm9272 = vcmp.gt.s32.totalorder %v9271, 0
        %v9273 = vsel %vm9272, %v9271, 0
        %v9274 = vshrl.u32 %v9273, 5
        %v9275 = vand.u32 %v9273, 31
        %v9276 = vsub.s32 32, %v9275
        %v9277 = vshrl.u32 683565275, %v9276
        %v9278 = vshll.u32 683565275, %v9275
        %v9279 = vshrl.u32 2475754826, %v9276
        %v9280 = vor.u32 %v9278, %v9279
        %v9281 = vshll.u32 2475754826, %v9275
        %v9282 = vshrl.u32 2131351028, %v9276
        %v9283 = vor.u32 %v9281, %v9282
        %v9284 = vshll.u32 2131351028, %v9275
        %v9285 = vshrl.u32 2102212464, %v9276
        %v9286 = vor.u32 %v9284, %v9285
        %v9287 = vshll.u32 2102212464, %v9275
        %v9288 = vshrl.u32 920167782, %v9276
        %v9289 = vor.u32 %v9287, %v9288
        %v9290 = vshll.u32 920167782, %v9275
        %v9291 = vshrl.u32 1326507024, %v9276
        %v9292 = vor.u32 %v9290, %v9291
        %vm9293 = vcmp.lt.s32.totalorder %v9274, 1
        %vm9294 = vcmp.lt.s32.totalorder %v9274, 2
        %vm9295 = vcmp.lt.s32.totalorder %v9274, 3
        %vm9296 = vcmp.lt.s32.totalorder %v9274, 4
        %v9297 = vsel %vm9293, %v9277, %v9280
        %v9298 = vsel %vm9296, %v9286, 2102212464
        %v9299 = vsel %vm9295, %v9283, %v9298
        %v9300 = vsel %vm9294, %v9297, %v9299
        %v9301 = vsel %vm9293, %v9280, %v9283
        %v9302 = vsel %vm9296, %v9289, 920167782
        %v9303 = vsel %vm9295, %v9286, %v9302
        %v9304 = vsel %vm9294, %v9301, %v9303
        %v9305 = vsel %vm9293, %v9283, %v9286
        %v9306 = vsel %vm9296, %v9292, 1326507024
        %v9307 = vsel %vm9295, %v9289, %v9306
        %v9308 = vsel %vm9294, %v9305, %v9307
        %v9309 = vshll.u32 %v9269, 8
        %v9310 = vand.u32 %v9309, 65535
        %v9311 = vshrl.u32 %v9309, 16
        %v9312 = vand.u32 %v9308, 65535
        %v9313 = vshrl.u32 %v9308, 16
        %v9314 = vmul.u32 %v9310, %v9312
        %v9315 = vmul.u32 %v9310, %v9313
        %v9316 = vmul.u32 %v9311, %v9312
        %v9317 = vmul.u32 %v9311, %v9313
        %v9318 = vshll.u32 %v9315, 16
        %v9319 = vshrl.u32 %v9315, 16
        %v9320 = vshll.u32 %v9316, 16
        %v9321 = vshrl.u32 %v9316, 16
        %vm9322 = vc.u32 %v9314, %v9318
        %v9323 = vsel %vm9322, 1, 0
        %v9324 = vadd.s32 %v9314, %v9318
        %v9325 = vadd.s32 %v9317, %v9323
        %vm9326 = vc.u32 %v9324, %v9320
        %v9327 = vsel %vm9326, 1, 0
        %v9328 = vadd.s32 %v9324, %v9320
        %v9329 = vadd.s32 %v9325, %v9327
        %v9330 = vadd.s32 %v9329, %v9319
        %v9331 = vadd.s32 %v9330, %v9321
        %v9332 = vand.u32 %v9309, 65535
        %v9333 = vshrl.u32 %v9309, 16
        %v9334 = vand.u32 %v9304, 65535
        %v9335 = vshrl.u32 %v9304, 16
        %v9336 = vmul.u32 %v9332, %v9334
        %v9337 = vmul.u32 %v9332, %v9335
        %v9338 = vmul.u32 %v9333, %v9334
        %v9339 = vmul.u32 %v9333, %v9335
        %v9340 = vshll.u32 %v9337, 16
        %v9341 = vshrl.u32 %v9337, 16
        %v9342 = vshll.u32 %v9338, 16
        %v9343 = vshrl.u32 %v9338, 16
        %vm9344 = vc.u32 %v9336, %v9340
        %v9345 = vsel %vm9344, 1, 0
        %v9346 = vadd.s32 %v9336, %v9340
        %v9347 = vadd.s32 %v9339, %v9345
        %vm9348 = vc.u32 %v9346, %v9342
        %v9349 = vsel %vm9348, 1, 0
        %v9350 = vadd.s32 %v9346, %v9342
        %v9351 = vadd.s32 %v9347, %v9349
        %v9352 = vadd.s32 %v9351, %v9341
        %v9353 = vadd.s32 %v9352, %v9343
        %v9354 = vmul.u32 %v9309, %v9300
        %v9355 = vadd.s32 %v9331, %v9350
        %vm9356 = vc.u32 %v9331, %v9350
        %v9357 = vadd.s32 %v9353, 1
        %v9358 = vsel %vm9356, %v9357, %v9353
        %v9359 = vadd.s32 %v9354, %v9358
        %v9360 = vadd.s32 %v9359, 536870912
        %v9361 = vshrl.u32 %v9360, 30
        %v9362 = vshll.u32 %v9361, 30
        %v9363 = vsub.s32 %v9359, %v9362
        %vm9364 = vcmp.lt.s32.totalorder %v9363, 0
        %v9365 = vsub.s32 0, %v9363
        %v9366 = vsel %vm9364, %v9365, %v9363
        %v9367 = vclz %v9366
        %v9368 = vsub.s32 %v9367, 2
        %vm9369 = vcmp.gt.s32.totalorder 0, %v9368
        %v9370 = vsel %vm9369, 0, %v9368
        %v9371 = vsub.s32 32, %v9370
        %v9372 = vshll.u32 %v9363, %v9370
        %v9373 = vshrl.u32 %v9355, %v9371
        %v9374 = vor.u32 %v9372, %v9373
        %v9375 = vsub.s32 4294967266, %v9370
        %v9376 = vadd.s32 %v9375, 127
        %v9377 = vshll.u32 %v9376, 23
        %v9378 = vor.u32 4788187, %v9377
        %v9379 = vand.u32 2147483647, %v9378
        %v9381 = vcvt.s32.f32 %v9374
        %v9382 = vmul.f32 %v9381, %v9379
        %v9383 = vxor.u32 %v9382, 2147483648
        %v9384 = vsel %vm9263, %v9383, %v9382
        %v9385 = vsub.s32 4, %v9361
        %v9386 = vsel %vm9263, %v9385, %v9361
        %v9387 = vsel %vm9262, %v782, %v9384
        %v9388 = vsel %vm9262, 0, %v9386
        %v9389 = vmul.f32 %v9387, %v9387
        %v9390 = vmul.f32 %v9389, -0.001358992
        %v9391 = vadd.f32 %v9390, 0.041655596
        %v9392 = vmul.f32 %v9389, %v9391
        %v9393 = vadd.f32 %v9392, -0.4999988
        %v9394 = vmul.f32 %v9389, %v9393
        %v9395 = vadd.f32 1.0, %v9394
        %v9396 = vmul.f32 %v9387, %v9387
        %v9397 = vmul.f32 %v9396, -0.00019511016
        %v9398 = vadd.f32 %v9397, 0.008332121
        %v9399 = vmul.f32 %v9396, %v9398
        %v9400 = vadd.f32 %v9399, -0.16666654
        %v9401 = vmul.f32 %v9396, %v9400
        %v9402 = vadd.f32 %v9401, 1.0
        %v9403 = vmul.f32 %v9402, %v9387
        %vm9404 = vweird.f32 %v782
        %v9405 = vand.u32 %v9388, 3
        %vm9406 = vcmp.lt.s32.totalorder %v9405, 2
        %vm9407 = vcmp.eq.s32.totalorder %v9405, 0
        %v9408 = vxor.u32 %v9403, 2147483648
        %v9409 = vsel %vm9407, %v9395, %v9408
        %vm9410 = vcmp.eq.s32.totalorder %v9405, 2
        %v9411 = vxor.u32 %v9395, 2147483648
        %v9412 = vsel %vm9410, %v9411, %v9403
        %v9413 = vsel %vm9406, %v9409, %v9412
        %v9414 = vsel %vm9404, nan, %v9413
        %v9415 = vand.u32 2147483647, %v783
        %vm9416 = vcmp.le.f32.partialorder %v9415, 0.7853982
        %vm9417 = vcmp.lt.s32.totalorder %v783, 0
        %v9418 = vand.u32 %v783, 2139095040
        %v9419 = vshrl.u32 %v9418, 23
        %v9420 = vsub.s32 %v9419, 127
        %v9421 = vand.u32 2147483647, %v783
        %v9422 = vand.u32 %v9421, 8388607
        %v9423 = vor.u32 %v9422, 8388608
        %v9424 = vsub.s32 0, %v9423
        %v9425 = vadd.s32 %v9420, 1
        %vm9426 = vcmp.gt.s32.totalorder %v9425, 0
        %v9427 = vsel %vm9426, %v9425, 0
        %v9428 = vshrl.u32 %v9427, 5
        %v9429 = vand.u32 %v9427, 31
        %v9430 = vsub.s32 32, %v9429
        %v9431 = vshrl.u32 683565275, %v9430
        %v9432 = vshll.u32 683565275, %v9429
        %v9433 = vshrl.u32 2475754826, %v9430
        %v9434 = vor.u32 %v9432, %v9433
        %v9435 = vshll.u32 2475754826, %v9429
        %v9436 = vshrl.u32 2131351028, %v9430
        %v9437 = vor.u32 %v9435, %v9436
        %v9438 = vshll.u32 2131351028, %v9429
        %v9439 = vshrl.u32 2102212464, %v9430
        %v9440 = vor.u32 %v9438, %v9439
        %v9441 = vshll.u32 2102212464, %v9429
        %v9442 = vshrl.u32 920167782, %v9430
        %v9443 = vor.u32 %v9441, %v9442
        %v9444 = vshll.u32 920167782, %v9429
        %v9445 = vshrl.u32 1326507024, %v9430
        %v9446 = vor.u32 %v9444, %v9445
        %vm9447 = vcmp.lt.s32.totalorder %v9428, 1
        %vm9448 = vcmp.lt.s32.totalorder %v9428, 2
        %vm9449 = vcmp.lt.s32.totalorder %v9428, 3
        %vm9450 = vcmp.lt.s32.totalorder %v9428, 4
        %v9451 = vsel %vm9447, %v9431, %v9434
        %v9452 = vsel %vm9450, %v9440, 2102212464
        %v9453 = vsel %vm9449, %v9437, %v9452
        %v9454 = vsel %vm9448, %v9451, %v9453
        %v9455 = vsel %vm9447, %v9434, %v9437
        %v9456 = vsel %vm9450, %v9443, 920167782
        %v9457 = vsel %vm9449, %v9440, %v9456
        %v9458 = vsel %vm9448, %v9455, %v9457
        %v9459 = vsel %vm9447, %v9437, %v9440
        %v9460 = vsel %vm9450, %v9446, 1326507024
        %v9461 = vsel %vm9449, %v9443, %v9460
        %v9462 = vsel %vm9448, %v9459, %v9461
        %v9463 = vshll.u32 %v9423, 8
        %v9464 = vand.u32 %v9463, 65535
        %v9465 = vshrl.u32 %v9463, 16
        %v9466 = vand.u32 %v9462, 65535
        %v9467 = vshrl.u32 %v9462, 16
        %v9468 = vmul.u32 %v9464, %v9466
        %v9469 = vmul.u32 %v9464, %v9467
        %v9470 = vmul.u32 %v9465, %v9466
        %v9471 = vmul.u32 %v9465, %v9467
        %v9472 = vshll.u32 %v9469, 16
        %v9473 = vshrl.u32 %v9469, 16
        %v9474 = vshll.u32 %v9470, 16
        %v9475 = vshrl.u32 %v9470, 16
        %vm9476 = vc.u32 %v9468, %v9472
        %v9477 = vsel %vm9476, 1, 0
        %v9478 = vadd.s32 %v9468, %v9472
        %v9479 = vadd.s32 %v9471, %v9477
        %vm9480 = vc.u32 %v9478, %v9474
        %v9481 = vsel %vm9480, 1, 0
        %v9482 = vadd.s32 %v9478, %v9474
        %v9483 = vadd.s32 %v9479, %v9481
        %v9484 = vadd.s32 %v9483, %v9473
        %v9485 = vadd.s32 %v9484, %v9475
        %v9486 = vand.u32 %v9463, 65535
        %v9487 = vshrl.u32 %v9463, 16
        %v9488 = vand.u32 %v9458, 65535
        %v9489 = vshrl.u32 %v9458, 16
        %v9490 = vmul.u32 %v9486, %v9488
        %v9491 = vmul.u32 %v9486, %v9489
        %v9492 = vmul.u32 %v9487, %v9488
        %v9493 = vmul.u32 %v9487, %v9489
        %v9494 = vshll.u32 %v9491, 16
        %v9495 = vshrl.u32 %v9491, 16
        %v9496 = vshll.u32 %v9492, 16
        %v9497 = vshrl.u32 %v9492, 16
        %vm9498 = vc.u32 %v9490, %v9494
        %v9499 = vsel %vm9498, 1, 0
        %v9500 = vadd.s32 %v9490, %v9494
        %v9501 = vadd.s32 %v9493, %v9499
        %vm9502 = vc.u32 %v9500, %v9496
        %v9503 = vsel %vm9502, 1, 0
        %v9504 = vadd.s32 %v9500, %v9496
        %v9505 = vadd.s32 %v9501, %v9503
        %v9506 = vadd.s32 %v9505, %v9495
        %v9507 = vadd.s32 %v9506, %v9497
        %v9508 = vmul.u32 %v9463, %v9454
        %v9509 = vadd.s32 %v9485, %v9504
        %vm9510 = vc.u32 %v9485, %v9504
        %v9511 = vadd.s32 %v9507, 1
        %v9512 = vsel %vm9510, %v9511, %v9507
        %v9513 = vadd.s32 %v9508, %v9512
        %v9514 = vadd.s32 %v9513, 536870912
        %v9515 = vshrl.u32 %v9514, 30
        %v9516 = vshll.u32 %v9515, 30
        %v9517 = vsub.s32 %v9513, %v9516
        %vm9518 = vcmp.lt.s32.totalorder %v9517, 0
        %v9519 = vsub.s32 0, %v9517
        %v9520 = vsel %vm9518, %v9519, %v9517
        %v9521 = vclz %v9520
        %v9522 = vsub.s32 %v9521, 2
        %vm9523 = vcmp.gt.s32.totalorder 0, %v9522
        %v9524 = vsel %vm9523, 0, %v9522
        %v9525 = vsub.s32 32, %v9524
        %v9526 = vshll.u32 %v9517, %v9524
        %v9527 = vshrl.u32 %v9509, %v9525
        %v9528 = vor.u32 %v9526, %v9527
        %v9529 = vsub.s32 4294967266, %v9524
        %v9530 = vadd.s32 %v9529, 127
        %v9531 = vshll.u32 %v9530, 23
        %v9532 = vor.u32 4788187, %v9531
        %v9533 = vand.u32 2147483647, %v9532
        %v9535 = vcvt.s32.f32 %v9528
        %v9536 = vmul.f32 %v9535, %v9533
        %v9537 = vxor.u32 %v9536, 2147483648
        %v9538 = vsel %vm9417, %v9537, %v9536
        %v9539 = vsub.s32 4, %v9515
        %v9540 = vsel %vm9417, %v9539, %v9515
        %v9541 = vsel %vm9416, %v783, %v9538
        %v9542 = vsel %vm9416, 0, %v9540
        %v9543 = vmul.f32 %v9541, %v9541
        %v9544 = vmul.f32 %v9543, -0.001358992
        %v9545 = vadd.f32 %v9544, 0.041655596
        %v9546 = vmul.f32 %v9543, %v9545
        %v9547 = vadd.f32 %v9546, -0.4999988
        %v9548 = vmul.f32 %v9543, %v9547
        %v9549 = vadd.f32 1.0, %v9548
        %v9550 = vmul.f32 %v9541, %v9541
        %v9551 = vmul.f32 %v9550, -0.00019511016
        %v9552 = vadd.f32 %v9551, 0.008332121
        %v9553 = vmul.f32 %v9550, %v9552
        %v9554 = vadd.f32 %v9553, -0.16666654
        %v9555 = vmul.f32 %v9550, %v9554
        %v9556 = vadd.f32 %v9555, 1.0
        %v9557 = vmul.f32 %v9556, %v9541
        %vm9558 = vweird.f32 %v783
        %v9559 = vand.u32 %v9542, 3
        %vm9560 = vcmp.lt.s32.totalorder %v9559, 2
        %vm9561 = vcmp.eq.s32.totalorder %v9559, 0
        %v9562 = vxor.u32 %v9557, 2147483648
        %v9563 = vsel %vm9561, %v9549, %v9562
        %vm9564 = vcmp.eq.s32.totalorder %v9559, 2
        %v9565 = vxor.u32 %v9549, 2147483648
        %v9566 = vsel %vm9564, %v9565, %v9557
        %v9567 = vsel %vm9560, %v9563, %v9566
        %v9568 = vsel %vm9558, nan, %v9567
        %v9569 = vand.u32 2147483647, %v784
        %vm9570 = vcmp.le.f32.partialorder %v9569, 0.7853982
        %vm9571 = vcmp.lt.s32.totalorder %v784, 0
        %v9572 = vand.u32 %v784, 2139095040
        %v9573 = vshrl.u32 %v9572, 23
        %v9574 = vsub.s32 %v9573, 127
        %v9575 = vand.u32 2147483647, %v784
        %v9576 = vand.u32 %v9575, 8388607
        %v9577 = vor.u32 %v9576, 8388608
        %v9578 = vsub.s32 0, %v9577
        %v9579 = vadd.s32 %v9574, 1
        %vm9580 = vcmp.gt.s32.totalorder %v9579, 0
        %v9581 = vsel %vm9580, %v9579, 0
        %v9582 = vshrl.u32 %v9581, 5
        %v9583 = vand.u32 %v9581, 31
        %v9584 = vsub.s32 32, %v9583
        %v9585 = vshrl.u32 683565275, %v9584
        %v9586 = vshll.u32 683565275, %v9583
        %v9587 = vshrl.u32 2475754826, %v9584
        %v9588 = vor.u32 %v9586, %v9587
        %v9589 = vshll.u32 2475754826, %v9583
        %v9590 = vshrl.u32 2131351028, %v9584
        %v9591 = vor.u32 %v9589, %v9590
        %v9592 = vshll.u32 2131351028, %v9583
        %v9593 = vshrl.u32 2102212464, %v9584
        %v9594 = vor.u32 %v9592, %v9593
        %v9595 = vshll.u32 2102212464, %v9583
        %v9596 = vshrl.u32 920167782, %v9584
        %v9597 = vor.u32 %v9595, %v9596
        %v9598 = vshll.u32 920167782, %v9583
        %v9599 = vshrl.u32 1326507024, %v9584
        %v9600 = vor.u32 %v9598, %v9599
        %vm9601 = vcmp.lt.s32.totalorder %v9582, 1
        %vm9602 = vcmp.lt.s32.totalorder %v9582, 2
        %vm9603 = vcmp.lt.s32.totalorder %v9582, 3
        %vm9604 = vcmp.lt.s32.totalorder %v9582, 4
        %v9605 = vsel %vm9601, %v9585, %v9588
        %v9606 = vsel %vm9604, %v9594, 2102212464
        %v9607 = vsel %vm9603, %v9591, %v9606
        %v9608 = vsel %vm9602, %v9605, %v9607
        %v9609 = vsel %vm9601, %v9588, %v9591
        %v9610 = vsel %vm9604, %v9597, 920167782
        %v9611 = vsel %vm9603, %v9594, %v9610
        %v9612 = vsel %vm9602, %v9609, %v9611
        %v9613 = vsel %vm9601, %v9591, %v9594
        %v9614 = vsel %vm9604, %v9600, 1326507024
        %v9615 = vsel %vm9603, %v9597, %v9614
        %v9616 = vsel %vm9602, %v9613, %v9615
        %v9617 = vshll.u32 %v9577, 8
        %v9618 = vand.u32 %v9617, 65535
        %v9619 = vshrl.u32 %v9617, 16
        %v9620 = vand.u32 %v9616, 65535
        %v9621 = vshrl.u32 %v9616, 16
        %v9622 = vmul.u32 %v9618, %v9620
        %v9623 = vmul.u32 %v9618, %v9621
        %v9624 = vmul.u32 %v9619, %v9620
        %v9625 = vmul.u32 %v9619, %v9621
        %v9626 = vshll.u32 %v9623, 16
        %v9627 = vshrl.u32 %v9623, 16
        %v9628 = vshll.u32 %v9624, 16
        %v9629 = vshrl.u32 %v9624, 16
        %vm9630 = vc.u32 %v9622, %v9626
        %v9631 = vsel %vm9630, 1, 0
        %v9632 = vadd.s32 %v9622, %v9626
        %v9633 = vadd.s32 %v9625, %v9631
        %vm9634 = vc.u32 %v9632, %v9628
        %v9635 = vsel %vm9634, 1, 0
        %v9636 = vadd.s32 %v9632, %v9628
        %v9637 = vadd.s32 %v9633, %v9635
        %v9638 = vadd.s32 %v9637, %v9627
        %v9639 = vadd.s32 %v9638, %v9629
        %v9640 = vand.u32 %v9617, 65535
        %v9641 = vshrl.u32 %v9617, 16
        %v9642 = vand.u32 %v9612, 65535
        %v9643 = vshrl.u32 %v9612, 16
        %v9644 = vmul.u32 %v9640, %v9642
        %v9645 = vmul.u32 %v9640, %v9643
        %v9646 = vmul.u32 %v9641, %v9642
        %v9647 = vmul.u32 %v9641, %v9643
        %v9648 = vshll.u32 %v9645, 16
        %v9649 = vshrl.u32 %v9645, 16
        %v9650 = vshll.u32 %v9646, 16
        %v9651 = vshrl.u32 %v9646, 16
        %vm9652 = vc.u32 %v9644, %v9648
        %v9653 = vsel %vm9652, 1, 0
        %v9654 = vadd.s32 %v9644, %v9648
        %v9655 = vadd.s32 %v9647, %v9653
        %vm9656 = vc.u32 %v9654, %v9650
        %v9657 = vsel %vm9656, 1, 0
        %v9658 = vadd.s32 %v9654, %v9650
        %v9659 = vadd.s32 %v9655, %v9657
        %v9660 = vadd.s32 %v9659, %v9649
        %v9661 = vadd.s32 %v9660, %v9651
        %v9662 = vmul.u32 %v9617, %v9608
        %v9663 = vadd.s32 %v9639, %v9658
        %vm9664 = vc.u32 %v9639, %v9658
        %v9665 = vadd.s32 %v9661, 1
        %v9666 = vsel %vm9664, %v9665, %v9661
        %v9667 = vadd.s32 %v9662, %v9666
        %v9668 = vadd.s32 %v9667, 536870912
        %v9669 = vshrl.u32 %v9668, 30
        %v9670 = vshll.u32 %v9669, 30
        %v9671 = vsub.s32 %v9667, %v9670
        %vm9672 = vcmp.lt.s32.totalorder %v9671, 0
        %v9673 = vsub.s32 0, %v9671
        %v9674 = vsel %vm9672, %v9673, %v9671
        %v9675 = vclz %v9674
        %v9676 = vsub.s32 %v9675, 2
        %vm9677 = vcmp.gt.s32.totalorder 0, %v9676
        %v9678 = vsel %vm9677, 0, %v9676
        %v9679 = vsub.s32 32, %v9678
        %v9680 = vshll.u32 %v9671, %v9678
        %v9681 = vshrl.u32 %v9663, %v9679
        %v9682 = vor.u32 %v9680, %v9681
        %v9683 = vsub.s32 4294967266, %v9678
        %v9684 = vadd.s32 %v9683, 127
        %v9685 = vshll.u32 %v9684, 23
        %v9686 = vor.u32 4788187, %v9685
        %v9687 = vand.u32 2147483647, %v9686
        %v9689 = vcvt.s32.f32 %v9682
        %v9690 = vmul.f32 %v9689, %v9687
        %v9691 = vxor.u32 %v9690, 2147483648
        %v9692 = vsel %vm9571, %v9691, %v9690
        %v9693 = vsub.s32 4, %v9669
        %v9694 = vsel %vm9571, %v9693, %v9669
        %v9695 = vsel %vm9570, %v784, %v9692
        %v9696 = vsel %vm9570, 0, %v9694
        %v9697 = vmul.f32 %v9695, %v9695
        %v9698 = vmul.f32 %v9697, -0.001358992
        %v9699 = vadd.f32 %v9698, 0.041655596
        %v9700 = vmul.f32 %v9697, %v9699
        %v9701 = vadd.f32 %v9700, -0.4999988
        %v9702 = vmul.f32 %v9697, %v9701
        %v9703 = vadd.f32 1.0, %v9702
        %v9704 = vmul.f32 %v9695, %v9695
        %v9705 = vmul.f32 %v9704, -0.00019511016
        %v9706 = vadd.f32 %v9705, 0.008332121
        %v9707 = vmul.f32 %v9704, %v9706
        %v9708 = vadd.f32 %v9707, -0.16666654
        %v9709 = vmul.f32 %v9704, %v9708
        %v9710 = vadd.f32 %v9709, 1.0
        %v9711 = vmul.f32 %v9710, %v9695
        %vm9712 = vweird.f32 %v784
        %v9713 = vand.u32 %v9696, 3
        %vm9714 = vcmp.lt.s32.totalorder %v9713, 2
        %vm9715 = vcmp.eq.s32.totalorder %v9713, 0
        %v9716 = vxor.u32 %v9711, 2147483648
        %v9717 = vsel %vm9715, %v9703, %v9716
        %vm9718 = vcmp.eq.s32.totalorder %v9713, 2
        %v9719 = vxor.u32 %v9703, 2147483648
        %v9720 = vsel %vm9718, %v9719, %v9711
        %v9721 = vsel %vm9714, %v9717, %v9720
        %v9722 = vsel %vm9712, nan, %v9721
        %v9723 = vand.u32 2147483647, %v785
        %vm9724 = vcmp.le.f32.partialorder %v9723, 0.7853982
        %vm9725 = vcmp.lt.s32.totalorder %v785, 0
        %v9726 = vand.u32 %v785, 2139095040
        %v9727 = vshrl.u32 %v9726, 23
        %v9728 = vsub.s32 %v9727, 127
        %v9729 = vand.u32 2147483647, %v785
        %v9730 = vand.u32 %v9729, 8388607
        %v9731 = vor.u32 %v9730, 8388608
        %v9732 = vsub.s32 0, %v9731
        %v9733 = vadd.s32 %v9728, 1
        %vm9734 = vcmp.gt.s32.totalorder %v9733, 0
        %v9735 = vsel %vm9734, %v9733, 0
        %v9736 = vshrl.u32 %v9735, 5
        %v9737 = vand.u32 %v9735, 31
        %v9738 = vsub.s32 32, %v9737
        %v9739 = vshrl.u32 683565275, %v9738
        %v9740 = vshll.u32 683565275, %v9737
        %v9741 = vshrl.u32 2475754826, %v9738
        %v9742 = vor.u32 %v9740, %v9741
        %v9743 = vshll.u32 2475754826, %v9737
        %v9744 = vshrl.u32 2131351028, %v9738
        %v9745 = vor.u32 %v9743, %v9744
        %v9746 = vshll.u32 2131351028, %v9737
        %v9747 = vshrl.u32 2102212464, %v9738
        %v9748 = vor.u32 %v9746, %v9747
        %v9749 = vshll.u32 2102212464, %v9737
        %v9750 = vshrl.u32 920167782, %v9738
        %v9751 = vor.u32 %v9749, %v9750
        %v9752 = vshll.u32 920167782, %v9737
        %v9753 = vshrl.u32 1326507024, %v9738
        %v9754 = vor.u32 %v9752, %v9753
        %vm9755 = vcmp.lt.s32.totalorder %v9736, 1
        %vm9756 = vcmp.lt.s32.totalorder %v9736, 2
        %vm9757 = vcmp.lt.s32.totalorder %v9736, 3
        %vm9758 = vcmp.lt.s32.totalorder %v9736, 4
        %v9759 = vsel %vm9755, %v9739, %v9742
        %v9760 = vsel %vm9758, %v9748, 2102212464
        %v9761 = vsel %vm9757, %v9745, %v9760
        %v9762 = vsel %vm9756, %v9759, %v9761
        %v9763 = vsel %vm9755, %v9742, %v9745
        %v9764 = vsel %vm9758, %v9751, 920167782
        %v9765 = vsel %vm9757, %v9748, %v9764
        %v9766 = vsel %vm9756, %v9763, %v9765
        %v9767 = vsel %vm9755, %v9745, %v9748
        %v9768 = vsel %vm9758, %v9754, 1326507024
        %v9769 = vsel %vm9757, %v9751, %v9768
        %v9770 = vsel %vm9756, %v9767, %v9769
        %v9771 = vshll.u32 %v9731, 8
        %v9772 = vand.u32 %v9771, 65535
        %v9773 = vshrl.u32 %v9771, 16
        %v9774 = vand.u32 %v9770, 65535
        %v9775 = vshrl.u32 %v9770, 16
        %v9776 = vmul.u32 %v9772, %v9774
        %v9777 = vmul.u32 %v9772, %v9775
        %v9778 = vmul.u32 %v9773, %v9774
        %v9779 = vmul.u32 %v9773, %v9775
        %v9780 = vshll.u32 %v9777, 16
        %v9781 = vshrl.u32 %v9777, 16
        %v9782 = vshll.u32 %v9778, 16
        %v9783 = vshrl.u32 %v9778, 16
        %vm9784 = vc.u32 %v9776, %v9780
        %v9785 = vsel %vm9784, 1, 0
        %v9786 = vadd.s32 %v9776, %v9780
        %v9787 = vadd.s32 %v9779, %v9785
        %vm9788 = vc.u32 %v9786, %v9782
        %v9789 = vsel %vm9788, 1, 0
        %v9790 = vadd.s32 %v9786, %v9782
        %v9791 = vadd.s32 %v9787, %v9789
        %v9792 = vadd.s32 %v9791, %v9781
        %v9793 = vadd.s32 %v9792, %v9783
        %v9794 = vand.u32 %v9771, 65535
        %v9795 = vshrl.u32 %v9771, 16
        %v9796 = vand.u32 %v9766, 65535
        %v9797 = vshrl.u32 %v9766, 16
        %v9798 = vmul.u32 %v9794, %v9796
        %v9799 = vmul.u32 %v9794, %v9797
        %v9800 = vmul.u32 %v9795, %v9796
        %v9801 = vmul.u32 %v9795, %v9797
        %v9802 = vshll.u32 %v9799, 16
        %v9803 = vshrl.u32 %v9799, 16
        %v9804 = vshll.u32 %v9800, 16
        %v9805 = vshrl.u32 %v9800, 16
        %vm9806 = vc.u32 %v9798, %v9802
        %v9807 = vsel %vm9806, 1, 0
        %v9808 = vadd.s32 %v9798, %v9802
        %v9809 = vadd.s32 %v9801, %v9807
        %vm9810 = vc.u32 %v9808, %v9804
        %v9811 = vsel %vm9810, 1, 0
        %v9812 = vadd.s32 %v9808, %v9804
        %v9813 = vadd.s32 %v9809, %v9811
        %v9814 = vadd.s32 %v9813, %v9803
        %v9815 = vadd.s32 %v9814, %v9805
        %v9816 = vmul.u32 %v9771, %v9762
        %v9817 = vadd.s32 %v9793, %v9812
        %vm9818 = vc.u32 %v9793, %v9812
        %v9819 = vadd.s32 %v9815, 1
        %v9820 = vsel %vm9818, %v9819, %v9815
        %v9821 = vadd.s32 %v9816, %v9820
        %v9822 = vadd.s32 %v9821, 536870912
        %v9823 = vshrl.u32 %v9822, 30
        %v9824 = vshll.u32 %v9823, 30
        %v9825 = vsub.s32 %v9821, %v9824
        %vm9826 = vcmp.lt.s32.totalorder %v9825, 0
        %v9827 = vsub.s32 0, %v9825
        %v9828 = vsel %vm9826, %v9827, %v9825
        %v9829 = vclz %v9828
        %v9830 = vsub.s32 %v9829, 2
        %vm9831 = vcmp.gt.s32.totalorder 0, %v9830
        %v9832 = vsel %vm9831, 0, %v9830
        %v9833 = vsub.s32 32, %v9832
        %v9834 = vshll.u32 %v9825, %v9832
        %v9835 = vshrl.u32 %v9817, %v9833
        %v9836 = vor.u32 %v9834, %v9835
        %v9837 = vsub.s32 4294967266, %v9832
        %v9838 = vadd.s32 %v9837, 127
        %v9839 = vshll.u32 %v9838, 23
        %v9840 = vor.u32 4788187, %v9839
        %v9841 = vand.u32 2147483647, %v9840
        %v9843 = vcvt.s32.f32 %v9836
        %v9844 = vmul.f32 %v9843, %v9841
        %v9845 = vxor.u32 %v9844, 2147483648
        %v9846 = vsel %vm9725, %v9845, %v9844
        %v9847 = vsub.s32 4, %v9823
        %v9848 = vsel %vm9725, %v9847, %v9823
        %v9849 = vsel %vm9724, %v785, %v9846
        %v9850 = vsel %vm9724, 0, %v9848
        %v9851 = vmul.f32 %v9849, %v9849
        %v9852 = vmul.f32 %v9851, -0.001358992
        %v9853 = vadd.f32 %v9852, 0.041655596
        %v9854 = vmul.f32 %v9851, %v9853
        %v9855 = vadd.f32 %v9854, -0.4999988
        %v9856 = vmul.f32 %v9851, %v9855
        %v9857 = vadd.f32 1.0, %v9856
        %v9858 = vmul.f32 %v9849, %v9849
        %v9859 = vmul.f32 %v9858, -0.00019511016
        %v9860 = vadd.f32 %v9859, 0.008332121
        %v9861 = vmul.f32 %v9858, %v9860
        %v9862 = vadd.f32 %v9861, -0.16666654
        %v9863 = vmul.f32 %v9858, %v9862
        %v9864 = vadd.f32 %v9863, 1.0
        %v9865 = vmul.f32 %v9864, %v9849
        %vm9866 = vweird.f32 %v785
        %v9867 = vand.u32 %v9850, 3
        %vm9868 = vcmp.lt.s32.totalorder %v9867, 2
        %vm9869 = vcmp.eq.s32.totalorder %v9867, 0
        %v9870 = vxor.u32 %v9865, 2147483648
        %v9871 = vsel %vm9869, %v9857, %v9870
        %vm9872 = vcmp.eq.s32.totalorder %v9867, 2
        %v9873 = vxor.u32 %v9857, 2147483648
        %v9874 = vsel %vm9872, %v9873, %v9865
        %v9875 = vsel %vm9868, %v9871, %v9874
        %v9876 = vsel %vm9866, nan, %v9875
        %v9877 = vand.u32 2147483647, %v786
        %vm9878 = vcmp.le.f32.partialorder %v9877, 0.7853982
        %vm9879 = vcmp.lt.s32.totalorder %v786, 0
        %v9880 = vand.u32 %v786, 2139095040
        %v9881 = vshrl.u32 %v9880, 23
        %v9882 = vsub.s32 %v9881, 127
        %v9883 = vand.u32 2147483647, %v786
        %v9884 = vand.u32 %v9883, 8388607
        %v9885 = vor.u32 %v9884, 8388608
        %v9886 = vsub.s32 0, %v9885
        %v9887 = vadd.s32 %v9882, 1
        %vm9888 = vcmp.gt.s32.totalorder %v9887, 0
        %v9889 = vsel %vm9888, %v9887, 0
        %v9890 = vshrl.u32 %v9889, 5
        %v9891 = vand.u32 %v9889, 31
        %v9892 = vsub.s32 32, %v9891
        %v9893 = vshrl.u32 683565275, %v9892
        %v9894 = vshll.u32 683565275, %v9891
        %v9895 = vshrl.u32 2475754826, %v9892
        %v9896 = vor.u32 %v9894, %v9895
        %v9897 = vshll.u32 2475754826, %v9891
        %v9898 = vshrl.u32 2131351028, %v9892
        %v9899 = vor.u32 %v9897, %v9898
        %v9900 = vshll.u32 2131351028, %v9891
        %v9901 = vshrl.u32 2102212464, %v9892
        %v9902 = vor.u32 %v9900, %v9901
        %v9903 = vshll.u32 2102212464, %v9891
        %v9904 = vshrl.u32 920167782, %v9892
        %v9905 = vor.u32 %v9903, %v9904
        %v9906 = vshll.u32 920167782, %v9891
        %v9907 = vshrl.u32 1326507024, %v9892
        %v9908 = vor.u32 %v9906, %v9907
        %vm9909 = vcmp.lt.s32.totalorder %v9890, 1
        %vm9910 = vcmp.lt.s32.totalorder %v9890, 2
        %vm9911 = vcmp.lt.s32.totalorder %v9890, 3
        %vm9912 = vcmp.lt.s32.totalorder %v9890, 4
        %v9913 = vsel %vm9909, %v9893, %v9896
        %v9914 = vsel %vm9912, %v9902, 2102212464
        %v9915 = vsel %vm9911, %v9899, %v9914
        %v9916 = vsel %vm9910, %v9913, %v9915
        %v9917 = vsel %vm9909, %v9896, %v9899
        %v9918 = vsel %vm9912, %v9905, 920167782
        %v9919 = vsel %vm9911, %v9902, %v9918
        %v9920 = vsel %vm9910, %v9917, %v9919
        %v9921 = vsel %vm9909, %v9899, %v9902
        %v9922 = vsel %vm9912, %v9908, 1326507024
        %v9923 = vsel %vm9911, %v9905, %v9922
        %v9924 = vsel %vm9910, %v9921, %v9923
        %v9925 = vshll.u32 %v9885, 8
        %v9926 = vand.u32 %v9925, 65535
        %v9927 = vshrl.u32 %v9925, 16
        %v9928 = vand.u32 %v9924, 65535
        %v9929 = vshrl.u32 %v9924, 16
        %v9930 = vmul.u32 %v9926, %v9928
        %v9931 = vmul.u32 %v9926, %v9929
        %v9932 = vmul.u32 %v9927, %v9928
        %v9933 = vmul.u32 %v9927, %v9929
        %v9934 = vshll.u32 %v9931, 16
        %v9935 = vshrl.u32 %v9931, 16
        %v9936 = vshll.u32 %v9932, 16
        %v9937 = vshrl.u32 %v9932, 16
        %vm9938 = vc.u32 %v9930, %v9934
        %v9939 = vsel %vm9938, 1, 0
        %v9940 = vadd.s32 %v9930, %v9934
        %v9941 = vadd.s32 %v9933, %v9939
        %vm9942 = vc.u32 %v9940, %v9936
        %v9943 = vsel %vm9942, 1, 0
        %v9944 = vadd.s32 %v9940, %v9936
        %v9945 = vadd.s32 %v9941, %v9943
        %v9946 = vadd.s32 %v9945, %v9935
        %v9947 = vadd.s32 %v9946, %v9937
        %v9948 = vand.u32 %v9925, 65535
        %v9949 = vshrl.u32 %v9925, 16
        %v9950 = vand.u32 %v9920, 65535
        %v9951 = vshrl.u32 %v9920, 16
        %v9952 = vmul.u32 %v9948, %v9950
        %v9953 = vmul.u32 %v9948, %v9951
        %v9954 = vmul.u32 %v9949, %v9950
        %v9955 = vmul.u32 %v9949, %v9951
        %v9956 = vshll.u32 %v9953, 16
        %v9957 = vshrl.u32 %v9953, 16
        %v9958 = vshll.u32 %v9954, 16
        %v9959 = vshrl.u32 %v9954, 16
        %vm9960 = vc.u32 %v9952, %v9956
        %v9961 = vsel %vm9960, 1, 0
        %v9962 = vadd.s32 %v9952, %v9956
        %v9963 = vadd.s32 %v9955, %v9961
        %vm9964 = vc.u32 %v9962, %v9958
        %v9965 = vsel %vm9964, 1, 0
        %v9966 = vadd.s32 %v9962, %v9958
        %v9967 = vadd.s32 %v9963, %v9965
        %v9968 = vadd.s32 %v9967, %v9957
        %v9969 = vadd.s32 %v9968, %v9959
        %v9970 = vmul.u32 %v9925, %v9916
        %v9971 = vadd.s32 %v9947, %v9966
        %vm9972 = vc.u32 %v9947, %v9966
        %v9973 = vadd.s32 %v9969, 1
        %v9974 = vsel %vm9972, %v9973, %v9969
        %v9975 = vadd.s32 %v9970, %v9974
        %v9976 = vadd.s32 %v9975, 536870912
        %v9977 = vshrl.u32 %v9976, 30
        %v9978 = vshll.u32 %v9977, 30
        %v9979 = vsub.s32 %v9975, %v9978
        %vm9980 = vcmp.lt.s32.totalorder %v9979, 0
        %v9981 = vsub.s32 0, %v9979
        %v9982 = vsel %vm9980, %v9981, %v9979
        %v9983 = vclz %v9982
        %v9984 = vsub.s32 %v9983, 2
        %vm9985 = vcmp.gt.s32.totalorder 0, %v9984
        %v9986 = vsel %vm9985, 0, %v9984
        %v9987 = vsub.s32 32, %v9986
        %v9988 = vshll.u32 %v9979, %v9986
        %v9989 = vshrl.u32 %v9971, %v9987
        %v9990 = vor.u32 %v9988, %v9989
        %v9991 = vsub.s32 4294967266, %v9986
        %v9992 = vadd.s32 %v9991, 127
        %v9993 = vshll.u32 %v9992, 23
        %v9994 = vor.u32 4788187, %v9993
        %v9995 = vand.u32 2147483647, %v9994
        %v9997 = vcvt.s32.f32 %v9990
        %v9998 = vmul.f32 %v9997, %v9995
        %v9999 = vxor.u32 %v9998, 2147483648
        %v10000 = vsel %vm9879, %v9999, %v9998
        %v10001 = vsub.s32 4, %v9977
        %v10002 = vsel %vm9879, %v10001, %v9977
        %v10003 = vsel %vm9878, %v786, %v10000
        %v10004 = vsel %vm9878, 0, %v10002
        %v10005 = vmul.f32 %v10003, %v10003
        %v10006 = vmul.f32 %v10005, -0.001358992
        %v10007 = vadd.f32 %v10006, 0.041655596
        %v10008 = vmul.f32 %v10005, %v10007
        %v10009 = vadd.f32 %v10008, -0.4999988
        %v10010 = vmul.f32 %v10005, %v10009
        %v10011 = vadd.f32 1.0, %v10010
        %v10012 = vmul.f32 %v10003, %v10003
        %v10013 = vmul.f32 %v10012, -0.00019511016
        %v10014 = vadd.f32 %v10013, 0.008332121
        %v10015 = vmul.f32 %v10012, %v10014
        %v10016 = vadd.f32 %v10015, -0.16666654
        %v10017 = vmul.f32 %v10012, %v10016
        %v10018 = vadd.f32 %v10017, 1.0
        %v10019 = vmul.f32 %v10018, %v10003
        %vm10020 = vweird.f32 %v786
        %v10021 = vand.u32 %v10004, 3
        %vm10022 = vcmp.lt.s32.totalorder %v10021, 2
        %vm10023 = vcmp.eq.s32.totalorder %v10021, 0
        %v10024 = vxor.u32 %v10019, 2147483648
        %v10025 = vsel %vm10023, %v10011, %v10024
        %vm10026 = vcmp.eq.s32.totalorder %v10021, 2
        %v10027 = vxor.u32 %v10011, 2147483648
        %v10028 = vsel %vm10026, %v10027, %v10019
        %v10029 = vsel %vm10022, %v10025, %v10028
        %v10030 = vsel %vm10020, nan, %v10029
        %v10031 = vand.u32 2147483647, %v787
        %vm10032 = vcmp.le.f32.partialorder %v10031, 0.7853982
        %vm10033 = vcmp.lt.s32.totalorder %v787, 0
        %v10034 = vand.u32 %v787, 2139095040
        %v10035 = vshrl.u32 %v10034, 23
        %v10036 = vsub.s32 %v10035, 127
        %v10037 = vand.u32 2147483647, %v787
        %v10038 = vand.u32 %v10037, 8388607
        %v10039 = vor.u32 %v10038, 8388608
        %v10040 = vsub.s32 0, %v10039
        %v10041 = vadd.s32 %v10036, 1
        %vm10042 = vcmp.gt.s32.totalorder %v10041, 0
        %v10043 = vsel %vm10042, %v10041, 0
        %v10044 = vshrl.u32 %v10043, 5
        %v10045 = vand.u32 %v10043, 31
        %v10046 = vsub.s32 32, %v10045
        %v10047 = vshrl.u32 683565275, %v10046
        %v10048 = vshll.u32 683565275, %v10045
        %v10049 = vshrl.u32 2475754826, %v10046
        %v10050 = vor.u32 %v10048, %v10049
        %v10051 = vshll.u32 2475754826, %v10045
        %v10052 = vshrl.u32 2131351028, %v10046
        %v10053 = vor.u32 %v10051, %v10052
        %v10054 = vshll.u32 2131351028, %v10045
        %v10055 = vshrl.u32 2102212464, %v10046
        %v10056 = vor.u32 %v10054, %v10055
        %v10057 = vshll.u32 2102212464, %v10045
        %v10058 = vshrl.u32 920167782, %v10046
        %v10059 = vor.u32 %v10057, %v10058
        %v10060 = vshll.u32 920167782, %v10045
        %v10061 = vshrl.u32 1326507024, %v10046
        %v10062 = vor.u32 %v10060, %v10061
        %vm10063 = vcmp.lt.s32.totalorder %v10044, 1
        %vm10064 = vcmp.lt.s32.totalorder %v10044, 2
        %vm10065 = vcmp.lt.s32.totalorder %v10044, 3
        %vm10066 = vcmp.lt.s32.totalorder %v10044, 4
        %v10067 = vsel %vm10063, %v10047, %v10050
        %v10068 = vsel %vm10066, %v10056, 2102212464
        %v10069 = vsel %vm10065, %v10053, %v10068
        %v10070 = vsel %vm10064, %v10067, %v10069
        %v10071 = vsel %vm10063, %v10050, %v10053
        %v10072 = vsel %vm10066, %v10059, 920167782
        %v10073 = vsel %vm10065, %v10056, %v10072
        %v10074 = vsel %vm10064, %v10071, %v10073
        %v10075 = vsel %vm10063, %v10053, %v10056
        %v10076 = vsel %vm10066, %v10062, 1326507024
        %v10077 = vsel %vm10065, %v10059, %v10076
        %v10078 = vsel %vm10064, %v10075, %v10077
        %v10079 = vshll.u32 %v10039, 8
        %v10080 = vand.u32 %v10079, 65535
        %v10081 = vshrl.u32 %v10079, 16
        %v10082 = vand.u32 %v10078, 65535
        %v10083 = vshrl.u32 %v10078, 16
        %v10084 = vmul.u32 %v10080, %v10082
        %v10085 = vmul.u32 %v10080, %v10083
        %v10086 = vmul.u32 %v10081, %v10082
        %v10087 = vmul.u32 %v10081, %v10083
        %v10088 = vshll.u32 %v10085, 16
        %v10089 = vshrl.u32 %v10085, 16
        %v10090 = vshll.u32 %v10086, 16
        %v10091 = vshrl.u32 %v10086, 16
        %vm10092 = vc.u32 %v10084, %v10088
        %v10093 = vsel %vm10092, 1, 0
        %v10094 = vadd.s32 %v10084, %v10088
        %v10095 = vadd.s32 %v10087, %v10093
        %vm10096 = vc.u32 %v10094, %v10090
        %v10097 = vsel %vm10096, 1, 0
        %v10098 = vadd.s32 %v10094, %v10090
        %v10099 = vadd.s32 %v10095, %v10097
        %v10100 = vadd.s32 %v10099, %v10089
        %v10101 = vadd.s32 %v10100, %v10091
        %v10102 = vand.u32 %v10079, 65535
        %v10103 = vshrl.u32 %v10079, 16
        %v10104 = vand.u32 %v10074, 65535
        %v10105 = vshrl.u32 %v10074, 16
        %v10106 = vmul.u32 %v10102, %v10104
        %v10107 = vmul.u32 %v10102, %v10105
        %v10108 = vmul.u32 %v10103, %v10104
        %v10109 = vmul.u32 %v10103, %v10105
        %v10110 = vshll.u32 %v10107, 16
        %v10111 = vshrl.u32 %v10107, 16
        %v10112 = vshll.u32 %v10108, 16
        %v10113 = vshrl.u32 %v10108, 16
        %vm10114 = vc.u32 %v10106, %v10110
        %v10115 = vsel %vm10114, 1, 0
        %v10116 = vadd.s32 %v10106, %v10110
        %v10117 = vadd.s32 %v10109, %v10115
        %vm10118 = vc.u32 %v10116, %v10112
        %v10119 = vsel %vm10118, 1, 0
        %v10120 = vadd.s32 %v10116, %v10112
        %v10121 = vadd.s32 %v10117, %v10119
        %v10122 = vadd.s32 %v10121, %v10111
        %v10123 = vadd.s32 %v10122, %v10113
        %v10124 = vmul.u32 %v10079, %v10070
        %v10125 = vadd.s32 %v10101, %v10120
        %vm10126 = vc.u32 %v10101, %v10120
        %v10127 = vadd.s32 %v10123, 1
        %v10128 = vsel %vm10126, %v10127, %v10123
        %v10129 = vadd.s32 %v10124, %v10128
        %v10130 = vadd.s32 %v10129, 536870912
        %v10131 = vshrl.u32 %v10130, 30
        %v10132 = vshll.u32 %v10131, 30
        %v10133 = vsub.s32 %v10129, %v10132
        %vm10134 = vcmp.lt.s32.totalorder %v10133, 0
        %v10135 = vsub.s32 0, %v10133
        %v10136 = vsel %vm10134, %v10135, %v10133
        %v10137 = vclz %v10136
        %v10138 = vsub.s32 %v10137, 2
        %vm10139 = vcmp.gt.s32.totalorder 0, %v10138
        %v10140 = vsel %vm10139, 0, %v10138
        %v10141 = vsub.s32 32, %v10140
        %v10142 = vshll.u32 %v10133, %v10140
        %v10143 = vshrl.u32 %v10125, %v10141
        %v10144 = vor.u32 %v10142, %v10143
        %v10145 = vsub.s32 4294967266, %v10140
        %v10146 = vadd.s32 %v10145, 127
        %v10147 = vshll.u32 %v10146, 23
        %v10148 = vor.u32 4788187, %v10147
        %v10149 = vand.u32 2147483647, %v10148
        %v10151 = vcvt.s32.f32 %v10144
        %v10152 = vmul.f32 %v10151, %v10149
        %v10153 = vxor.u32 %v10152, 2147483648
        %v10154 = vsel %vm10033, %v10153, %v10152
        %v10155 = vsub.s32 4, %v10131
        %v10156 = vsel %vm10033, %v10155, %v10131
        %v10157 = vsel %vm10032, %v787, %v10154
        %v10158 = vsel %vm10032, 0, %v10156
        %v10159 = vmul.f32 %v10157, %v10157
        %v10160 = vmul.f32 %v10159, -0.001358992
        %v10161 = vadd.f32 %v10160, 0.041655596
        %v10162 = vmul.f32 %v10159, %v10161
        %v10163 = vadd.f32 %v10162, -0.4999988
        %v10164 = vmul.f32 %v10159, %v10163
        %v10165 = vadd.f32 1.0, %v10164
        %v10166 = vmul.f32 %v10157, %v10157
        %v10167 = vmul.f32 %v10166, -0.00019511016
        %v10168 = vadd.f32 %v10167, 0.008332121
        %v10169 = vmul.f32 %v10166, %v10168
        %v10170 = vadd.f32 %v10169, -0.16666654
        %v10171 = vmul.f32 %v10166, %v10170
        %v10172 = vadd.f32 %v10171, 1.0
        %v10173 = vmul.f32 %v10172, %v10157
        %vm10174 = vweird.f32 %v787
        %v10175 = vand.u32 %v10158, 3
        %vm10176 = vcmp.lt.s32.totalorder %v10175, 2
        %vm10177 = vcmp.eq.s32.totalorder %v10175, 0
        %v10178 = vxor.u32 %v10173, 2147483648
        %v10179 = vsel %vm10177, %v10165, %v10178
        %vm10180 = vcmp.eq.s32.totalorder %v10175, 2
        %v10181 = vxor.u32 %v10165, 2147483648
        %v10182 = vsel %vm10180, %v10181, %v10173
        %v10183 = vsel %vm10176, %v10179, %v10182
        %v10184 = vsel %vm10174, nan, %v10183
        %v10185 = vand.u32 2147483647, %v788
        %vm10186 = vcmp.le.f32.partialorder %v10185, 0.7853982
        %vm10187 = vcmp.lt.s32.totalorder %v788, 0
        %v10188 = vand.u32 %v788, 2139095040
        %v10189 = vshrl.u32 %v10188, 23
        %v10190 = vsub.s32 %v10189, 127
        %v10191 = vand.u32 2147483647, %v788
        %v10192 = vand.u32 %v10191, 8388607
        %v10193 = vor.u32 %v10192, 8388608
        %v10194 = vsub.s32 0, %v10193
        %v10195 = vadd.s32 %v10190, 1
        %vm10196 = vcmp.gt.s32.totalorder %v10195, 0
        %v10197 = vsel %vm10196, %v10195, 0
        %v10198 = vshrl.u32 %v10197, 5
        %v10199 = vand.u32 %v10197, 31
        %v10200 = vsub.s32 32, %v10199
        %v10201 = vshrl.u32 683565275, %v10200
        %v10202 = vshll.u32 683565275, %v10199
        %v10203 = vshrl.u32 2475754826, %v10200
        %v10204 = vor.u32 %v10202, %v10203
        %v10205 = vshll.u32 2475754826, %v10199
        %v10206 = vshrl.u32 2131351028, %v10200
        %v10207 = vor.u32 %v10205, %v10206
        %v10208 = vshll.u32 2131351028, %v10199
        %v10209 = vshrl.u32 2102212464, %v10200
        %v10210 = vor.u32 %v10208, %v10209
        %v10211 = vshll.u32 2102212464, %v10199
        %v10212 = vshrl.u32 920167782, %v10200
        %v10213 = vor.u32 %v10211, %v10212
        %v10214 = vshll.u32 920167782, %v10199
        %v10215 = vshrl.u32 1326507024, %v10200
        %v10216 = vor.u32 %v10214, %v10215
        %vm10217 = vcmp.lt.s32.totalorder %v10198, 1
        %vm10218 = vcmp.lt.s32.totalorder %v10198, 2
        %vm10219 = vcmp.lt.s32.totalorder %v10198, 3
        %vm10220 = vcmp.lt.s32.totalorder %v10198, 4
        %v10221 = vsel %vm10217, %v10201, %v10204
        %v10222 = vsel %vm10220, %v10210, 2102212464
        %v10223 = vsel %vm10219, %v10207, %v10222
        %v10224 = vsel %vm10218, %v10221, %v10223
        %v10225 = vsel %vm10217, %v10204, %v10207
        %v10226 = vsel %vm10220, %v10213, 920167782
        %v10227 = vsel %vm10219, %v10210, %v10226
        %v10228 = vsel %vm10218, %v10225, %v10227
        %v10229 = vsel %vm10217, %v10207, %v10210
        %v10230 = vsel %vm10220, %v10216, 1326507024
        %v10231 = vsel %vm10219, %v10213, %v10230
        %v10232 = vsel %vm10218, %v10229, %v10231
        %v10233 = vshll.u32 %v10193, 8
        %v10234 = vand.u32 %v10233, 65535
        %v10235 = vshrl.u32 %v10233, 16
        %v10236 = vand.u32 %v10232, 65535
        %v10237 = vshrl.u32 %v10232, 16
        %v10238 = vmul.u32 %v10234, %v10236
        %v10239 = vmul.u32 %v10234, %v10237
        %v10240 = vmul.u32 %v10235, %v10236
        %v10241 = vmul.u32 %v10235, %v10237
        %v10242 = vshll.u32 %v10239, 16
        %v10243 = vshrl.u32 %v10239, 16
        %v10244 = vshll.u32 %v10240, 16
        %v10245 = vshrl.u32 %v10240, 16
        %vm10246 = vc.u32 %v10238, %v10242
        %v10247 = vsel %vm10246, 1, 0
        %v10248 = vadd.s32 %v10238, %v10242
        %v10249 = vadd.s32 %v10241, %v10247
        %vm10250 = vc.u32 %v10248, %v10244
        %v10251 = vsel %vm10250, 1, 0
        %v10252 = vadd.s32 %v10248, %v10244
        %v10253 = vadd.s32 %v10249, %v10251
        %v10254 = vadd.s32 %v10253, %v10243
        %v10255 = vadd.s32 %v10254, %v10245
        %v10256 = vand.u32 %v10233, 65535
        %v10257 = vshrl.u32 %v10233, 16
        %v10258 = vand.u32 %v10228, 65535
        %v10259 = vshrl.u32 %v10228, 16
        %v10260 = vmul.u32 %v10256, %v10258
        %v10261 = vmul.u32 %v10256, %v10259
        %v10262 = vmul.u32 %v10257, %v10258
        %v10263 = vmul.u32 %v10257, %v10259
        %v10264 = vshll.u32 %v10261, 16
        %v10265 = vshrl.u32 %v10261, 16
        %v10266 = vshll.u32 %v10262, 16
        %v10267 = vshrl.u32 %v10262, 16
        %vm10268 = vc.u32 %v10260, %v10264
        %v10269 = vsel %vm10268, 1, 0
        %v10270 = vadd.s32 %v10260, %v10264
        %v10271 = vadd.s32 %v10263, %v10269
        %vm10272 = vc.u32 %v10270, %v10266
        %v10273 = vsel %vm10272, 1, 0
        %v10274 = vadd.s32 %v10270, %v10266
        %v10275 = vadd.s32 %v10271, %v10273
        %v10276 = vadd.s32 %v10275, %v10265
        %v10277 = vadd.s32 %v10276, %v10267
        %v10278 = vmul.u32 %v10233, %v10224
        %v10279 = vadd.s32 %v10255, %v10274
        %vm10280 = vc.u32 %v10255, %v10274
        %v10281 = vadd.s32 %v10277, 1
        %v10282 = vsel %vm10280, %v10281, %v10277
        %v10283 = vadd.s32 %v10278, %v10282
        %v10284 = vadd.s32 %v10283, 536870912
        %v10285 = vshrl.u32 %v10284, 30
        %v10286 = vshll.u32 %v10285, 30
        %v10287 = vsub.s32 %v10283, %v10286
        %vm10288 = vcmp.lt.s32.totalorder %v10287, 0
        %v10289 = vsub.s32 0, %v10287
        %v10290 = vsel %vm10288, %v10289, %v10287
        %v10291 = vclz %v10290
        %v10292 = vsub.s32 %v10291, 2
        %vm10293 = vcmp.gt.s32.totalorder 0, %v10292
        %v10294 = vsel %vm10293, 0, %v10292
        %v10295 = vsub.s32 32, %v10294
        %v10296 = vshll.u32 %v10287, %v10294
        %v10297 = vshrl.u32 %v10279, %v10295
        %v10298 = vor.u32 %v10296, %v10297
        %v10299 = vsub.s32 4294967266, %v10294
        %v10300 = vadd.s32 %v10299, 127
        %v10301 = vshll.u32 %v10300, 23
        %v10302 = vor.u32 4788187, %v10301
        %v10303 = vand.u32 2147483647, %v10302
        %v10305 = vcvt.s32.f32 %v10298
        %v10306 = vmul.f32 %v10305, %v10303
        %v10307 = vxor.u32 %v10306, 2147483648
        %v10308 = vsel %vm10187, %v10307, %v10306
        %v10309 = vsub.s32 4, %v10285
        %v10310 = vsel %vm10187, %v10309, %v10285
        %v10311 = vsel %vm10186, %v788, %v10308
        %v10312 = vsel %vm10186, 0, %v10310
        %v10313 = vmul.f32 %v10311, %v10311
        %v10314 = vmul.f32 %v10313, -0.001358992
        %v10315 = vadd.f32 %v10314, 0.041655596
        %v10316 = vmul.f32 %v10313, %v10315
        %v10317 = vadd.f32 %v10316, -0.4999988
        %v10318 = vmul.f32 %v10313, %v10317
        %v10319 = vadd.f32 1.0, %v10318
        %v10320 = vmul.f32 %v10311, %v10311
        %v10321 = vmul.f32 %v10320, -0.00019511016
        %v10322 = vadd.f32 %v10321, 0.008332121
        %v10323 = vmul.f32 %v10320, %v10322
        %v10324 = vadd.f32 %v10323, -0.16666654
        %v10325 = vmul.f32 %v10320, %v10324
        %v10326 = vadd.f32 %v10325, 1.0
        %v10327 = vmul.f32 %v10326, %v10311
        %vm10328 = vweird.f32 %v788
        %v10329 = vand.u32 %v10312, 3
        %vm10330 = vcmp.lt.s32.totalorder %v10329, 2
        %vm10331 = vcmp.eq.s32.totalorder %v10329, 0
        %v10332 = vxor.u32 %v10327, 2147483648
        %v10333 = vsel %vm10331, %v10319, %v10332
        %vm10334 = vcmp.eq.s32.totalorder %v10329, 2
        %v10335 = vxor.u32 %v10319, 2147483648
        %v10336 = vsel %vm10334, %v10335, %v10327
        %v10337 = vsel %vm10330, %v10333, %v10336
        %v10338 = vsel %vm10328, nan, %v10337
        %v10339 = vand.u32 2147483647, %v789
        %vm10340 = vcmp.le.f32.partialorder %v10339, 0.7853982
        %vm10341 = vcmp.lt.s32.totalorder %v789, 0
        %v10342 = vand.u32 %v789, 2139095040
        %v10343 = vshrl.u32 %v10342, 23
        %v10344 = vsub.s32 %v10343, 127
        %v10345 = vand.u32 2147483647, %v789
        %v10346 = vand.u32 %v10345, 8388607
        %v10347 = vor.u32 %v10346, 8388608
        %v10348 = vsub.s32 0, %v10347
        %v10349 = vadd.s32 %v10344, 1
        %vm10350 = vcmp.gt.s32.totalorder %v10349, 0
        %v10351 = vsel %vm10350, %v10349, 0
        %v10352 = vshrl.u32 %v10351, 5
        %v10353 = vand.u32 %v10351, 31
        %v10354 = vsub.s32 32, %v10353
        %v10355 = vshrl.u32 683565275, %v10354
        %v10356 = vshll.u32 683565275, %v10353
        %v10357 = vshrl.u32 2475754826, %v10354
        %v10358 = vor.u32 %v10356, %v10357
        %v10359 = vshll.u32 2475754826, %v10353
        %v10360 = vshrl.u32 2131351028, %v10354
        %v10361 = vor.u32 %v10359, %v10360
        %v10362 = vshll.u32 2131351028, %v10353
        %v10363 = vshrl.u32 2102212464, %v10354
        %v10364 = vor.u32 %v10362, %v10363
        %v10365 = vshll.u32 2102212464, %v10353
        %v10366 = vshrl.u32 920167782, %v10354
        %v10367 = vor.u32 %v10365, %v10366
        %v10368 = vshll.u32 920167782, %v10353
        %v10369 = vshrl.u32 1326507024, %v10354
        %v10370 = vor.u32 %v10368, %v10369
        %vm10371 = vcmp.lt.s32.totalorder %v10352, 1
        %vm10372 = vcmp.lt.s32.totalorder %v10352, 2
        %vm10373 = vcmp.lt.s32.totalorder %v10352, 3
        %vm10374 = vcmp.lt.s32.totalorder %v10352, 4
        %v10375 = vsel %vm10371, %v10355, %v10358
        %v10376 = vsel %vm10374, %v10364, 2102212464
        %v10377 = vsel %vm10373, %v10361, %v10376
        %v10378 = vsel %vm10372, %v10375, %v10377
        %v10379 = vsel %vm10371, %v10358, %v10361
        %v10380 = vsel %vm10374, %v10367, 920167782
        %v10381 = vsel %vm10373, %v10364, %v10380
        %v10382 = vsel %vm10372, %v10379, %v10381
        %v10383 = vsel %vm10371, %v10361, %v10364
        %v10384 = vsel %vm10374, %v10370, 1326507024
        %v10385 = vsel %vm10373, %v10367, %v10384
        %v10386 = vsel %vm10372, %v10383, %v10385
        %v10387 = vshll.u32 %v10347, 8
        %v10388 = vand.u32 %v10387, 65535
        %v10389 = vshrl.u32 %v10387, 16
        %v10390 = vand.u32 %v10386, 65535
        %v10391 = vshrl.u32 %v10386, 16
        %v10392 = vmul.u32 %v10388, %v10390
        %v10393 = vmul.u32 %v10388, %v10391
        %v10394 = vmul.u32 %v10389, %v10390
        %v10395 = vmul.u32 %v10389, %v10391
        %v10396 = vshll.u32 %v10393, 16
        %v10397 = vshrl.u32 %v10393, 16
        %v10398 = vshll.u32 %v10394, 16
        %v10399 = vshrl.u32 %v10394, 16
        %vm10400 = vc.u32 %v10392, %v10396
        %v10401 = vsel %vm10400, 1, 0
        %v10402 = vadd.s32 %v10392, %v10396
        %v10403 = vadd.s32 %v10395, %v10401
        %vm10404 = vc.u32 %v10402, %v10398
        %v10405 = vsel %vm10404, 1, 0
        %v10406 = vadd.s32 %v10402, %v10398
        %v10407 = vadd.s32 %v10403, %v10405
        %v10408 = vadd.s32 %v10407, %v10397
        %v10409 = vadd.s32 %v10408, %v10399
        %v10410 = vand.u32 %v10387, 65535
        %v10411 = vshrl.u32 %v10387, 16
        %v10412 = vand.u32 %v10382, 65535
        %v10413 = vshrl.u32 %v10382, 16
        %v10414 = vmul.u32 %v10410, %v10412
        %v10415 = vmul.u32 %v10410, %v10413
        %v10416 = vmul.u32 %v10411, %v10412
        %v10417 = vmul.u32 %v10411, %v10413
        %v10418 = vshll.u32 %v10415, 16
        %v10419 = vshrl.u32 %v10415, 16
        %v10420 = vshll.u32 %v10416, 16
        %v10421 = vshrl.u32 %v10416, 16
        %vm10422 = vc.u32 %v10414, %v10418
        %v10423 = vsel %vm10422, 1, 0
        %v10424 = vadd.s32 %v10414, %v10418
        %v10425 = vadd.s32 %v10417, %v10423
        %vm10426 = vc.u32 %v10424, %v10420
        %v10427 = vsel %vm10426, 1, 0
        %v10428 = vadd.s32 %v10424, %v10420
        %v10429 = vadd.s32 %v10425, %v10427
        %v10430 = vadd.s32 %v10429, %v10419
        %v10431 = vadd.s32 %v10430, %v10421
        %v10432 = vmul.u32 %v10387, %v10378
        %v10433 = vadd.s32 %v10409, %v10428
        %vm10434 = vc.u32 %v10409, %v10428
        %v10435 = vadd.s32 %v10431, 1
        %v10436 = vsel %vm10434, %v10435, %v10431
        %v10437 = vadd.s32 %v10432, %v10436
        %v10438 = vadd.s32 %v10437, 536870912
        %v10439 = vshrl.u32 %v10438, 30
        %v10440 = vshll.u32 %v10439, 30
        %v10441 = vsub.s32 %v10437, %v10440
        %vm10442 = vcmp.lt.s32.totalorder %v10441, 0
        %v10443 = vsub.s32 0, %v10441
        %v10444 = vsel %vm10442, %v10443, %v10441
        %v10445 = vclz %v10444
        %v10446 = vsub.s32 %v10445, 2
        %vm10447 = vcmp.gt.s32.totalorder 0, %v10446
        %v10448 = vsel %vm10447, 0, %v10446
        %v10449 = vsub.s32 32, %v10448
        %v10450 = vshll.u32 %v10441, %v10448
        %v10451 = vshrl.u32 %v10433, %v10449
        %v10452 = vor.u32 %v10450, %v10451
        %v10453 = vsub.s32 4294967266, %v10448
        %v10454 = vadd.s32 %v10453, 127
        %v10455 = vshll.u32 %v10454, 23
        %v10456 = vor.u32 4788187, %v10455
        %v10457 = vand.u32 2147483647, %v10456
        %v10459 = vcvt.s32.f32 %v10452
        %v10460 = vmul.f32 %v10459, %v10457
        %v10461 = vxor.u32 %v10460, 2147483648
        %v10462 = vsel %vm10341, %v10461, %v10460
        %v10463 = vsub.s32 4, %v10439
        %v10464 = vsel %vm10341, %v10463, %v10439
        %v10465 = vsel %vm10340, %v789, %v10462
        %v10466 = vsel %vm10340, 0, %v10464
        %v10467 = vmul.f32 %v10465, %v10465
        %v10468 = vmul.f32 %v10467, -0.001358992
        %v10469 = vadd.f32 %v10468, 0.041655596
        %v10470 = vmul.f32 %v10467, %v10469
        %v10471 = vadd.f32 %v10470, -0.4999988
        %v10472 = vmul.f32 %v10467, %v10471
        %v10473 = vadd.f32 1.0, %v10472
        %v10474 = vmul.f32 %v10465, %v10465
        %v10475 = vmul.f32 %v10474, -0.00019511016
        %v10476 = vadd.f32 %v10475, 0.008332121
        %v10477 = vmul.f32 %v10474, %v10476
        %v10478 = vadd.f32 %v10477, -0.16666654
        %v10479 = vmul.f32 %v10474, %v10478
        %v10480 = vadd.f32 %v10479, 1.0
        %v10481 = vmul.f32 %v10480, %v10465
        %vm10482 = vweird.f32 %v789
        %v10483 = vand.u32 %v10466, 3
        %vm10484 = vcmp.lt.s32.totalorder %v10483, 2
        %vm10485 = vcmp.eq.s32.totalorder %v10483, 0
        %v10486 = vxor.u32 %v10481, 2147483648
        %v10487 = vsel %vm10485, %v10473, %v10486
        %vm10488 = vcmp.eq.s32.totalorder %v10483, 2
        %v10489 = vxor.u32 %v10473, 2147483648
        %v10490 = vsel %vm10488, %v10489, %v10481
        %v10491 = vsel %vm10484, %v10487, %v10490
        %v10492 = vsel %vm10482, nan, %v10491
        %v10493 = vand.u32 2147483647, %v790
        %vm10494 = vcmp.le.f32.partialorder %v10493, 0.7853982
        %vm10495 = vcmp.lt.s32.totalorder %v790, 0
        %v10496 = vand.u32 %v790, 2139095040
        %v10497 = vshrl.u32 %v10496, 23
        %v10498 = vsub.s32 %v10497, 127
        %v10499 = vand.u32 2147483647, %v790
        %v10500 = vand.u32 %v10499, 8388607
        %v10501 = vor.u32 %v10500, 8388608
        %v10502 = vsub.s32 0, %v10501
        %v10503 = vadd.s32 %v10498, 1
        %vm10504 = vcmp.gt.s32.totalorder %v10503, 0
        %v10505 = vsel %vm10504, %v10503, 0
        %v10506 = vshrl.u32 %v10505, 5
        %v10507 = vand.u32 %v10505, 31
        %v10508 = vsub.s32 32, %v10507
        %v10509 = vshrl.u32 683565275, %v10508
        %v10510 = vshll.u32 683565275, %v10507
        %v10511 = vshrl.u32 2475754826, %v10508
        %v10512 = vor.u32 %v10510, %v10511
        %v10513 = vshll.u32 2475754826, %v10507
        %v10514 = vshrl.u32 2131351028, %v10508
        %v10515 = vor.u32 %v10513, %v10514
        %v10516 = vshll.u32 2131351028, %v10507
        %v10517 = vshrl.u32 2102212464, %v10508
        %v10518 = vor.u32 %v10516, %v10517
        %v10519 = vshll.u32 2102212464, %v10507
        %v10520 = vshrl.u32 920167782, %v10508
        %v10521 = vor.u32 %v10519, %v10520
        %v10522 = vshll.u32 920167782, %v10507
        %v10523 = vshrl.u32 1326507024, %v10508
        %v10524 = vor.u32 %v10522, %v10523
        %vm10525 = vcmp.lt.s32.totalorder %v10506, 1
        %vm10526 = vcmp.lt.s32.totalorder %v10506, 2
        %vm10527 = vcmp.lt.s32.totalorder %v10506, 3
        %vm10528 = vcmp.lt.s32.totalorder %v10506, 4
        %v10529 = vsel %vm10525, %v10509, %v10512
        %v10530 = vsel %vm10528, %v10518, 2102212464
        %v10531 = vsel %vm10527, %v10515, %v10530
        %v10532 = vsel %vm10526, %v10529, %v10531
        %v10533 = vsel %vm10525, %v10512, %v10515
        %v10534 = vsel %vm10528, %v10521, 920167782
        %v10535 = vsel %vm10527, %v10518, %v10534
        %v10536 = vsel %vm10526, %v10533, %v10535
        %v10537 = vsel %vm10525, %v10515, %v10518
        %v10538 = vsel %vm10528, %v10524, 1326507024
        %v10539 = vsel %vm10527, %v10521, %v10538
        %v10540 = vsel %vm10526, %v10537, %v10539
        %v10541 = vshll.u32 %v10501, 8
        %v10542 = vand.u32 %v10541, 65535
        %v10543 = vshrl.u32 %v10541, 16
        %v10544 = vand.u32 %v10540, 65535
        %v10545 = vshrl.u32 %v10540, 16
        %v10546 = vmul.u32 %v10542, %v10544
        %v10547 = vmul.u32 %v10542, %v10545
        %v10548 = vmul.u32 %v10543, %v10544
        %v10549 = vmul.u32 %v10543, %v10545
        %v10550 = vshll.u32 %v10547, 16
        %v10551 = vshrl.u32 %v10547, 16
        %v10552 = vshll.u32 %v10548, 16
        %v10553 = vshrl.u32 %v10548, 16
        %vm10554 = vc.u32 %v10546, %v10550
        %v10555 = vsel %vm10554, 1, 0
        %v10556 = vadd.s32 %v10546, %v10550
        %v10557 = vadd.s32 %v10549, %v10555
        %vm10558 = vc.u32 %v10556, %v10552
        %v10559 = vsel %vm10558, 1, 0
        %v10560 = vadd.s32 %v10556, %v10552
        %v10561 = vadd.s32 %v10557, %v10559
        %v10562 = vadd.s32 %v10561, %v10551
        %v10563 = vadd.s32 %v10562, %v10553
        %v10564 = vand.u32 %v10541, 65535
        %v10565 = vshrl.u32 %v10541, 16
        %v10566 = vand.u32 %v10536, 65535
        %v10567 = vshrl.u32 %v10536, 16
        %v10568 = vmul.u32 %v10564, %v10566
        %v10569 = vmul.u32 %v10564, %v10567
        %v10570 = vmul.u32 %v10565, %v10566
        %v10571 = vmul.u32 %v10565, %v10567
        %v10572 = vshll.u32 %v10569, 16
        %v10573 = vshrl.u32 %v10569, 16
        %v10574 = vshll.u32 %v10570, 16
        %v10575 = vshrl.u32 %v10570, 16
        %vm10576 = vc.u32 %v10568, %v10572
        %v10577 = vsel %vm10576, 1, 0
        %v10578 = vadd.s32 %v10568, %v10572
        %v10579 = vadd.s32 %v10571, %v10577
        %vm10580 = vc.u32 %v10578, %v10574
        %v10581 = vsel %vm10580, 1, 0
        %v10582 = vadd.s32 %v10578, %v10574
        %v10583 = vadd.s32 %v10579, %v10581
        %v10584 = vadd.s32 %v10583, %v10573
        %v10585 = vadd.s32 %v10584, %v10575
        %v10586 = vmul.u32 %v10541, %v10532
        %v10587 = vadd.s32 %v10563, %v10582
        %vm10588 = vc.u32 %v10563, %v10582
        %v10589 = vadd.s32 %v10585, 1
        %v10590 = vsel %vm10588, %v10589, %v10585
        %v10591 = vadd.s32 %v10586, %v10590
        %v10592 = vadd.s32 %v10591, 536870912
        %v10593 = vshrl.u32 %v10592, 30
        %v10594 = vshll.u32 %v10593, 30
        %v10595 = vsub.s32 %v10591, %v10594
        %vm10596 = vcmp.lt.s32.totalorder %v10595, 0
        %v10597 = vsub.s32 0, %v10595
        %v10598 = vsel %vm10596, %v10597, %v10595
        %v10599 = vclz %v10598
        %v10600 = vsub.s32 %v10599, 2
        %vm10601 = vcmp.gt.s32.totalorder 0, %v10600
        %v10602 = vsel %vm10601, 0, %v10600
        %v10603 = vsub.s32 32, %v10602
        %v10604 = vshll.u32 %v10595, %v10602
        %v10605 = vshrl.u32 %v10587, %v10603
        %v10606 = vor.u32 %v10604, %v10605
        %v10607 = vsub.s32 4294967266, %v10602
        %v10608 = vadd.s32 %v10607, 127
        %v10609 = vshll.u32 %v10608, 23
        %v10610 = vor.u32 4788187, %v10609
        %v10611 = vand.u32 2147483647, %v10610
        %v10613 = vcvt.s32.f32 %v10606
        %v10614 = vmul.f32 %v10613, %v10611
        %v10615 = vxor.u32 %v10614, 2147483648
        %v10616 = vsel %vm10495, %v10615, %v10614
        %v10617 = vsub.s32 4, %v10593
        %v10618 = vsel %vm10495, %v10617, %v10593
        %v10619 = vsel %vm10494, %v790, %v10616
        %v10620 = vsel %vm10494, 0, %v10618
        %v10621 = vmul.f32 %v10619, %v10619
        %v10622 = vmul.f32 %v10621, -0.001358992
        %v10623 = vadd.f32 %v10622, 0.041655596
        %v10624 = vmul.f32 %v10621, %v10623
        %v10625 = vadd.f32 %v10624, -0.4999988
        %v10626 = vmul.f32 %v10621, %v10625
        %v10627 = vadd.f32 1.0, %v10626
        %v10628 = vmul.f32 %v10619, %v10619
        %v10629 = vmul.f32 %v10628, -0.00019511016
        %v10630 = vadd.f32 %v10629, 0.008332121
        %v10631 = vmul.f32 %v10628, %v10630
        %v10632 = vadd.f32 %v10631, -0.16666654
        %v10633 = vmul.f32 %v10628, %v10632
        %v10634 = vadd.f32 %v10633, 1.0
        %v10635 = vmul.f32 %v10634, %v10619
        %vm10636 = vweird.f32 %v790
        %v10637 = vand.u32 %v10620, 3
        %vm10638 = vcmp.lt.s32.totalorder %v10637, 2
        %vm10639 = vcmp.eq.s32.totalorder %v10637, 0
        %v10640 = vxor.u32 %v10635, 2147483648
        %v10641 = vsel %vm10639, %v10627, %v10640
        %vm10642 = vcmp.eq.s32.totalorder %v10637, 2
        %v10643 = vxor.u32 %v10627, 2147483648
        %v10644 = vsel %vm10642, %v10643, %v10635
        %v10645 = vsel %vm10638, %v10641, %v10644
        %v10646 = vsel %vm10636, nan, %v10645
        %v10647 = vld [vmem:[%s4] sm:$0x3]
        %10648 = vmatpush.msra.mxu0 %v10184
        %10649 = vmatpush.msra.mxu0 %v9568
        %10650 = vmatpush.msra.mxu0 %v8952
        %10651 = vmatpush.msra.mxu0 %v8336
        %10652 = vmatpush.msra.mxu0 %v7720
        %10653 = vmatpush.msra.mxu0 %v7104
        %10654 = vmatpush.msra.mxu0 %v6488
        %10655 = vmatpush.msra.mxu0 %v5872
        %10656 = vmatpush.msra.mxu0 %v5256
        %10657 = vmatpush.msra.mxu0 %v4640
        %10658 = vmatpush.msra.mxu0 %v4024
        %10659 = vmatpush.msra.mxu0 %v3408
        %10660 = vmatpush.msra.mxu0 %v2792
        %10661 = vmatpush.msra.mxu0 %v2176
        %10662 = vmatpush.msra.mxu0 %v1560
        %10663 = vmatpush.msra.mxu0 %v944
        %10664 = vmatmul.f32.gmra.mxu0 %v10647
        %v10665 = vpop.f32.mrf.mxu0
        %v10666 = vadd.f32 0.0, %v10665
        %10667 = vdwg.mxu0
        %10668 = vmatpush.msra.mxu0 %v10338
        %10669 = vmatpush.msra.mxu0 %v9722
        %10670 = vmatpush.msra.mxu0 %v9106
        %10671 = vmatpush.msra.mxu0 %v8490
        %10672 = vmatpush.msra.mxu0 %v7874
        %10673 = vmatpush.msra.mxu0 %v7258
        %10674 = vmatpush.msra.mxu0 %v6642
        %10675 = vmatpush.msra.mxu0 %v6026
        %10676 = vmatpush.msra.mxu0 %v5410
        %10677 = vmatpush.msra.mxu0 %v4794
        %10678 = vmatpush.msra.mxu0 %v4178
        %10679 = vmatpush.msra.mxu0 %v3562
        %10680 = vmatpush.msra.mxu0 %v2946
        %10681 = vmatpush.msra.mxu0 %v2330
        %10682 = vmatpush.msra.mxu0 %v1714
        %10683 = vmatpush.msra.mxu0 %v1098
        %10684 = vmatmul.f32.gmra.mxu0 %v10647
        %v10685 = vpop.f32.mrf.mxu0
        %v10686 = vadd.f32 0.0, %v10685
        %10687 = vdwg.mxu0
        %10688 = vmatpush.msra.mxu0 %v10492
        %10689 = vmatpush.msra.mxu0 %v9876
        %10690 = vmatpush.msra.mxu0 %v9260
        %10691 = vmatpush.msra.mxu0 %v8644
        %10692 = vmatpush.msra.mxu0 %v8028
        %10693 = vmatpush.msra.mxu0 %v7412
        %10694 = vmatpush.msra.mxu0 %v6796
        %10695 = vmatpush.msra.mxu0 %v6180
        %10696 = vmatpush.msra.mxu0 %v5564
        %10697 = vmatpush.msra.mxu0 %v4948
        %10698 = vmatpush.msra.mxu0 %v4332
        %10699 = vmatpush.msra.mxu0 %v3716
        %10700 = vmatpush.msra.mxu0 %v3100
        %10701 = vmatpush.msra.mxu0 %v2484
        %10702 = vmatpush.msra.mxu0 %v1868
        %10703 = vmatpush.msra.mxu0 %v1252
        %10704 = vmatmul.f32.gmra.mxu0 %v10647
        %v10705 = vpop.f32.mrf.mxu0
        %v10706 = vadd.f32 0.0, %v10705
        %10707 = vdwg.mxu0
        %10708 = vmatpush.msra.mxu0 %v10646
        %10709 = vmatpush.msra.mxu0 %v10030
        %10710 = vmatpush.msra.mxu0 %v9414
        %10711 = vmatpush.msra.mxu0 %v8798
        %10712 = vmatpush.msra.mxu0 %v8182
        %10713 = vmatpush.msra.mxu0 %v7566
        %10714 = vmatpush.msra.mxu0 %v6950
        %10715 = vmatpush.msra.mxu0 %v6334
        %10716 = vmatpush.msra.mxu0 %v5718
        %10717 = vmatpush.msra.mxu0 %v5102
        %10718 = vmatpush.msra.mxu0 %v4486
        %10719 = vmatpush.msra.mxu0 %v3870
        %10720 = vmatpush.msra.mxu0 %v3254
        %10721 = vmatpush.msra.mxu0 %v2638
        %10722 = vmatpush.msra.mxu0 %v2022
        %10723 = vmatpush.msra.mxu0 %v1406
        %10724 = vmatmul.f32.gmra.mxu0 %v10647
        %v10725 = vpop.f32.mrf.mxu0
        %v10726 = vadd.f32 0.0, %v10725
        %10727 = vdwg.mxu0
        %v10732 = vrot.slane %v10686, 6
        %v10733 = vrot.slane %v10706, 4
        %v10734 = vrot.slane %v10726, 2
        %vm10735 = vcmask 1041408
        %v10736 = vsel %vm10735, %v10666, %v10732
        %vm10737 = vcmask 1045508
        %v10738 = vsel %vm10737, %v10733, %v10734
        %vm10739 = vcmask 1043456
        %v10740 = vsel %vm10739, %v10736, %v10738
        %10742 = vst [vmem:[%s218] sm:$0xff] %v10740
        %s10743 = sand.u32 %s137, 1
        %s10744 = scalar_lea.sflag [#allocation3], %s10743
        %s10745 = sand.u32 %s137, 1
        %s10746 = smul.addr %s10745, 8
        %s10747 = scalar_lea.vmem [#allocation2], %s10746
        // Predicated region
        $region41: #{tpu_custom_call.1} parent=39 // pred_check
          %p10748 = pneg %p147
        $region42: #{tpu_custom_call.1} parent=39 // pred_check_branch
          %10750 = sbr.rel (%p10748) target = $region44
        $region43: #{tpu_custom_call.1} parent=39 // pred_region
          %s10751 = smul.u32 4, %s19
          %10753 = vsyncadd %s10744, 0
          %s10754 = smul.addr %s10751, 2
          %s10755 = scalar_lea.hbm %s5, %s10754
          %s10757 = sshll.u32 %s10747, 4
          %s10758 = int_to_ptr.vmem [resolvable:$true] %s10757
          %s10759 = sshll.u32 %s10755, 4
          %s10760 = int_to_ptr.hbm [resolvable:$true] %s10759
          %10762 = dma.vmem_to_hbm [thread:$0]  %s10758, 128, %s10760, %s10744
        $region44: #{tpu_custom_call.1} parent=39 // pred_fallthru
          _
      $region40: #{tpu_custom_call.1} parent=5 // pred_fallthru
        _
      %p10763 = scmp.le.s32.totalorder 2, %s14
      // Predicated region
      $region45: #{tpu_custom_call.1} parent=5 // pred_check
        %p10764 = pneg %p10763
      $region46: #{tpu_custom_call.1} parent=5 // pred_check_branch
        %10766 = sbr.rel (%p10764) target = $region48
      $region47: #{tpu_custom_call.1} parent=5 // pred_region
        %s10767 = ssub.s32 %s14, 2
        // Predicated region
        $region49: #{tpu_custom_call.1} parent=47 // pred_check
          %p10768 = pneg %p153
        $region50: #{tpu_custom_call.1} parent=47 // pred_check_branch
          %10770 = sbr.rel (%p10768) target = $region52
        $region51: #{tpu_custom_call.1} parent=47 // pred_region
          %s10771 = sand.u32 %s138, 1
          %s10772 = scalar_lea.sflag [#allocation3], %s10771
          %s10773 = sand.u32 %s138, 1
          %s10774 = smul.addr %s10773, 8
          %s10775 = scalar_lea.vmem [#allocation2], %s10774
          %10777 = dma.done %s10772, 128
        $region52: #{tpu_custom_call.1} parent=47 // pred_fallthru
          _
      $region48: #{tpu_custom_call.1} parent=5 // pred_fallthru
        _
    $region6: #{tpu_custom_call.1} parent=1 // loop_footer
      %s18 = sadd.s32 1, %s14
    $region7: #{tpu_custom_call.1} parent=1 // loop_footer_branch
      %13 = sbr.rel target = $region3
    $region8: #{tpu_custom_call.1} parent=1 // loop_exit
      _
    %10778 = vsyncpa [#allocation3], 1
    %s10779 = scalar_lea.sflag [#allocation3], 1
    %10780 = vsyncpa %s10779, 1

</llo_original>
